<compile_context>
chip_gen: v6e
topology: v6e:2x2x1
jax: 0.10.0
libtpu: 0.0.40
codegen_flags: <defaults>
</compile_context>

<pallas_src>
import functools
import math

import jax
import jax.numpy as jnp
from jax.experimental import pallas as pl
from jax.experimental.pallas import tpu as pltpu


# ----------------------------- in-kernel helpers ------------------------------

def _layernorm(z, gamma, beta, eps):
    """z: (N, E) f32, gamma/beta: (1, E) f32."""
    mean = jnp.mean(z, axis=-1, keepdims=True)
    var = jnp.mean(jnp.square(z - mean), axis=-1, keepdims=True)
    return (z - mean) * jax.lax.rsqrt(var + eps) * gamma + beta


def _mha(xq3, xkv3, head_mask, wq, wk, wv, bq, bk, bv, wo, bo, *, num_heads, scale):
    """Multi-head attention incl. output projection. Returns (Bq*Sq, E) f32."""
    B, Sq, E = xq3.shape
    Sk = xkv3.shape[1]
    xq2 = xq3.reshape(B * Sq, E).astype(jnp.bfloat16)
    xkv2 = xkv3.reshape(B * Sk, E).astype(jnp.bfloat16)

    # Lane-dense projections: one MXU push each, f32 accumulate, bias in f32.
    # Scale is folded into Q (applies to bias too, matching q@k^T / sqrt(Dh)).
    q = (jnp.dot(xq2, wq, preferred_element_type=jnp.float32) + bq) * scale
    k = jnp.dot(xkv2, wk, preferred_element_type=jnp.float32) + bk
    v = jnp.dot(xkv2, wv, preferred_element_type=jnp.float32) + bv

    # Cast once; reshape back to (B, S, E) (leading-dim reshape, layout-preserving).
    qb = q.reshape(B, Sq, E).astype(jnp.bfloat16)
    kb = k.reshape(B, Sk, E).astype(jnp.bfloat16)
    vb = v.reshape(B, Sk, E).astype(jnp.bfloat16)

    o_acc = jnp.zeros((B, Sq, E), jnp.float32)
    for h in range(num_heads):            # static unroll, H small
        mh = head_mask[h]                 # (1, E) bf16 one-hot lane mask for head h
        # Masking Q's lanes makes the full-E contraction equal the per-head
        # Dh contraction (other lanes contribute 0); extra MXU lanes are free.
        qh = qb * mh
        s = jnp.einsum('bqd,bkd->bqk', qh, kb,
                       preferred_element_type=jnp.float32)
        m = jnp.max(s, axis=-1, keepdims=True)
        p = jnp.exp(s - m)                # f32 softmax (EUP)
        p = p * pl.reciprocal(jnp.sum(p, axis=-1, keepdims=True), approx=True)
        vh = vb * mh
        # p @ V_h lands directly in head h's lanes; summing over h rebuilds the
        # concatenated multi-head output with no concat / transpose / lane slice.
        o_acc = o_acc + jnp.einsum('bqk,bkd->bqd', p.astype(jnp.bfloat16), vh,
                                   preferred_element_type=jnp.float32)

    o2 = o_acc.reshape(B * Sq, E).astype(jnp.bfloat16)
    return jnp.dot(o2, wo, preferred_element_type=jnp.float32) + bo


def _ffn(x2, w1, b1, w2, b2):
    """linear1 -> ReLU -> linear2 on a (N, E) slab."""
    h = jnp.dot(x2.astype(jnp.bfloat16), w1, preferred_element_type=jnp.float32) + b1
    h = jnp.maximum(h, 0.0)
    return jnp.dot(h.astype(jnp.bfloat16), w2, preferred_element_type=jnp.float32) + b2


# ------------------------- fused encoder-layer kernel -------------------------

def _encoder_layer_kernel(src_ref, mask_ref,
                          wq_ref, wk_ref, wv_ref, bq_ref, bk_ref, bv_ref,
                          wo_ref, bo_ref,
                          g1_ref, be1_ref,
                          w1_ref, fb1_ref, w2_ref, fb2_ref,
                          g2_ref, be2_ref, ge_ref, bee_ref,
                          o_ref, *, num_heads, scale, eps):
    x3 = src_ref[...]                                   # (B, Sr, E) f32
    B, S, E = x3.shape
    x2 = x3.reshape(B * S, E)
    attn = _mha(x3, x3, mask_ref[...],
                wq_ref[...], wk_ref[...], wv_ref[...],
                bq_ref[...], bk_ref[...], bv_ref[...],
                wo_ref[...], bo_ref[...],
                num_heads=num_heads, scale=scale)
    z = _layernorm(x2 + attn, g1_ref[...], be1_ref[...], eps)       # norm1
    y = _ffn(z, w1_ref[...], fb1_ref[...], w2_ref[...], fb2_ref[...])
    z = _layernorm(z + y, g2_ref[...], be2_ref[...], eps)           # norm2
    z = _layernorm(z, ge_ref[...], bee_ref[...], eps)               # encoder-stack norm
    o_ref[...] = z.reshape(B, S, E)


# ------------------------- fused decoder-layer kernel -------------------------

def _decoder_layer_kernel(tgt_ref, mem_ref, mask_ref,
                          s_wq, s_wk, s_wv, s_bq, s_bk, s_bv, s_wo, s_bo,
                          g1_ref, be1_ref,
                          c_wq, c_wk, c_wv, c_bq, c_bk, c_bv, c_wo, c_bo,
                          g2_ref, be2_ref,
                          w1_ref, fb1_ref, w2_ref, fb2_ref,
                          g3_ref, be3_ref,
                          gd_ref, bed_ref,
                          o_ref, *, num_heads, scale, eps):
    x3 = tgt_ref[...]                                   # (B, Sm, E) f32
    mem3 = mem_ref[...]                                 # (B, Sr, E) f32
    mask = mask_ref[...]
    B, S, E = x3.shape
    x2 = x3.reshape(B * S, E)

    a1 = _mha(x3, x3, mask,
              s_wq[...], s_wk[...], s_wv[...],
              s_bq[...], s_bk[...], s_bv[...],
              s_wo[...], s_bo[...], num_heads=num_heads, scale=scale)
    z = _layernorm(x2 + a1, g1_ref[...], be1_ref[...], eps)         # norm1

    a2 = _mha(z.reshape(B, S, E), mem3, mask,
              c_wq[...], c_wk[...], c_wv[...],
              c_bq[...], c_bk[...], c_bv[...],
              c_wo[...], c_bo[...], num_heads=num_heads, scale=scale)
    z = _layernorm(z + a2, g2_ref[...], be2_ref[...], eps)          # norm2

    y = _ffn(z, w1_ref[...], fb1_ref[...], w2_ref[...], fb2_ref[...])
    z = _layernorm(z + y, g3_ref[...], be3_ref[...], eps)           # norm3
    z = _layernorm(z, gd_ref[...], bed_ref[...], eps)               # decoder-stack norm
    o_ref[...] = z.reshape(B, S, E)


# ------------------------------- wrappers -------------------------------------

_VMEM_SPEC = pl.BlockSpec(memory_space=pltpu.MemorySpace.VMEM)


def _head_mask(E, H):
    """(H, 1, E) bf16 one-hot lane masks: head h owns lanes [h*Dh, (h+1)*Dh)."""
    Dh = E // H
    lane = jnp.arange(E, dtype=jnp.int32)
    mask = (lane[None, :] // Dh) == jnp.arange(H, dtype=jnp.int32)[:, None]
    return mask.astype(jnp.bfloat16).reshape(H, 1, E)


def _attn_arrays(p, E):
    return [p["wq"].astype(jnp.bfloat16), p["wk"].astype(jnp.bfloat16),
            p["wv"].astype(jnp.bfloat16),
            p["bq"].reshape(1, E), p["bk"].reshape(1, E), p["bv"].reshape(1, E),
            p["wo"].astype(jnp.bfloat16), p["bo"].reshape(1, E)]


def _ln_arrays(p, E):
    return [p["g"].reshape(1, E), p["b"].reshape(1, E)]


def _ffn_arrays(p, E):
    F = p["w1"].shape[1]
    return [p["w1"].astype(jnp.bfloat16), p["b1"].reshape(1, F),
            p["w2"].astype(jnp.bfloat16), p["b2"].reshape(1, E)]


def encoder_layer(src, params, num_heads, eps=1e-5):
    B, S, E = src.shape
    p = params["enc_layer"]
    scale = 1.0 / math.sqrt(E // num_heads)
    args = ([src, _head_mask(E, num_heads)]
            + _attn_arrays(p["self_attn"], E)
            + _ln_arrays(p["norm1"], E)
            + _ffn_arrays(p["ffn"], E)
            + _ln_arrays(p["norm2"], E)
            + _ln_arrays(params["enc_norm"], E))
    kern = functools.partial(_encoder_layer_kernel, num_heads=num_heads,
                             scale=scale, eps=eps)
    return pl.pallas_call(
        kern,
        in_specs=[_VMEM_SPEC] * len(args),
        out_specs=_VMEM_SPEC,
        out_shape=jax.ShapeDtypeStruct((B, S, E), jnp.float32),
    )(*args)


def decoder_layer(tgt, memory, params, num_heads, eps=1e-5):
    B, S, E = tgt.shape
    p = params["dec_layer"]
    scale = 1.0 / math.sqrt(E // num_heads)
    args = ([tgt, memory, _head_mask(E, num_heads)]
            + _attn_arrays(p["self_attn"], E)
            + _ln_arrays(p["norm1"], E)
            + _attn_arrays(p["cross_attn"], E)
            + _ln_arrays(p["norm2"], E)
            + _ffn_arrays(p["ffn"], E)
            + _ln_arrays(p["norm3"], E)
            + _ln_arrays(params["dec_norm"], E))
    kern = functools.partial(_decoder_layer_kernel, num_heads=num_heads,
                             scale=scale, eps=eps)
    return pl.pallas_call(
        kern,
        in_specs=[_VMEM_SPEC] * len(args),
        out_specs=_VMEM_SPEC,
        out_shape=jax.ShapeDtypeStruct((B, S, E), jnp.float32),
    )(*args)


def transformer_relation(main_feats, ref_feats, params, num_heads):
    """Mirrors TransformerRelaton.forward: src=ref_feats, tgt=main_feats."""
    memory = encoder_layer(ref_feats, params, num_heads)
    out = decoder_layer(main_feats, memory, params, num_heads)
    return out, {}


# ------------------------------ Param init ------------------------------

def _mha_params(key, E):
    ks = jax.random.split(key, 4)
    s = 1.0 / math.sqrt(E)
    return {
        "wq": jax.random.normal(ks[0], (E, E), jnp.float32) * s,
        "wk": jax.random.normal(ks[1], (E, E), jnp.float32) * s,
        "wv": jax.random.normal(ks[2], (E, E), jnp.float32) * s,
        "wo": jax.random.normal(ks[3], (E, E), jnp.float32) * s,
        "bq": jnp.zeros((E,), jnp.float32),
        "bk": jnp.zeros((E,), jnp.float32),
        "bv": jnp.zeros((E,), jnp.float32),
        "bo": jnp.zeros((E,), jnp.float32),
    }


def _ffn_params(key, E, F):
    k1, k2 = jax.random.split(key)
    return {
        "w1": jax.random.normal(k1, (E, F), jnp.float32) / math.sqrt(E),
        "b1": jnp.zeros((F,), jnp.float32),
        "w2": jax.random.normal(k2, (F, E), jnp.float32) / math.sqrt(F),
        "b2": jnp.zeros((E,), jnp.float32),
    }


def _ln_params(E):
    return {"g": jnp.ones((E,), jnp.float32), "b": jnp.zeros((E,), jnp.float32)}


def make_params(key, embed_dim):
    E = embed_dim
    F = embed_dim  # dim_feedforward = embed_dim in the module constructor
    keys = jax.random.split(key, 6)
    return {
        "enc_layer": {
            "self_attn": _mha_params(keys[0], E),
            "ffn": _ffn_params(keys[1], E, F),
            "norm1": _ln_params(E),
            "norm2": _ln_params(E),
        },
        "enc_norm": _ln_params(E),
        "dec_layer": {
            "self_attn": _mha_params(keys[2], E),
            "cross_attn": _mha_params(keys[3], E),
            "ffn": _ffn_params(keys[4], E, F),
            "norm1": _ln_params(E),
            "norm2": _ln_params(E),
            "norm3": _ln_params(E),
        },
        "dec_norm": _ln_params(E),
    }


# ------------------------------ Main ------------------------------

if __name__ == "__main__":
    EMBED_DIM = 32
    NUM_HEADS = 8
    B, S_MAIN, S_REF = 2, 8, 16

    root = jax.random.PRNGKey(0)
    k_main, k_ref, k_par = jax.random.split(root, 3)

    main_feats = jax.random.normal(k_main, (B, S_MAIN, EMBED_DIM), jnp.float32)
    ref_feats = jax.random.normal(k_ref, (B, S_REF, EMBED_DIM), jnp.float32)
    params = make_params(k_par, EMBED_DIM)

    # TODO(synk): dropout layers (p=0.1) are treated as identity (eval-mode semantics).
    fwd = jax.jit(functools.partial(transformer_relation, num_heads=NUM_HEADS))
    refined, extra = fwd(main_feats, ref_feats, params)
    refined = jax.block_until_ready(refined)

    assert refined.shape == (B, S_MAIN, EMBED_DIM)
    assert bool(jnp.all(jnp.isfinite(refined)))
    print("KERNEL_OK")
</pallas_src>

<mosaic_0001>
module attributes {stable_mosaic.version = 11 : i64} {
  func.func @_encoder_layer_kernel(%arg0: memref<2x16x32xf32, #tpu.memory_space<vmem>>, %arg1: memref<8x1x32xbf16, #tpu.memory_space<vmem>>, %arg2: memref<32x32xbf16, #tpu.memory_space<vmem>>, %arg3: memref<32x32xbf16, #tpu.memory_space<vmem>>, %arg4: memref<32x32xbf16, #tpu.memory_space<vmem>>, %arg5: memref<1x32xf32, #tpu.memory_space<vmem>>, %arg6: memref<1x32xf32, #tpu.memory_space<vmem>>, %arg7: memref<1x32xf32, #tpu.memory_space<vmem>>, %arg8: memref<32x32xbf16, #tpu.memory_space<vmem>>, %arg9: memref<1x32xf32, #tpu.memory_space<vmem>>, %arg10: memref<1x32xf32, #tpu.memory_space<vmem>>, %arg11: memref<1x32xf32, #tpu.memory_space<vmem>>, %arg12: memref<32x32xbf16, #tpu.memory_space<vmem>>, %arg13: memref<1x32xf32, #tpu.memory_space<vmem>>, %arg14: memref<32x32xbf16, #tpu.memory_space<vmem>>, %arg15: memref<1x32xf32, #tpu.memory_space<vmem>>, %arg16: memref<1x32xf32, #tpu.memory_space<vmem>>, %arg17: memref<1x32xf32, #tpu.memory_space<vmem>>, %arg18: memref<1x32xf32, #tpu.memory_space<vmem>>, %arg19: memref<1x32xf32, #tpu.memory_space<vmem>>, %arg20: memref<2x16x32xf32, #tpu.memory_space<vmem>>) attributes {dimension_semantics = [], scalar_prefetch = 0 : i64, scratch_operands = 0 : i64, tpu.core_type = #tpu.core_type<tc>} {
    %c0 = arith.constant 0 : index
    %c0_0 = arith.constant 0 : index
    %c0_1 = arith.constant 0 : index
    %0 = vector.load %arg0[%c0, %c0_0, %c0_1] : memref<2x16x32xf32, #tpu.memory_space<vmem>>, vector<2x16x32xf32>
    %1 = vector.shape_cast %0 : vector<2x16x32xf32> to vector<32x32xf32>
    %c0_2 = arith.constant 0 : index
    %c0_3 = arith.constant 0 : index
    %c0_4 = arith.constant 0 : index
    %2 = vector.load %arg1[%c0_2, %c0_3, %c0_4] : memref<8x1x32xbf16, #tpu.memory_space<vmem>>, vector<8x1x32xbf16>
    %c0_5 = arith.constant 0 : index
    %c0_6 = arith.constant 0 : index
    %3 = vector.load %arg2[%c0_5, %c0_6] : memref<32x32xbf16, #tpu.memory_space<vmem>>, vector<32x32xbf16>
    %c0_7 = arith.constant 0 : index
    %c0_8 = arith.constant 0 : index
    %4 = vector.load %arg3[%c0_7, %c0_8] : memref<32x32xbf16, #tpu.memory_space<vmem>>, vector<32x32xbf16>
    %c0_9 = arith.constant 0 : index
    %c0_10 = arith.constant 0 : index
    %5 = vector.load %arg4[%c0_9, %c0_10] : memref<32x32xbf16, #tpu.memory_space<vmem>>, vector<32x32xbf16>
    %c0_11 = arith.constant 0 : index
    %c0_12 = arith.constant 0 : index
    %6 = vector.load %arg5[%c0_11, %c0_12] : memref<1x32xf32, #tpu.memory_space<vmem>>, vector<1x32xf32>
    %c0_13 = arith.constant 0 : index
    %c0_14 = arith.constant 0 : index
    %7 = vector.load %arg6[%c0_13, %c0_14] : memref<1x32xf32, #tpu.memory_space<vmem>>, vector<1x32xf32>
    %c0_15 = arith.constant 0 : index
    %c0_16 = arith.constant 0 : index
    %8 = vector.load %arg7[%c0_15, %c0_16] : memref<1x32xf32, #tpu.memory_space<vmem>>, vector<1x32xf32>
    %c0_17 = arith.constant 0 : index
    %c0_18 = arith.constant 0 : index
    %9 = vector.load %arg8[%c0_17, %c0_18] : memref<32x32xbf16, #tpu.memory_space<vmem>>, vector<32x32xbf16>
    %c0_19 = arith.constant 0 : index
    %c0_20 = arith.constant 0 : index
    %10 = vector.load %arg9[%c0_19, %c0_20] : memref<1x32xf32, #tpu.memory_space<vmem>>, vector<1x32xf32>
    %11 = vector.shape_cast %0 : vector<2x16x32xf32> to vector<32x32xf32>
    %12 = arith.truncf %11 : vector<32x32xf32> to vector<32x32xbf16>
    %13 = vector.shape_cast %0 : vector<2x16x32xf32> to vector<32x32xf32>
    %14 = arith.truncf %13 : vector<32x32xf32> to vector<32x32xbf16>
    %cst = arith.constant dense<0.000000e+00> : vector<32x32xf32>
    %15 = tpu.matmul %12, %3, %cst {dimension_numbers = #tpu.dot_dimension_numbers<[1], [0], [0], [1], [0, 0, 1, 1], [], []>} : vector<32x32xbf16>, vector<32x32xbf16>, vector<32x32xf32> -> vector<32x32xf32>
    %16 = vector.broadcast %6 : vector<1x32xf32> to vector<32x32xf32>
    %17 = arith.addf %15, %16 : vector<32x32xf32>
    %cst_21 = arith.constant 5.000000e-01 : f32
    %18 = vector.broadcast %cst_21 : f32 to vector<32x32xf32>
    %19 = arith.mulf %17, %18 : vector<32x32xf32>
    %cst_22 = arith.constant dense<0.000000e+00> : vector<32x32xf32>
    %20 = tpu.matmul %14, %4, %cst_22 {dimension_numbers = #tpu.dot_dimension_numbers<[1], [0], [0], [1], [0, 0, 1, 1], [], []>} : vector<32x32xbf16>, vector<32x32xbf16>, vector<32x32xf32> -> vector<32x32xf32>
    %21 = vector.broadcast %7 : vector<1x32xf32> to vector<32x32xf32>
    %22 = arith.addf %20, %21 : vector<32x32xf32>
    %cst_23 = arith.constant dense<0.000000e+00> : vector<32x32xf32>
    %23 = tpu.matmul %14, %5, %cst_23 {dimension_numbers = #tpu.dot_dimension_numbers<[1], [0], [0], [1], [0, 0, 1, 1], [], []>} : vector<32x32xbf16>, vector<32x32xbf16>, vector<32x32xf32> -> vector<32x32xf32>
    %24 = vector.broadcast %8 : vector<1x32xf32> to vector<32x32xf32>
    %25 = arith.addf %23, %24 : vector<32x32xf32>
    %26 = vector.shape_cast %19 : vector<32x32xf32> to vector<2x16x32xf32>
    %27 = arith.truncf %26 : vector<2x16x32xf32> to vector<2x16x32xbf16>
    %28 = vector.shape_cast %22 : vector<32x32xf32> to vector<2x16x32xf32>
    %29 = arith.truncf %28 : vector<2x16x32xf32> to vector<2x16x32xbf16>
    %30 = vector.shape_cast %25 : vector<32x32xf32> to vector<2x16x32xf32>
    %31 = arith.truncf %30 : vector<2x16x32xf32> to vector<2x16x32xbf16>
    %cst_24 = arith.constant 0.000000e+00 : f32
    %32 = vector.broadcast %cst_24 : f32 to vector<2x16x32xf32>
    %33 = vector.extract_strided_slice %2 {offsets = [0, 0, 0], sizes = [1, 1, 32], strides = [1, 1, 1]} : vector<8x1x32xbf16> to vector<1x1x32xbf16>
    %34 = vector.shape_cast %33 : vector<1x1x32xbf16> to vector<1x32xbf16>
    %35 = vector.shape_cast %34 : vector<1x32xbf16> to vector<1x1x32xbf16>
    %36 = vector.broadcast %35 : vector<1x1x32xbf16> to vector<2x16x32xbf16>
    %37 = arith.mulf %27, %36 : vector<2x16x32xbf16>
    "tpu.trace_start"() <{level = 10 : i32, message = "bqd,bkd->bqk"}> : () -> ()
    %cst_25 = arith.constant dense<0.000000e+00> : vector<2x16x16xf32>
    %38 = tpu.matmul %37, %29, %cst_25 {dimension_numbers = #tpu.dot_dimension_numbers<[2], [2], [1], [1], [0, 0, 0, 1, 1, 1], [0], [0]>} : vector<2x16x32xbf16>, vector<2x16x32xbf16>, vector<2x16x16xf32> -> vector<2x16x16xf32>
    "tpu.trace_stop"() : () -> ()
    %cst_26 = arith.constant dense<0xFF800000> : vector<2x16xf32>
    %39 = vector.multi_reduction <maximumf>, %38, %cst_26 [2] : vector<2x16x16xf32> to vector<2x16xf32>
    %40 = vector.shape_cast %39 : vector<2x16xf32> to vector<2x16x1xf32>
    %41 = vector.broadcast %40 : vector<2x16x1xf32> to vector<2x16x16xf32>
    %42 = arith.subf %38, %41 : vector<2x16x16xf32>
    %43 = math.exp %42 : vector<2x16x16xf32>
    %cst_27 = arith.constant dense<0.000000e+00> : vector<2x16xf32>
    %44 = vector.multi_reduction <add>, %43, %cst_27 [2] : vector<2x16x16xf32> to vector<2x16xf32>
    %45 = vector.shape_cast %44 : vector<2x16xf32> to vector<2x16x1xf32>
    %46 = tpu.reciprocal %45 {approx = true} : vector<2x16x1xf32> -> vector<2x16x1xf32>
    %47 = vector.broadcast %46 : vector<2x16x1xf32> to vector<2x16x16xf32>
    %48 = arith.mulf %43, %47 : vector<2x16x16xf32>
    %49 = vector.shape_cast %34 : vector<1x32xbf16> to vector<1x1x32xbf16>
    %50 = vector.broadcast %49 : vector<1x1x32xbf16> to vector<2x16x32xbf16>
    %51 = arith.mulf %31, %50 : vector<2x16x32xbf16>
    %52 = arith.truncf %48 : vector<2x16x16xf32> to vector<2x16x16xbf16>
    "tpu.trace_start"() <{level = 10 : i32, message = "bqk,bkd->bqd"}> : () -> ()
    %cst_28 = arith.constant dense<0.000000e+00> : vector<2x16x32xf32>
    %53 = tpu.matmul %52, %51, %cst_28 {dimension_numbers = #tpu.dot_dimension_numbers<[2], [1], [1], [2], [0, 0, 0, 1, 1, 2], [0], [0]>} : vector<2x16x16xbf16>, vector<2x16x32xbf16>, vector<2x16x32xf32> -> vector<2x16x32xf32>
    "tpu.trace_stop"() : () -> ()
    %54 = arith.addf %32, %53 : vector<2x16x32xf32>
    %55 = vector.extract_strided_slice %2 {offsets = [1, 0, 0], sizes = [1, 1, 32], strides = [1, 1, 1]} : vector<8x1x32xbf16> to vector<1x1x32xbf16>
    %56 = vector.shape_cast %55 : vector<1x1x32xbf16> to vector<1x32xbf16>
    %57 = vector.shape_cast %56 : vector<1x32xbf16> to vector<1x1x32xbf16>
    %58 = vector.broadcast %57 : vector<1x1x32xbf16> to vector<2x16x32xbf16>
    %59 = arith.mulf %27, %58 : vector<2x16x32xbf16>
    "tpu.trace_start"() <{level = 10 : i32, message = "bqd,bkd->bqk"}> : () -> ()
    %cst_29 = arith.constant dense<0.000000e+00> : vector<2x16x16xf32>
    %60 = tpu.matmul %59, %29, %cst_29 {dimension_numbers = #tpu.dot_dimension_numbers<[2], [2], [1], [1], [0, 0, 0, 1, 1, 1], [0], [0]>} : vector<2x16x32xbf16>, vector<2x16x32xbf16>, vector<2x16x16xf32> -> vector<2x16x16xf32>
    "tpu.trace_stop"() : () -> ()
    %cst_30 = arith.constant dense<0xFF800000> : vector<2x16xf32>
    %61 = vector.multi_reduction <maximumf>, %60, %cst_30 [2] : vector<2x16x16xf32> to vector<2x16xf32>
    %62 = vector.shape_cast %61 : vector<2x16xf32> to vector<2x16x1xf32>
    %63 = vector.broadcast %62 : vector<2x16x1xf32> to vector<2x16x16xf32>
    %64 = arith.subf %60, %63 : vector<2x16x16xf32>
    %65 = math.exp %64 : vector<2x16x16xf32>
    %cst_31 = arith.constant dense<0.000000e+00> : vector<2x16xf32>
    %66 = vector.multi_reduction <add>, %65, %cst_31 [2] : vector<2x16x16xf32> to vector<2x16xf32>
    %67 = vector.shape_cast %66 : vector<2x16xf32> to vector<2x16x1xf32>
    %68 = tpu.reciprocal %67 {approx = true} : vector<2x16x1xf32> -> vector<2x16x1xf32>
    %69 = vector.broadcast %68 : vector<2x16x1xf32> to vector<2x16x16xf32>
    %70 = arith.mulf %65, %69 : vector<2x16x16xf32>
    %71 = vector.shape_cast %56 : vector<1x32xbf16> to vector<1x1x32xbf16>
    %72 = vector.broadcast %71 : vector<1x1x32xbf16> to vector<2x16x32xbf16>
    %73 = arith.mulf %31, %72 : vector<2x16x32xbf16>
    %74 = arith.truncf %70 : vector<2x16x16xf32> to vector<2x16x16xbf16>
    "tpu.trace_start"() <{level = 10 : i32, message = "bqk,bkd->bqd"}> : () -> ()
    %cst_32 = arith.constant dense<0.000000e+00> : vector<2x16x32xf32>
    %75 = tpu.matmul %74, %73, %cst_32 {dimension_numbers = #tpu.dot_dimension_numbers<[2], [1], [1], [2], [0, 0, 0, 1, 1, 2], [0], [0]>} : vector<2x16x16xbf16>, vector<2x16x32xbf16>, vector<2x16x32xf32> -> vector<2x16x32xf32>
    "tpu.trace_stop"() : () -> ()
    %76 = arith.addf %54, %75 : vector<2x16x32xf32>
    %77 = vector.extract_strided_slice %2 {offsets = [2, 0, 0], sizes = [1, 1, 32], strides = [1, 1, 1]} : vector<8x1x32xbf16> to vector<1x1x32xbf16>
    %78 = vector.shape_cast %77 : vector<1x1x32xbf16> to vector<1x32xbf16>
    %79 = vector.shape_cast %78 : vector<1x32xbf16> to vector<1x1x32xbf16>
    %80 = vector.broadcast %79 : vector<1x1x32xbf16> to vector<2x16x32xbf16>
    %81 = arith.mulf %27, %80 : vector<2x16x32xbf16>
    "tpu.trace_start"() <{level = 10 : i32, message = "bqd,bkd->bqk"}> : () -> ()
    %cst_33 = arith.constant dense<0.000000e+00> : vector<2x16x16xf32>
    %82 = tpu.matmul %81, %29, %cst_33 {dimension_numbers = #tpu.dot_dimension_numbers<[2], [2], [1], [1], [0, 0, 0, 1, 1, 1], [0], [0]>} : vector<2x16x32xbf16>, vector<2x16x32xbf16>, vector<2x16x16xf32> -> vector<2x16x16xf32>
    "tpu.trace_stop"() : () -> ()
    %cst_34 = arith.constant dense<0xFF800000> : vector<2x16xf32>
    %83 = vector.multi_reduction <maximumf>, %82, %cst_34 [2] : vector<2x16x16xf32> to vector<2x16xf32>
    %84 = vector.shape_cast %83 : vector<2x16xf32> to vector<2x16x1xf32>
    %85 = vector.broadcast %84 : vector<2x16x1xf32> to vector<2x16x16xf32>
    %86 = arith.subf %82, %85 : vector<2x16x16xf32>
    %87 = math.exp %86 : vector<2x16x16xf32>
    %cst_35 = arith.constant dense<0.000000e+00> : vector<2x16xf32>
    %88 = vector.multi_reduction <add>, %87, %cst_35 [2] : vector<2x16x16xf32> to vector<2x16xf32>
    %89 = vector.shape_cast %88 : vector<2x16xf32> to vector<2x16x1xf32>
    %90 = tpu.reciprocal %89 {approx = true} : vector<2x16x1xf32> -> vector<2x16x1xf32>
    %91 = vector.broadcast %90 : vector<2x16x1xf32> to vector<2x16x16xf32>
    %92 = arith.mulf %87, %91 : vector<2x16x16xf32>
    %93 = vector.shape_cast %78 : vector<1x32xbf16> to vector<1x1x32xbf16>
    %94 = vector.broadcast %93 : vector<1x1x32xbf16> to vector<2x16x32xbf16>
    %95 = arith.mulf %31, %94 : vector<2x16x32xbf16>
    %96 = arith.truncf %92 : vector<2x16x16xf32> to vector<2x16x16xbf16>
    "tpu.trace_start"() <{level = 10 : i32, message = "bqk,bkd->bqd"}> : () -> ()
    %cst_36 = arith.constant dense<0.000000e+00> : vector<2x16x32xf32>
    %97 = tpu.matmul %96, %95, %cst_36 {dimension_numbers = #tpu.dot_dimension_numbers<[2], [1], [1], [2], [0, 0, 0, 1, 1, 2], [0], [0]>} : vector<2x16x16xbf16>, vector<2x16x32xbf16>, vector<2x16x32xf32> -> vector<2x16x32xf32>
    "tpu.trace_stop"() : () -> ()
    %98 = arith.addf %76, %97 : vector<2x16x32xf32>
    %99 = vector.extract_strided_slice %2 {offsets = [3, 0, 0], sizes = [1, 1, 32], strides = [1, 1, 1]} : vector<8x1x32xbf16> to vector<1x1x32xbf16>
    %100 = vector.shape_cast %99 : vector<1x1x32xbf16> to vector<1x32xbf16>
    %101 = vector.shape_cast %100 : vector<1x32xbf16> to vector<1x1x32xbf16>
    %102 = vector.broadcast %101 : vector<1x1x32xbf16> to vector<2x16x32xbf16>
    %103 = arith.mulf %27, %102 : vector<2x16x32xbf16>
    "tpu.trace_start"() <{level = 10 : i32, message = "bqd,bkd->bqk"}> : () -> ()
    %cst_37 = arith.constant dense<0.000000e+00> : vector<2x16x16xf32>
    %104 = tpu.matmul %103, %29, %cst_37 {dimension_numbers = #tpu.dot_dimension_numbers<[2], [2], [1], [1], [0, 0, 0, 1, 1, 1], [0], [0]>} : vector<2x16x32xbf16>, vector<2x16x32xbf16>, vector<2x16x16xf32> -> vector<2x16x16xf32>
    "tpu.trace_stop"() : () -> ()
    %cst_38 = arith.constant dense<0xFF800000> : vector<2x16xf32>
    %105 = vector.multi_reduction <maximumf>, %104, %cst_38 [2] : vector<2x16x16xf32> to vector<2x16xf32>
    %106 = vector.shape_cast %105 : vector<2x16xf32> to vector<2x16x1xf32>
    %107 = vector.broadcast %106 : vector<2x16x1xf32> to vector<2x16x16xf32>
    %108 = arith.subf %104, %107 : vector<2x16x16xf32>
    %109 = math.exp %108 : vector<2x16x16xf32>
    %cst_39 = arith.constant dense<0.000000e+00> : vector<2x16xf32>
    %110 = vector.multi_reduction <add>, %109, %cst_39 [2] : vector<2x16x16xf32> to vector<2x16xf32>
    %111 = vector.shape_cast %110 : vector<2x16xf32> to vector<2x16x1xf32>
    %112 = tpu.reciprocal %111 {approx = true} : vector<2x16x1xf32> -> vector<2x16x1xf32>
    %113 = vector.broadcast %112 : vector<2x16x1xf32> to vector<2x16x16xf32>
    %114 = arith.mulf %109, %113 : vector<2x16x16xf32>
    %115 = vector.shape_cast %100 : vector<1x32xbf16> to vector<1x1x32xbf16>
    %116 = vector.broadcast %115 : vector<1x1x32xbf16> to vector<2x16x32xbf16>
    %117 = arith.mulf %31, %116 : vector<2x16x32xbf16>
    %118 = arith.truncf %114 : vector<2x16x16xf32> to vector<2x16x16xbf16>
    "tpu.trace_start"() <{level = 10 : i32, message = "bqk,bkd->bqd"}> : () -> ()
    %cst_40 = arith.constant dense<0.000000e+00> : vector<2x16x32xf32>
    %119 = tpu.matmul %118, %117, %cst_40 {dimension_numbers = #tpu.dot_dimension_numbers<[2], [1], [1], [2], [0, 0, 0, 1, 1, 2], [0], [0]>} : vector<2x16x16xbf16>, vector<2x16x32xbf16>, vector<2x16x32xf32> -> vector<2x16x32xf32>
    "tpu.trace_stop"() : () -> ()
    %120 = arith.addf %98, %119 : vector<2x16x32xf32>
    %121 = vector.extract_strided_slice %2 {offsets = [4, 0, 0], sizes = [1, 1, 32], strides = [1, 1, 1]} : vector<8x1x32xbf16> to vector<1x1x32xbf16>
    %122 = vector.shape_cast %121 : vector<1x1x32xbf16> to vector<1x32xbf16>
    %123 = vector.shape_cast %122 : vector<1x32xbf16> to vector<1x1x32xbf16>
    %124 = vector.broadcast %123 : vector<1x1x32xbf16> to vector<2x16x32xbf16>
    %125 = arith.mulf %27, %124 : vector<2x16x32xbf16>
    "tpu.trace_start"() <{level = 10 : i32, message = "bqd,bkd->bqk"}> : () -> ()
    %cst_41 = arith.constant dense<0.000000e+00> : vector<2x16x16xf32>
    %126 = tpu.matmul %125, %29, %cst_41 {dimension_numbers = #tpu.dot_dimension_numbers<[2], [2], [1], [1], [0, 0, 0, 1, 1, 1], [0], [0]>} : vector<2x16x32xbf16>, vector<2x16x32xbf16>, vector<2x16x16xf32> -> vector<2x16x16xf32>
    "tpu.trace_stop"() : () -> ()
    %cst_42 = arith.constant dense<0xFF800000> : vector<2x16xf32>
    %127 = vector.multi_reduction <maximumf>, %126, %cst_42 [2] : vector<2x16x16xf32> to vector<2x16xf32>
    %128 = vector.shape_cast %127 : vector<2x16xf32> to vector<2x16x1xf32>
    %129 = vector.broadcast %128 : vector<2x16x1xf32> to vector<2x16x16xf32>
    %130 = arith.subf %126, %129 : vector<2x16x16xf32>
    %131 = math.exp %130 : vector<2x16x16xf32>
    %cst_43 = arith.constant dense<0.000000e+00> : vector<2x16xf32>
    %132 = vector.multi_reduction <add>, %131, %cst_43 [2] : vector<2x16x16xf32> to vector<2x16xf32>
    %133 = vector.shape_cast %132 : vector<2x16xf32> to vector<2x16x1xf32>
    %134 = tpu.reciprocal %133 {approx = true} : vector<2x16x1xf32> -> vector<2x16x1xf32>
    %135 = vector.broadcast %134 : vector<2x16x1xf32> to vector<2x16x16xf32>
    %136 = arith.mulf %131, %135 : vector<2x16x16xf32>
    %137 = vector.shape_cast %122 : vector<1x32xbf16> to vector<1x1x32xbf16>
    %138 = vector.broadcast %137 : vector<1x1x32xbf16> to vector<2x16x32xbf16>
    %139 = arith.mulf %31, %138 : vector<2x16x32xbf16>
    %140 = arith.truncf %136 : vector<2x16x16xf32> to vector<2x16x16xbf16>
    "tpu.trace_start"() <{level = 10 : i32, message = "bqk,bkd->bqd"}> : () -> ()
    %cst_44 = arith.constant dense<0.000000e+00> : vector<2x16x32xf32>
    %141 = tpu.matmul %140, %139, %cst_44 {dimension_numbers = #tpu.dot_dimension_numbers<[2], [1], [1], [2], [0, 0, 0, 1, 1, 2], [0], [0]>} : vector<2x16x16xbf16>, vector<2x16x32xbf16>, vector<2x16x32xf32> -> vector<2x16x32xf32>
    "tpu.trace_stop"() : () -> ()
    %142 = arith.addf %120, %141 : vector<2x16x32xf32>
    %143 = vector.extract_strided_slice %2 {offsets = [5, 0, 0], sizes = [1, 1, 32], strides = [1, 1, 1]} : vector<8x1x32xbf16> to vector<1x1x32xbf16>
    %144 = vector.shape_cast %143 : vector<1x1x32xbf16> to vector<1x32xbf16>
    %145 = vector.shape_cast %144 : vector<1x32xbf16> to vector<1x1x32xbf16>
    %146 = vector.broadcast %145 : vector<1x1x32xbf16> to vector<2x16x32xbf16>
    %147 = arith.mulf %27, %146 : vector<2x16x32xbf16>
    "tpu.trace_start"() <{level = 10 : i32, message = "bqd,bkd->bqk"}> : () -> ()
    %cst_45 = arith.constant dense<0.000000e+00> : vector<2x16x16xf32>
    %148 = tpu.matmul %147, %29, %cst_45 {dimension_numbers = #tpu.dot_dimension_numbers<[2], [2], [1], [1], [0, 0, 0, 1, 1, 1], [0], [0]>} : vector<2x16x32xbf16>, vector<2x16x32xbf16>, vector<2x16x16xf32> -> vector<2x16x16xf32>
    "tpu.trace_stop"() : () -> ()
    %cst_46 = arith.constant dense<0xFF800000> : vector<2x16xf32>
    %149 = vector.multi_reduction <maximumf>, %148, %cst_46 [2] : vector<2x16x16xf32> to vector<2x16xf32>
    %150 = vector.shape_cast %149 : vector<2x16xf32> to vector<2x16x1xf32>
    %151 = vector.broadcast %150 : vector<2x16x1xf32> to vector<2x16x16xf32>
    %152 = arith.subf %148, %151 : vector<2x16x16xf32>
    %153 = math.exp %152 : vector<2x16x16xf32>
    %cst_47 = arith.constant dense<0.000000e+00> : vector<2x16xf32>
    %154 = vector.multi_reduction <add>, %153, %cst_47 [2] : vector<2x16x16xf32> to vector<2x16xf32>
    %155 = vector.shape_cast %154 : vector<2x16xf32> to vector<2x16x1xf32>
    %156 = tpu.reciprocal %155 {approx = true} : vector<2x16x1xf32> -> vector<2x16x1xf32>
    %157 = vector.broadcast %156 : vector<2x16x1xf32> to vector<2x16x16xf32>
    %158 = arith.mulf %153, %157 : vector<2x16x16xf32>
    %159 = vector.shape_cast %144 : vector<1x32xbf16> to vector<1x1x32xbf16>
    %160 = vector.broadcast %159 : vector<1x1x32xbf16> to vector<2x16x32xbf16>
    %161 = arith.mulf %31, %160 : vector<2x16x32xbf16>
    %162 = arith.truncf %158 : vector<2x16x16xf32> to vector<2x16x16xbf16>
    "tpu.trace_start"() <{level = 10 : i32, message = "bqk,bkd->bqd"}> : () -> ()
    %cst_48 = arith.constant dense<0.000000e+00> : vector<2x16x32xf32>
    %163 = tpu.matmul %162, %161, %cst_48 {dimension_numbers = #tpu.dot_dimension_numbers<[2], [1], [1], [2], [0, 0, 0, 1, 1, 2], [0], [0]>} : vector<2x16x16xbf16>, vector<2x16x32xbf16>, vector<2x16x32xf32> -> vector<2x16x32xf32>
    "tpu.trace_stop"() : () -> ()
    %164 = arith.addf %142, %163 : vector<2x16x32xf32>
    %165 = vector.extract_strided_slice %2 {offsets = [6, 0, 0], sizes = [1, 1, 32], strides = [1, 1, 1]} : vector<8x1x32xbf16> to vector<1x1x32xbf16>
    %166 = vector.shape_cast %165 : vector<1x1x32xbf16> to vector<1x32xbf16>
    %167 = vector.shape_cast %166 : vector<1x32xbf16> to vector<1x1x32xbf16>
    %168 = vector.broadcast %167 : vector<1x1x32xbf16> to vector<2x16x32xbf16>
    %169 = arith.mulf %27, %168 : vector<2x16x32xbf16>
    "tpu.trace_start"() <{level = 10 : i32, message = "bqd,bkd->bqk"}> : () -> ()
    %cst_49 = arith.constant dense<0.000000e+00> : vector<2x16x16xf32>
    %170 = tpu.matmul %169, %29, %cst_49 {dimension_numbers = #tpu.dot_dimension_numbers<[2], [2], [1], [1], [0, 0, 0, 1, 1, 1], [0], [0]>} : vector<2x16x32xbf16>, vector<2x16x32xbf16>, vector<2x16x16xf32> -> vector<2x16x16xf32>
    "tpu.trace_stop"() : () -> ()
    %cst_50 = arith.constant dense<0xFF800000> : vector<2x16xf32>
    %171 = vector.multi_reduction <maximumf>, %170, %cst_50 [2] : vector<2x16x16xf32> to vector<2x16xf32>
    %172 = vector.shape_cast %171 : vector<2x16xf32> to vector<2x16x1xf32>
    %173 = vector.broadcast %172 : vector<2x16x1xf32> to vector<2x16x16xf32>
    %174 = arith.subf %170, %173 : vector<2x16x16xf32>
    %175 = math.exp %174 : vector<2x16x16xf32>
    %cst_51 = arith.constant dense<0.000000e+00> : vector<2x16xf32>
    %176 = vector.multi_reduction <add>, %175, %cst_51 [2] : vector<2x16x16xf32> to vector<2x16xf32>
    %177 = vector.shape_cast %176 : vector<2x16xf32> to vector<2x16x1xf32>
    %178 = tpu.reciprocal %177 {approx = true} : vector<2x16x1xf32> -> vector<2x16x1xf32>
    %179 = vector.broadcast %178 : vector<2x16x1xf32> to vector<2x16x16xf32>
    %180 = arith.mulf %175, %179 : vector<2x16x16xf32>
    %181 = vector.shape_cast %166 : vector<1x32xbf16> to vector<1x1x32xbf16>
    %182 = vector.broadcast %181 : vector<1x1x32xbf16> to vector<2x16x32xbf16>
    %183 = arith.mulf %31, %182 : vector<2x16x32xbf16>
    %184 = arith.truncf %180 : vector<2x16x16xf32> to vector<2x16x16xbf16>
    "tpu.trace_start"() <{level = 10 : i32, message = "bqk,bkd->bqd"}> : () -> ()
    %cst_52 = arith.constant dense<0.000000e+00> : vector<2x16x32xf32>
    %185 = tpu.matmul %184, %183, %cst_52 {dimension_numbers = #tpu.dot_dimension_numbers<[2], [1], [1], [2], [0, 0, 0, 1, 1, 2], [0], [0]>} : vector<2x16x16xbf16>, vector<2x16x32xbf16>, vector<2x16x32xf32> -> vector<2x16x32xf32>
    "tpu.trace_stop"() : () -> ()
    %186 = arith.addf %164, %185 : vector<2x16x32xf32>
    %187 = vector.extract_strided_slice %2 {offsets = [7, 0, 0], sizes = [1, 1, 32], strides = [1, 1, 1]} : vector<8x1x32xbf16> to vector<1x1x32xbf16>
    %188 = vector.shape_cast %187 : vector<1x1x32xbf16> to vector<1x32xbf16>
    %189 = vector.shape_cast %188 : vector<1x32xbf16> to vector<1x1x32xbf16>
    %190 = vector.broadcast %189 : vector<1x1x32xbf16> to vector<2x16x32xbf16>
    %191 = arith.mulf %27, %190 : vector<2x16x32xbf16>
    "tpu.trace_start"() <{level = 10 : i32, message = "bqd,bkd->bqk"}> : () -> ()
    %cst_53 = arith.constant dense<0.000000e+00> : vector<2x16x16xf32>
    %192 = tpu.matmul %191, %29, %cst_53 {dimension_numbers = #tpu.dot_dimension_numbers<[2], [2], [1], [1], [0, 0, 0, 1, 1, 1], [0], [0]>} : vector<2x16x32xbf16>, vector<2x16x32xbf16>, vector<2x16x16xf32> -> vector<2x16x16xf32>
    "tpu.trace_stop"() : () -> ()
    %cst_54 = arith.constant dense<0xFF800000> : vector<2x16xf32>
    %193 = vector.multi_reduction <maximumf>, %192, %cst_54 [2] : vector<2x16x16xf32> to vector<2x16xf32>
    %194 = vector.shape_cast %193 : vector<2x16xf32> to vector<2x16x1xf32>
    %195 = vector.broadcast %194 : vector<2x16x1xf32> to vector<2x16x16xf32>
    %196 = arith.subf %192, %195 : vector<2x16x16xf32>
    %197 = math.exp %196 : vector<2x16x16xf32>
    %cst_55 = arith.constant dense<0.000000e+00> : vector<2x16xf32>
    %198 = vector.multi_reduction <add>, %197, %cst_55 [2] : vector<2x16x16xf32> to vector<2x16xf32>
    %199 = vector.shape_cast %198 : vector<2x16xf32> to vector<2x16x1xf32>
    %200 = tpu.reciprocal %199 {approx = true} : vector<2x16x1xf32> -> vector<2x16x1xf32>
    %201 = vector.broadcast %200 : vector<2x16x1xf32> to vector<2x16x16xf32>
    %202 = arith.mulf %197, %201 : vector<2x16x16xf32>
    %203 = vector.shape_cast %188 : vector<1x32xbf16> to vector<1x1x32xbf16>
    %204 = vector.broadcast %203 : vector<1x1x32xbf16> to vector<2x16x32xbf16>
    %205 = arith.mulf %31, %204 : vector<2x16x32xbf16>
    %206 = arith.truncf %202 : vector<2x16x16xf32> to vector<2x16x16xbf16>
    "tpu.trace_start"() <{level = 10 : i32, message = "bqk,bkd->bqd"}> : () -> ()
    %cst_56 = arith.constant dense<0.000000e+00> : vector<2x16x32xf32>
    %207 = tpu.matmul %206, %205, %cst_56 {dimension_numbers = #tpu.dot_dimension_numbers<[2], [1], [1], [2], [0, 0, 0, 1, 1, 2], [0], [0]>} : vector<2x16x16xbf16>, vector<2x16x32xbf16>, vector<2x16x32xf32> -> vector<2x16x32xf32>
    "tpu.trace_stop"() : () -> ()
    %208 = arith.addf %186, %207 : vector<2x16x32xf32>
    %209 = vector.shape_cast %208 : vector<2x16x32xf32> to vector<32x32xf32>
    %210 = arith.truncf %209 : vector<32x32xf32> to vector<32x32xbf16>
    %cst_57 = arith.constant dense<0.000000e+00> : vector<32x32xf32>
    %211 = tpu.matmul %210, %9, %cst_57 {dimension_numbers = #tpu.dot_dimension_numbers<[1], [0], [0], [1], [0, 0, 1, 1], [], []>} : vector<32x32xbf16>, vector<32x32xbf16>, vector<32x32xf32> -> vector<32x32xf32>
    %212 = vector.broadcast %10 : vector<1x32xf32> to vector<32x32xf32>
    %213 = arith.addf %211, %212 : vector<32x32xf32>
    %214 = arith.addf %1, %213 : vector<32x32xf32>
    %c0_58 = arith.constant 0 : index
    %c0_59 = arith.constant 0 : index
    %215 = vector.load %arg10[%c0_58, %c0_59] : memref<1x32xf32, #tpu.memory_space<vmem>>, vector<1x32xf32>
    %c0_60 = arith.constant 0 : index
    %c0_61 = arith.constant 0 : index
    %216 = vector.load %arg11[%c0_60, %c0_61] : memref<1x32xf32, #tpu.memory_space<vmem>>, vector<1x32xf32>
    %cst_62 = arith.constant dense<0.000000e+00> : vector<32xf32>
    %217 = vector.multi_reduction <add>, %214, %cst_62 [1] : vector<32x32xf32> to vector<32xf32>
    %218 = vector.shape_cast %217 : vector<32xf32> to vector<32x1xf32>
    %cst_63 = arith.constant 3.200000e+01 : f32
    %219 = vector.broadcast %cst_63 : f32 to vector<32x1xf32>
    %220 = arith.divf %218, %219 : vector<32x1xf32>
    %221 = vector.broadcast %220 : vector<32x1xf32> to vector<32x32xf32>
    %222 = arith.subf %214, %221 : vector<32x32xf32>
    %223 = arith.mulf %222, %222 : vector<32x32xf32>
    %cst_64 = arith.constant dense<0.000000e+00> : vector<32xf32>
    %224 = vector.multi_reduction <add>, %223, %cst_64 [1] : vector<32x32xf32> to vector<32xf32>
    %225 = vector.shape_cast %224 : vector<32xf32> to vector<32x1xf32>
    %cst_65 = arith.constant 3.200000e+01 : f32
    %226 = vector.broadcast %cst_65 : f32 to vector<32x1xf32>
    %227 = arith.divf %225, %226 : vector<32x1xf32>
    %228 = vector.broadcast %220 : vector<32x1xf32> to vector<32x32xf32>
    %229 = arith.subf %214, %228 : vector<32x32xf32>
    %cst_66 = arith.constant 9.99999974E-6 : f32
    %230 = vector.broadcast %cst_66 : f32 to vector<32x1xf32>
    %231 = arith.addf %227, %230 : vector<32x1xf32>
    %232 = math.rsqrt %231 : vector<32x1xf32>
    %233 = vector.broadcast %232 : vector<32x1xf32> to vector<32x32xf32>
    %234 = arith.mulf %229, %233 : vector<32x32xf32>
    %235 = vector.broadcast %215 : vector<1x32xf32> to vector<32x32xf32>
    %236 = arith.mulf %234, %235 : vector<32x32xf32>
    %237 = vector.broadcast %216 : vector<1x32xf32> to vector<32x32xf32>
    %238 = arith.addf %236, %237 : vector<32x32xf32>
    %c0_67 = arith.constant 0 : index
    %c0_68 = arith.constant 0 : index
    %239 = vector.load %arg12[%c0_67, %c0_68] : memref<32x32xbf16, #tpu.memory_space<vmem>>, vector<32x32xbf16>
    %c0_69 = arith.constant 0 : index
    %c0_70 = arith.constant 0 : index
    %240 = vector.load %arg13[%c0_69, %c0_70] : memref<1x32xf32, #tpu.memory_space<vmem>>, vector<1x32xf32>
    %c0_71 = arith.constant 0 : index
    %c0_72 = arith.constant 0 : index
    %241 = vector.load %arg14[%c0_71, %c0_72] : memref<32x32xbf16, #tpu.memory_space<vmem>>, vector<32x32xbf16>
    %c0_73 = arith.constant 0 : index
    %c0_74 = arith.constant 0 : index
    %242 = vector.load %arg15[%c0_73, %c0_74] : memref<1x32xf32, #tpu.memory_space<vmem>>, vector<1x32xf32>
    %243 = arith.truncf %238 : vector<32x32xf32> to vector<32x32xbf16>
    %cst_75 = arith.constant dense<0.000000e+00> : vector<32x32xf32>
    %244 = tpu.matmul %243, %239, %cst_75 {dimension_numbers = #tpu.dot_dimension_numbers<[1], [0], [0], [1], [0, 0, 1, 1], [], []>} : vector<32x32xbf16>, vector<32x32xbf16>, vector<32x32xf32> -> vector<32x32xf32>
    %245 = vector.broadcast %240 : vector<1x32xf32> to vector<32x32xf32>
    %246 = arith.addf %244, %245 : vector<32x32xf32>
    %cst_76 = arith.constant 0.000000e+00 : f32
    %247 = vector.broadcast %cst_76 : f32 to vector<32x32xf32>
    %248 = arith.maximumf %246, %247 : vector<32x32xf32>
    %249 = arith.truncf %248 : vector<32x32xf32> to vector<32x32xbf16>
    %cst_77 = arith.constant dense<0.000000e+00> : vector<32x32xf32>
    %250 = tpu.matmul %249, %241, %cst_77 {dimension_numbers = #tpu.dot_dimension_numbers<[1], [0], [0], [1], [0, 0, 1, 1], [], []>} : vector<32x32xbf16>, vector<32x32xbf16>, vector<32x32xf32> -> vector<32x32xf32>
    %251 = vector.broadcast %242 : vector<1x32xf32> to vector<32x32xf32>
    %252 = arith.addf %250, %251 : vector<32x32xf32>
    %253 = arith.addf %238, %252 : vector<32x32xf32>
    %c0_78 = arith.constant 0 : index
    %c0_79 = arith.constant 0 : index
    %254 = vector.load %arg16[%c0_78, %c0_79] : memref<1x32xf32, #tpu.memory_space<vmem>>, vector<1x32xf32>
    %c0_80 = arith.constant 0 : index
    %c0_81 = arith.constant 0 : index
    %255 = vector.load %arg17[%c0_80, %c0_81] : memref<1x32xf32, #tpu.memory_space<vmem>>, vector<1x32xf32>
    %cst_82 = arith.constant dense<0.000000e+00> : vector<32xf32>
    %256 = vector.multi_reduction <add>, %253, %cst_82 [1] : vector<32x32xf32> to vector<32xf32>
    %257 = vector.shape_cast %256 : vector<32xf32> to vector<32x1xf32>
    %cst_83 = arith.constant 3.200000e+01 : f32
    %258 = vector.broadcast %cst_83 : f32 to vector<32x1xf32>
    %259 = arith.divf %257, %258 : vector<32x1xf32>
    %260 = vector.broadcast %259 : vector<32x1xf32> to vector<32x32xf32>
    %261 = arith.subf %253, %260 : vector<32x32xf32>
    %262 = arith.mulf %261, %261 : vector<32x32xf32>
    %cst_84 = arith.constant dense<0.000000e+00> : vector<32xf32>
    %263 = vector.multi_reduction <add>, %262, %cst_84 [1] : vector<32x32xf32> to vector<32xf32>
    %264 = vector.shape_cast %263 : vector<32xf32> to vector<32x1xf32>
    %cst_85 = arith.constant 3.200000e+01 : f32
    %265 = vector.broadcast %cst_85 : f32 to vector<32x1xf32>
    %266 = arith.divf %264, %265 : vector<32x1xf32>
    %267 = vector.broadcast %259 : vector<32x1xf32> to vector<32x32xf32>
    %268 = arith.subf %253, %267 : vector<32x32xf32>
    %cst_86 = arith.constant 9.99999974E-6 : f32
    %269 = vector.broadcast %cst_86 : f32 to vector<32x1xf32>
    %270 = arith.addf %266, %269 : vector<32x1xf32>
    %271 = math.rsqrt %270 : vector<32x1xf32>
    %272 = vector.broadcast %271 : vector<32x1xf32> to vector<32x32xf32>
    %273 = arith.mulf %268, %272 : vector<32x32xf32>
    %274 = vector.broadcast %254 : vector<1x32xf32> to vector<32x32xf32>
    %275 = arith.mulf %273, %274 : vector<32x32xf32>
    %276 = vector.broadcast %255 : vector<1x32xf32> to vector<32x32xf32>
    %277 = arith.addf %275, %276 : vector<32x32xf32>
    %c0_87 = arith.constant 0 : index
    %c0_88 = arith.constant 0 : index
    %278 = vector.load %arg18[%c0_87, %c0_88] : memref<1x32xf32, #tpu.memory_space<vmem>>, vector<1x32xf32>
    %c0_89 = arith.constant 0 : index
    %c0_90 = arith.constant 0 : index
    %279 = vector.load %arg19[%c0_89, %c0_90] : memref<1x32xf32, #tpu.memory_space<vmem>>, vector<1x32xf32>
    %cst_91 = arith.constant dense<0.000000e+00> : vector<32xf32>
    %280 = vector.multi_reduction <add>, %277, %cst_91 [1] : vector<32x32xf32> to vector<32xf32>
    %281 = vector.shape_cast %280 : vector<32xf32> to vector<32x1xf32>
    %cst_92 = arith.constant 3.200000e+01 : f32
    %282 = vector.broadcast %cst_92 : f32 to vector<32x1xf32>
    %283 = arith.divf %281, %282 : vector<32x1xf32>
    %284 = vector.broadcast %283 : vector<32x1xf32> to vector<32x32xf32>
    %285 = arith.subf %277, %284 : vector<32x32xf32>
    %286 = arith.mulf %285, %285 : vector<32x32xf32>
    %cst_93 = arith.constant dense<0.000000e+00> : vector<32xf32>
    %287 = vector.multi_reduction <add>, %286, %cst_93 [1] : vector<32x32xf32> to vector<32xf32>
    %288 = vector.shape_cast %287 : vector<32xf32> to vector<32x1xf32>
    %cst_94 = arith.constant 3.200000e+01 : f32
    %289 = vector.broadcast %cst_94 : f32 to vector<32x1xf32>
    %290 = arith.divf %288, %289 : vector<32x1xf32>
    %291 = vector.broadcast %283 : vector<32x1xf32> to vector<32x32xf32>
    %292 = arith.subf %277, %291 : vector<32x32xf32>
    %cst_95 = arith.constant 9.99999974E-6 : f32
    %293 = vector.broadcast %cst_95 : f32 to vector<32x1xf32>
    %294 = arith.addf %290, %293 : vector<32x1xf32>
    %295 = math.rsqrt %294 : vector<32x1xf32>
    %296 = vector.broadcast %295 : vector<32x1xf32> to vector<32x32xf32>
    %297 = arith.mulf %292, %296 : vector<32x32xf32>
    %298 = vector.broadcast %278 : vector<1x32xf32> to vector<32x32xf32>
    %299 = arith.mulf %297, %298 : vector<32x32xf32>
    %300 = vector.broadcast %279 : vector<1x32xf32> to vector<32x32xf32>
    %301 = arith.addf %299, %300 : vector<32x32xf32>
    %302 = vector.shape_cast %301 : vector<32x32xf32> to vector<2x16x32xf32>
    %c0_96 = arith.constant 0 : index
    %c0_97 = arith.constant 0 : index
    %c0_98 = arith.constant 0 : index
    %303 = vector.load %arg20[%c0_96, %c0_97, %c0_98] : memref<2x16x32xf32, #tpu.memory_space<vmem>>, vector<2x16x32xf32>
    tpu.vector_store %arg20[%c0_96, %c0_97, %c0_98], %302 {strides = array<i32>} : memref<2x16x32xf32, #tpu.memory_space<vmem>>, vector<2x16x32xf32>,
    return
  }
}

module attributes {stable_mosaic.version = 11 : i64} {
  func.func @_decoder_layer_kernel(%arg0: memref<2x8x32xf32, #tpu.memory_space<vmem>>, %arg1: memref<2x16x32xf32, #tpu.memory_space<vmem>>, %arg2: memref<8x1x32xbf16, #tpu.memory_space<vmem>>, %arg3: memref<32x32xbf16, #tpu.memory_space<vmem>>, %arg4: memref<32x32xbf16, #tpu.memory_space<vmem>>, %arg5: memref<32x32xbf16, #tpu.memory_space<vmem>>, %arg6: memref<1x32xf32, #tpu.memory_space<vmem>>, %arg7: memref<1x32xf32, #tpu.memory_space<vmem>>, %arg8: memref<1x32xf32, #tpu.memory_space<vmem>>, %arg9: memref<32x32xbf16, #tpu.memory_space<vmem>>, %arg10: memref<1x32xf32, #tpu.memory_space<vmem>>, %arg11: memref<1x32xf32, #tpu.memory_space<vmem>>, %arg12: memref<1x32xf32, #tpu.memory_space<vmem>>, %arg13: memref<32x32xbf16, #tpu.memory_space<vmem>>, %arg14: memref<32x32xbf16, #tpu.memory_space<vmem>>, %arg15: memref<32x32xbf16, #tpu.memory_space<vmem>>, %arg16: memref<1x32xf32, #tpu.memory_space<vmem>>, %arg17: memref<1x32xf32, #tpu.memory_space<vmem>>, %arg18: memref<1x32xf32, #tpu.memory_space<vmem>>, %arg19: memref<32x32xbf16, #tpu.memory_space<vmem>>, %arg20: memref<1x32xf32, #tpu.memory_space<vmem>>, %arg21: memref<1x32xf32, #tpu.memory_space<vmem>>, %arg22: memref<1x32xf32, #tpu.memory_space<vmem>>, %arg23: memref<32x32xbf16, #tpu.memory_space<vmem>>, %arg24: memref<1x32xf32, #tpu.memory_space<vmem>>, %arg25: memref<32x32xbf16, #tpu.memory_space<vmem>>, %arg26: memref<1x32xf32, #tpu.memory_space<vmem>>, %arg27: memref<1x32xf32, #tpu.memory_space<vmem>>, %arg28: memref<1x32xf32, #tpu.memory_space<vmem>>, %arg29: memref<1x32xf32, #tpu.memory_space<vmem>>, %arg30: memref<1x32xf32, #tpu.memory_space<vmem>>, %arg31: memref<2x8x32xf32, #tpu.memory_space<vmem>>) attributes {dimension_semantics = [], scalar_prefetch = 0 : i64, scratch_operands = 0 : i64, tpu.core_type = #tpu.core_type<tc>} {
    %c0 = arith.constant 0 : index
    %c0_0 = arith.constant 0 : index
    %c0_1 = arith.constant 0 : index
    %0 = vector.load %arg0[%c0, %c0_0, %c0_1] : memref<2x8x32xf32, #tpu.memory_space<vmem>>, vector<2x8x32xf32>
    %c0_2 = arith.constant 0 : index
    %c0_3 = arith.constant 0 : index
    %c0_4 = arith.constant 0 : index
    %1 = vector.load %arg1[%c0_2, %c0_3, %c0_4] : memref<2x16x32xf32, #tpu.memory_space<vmem>>, vector<2x16x32xf32>
    %c0_5 = arith.constant 0 : index
    %c0_6 = arith.constant 0 : index
    %c0_7 = arith.constant 0 : index
    %2 = vector.load %arg2[%c0_5, %c0_6, %c0_7] : memref<8x1x32xbf16, #tpu.memory_space<vmem>>, vector<8x1x32xbf16>
    %3 = vector.shape_cast %0 : vector<2x8x32xf32> to vector<16x32xf32>
    %c0_8 = arith.constant 0 : index
    %c0_9 = arith.constant 0 : index
    %4 = vector.load %arg3[%c0_8, %c0_9] : memref<32x32xbf16, #tpu.memory_space<vmem>>, vector<32x32xbf16>
    %c0_10 = arith.constant 0 : index
    %c0_11 = arith.constant 0 : index
    %5 = vector.load %arg4[%c0_10, %c0_11] : memref<32x32xbf16, #tpu.memory_space<vmem>>, vector<32x32xbf16>
    %c0_12 = arith.constant 0 : index
    %c0_13 = arith.constant 0 : index
    %6 = vector.load %arg5[%c0_12, %c0_13] : memref<32x32xbf16, #tpu.memory_space<vmem>>, vector<32x32xbf16>
    %c0_14 = arith.constant 0 : index
    %c0_15 = arith.constant 0 : index
    %7 = vector.load %arg6[%c0_14, %c0_15] : memref<1x32xf32, #tpu.memory_space<vmem>>, vector<1x32xf32>
    %c0_16 = arith.constant 0 : index
    %c0_17 = arith.constant 0 : index
    %8 = vector.load %arg7[%c0_16, %c0_17] : memref<1x32xf32, #tpu.memory_space<vmem>>, vector<1x32xf32>
    %c0_18 = arith.constant 0 : index
    %c0_19 = arith.constant 0 : index
    %9 = vector.load %arg8[%c0_18, %c0_19] : memref<1x32xf32, #tpu.memory_space<vmem>>, vector<1x32xf32>
    %c0_20 = arith.constant 0 : index
    %c0_21 = arith.constant 0 : index
    %10 = vector.load %arg9[%c0_20, %c0_21] : memref<32x32xbf16, #tpu.memory_space<vmem>>, vector<32x32xbf16>
    %c0_22 = arith.constant 0 : index
    %c0_23 = arith.constant 0 : index
    %11 = vector.load %arg10[%c0_22, %c0_23] : memref<1x32xf32, #tpu.memory_space<vmem>>, vector<1x32xf32>
    %12 = vector.shape_cast %0 : vector<2x8x32xf32> to vector<16x32xf32>
    %13 = arith.truncf %12 : vector<16x32xf32> to vector<16x32xbf16>
    %14 = vector.shape_cast %0 : vector<2x8x32xf32> to vector<16x32xf32>
    %15 = arith.truncf %14 : vector<16x32xf32> to vector<16x32xbf16>
    %cst = arith.constant dense<0.000000e+00> : vector<16x32xf32>
    %16 = tpu.matmul %13, %4, %cst {dimension_numbers = #tpu.dot_dimension_numbers<[1], [0], [0], [1], [0, 0, 1, 1], [], []>} : vector<16x32xbf16>, vector<32x32xbf16>, vector<16x32xf32> -> vector<16x32xf32>
    %17 = vector.broadcast %7 : vector<1x32xf32> to vector<16x32xf32>
    %18 = arith.addf %16, %17 : vector<16x32xf32>
    %cst_24 = arith.constant 5.000000e-01 : f32
    %19 = vector.broadcast %cst_24 : f32 to vector<16x32xf32>
    %20 = arith.mulf %18, %19 : vector<16x32xf32>
    %cst_25 = arith.constant dense<0.000000e+00> : vector<16x32xf32>
    %21 = tpu.matmul %15, %5, %cst_25 {dimension_numbers = #tpu.dot_dimension_numbers<[1], [0], [0], [1], [0, 0, 1, 1], [], []>} : vector<16x32xbf16>, vector<32x32xbf16>, vector<16x32xf32> -> vector<16x32xf32>
    %22 = vector.broadcast %8 : vector<1x32xf32> to vector<16x32xf32>
    %23 = arith.addf %21, %22 : vector<16x32xf32>
    %cst_26 = arith.constant dense<0.000000e+00> : vector<16x32xf32>
    %24 = tpu.matmul %15, %6, %cst_26 {dimension_numbers = #tpu.dot_dimension_numbers<[1], [0], [0], [1], [0, 0, 1, 1], [], []>} : vector<16x32xbf16>, vector<32x32xbf16>, vector<16x32xf32> -> vector<16x32xf32>
    %25 = vector.broadcast %9 : vector<1x32xf32> to vector<16x32xf32>
    %26 = arith.addf %24, %25 : vector<16x32xf32>
    %27 = vector.shape_cast %20 : vector<16x32xf32> to vector<2x8x32xf32>
    %28 = arith.truncf %27 : vector<2x8x32xf32> to vector<2x8x32xbf16>
    %29 = vector.shape_cast %23 : vector<16x32xf32> to vector<2x8x32xf32>
    %30 = arith.truncf %29 : vector<2x8x32xf32> to vector<2x8x32xbf16>
    %31 = vector.shape_cast %26 : vector<16x32xf32> to vector<2x8x32xf32>
    %32 = arith.truncf %31 : vector<2x8x32xf32> to vector<2x8x32xbf16>
    %cst_27 = arith.constant 0.000000e+00 : f32
    %33 = vector.broadcast %cst_27 : f32 to vector<2x8x32xf32>
    %34 = vector.extract_strided_slice %2 {offsets = [0, 0, 0], sizes = [1, 1, 32], strides = [1, 1, 1]} : vector<8x1x32xbf16> to vector<1x1x32xbf16>
    %35 = vector.shape_cast %34 : vector<1x1x32xbf16> to vector<1x32xbf16>
    %36 = vector.shape_cast %35 : vector<1x32xbf16> to vector<1x1x32xbf16>
    %37 = vector.broadcast %36 : vector<1x1x32xbf16> to vector<2x8x32xbf16>
    %38 = arith.mulf %28, %37 : vector<2x8x32xbf16>
    "tpu.trace_start"() <{level = 10 : i32, message = "bqd,bkd->bqk"}> : () -> ()
    %cst_28 = arith.constant dense<0.000000e+00> : vector<2x8x8xf32>
    %39 = tpu.matmul %38, %30, %cst_28 {dimension_numbers = #tpu.dot_dimension_numbers<[2], [2], [1], [1], [0, 0, 0, 1, 1, 1], [0], [0]>} : vector<2x8x32xbf16>, vector<2x8x32xbf16>, vector<2x8x8xf32> -> vector<2x8x8xf32>
    "tpu.trace_stop"() : () -> ()
    %cst_29 = arith.constant dense<0xFF800000> : vector<2x8xf32>
    %40 = vector.multi_reduction <maximumf>, %39, %cst_29 [2] : vector<2x8x8xf32> to vector<2x8xf32>
    %41 = vector.shape_cast %40 : vector<2x8xf32> to vector<2x8x1xf32>
    %42 = vector.broadcast %41 : vector<2x8x1xf32> to vector<2x8x8xf32>
    %43 = arith.subf %39, %42 : vector<2x8x8xf32>
    %44 = math.exp %43 : vector<2x8x8xf32>
    %cst_30 = arith.constant dense<0.000000e+00> : vector<2x8xf32>
    %45 = vector.multi_reduction <add>, %44, %cst_30 [2] : vector<2x8x8xf32> to vector<2x8xf32>
    %46 = vector.shape_cast %45 : vector<2x8xf32> to vector<2x8x1xf32>
    %47 = tpu.reciprocal %46 {approx = true} : vector<2x8x1xf32> -> vector<2x8x1xf32>
    %48 = vector.broadcast %47 : vector<2x8x1xf32> to vector<2x8x8xf32>
    %49 = arith.mulf %44, %48 : vector<2x8x8xf32>
    %50 = vector.shape_cast %35 : vector<1x32xbf16> to vector<1x1x32xbf16>
    %51 = vector.broadcast %50 : vector<1x1x32xbf16> to vector<2x8x32xbf16>
    %52 = arith.mulf %32, %51 : vector<2x8x32xbf16>
    %53 = arith.truncf %49 : vector<2x8x8xf32> to vector<2x8x8xbf16>
    "tpu.trace_start"() <{level = 10 : i32, message = "bqk,bkd->bqd"}> : () -> ()
    %cst_31 = arith.constant dense<0.000000e+00> : vector<2x8x32xf32>
    %54 = tpu.matmul %53, %52, %cst_31 {dimension_numbers = #tpu.dot_dimension_numbers<[2], [1], [1], [2], [0, 0, 0, 1, 1, 2], [0], [0]>} : vector<2x8x8xbf16>, vector<2x8x32xbf16>, vector<2x8x32xf32> -> vector<2x8x32xf32>
    "tpu.trace_stop"() : () -> ()
    %55 = arith.addf %33, %54 : vector<2x8x32xf32>
    %56 = vector.extract_strided_slice %2 {offsets = [1, 0, 0], sizes = [1, 1, 32], strides = [1, 1, 1]} : vector<8x1x32xbf16> to vector<1x1x32xbf16>
    %57 = vector.shape_cast %56 : vector<1x1x32xbf16> to vector<1x32xbf16>
    %58 = vector.shape_cast %57 : vector<1x32xbf16> to vector<1x1x32xbf16>
    %59 = vector.broadcast %58 : vector<1x1x32xbf16> to vector<2x8x32xbf16>
    %60 = arith.mulf %28, %59 : vector<2x8x32xbf16>
    "tpu.trace_start"() <{level = 10 : i32, message = "bqd,bkd->bqk"}> : () -> ()
    %cst_32 = arith.constant dense<0.000000e+00> : vector<2x8x8xf32>
    %61 = tpu.matmul %60, %30, %cst_32 {dimension_numbers = #tpu.dot_dimension_numbers<[2], [2], [1], [1], [0, 0, 0, 1, 1, 1], [0], [0]>} : vector<2x8x32xbf16>, vector<2x8x32xbf16>, vector<2x8x8xf32> -> vector<2x8x8xf32>
    "tpu.trace_stop"() : () -> ()
    %cst_33 = arith.constant dense<0xFF800000> : vector<2x8xf32>
    %62 = vector.multi_reduction <maximumf>, %61, %cst_33 [2] : vector<2x8x8xf32> to vector<2x8xf32>
    %63 = vector.shape_cast %62 : vector<2x8xf32> to vector<2x8x1xf32>
    %64 = vector.broadcast %63 : vector<2x8x1xf32> to vector<2x8x8xf32>
    %65 = arith.subf %61, %64 : vector<2x8x8xf32>
    %66 = math.exp %65 : vector<2x8x8xf32>
    %cst_34 = arith.constant dense<0.000000e+00> : vector<2x8xf32>
    %67 = vector.multi_reduction <add>, %66, %cst_34 [2] : vector<2x8x8xf32> to vector<2x8xf32>
    %68 = vector.shape_cast %67 : vector<2x8xf32> to vector<2x8x1xf32>
    %69 = tpu.reciprocal %68 {approx = true} : vector<2x8x1xf32> -> vector<2x8x1xf32>
    %70 = vector.broadcast %69 : vector<2x8x1xf32> to vector<2x8x8xf32>
    %71 = arith.mulf %66, %70 : vector<2x8x8xf32>
    %72 = vector.shape_cast %57 : vector<1x32xbf16> to vector<1x1x32xbf16>
    %73 = vector.broadcast %72 : vector<1x1x32xbf16> to vector<2x8x32xbf16>
    %74 = arith.mulf %32, %73 : vector<2x8x32xbf16>
    %75 = arith.truncf %71 : vector<2x8x8xf32> to vector<2x8x8xbf16>
    "tpu.trace_start"() <{level = 10 : i32, message = "bqk,bkd->bqd"}> : () -> ()
    %cst_35 = arith.constant dense<0.000000e+00> : vector<2x8x32xf32>
    %76 = tpu.matmul %75, %74, %cst_35 {dimension_numbers = #tpu.dot_dimension_numbers<[2], [1], [1], [2], [0, 0, 0, 1, 1, 2], [0], [0]>} : vector<2x8x8xbf16>, vector<2x8x32xbf16>, vector<2x8x32xf32> -> vector<2x8x32xf32>
    "tpu.trace_stop"() : () -> ()
    %77 = arith.addf %55, %76 : vector<2x8x32xf32>
    %78 = vector.extract_strided_slice %2 {offsets = [2, 0, 0], sizes = [1, 1, 32], strides = [1, 1, 1]} : vector<8x1x32xbf16> to vector<1x1x32xbf16>
    %79 = vector.shape_cast %78 : vector<1x1x32xbf16> to vector<1x32xbf16>
    %80 = vector.shape_cast %79 : vector<1x32xbf16> to vector<1x1x32xbf16>
    %81 = vector.broadcast %80 : vector<1x1x32xbf16> to vector<2x8x32xbf16>
    %82 = arith.mulf %28, %81 : vector<2x8x32xbf16>
    "tpu.trace_start"() <{level = 10 : i32, message = "bqd,bkd->bqk"}> : () -> ()
    %cst_36 = arith.constant dense<0.000000e+00> : vector<2x8x8xf32>
    %83 = tpu.matmul %82, %30, %cst_36 {dimension_numbers = #tpu.dot_dimension_numbers<[2], [2], [1], [1], [0, 0, 0, 1, 1, 1], [0], [0]>} : vector<2x8x32xbf16>, vector<2x8x32xbf16>, vector<2x8x8xf32> -> vector<2x8x8xf32>
    "tpu.trace_stop"() : () -> ()
    %cst_37 = arith.constant dense<0xFF800000> : vector<2x8xf32>
    %84 = vector.multi_reduction <maximumf>, %83, %cst_37 [2] : vector<2x8x8xf32> to vector<2x8xf32>
    %85 = vector.shape_cast %84 : vector<2x8xf32> to vector<2x8x1xf32>
    %86 = vector.broadcast %85 : vector<2x8x1xf32> to vector<2x8x8xf32>
    %87 = arith.subf %83, %86 : vector<2x8x8xf32>
    %88 = math.exp %87 : vector<2x8x8xf32>
    %cst_38 = arith.constant dense<0.000000e+00> : vector<2x8xf32>
    %89 = vector.multi_reduction <add>, %88, %cst_38 [2] : vector<2x8x8xf32> to vector<2x8xf32>
    %90 = vector.shape_cast %89 : vector<2x8xf32> to vector<2x8x1xf32>
    %91 = tpu.reciprocal %90 {approx = true} : vector<2x8x1xf32> -> vector<2x8x1xf32>
    %92 = vector.broadcast %91 : vector<2x8x1xf32> to vector<2x8x8xf32>
    %93 = arith.mulf %88, %92 : vector<2x8x8xf32>
    %94 = vector.shape_cast %79 : vector<1x32xbf16> to vector<1x1x32xbf16>
    %95 = vector.broadcast %94 : vector<1x1x32xbf16> to vector<2x8x32xbf16>
    %96 = arith.mulf %32, %95 : vector<2x8x32xbf16>
    %97 = arith.truncf %93 : vector<2x8x8xf32> to vector<2x8x8xbf16>
    "tpu.trace_start"() <{level = 10 : i32, message = "bqk,bkd->bqd"}> : () -> ()
    %cst_39 = arith.constant dense<0.000000e+00> : vector<2x8x32xf32>
    %98 = tpu.matmul %97, %96, %cst_39 {dimension_numbers = #tpu.dot_dimension_numbers<[2], [1], [1], [2], [0, 0, 0, 1, 1, 2], [0], [0]>} : vector<2x8x8xbf16>, vector<2x8x32xbf16>, vector<2x8x32xf32> -> vector<2x8x32xf32>
    "tpu.trace_stop"() : () -> ()
    %99 = arith.addf %77, %98 : vector<2x8x32xf32>
    %100 = vector.extract_strided_slice %2 {offsets = [3, 0, 0], sizes = [1, 1, 32], strides = [1, 1, 1]} : vector<8x1x32xbf16> to vector<1x1x32xbf16>
    %101 = vector.shape_cast %100 : vector<1x1x32xbf16> to vector<1x32xbf16>
    %102 = vector.shape_cast %101 : vector<1x32xbf16> to vector<1x1x32xbf16>
    %103 = vector.broadcast %102 : vector<1x1x32xbf16> to vector<2x8x32xbf16>
    %104 = arith.mulf %28, %103 : vector<2x8x32xbf16>
    "tpu.trace_start"() <{level = 10 : i32, message = "bqd,bkd->bqk"}> : () -> ()
    %cst_40 = arith.constant dense<0.000000e+00> : vector<2x8x8xf32>
    %105 = tpu.matmul %104, %30, %cst_40 {dimension_numbers = #tpu.dot_dimension_numbers<[2], [2], [1], [1], [0, 0, 0, 1, 1, 1], [0], [0]>} : vector<2x8x32xbf16>, vector<2x8x32xbf16>, vector<2x8x8xf32> -> vector<2x8x8xf32>
    "tpu.trace_stop"() : () -> ()
    %cst_41 = arith.constant dense<0xFF800000> : vector<2x8xf32>
    %106 = vector.multi_reduction <maximumf>, %105, %cst_41 [2] : vector<2x8x8xf32> to vector<2x8xf32>
    %107 = vector.shape_cast %106 : vector<2x8xf32> to vector<2x8x1xf32>
    %108 = vector.broadcast %107 : vector<2x8x1xf32> to vector<2x8x8xf32>
    %109 = arith.subf %105, %108 : vector<2x8x8xf32>
    %110 = math.exp %109 : vector<2x8x8xf32>
    %cst_42 = arith.constant dense<0.000000e+00> : vector<2x8xf32>
    %111 = vector.multi_reduction <add>, %110, %cst_42 [2] : vector<2x8x8xf32> to vector<2x8xf32>
    %112 = vector.shape_cast %111 : vector<2x8xf32> to vector<2x8x1xf32>
    %113 = tpu.reciprocal %112 {approx = true} : vector<2x8x1xf32> -> vector<2x8x1xf32>
    %114 = vector.broadcast %113 : vector<2x8x1xf32> to vector<2x8x8xf32>
    %115 = arith.mulf %110, %114 : vector<2x8x8xf32>
    %116 = vector.shape_cast %101 : vector<1x32xbf16> to vector<1x1x32xbf16>
    %117 = vector.broadcast %116 : vector<1x1x32xbf16> to vector<2x8x32xbf16>
    %118 = arith.mulf %32, %117 : vector<2x8x32xbf16>
    %119 = arith.truncf %115 : vector<2x8x8xf32> to vector<2x8x8xbf16>
    "tpu.trace_start"() <{level = 10 : i32, message = "bqk,bkd->bqd"}> : () -> ()
    %cst_43 = arith.constant dense<0.000000e+00> : vector<2x8x32xf32>
    %120 = tpu.matmul %119, %118, %cst_43 {dimension_numbers = #tpu.dot_dimension_numbers<[2], [1], [1], [2], [0, 0, 0, 1, 1, 2], [0], [0]>} : vector<2x8x8xbf16>, vector<2x8x32xbf16>, vector<2x8x32xf32> -> vector<2x8x32xf32>
    "tpu.trace_stop"() : () -> ()
    %121 = arith.addf %99, %120 : vector<2x8x32xf32>
    %122 = vector.extract_strided_slice %2 {offsets = [4, 0, 0], sizes = [1, 1, 32], strides = [1, 1, 1]} : vector<8x1x32xbf16> to vector<1x1x32xbf16>
    %123 = vector.shape_cast %122 : vector<1x1x32xbf16> to vector<1x32xbf16>
    %124 = vector.shape_cast %123 : vector<1x32xbf16> to vector<1x1x32xbf16>
    %125 = vector.broadcast %124 : vector<1x1x32xbf16> to vector<2x8x32xbf16>
    %126 = arith.mulf %28, %125 : vector<2x8x32xbf16>
    "tpu.trace_start"() <{level = 10 : i32, message = "bqd,bkd->bqk"}> : () -> ()
    %cst_44 = arith.constant dense<0.000000e+00> : vector<2x8x8xf32>
    %127 = tpu.matmul %126, %30, %cst_44 {dimension_numbers = #tpu.dot_dimension_numbers<[2], [2], [1], [1], [0, 0, 0, 1, 1, 1], [0], [0]>} : vector<2x8x32xbf16>, vector<2x8x32xbf16>, vector<2x8x8xf32> -> vector<2x8x8xf32>
    "tpu.trace_stop"() : () -> ()
    %cst_45 = arith.constant dense<0xFF800000> : vector<2x8xf32>
    %128 = vector.multi_reduction <maximumf>, %127, %cst_45 [2] : vector<2x8x8xf32> to vector<2x8xf32>
    %129 = vector.shape_cast %128 : vector<2x8xf32> to vector<2x8x1xf32>
    %130 = vector.broadcast %129 : vector<2x8x1xf32> to vector<2x8x8xf32>
    %131 = arith.subf %127, %130 : vector<2x8x8xf32>
    %132 = math.exp %131 : vector<2x8x8xf32>
    %cst_46 = arith.constant dense<0.000000e+00> : vector<2x8xf32>
    %133 = vector.multi_reduction <add>, %132, %cst_46 [2] : vector<2x8x8xf32> to vector<2x8xf32>
    %134 = vector.shape_cast %133 : vector<2x8xf32> to vector<2x8x1xf32>
    %135 = tpu.reciprocal %134 {approx = true} : vector<2x8x1xf32> -> vector<2x8x1xf32>
    %136 = vector.broadcast %135 : vector<2x8x1xf32> to vector<2x8x8xf32>
    %137 = arith.mulf %132, %136 : vector<2x8x8xf32>
    %138 = vector.shape_cast %123 : vector<1x32xbf16> to vector<1x1x32xbf16>
    %139 = vector.broadcast %138 : vector<1x1x32xbf16> to vector<2x8x32xbf16>
    %140 = arith.mulf %32, %139 : vector<2x8x32xbf16>
    %141 = arith.truncf %137 : vector<2x8x8xf32> to vector<2x8x8xbf16>
    "tpu.trace_start"() <{level = 10 : i32, message = "bqk,bkd->bqd"}> : () -> ()
    %cst_47 = arith.constant dense<0.000000e+00> : vector<2x8x32xf32>
    %142 = tpu.matmul %141, %140, %cst_47 {dimension_numbers = #tpu.dot_dimension_numbers<[2], [1], [1], [2], [0, 0, 0, 1, 1, 2], [0], [0]>} : vector<2x8x8xbf16>, vector<2x8x32xbf16>, vector<2x8x32xf32> -> vector<2x8x32xf32>
    "tpu.trace_stop"() : () -> ()
    %143 = arith.addf %121, %142 : vector<2x8x32xf32>
    %144 = vector.extract_strided_slice %2 {offsets = [5, 0, 0], sizes = [1, 1, 32], strides = [1, 1, 1]} : vector<8x1x32xbf16> to vector<1x1x32xbf16>
    %145 = vector.shape_cast %144 : vector<1x1x32xbf16> to vector<1x32xbf16>
    %146 = vector.shape_cast %145 : vector<1x32xbf16> to vector<1x1x32xbf16>
    %147 = vector.broadcast %146 : vector<1x1x32xbf16> to vector<2x8x32xbf16>
    %148 = arith.mulf %28, %147 : vector<2x8x32xbf16>
    "tpu.trace_start"() <{level = 10 : i32, message = "bqd,bkd->bqk"}> : () -> ()
    %cst_48 = arith.constant dense<0.000000e+00> : vector<2x8x8xf32>
    %149 = tpu.matmul %148, %30, %cst_48 {dimension_numbers = #tpu.dot_dimension_numbers<[2], [2], [1], [1], [0, 0, 0, 1, 1, 1], [0], [0]>} : vector<2x8x32xbf16>, vector<2x8x32xbf16>, vector<2x8x8xf32> -> vector<2x8x8xf32>
    "tpu.trace_stop"() : () -> ()
    %cst_49 = arith.constant dense<0xFF800000> : vector<2x8xf32>
    %150 = vector.multi_reduction <maximumf>, %149, %cst_49 [2] : vector<2x8x8xf32> to vector<2x8xf32>
    %151 = vector.shape_cast %150 : vector<2x8xf32> to vector<2x8x1xf32>
    %152 = vector.broadcast %151 : vector<2x8x1xf32> to vector<2x8x8xf32>
    %153 = arith.subf %149, %152 : vector<2x8x8xf32>
    %154 = math.exp %153 : vector<2x8x8xf32>
    %cst_50 = arith.constant dense<0.000000e+00> : vector<2x8xf32>
    %155 = vector.multi_reduction <add>, %154, %cst_50 [2] : vector<2x8x8xf32> to vector<2x8xf32>
    %156 = vector.shape_cast %155 : vector<2x8xf32> to vector<2x8x1xf32>
    %157 = tpu.reciprocal %156 {approx = true} : vector<2x8x1xf32> -> vector<2x8x1xf32>
    %158 = vector.broadcast %157 : vector<2x8x1xf32> to vector<2x8x8xf32>
    %159 = arith.mulf %154, %158 : vector<2x8x8xf32>
    %160 = vector.shape_cast %145 : vector<1x32xbf16> to vector<1x1x32xbf16>
    %161 = vector.broadcast %160 : vector<1x1x32xbf16> to vector<2x8x32xbf16>
    %162 = arith.mulf %32, %161 : vector<2x8x32xbf16>
    %163 = arith.truncf %159 : vector<2x8x8xf32> to vector<2x8x8xbf16>
    "tpu.trace_start"() <{level = 10 : i32, message = "bqk,bkd->bqd"}> : () -> ()
    %cst_51 = arith.constant dense<0.000000e+00> : vector<2x8x32xf32>
    %164 = tpu.matmul %163, %162, %cst_51 {dimension_numbers = #tpu.dot_dimension_numbers<[2], [1], [1], [2], [0, 0, 0, 1, 1, 2], [0], [0]>} : vector<2x8x8xbf16>, vector<2x8x32xbf16>, vector<2x8x32xf32> -> vector<2x8x32xf32>
    "tpu.trace_stop"() : () -> ()
    %165 = arith.addf %143, %164 : vector<2x8x32xf32>
    %166 = vector.extract_strided_slice %2 {offsets = [6, 0, 0], sizes = [1, 1, 32], strides = [1, 1, 1]} : vector<8x1x32xbf16> to vector<1x1x32xbf16>
    %167 = vector.shape_cast %166 : vector<1x1x32xbf16> to vector<1x32xbf16>
    %168 = vector.shape_cast %167 : vector<1x32xbf16> to vector<1x1x32xbf16>
    %169 = vector.broadcast %168 : vector<1x1x32xbf16> to vector<2x8x32xbf16>
    %170 = arith.mulf %28, %169 : vector<2x8x32xbf16>
    "tpu.trace_start"() <{level = 10 : i32, message = "bqd,bkd->bqk"}> : () -> ()
    %cst_52 = arith.constant dense<0.000000e+00> : vector<2x8x8xf32>
    %171 = tpu.matmul %170, %30, %cst_52 {dimension_numbers = #tpu.dot_dimension_numbers<[2], [2], [1], [1], [0, 0, 0, 1, 1, 1], [0], [0]>} : vector<2x8x32xbf16>, vector<2x8x32xbf16>, vector<2x8x8xf32> -> vector<2x8x8xf32>
    "tpu.trace_stop"() : () -> ()
    %cst_53 = arith.constant dense<0xFF800000> : vector<2x8xf32>
    %172 = vector.multi_reduction <maximumf>, %171, %cst_53 [2] : vector<2x8x8xf32> to vector<2x8xf32>
    %173 = vector.shape_cast %172 : vector<2x8xf32> to vector<2x8x1xf32>
    %174 = vector.broadcast %173 : vector<2x8x1xf32> to vector<2x8x8xf32>
    %175 = arith.subf %171, %174 : vector<2x8x8xf32>
    %176 = math.exp %175 : vector<2x8x8xf32>
    %cst_54 = arith.constant dense<0.000000e+00> : vector<2x8xf32>
    %177 = vector.multi_reduction <add>, %176, %cst_54 [2] : vector<2x8x8xf32> to vector<2x8xf32>
    %178 = vector.shape_cast %177 : vector<2x8xf32> to vector<2x8x1xf32>
    %179 = tpu.reciprocal %178 {approx = true} : vector<2x8x1xf32> -> vector<2x8x1xf32>
    %180 = vector.broadcast %179 : vector<2x8x1xf32> to vector<2x8x8xf32>
    %181 = arith.mulf %176, %180 : vector<2x8x8xf32>
    %182 = vector.shape_cast %167 : vector<1x32xbf16> to vector<1x1x32xbf16>
    %183 = vector.broadcast %182 : vector<1x1x32xbf16> to vector<2x8x32xbf16>
    %184 = arith.mulf %32, %183 : vector<2x8x32xbf16>
    %185 = arith.truncf %181 : vector<2x8x8xf32> to vector<2x8x8xbf16>
    "tpu.trace_start"() <{level = 10 : i32, message = "bqk,bkd->bqd"}> : () -> ()
    %cst_55 = arith.constant dense<0.000000e+00> : vector<2x8x32xf32>
    %186 = tpu.matmul %185, %184, %cst_55 {dimension_numbers = #tpu.dot_dimension_numbers<[2], [1], [1], [2], [0, 0, 0, 1, 1, 2], [0], [0]>} : vector<2x8x8xbf16>, vector<2x8x32xbf16>, vector<2x8x32xf32> -> vector<2x8x32xf32>
    "tpu.trace_stop"() : () -> ()
    %187 = arith.addf %165, %186 : vector<2x8x32xf32>
    %188 = vector.extract_strided_slice %2 {offsets = [7, 0, 0], sizes = [1, 1, 32], strides = [1, 1, 1]} : vector<8x1x32xbf16> to vector<1x1x32xbf16>
    %189 = vector.shape_cast %188 : vector<1x1x32xbf16> to vector<1x32xbf16>
    %190 = vector.shape_cast %189 : vector<1x32xbf16> to vector<1x1x32xbf16>
    %191 = vector.broadcast %190 : vector<1x1x32xbf16> to vector<2x8x32xbf16>
    %192 = arith.mulf %28, %191 : vector<2x8x32xbf16>
    "tpu.trace_start"() <{level = 10 : i32, message = "bqd,bkd->bqk"}> : () -> ()
    %cst_56 = arith.constant dense<0.000000e+00> : vector<2x8x8xf32>
    %193 = tpu.matmul %192, %30, %cst_56 {dimension_numbers = #tpu.dot_dimension_numbers<[2], [2], [1], [1], [0, 0, 0, 1, 1, 1], [0], [0]>} : vector<2x8x32xbf16>, vector<2x8x32xbf16>, vector<2x8x8xf32> -> vector<2x8x8xf32>
    "tpu.trace_stop"() : () -> ()
    %cst_57 = arith.constant dense<0xFF800000> : vector<2x8xf32>
    %194 = vector.multi_reduction <maximumf>, %193, %cst_57 [2] : vector<2x8x8xf32> to vector<2x8xf32>
    %195 = vector.shape_cast %194 : vector<2x8xf32> to vector<2x8x1xf32>
    %196 = vector.broadcast %195 : vector<2x8x1xf32> to vector<2x8x8xf32>
    %197 = arith.subf %193, %196 : vector<2x8x8xf32>
    %198 = math.exp %197 : vector<2x8x8xf32>
    %cst_58 = arith.constant dense<0.000000e+00> : vector<2x8xf32>
    %199 = vector.multi_reduction <add>, %198, %cst_58 [2] : vector<2x8x8xf32> to vector<2x8xf32>
    %200 = vector.shape_cast %199 : vector<2x8xf32> to vector<2x8x1xf32>
    %201 = tpu.reciprocal %200 {approx = true} : vector<2x8x1xf32> -> vector<2x8x1xf32>
    %202 = vector.broadcast %201 : vector<2x8x1xf32> to vector<2x8x8xf32>
    %203 = arith.mulf %198, %202 : vector<2x8x8xf32>
    %204 = vector.shape_cast %189 : vector<1x32xbf16> to vector<1x1x32xbf16>
    %205 = vector.broadcast %204 : vector<1x1x32xbf16> to vector<2x8x32xbf16>
    %206 = arith.mulf %32, %205 : vector<2x8x32xbf16>
    %207 = arith.truncf %203 : vector<2x8x8xf32> to vector<2x8x8xbf16>
    "tpu.trace_start"() <{level = 10 : i32, message = "bqk,bkd->bqd"}> : () -> ()
    %cst_59 = arith.constant dense<0.000000e+00> : vector<2x8x32xf32>
    %208 = tpu.matmul %207, %206, %cst_59 {dimension_numbers = #tpu.dot_dimension_numbers<[2], [1], [1], [2], [0, 0, 0, 1, 1, 2], [0], [0]>} : vector<2x8x8xbf16>, vector<2x8x32xbf16>, vector<2x8x32xf32> -> vector<2x8x32xf32>
    "tpu.trace_stop"() : () -> ()
    %209 = arith.addf %187, %208 : vector<2x8x32xf32>
    %210 = vector.shape_cast %209 : vector<2x8x32xf32> to vector<16x32xf32>
    %211 = arith.truncf %210 : vector<16x32xf32> to vector<16x32xbf16>
    %cst_60 = arith.constant dense<0.000000e+00> : vector<16x32xf32>
    %212 = tpu.matmul %211, %10, %cst_60 {dimension_numbers = #tpu.dot_dimension_numbers<[1], [0], [0], [1], [0, 0, 1, 1], [], []>} : vector<16x32xbf16>, vector<32x32xbf16>, vector<16x32xf32> -> vector<16x32xf32>
    %213 = vector.broadcast %11 : vector<1x32xf32> to vector<16x32xf32>
    %214 = arith.addf %212, %213 : vector<16x32xf32>
    %215 = arith.addf %3, %214 : vector<16x32xf32>
    %c0_61 = arith.constant 0 : index
    %c0_62 = arith.constant 0 : index
    %216 = vector.load %arg11[%c0_61, %c0_62] : memref<1x32xf32, #tpu.memory_space<vmem>>, vector<1x32xf32>
    %c0_63 = arith.constant 0 : index
    %c0_64 = arith.constant 0 : index
    %217 = vector.load %arg12[%c0_63, %c0_64] : memref<1x32xf32, #tpu.memory_space<vmem>>, vector<1x32xf32>
    %cst_65 = arith.constant dense<0.000000e+00> : vector<16xf32>
    %218 = vector.multi_reduction <add>, %215, %cst_65 [1] : vector<16x32xf32> to vector<16xf32>
    %219 = vector.shape_cast %218 : vector<16xf32> to vector<16x1xf32>
    %cst_66 = arith.constant 3.200000e+01 : f32
    %220 = vector.broadcast %cst_66 : f32 to vector<16x1xf32>
    %221 = arith.divf %219, %220 : vector<16x1xf32>
    %222 = vector.broadcast %221 : vector<16x1xf32> to vector<16x32xf32>
    %223 = arith.subf %215, %222 : vector<16x32xf32>
    %224 = arith.mulf %223, %223 : vector<16x32xf32>
    %cst_67 = arith.constant dense<0.000000e+00> : vector<16xf32>
    %225 = vector.multi_reduction <add>, %224, %cst_67 [1] : vector<16x32xf32> to vector<16xf32>
    %226 = vector.shape_cast %225 : vector<16xf32> to vector<16x1xf32>
    %cst_68 = arith.constant 3.200000e+01 : f32
    %227 = vector.broadcast %cst_68 : f32 to vector<16x1xf32>
    %228 = arith.divf %226, %227 : vector<16x1xf32>
    %229 = vector.broadcast %221 : vector<16x1xf32> to vector<16x32xf32>
    %230 = arith.subf %215, %229 : vector<16x32xf32>
    %cst_69 = arith.constant 9.99999974E-6 : f32
    %231 = vector.broadcast %cst_69 : f32 to vector<16x1xf32>
    %232 = arith.addf %228, %231 : vector<16x1xf32>
    %233 = math.rsqrt %232 : vector<16x1xf32>
    %234 = vector.broadcast %233 : vector<16x1xf32> to vector<16x32xf32>
    %235 = arith.mulf %230, %234 : vector<16x32xf32>
    %236 = vector.broadcast %216 : vector<1x32xf32> to vector<16x32xf32>
    %237 = arith.mulf %235, %236 : vector<16x32xf32>
    %238 = vector.broadcast %217 : vector<1x32xf32> to vector<16x32xf32>
    %239 = arith.addf %237, %238 : vector<16x32xf32>
    %240 = vector.shape_cast %239 : vector<16x32xf32> to vector<2x8x32xf32>
    %c0_70 = arith.constant 0 : index
    %c0_71 = arith.constant 0 : index
    %241 = vector.load %arg13[%c0_70, %c0_71] : memref<32x32xbf16, #tpu.memory_space<vmem>>, vector<32x32xbf16>
    %c0_72 = arith.constant 0 : index
    %c0_73 = arith.constant 0 : index
    %242 = vector.load %arg14[%c0_72, %c0_73] : memref<32x32xbf16, #tpu.memory_space<vmem>>, vector<32x32xbf16>
    %c0_74 = arith.constant 0 : index
    %c0_75 = arith.constant 0 : index
    %243 = vector.load %arg15[%c0_74, %c0_75] : memref<32x32xbf16, #tpu.memory_space<vmem>>, vector<32x32xbf16>
    %c0_76 = arith.constant 0 : index
    %c0_77 = arith.constant 0 : index
    %244 = vector.load %arg16[%c0_76, %c0_77] : memref<1x32xf32, #tpu.memory_space<vmem>>, vector<1x32xf32>
    %c0_78 = arith.constant 0 : index
    %c0_79 = arith.constant 0 : index
    %245 = vector.load %arg17[%c0_78, %c0_79] : memref<1x32xf32, #tpu.memory_space<vmem>>, vector<1x32xf32>
    %c0_80 = arith.constant 0 : index
    %c0_81 = arith.constant 0 : index
    %246 = vector.load %arg18[%c0_80, %c0_81] : memref<1x32xf32, #tpu.memory_space<vmem>>, vector<1x32xf32>
    %c0_82 = arith.constant 0 : index
    %c0_83 = arith.constant 0 : index
    %247 = vector.load %arg19[%c0_82, %c0_83] : memref<32x32xbf16, #tpu.memory_space<vmem>>, vector<32x32xbf16>
    %c0_84 = arith.constant 0 : index
    %c0_85 = arith.constant 0 : index
    %248 = vector.load %arg20[%c0_84, %c0_85] : memref<1x32xf32, #tpu.memory_space<vmem>>, vector<1x32xf32>
    %249 = vector.shape_cast %240 : vector<2x8x32xf32> to vector<16x32xf32>
    %250 = arith.truncf %249 : vector<16x32xf32> to vector<16x32xbf16>
    %251 = vector.shape_cast %1 : vector<2x16x32xf32> to vector<32x32xf32>
    %252 = arith.truncf %251 : vector<32x32xf32> to vector<32x32xbf16>
    %cst_86 = arith.constant dense<0.000000e+00> : vector<16x32xf32>
    %253 = tpu.matmul %250, %241, %cst_86 {dimension_numbers = #tpu.dot_dimension_numbers<[1], [0], [0], [1], [0, 0, 1, 1], [], []>} : vector<16x32xbf16>, vector<32x32xbf16>, vector<16x32xf32> -> vector<16x32xf32>
    %254 = vector.broadcast %244 : vector<1x32xf32> to vector<16x32xf32>
    %255 = arith.addf %253, %254 : vector<16x32xf32>
    %cst_87 = arith.constant 5.000000e-01 : f32
    %256 = vector.broadcast %cst_87 : f32 to vector<16x32xf32>
    %257 = arith.mulf %255, %256 : vector<16x32xf32>
    %cst_88 = arith.constant dense<0.000000e+00> : vector<32x32xf32>
    %258 = tpu.matmul %252, %242, %cst_88 {dimension_numbers = #tpu.dot_dimension_numbers<[1], [0], [0], [1], [0, 0, 1, 1], [], []>} : vector<32x32xbf16>, vector<32x32xbf16>, vector<32x32xf32> -> vector<32x32xf32>
    %259 = vector.broadcast %245 : vector<1x32xf32> to vector<32x32xf32>
    %260 = arith.addf %258, %259 : vector<32x32xf32>
    %cst_89 = arith.constant dense<0.000000e+00> : vector<32x32xf32>
    %261 = tpu.matmul %252, %243, %cst_89 {dimension_numbers = #tpu.dot_dimension_numbers<[1], [0], [0], [1], [0, 0, 1, 1], [], []>} : vector<32x32xbf16>, vector<32x32xbf16>, vector<32x32xf32> -> vector<32x32xf32>
    %262 = vector.broadcast %246 : vector<1x32xf32> to vector<32x32xf32>
    %263 = arith.addf %261, %262 : vector<32x32xf32>
    %264 = vector.shape_cast %257 : vector<16x32xf32> to vector<2x8x32xf32>
    %265 = arith.truncf %264 : vector<2x8x32xf32> to vector<2x8x32xbf16>
    %266 = vector.shape_cast %260 : vector<32x32xf32> to vector<2x16x32xf32>
    %267 = arith.truncf %266 : vector<2x16x32xf32> to vector<2x16x32xbf16>
    %268 = vector.shape_cast %263 : vector<32x32xf32> to vector<2x16x32xf32>
    %269 = arith.truncf %268 : vector<2x16x32xf32> to vector<2x16x32xbf16>
    %cst_90 = arith.constant 0.000000e+00 : f32
    %270 = vector.broadcast %cst_90 : f32 to vector<2x8x32xf32>
    %271 = vector.extract_strided_slice %2 {offsets = [0, 0, 0], sizes = [1, 1, 32], strides = [1, 1, 1]} : vector<8x1x32xbf16> to vector<1x1x32xbf16>
    %272 = vector.shape_cast %271 : vector<1x1x32xbf16> to vector<1x32xbf16>
    %273 = vector.shape_cast %272 : vector<1x32xbf16> to vector<1x1x32xbf16>
    %274 = vector.broadcast %273 : vector<1x1x32xbf16> to vector<2x8x32xbf16>
    %275 = arith.mulf %265, %274 : vector<2x8x32xbf16>
    "tpu.trace_start"() <{level = 10 : i32, message = "bqd,bkd->bqk"}> : () -> ()
    %cst_91 = arith.constant dense<0.000000e+00> : vector<2x8x16xf32>
    %276 = tpu.matmul %275, %267, %cst_91 {dimension_numbers = #tpu.dot_dimension_numbers<[2], [2], [1], [1], [0, 0, 0, 1, 1, 1], [0], [0]>} : vector<2x8x32xbf16>, vector<2x16x32xbf16>, vector<2x8x16xf32> -> vector<2x8x16xf32>
    "tpu.trace_stop"() : () -> ()
    %cst_92 = arith.constant dense<0xFF800000> : vector<2x8xf32>
    %277 = vector.multi_reduction <maximumf>, %276, %cst_92 [2] : vector<2x8x16xf32> to vector<2x8xf32>
    %278 = vector.shape_cast %277 : vector<2x8xf32> to vector<2x8x1xf32>
    %279 = vector.broadcast %278 : vector<2x8x1xf32> to vector<2x8x16xf32>
    %280 = arith.subf %276, %279 : vector<2x8x16xf32>
    %281 = math.exp %280 : vector<2x8x16xf32>
    %cst_93 = arith.constant dense<0.000000e+00> : vector<2x8xf32>
    %282 = vector.multi_reduction <add>, %281, %cst_93 [2] : vector<2x8x16xf32> to vector<2x8xf32>
    %283 = vector.shape_cast %282 : vector<2x8xf32> to vector<2x8x1xf32>
    %284 = tpu.reciprocal %283 {approx = true} : vector<2x8x1xf32> -> vector<2x8x1xf32>
    %285 = vector.broadcast %284 : vector<2x8x1xf32> to vector<2x8x16xf32>
    %286 = arith.mulf %281, %285 : vector<2x8x16xf32>
    %287 = vector.shape_cast %272 : vector<1x32xbf16> to vector<1x1x32xbf16>
    %288 = vector.broadcast %287 : vector<1x1x32xbf16> to vector<2x16x32xbf16>
    %289 = arith.mulf %269, %288 : vector<2x16x32xbf16>
    %290 = arith.truncf %286 : vector<2x8x16xf32> to vector<2x8x16xbf16>
    "tpu.trace_start"() <{level = 10 : i32, message = "bqk,bkd->bqd"}> : () -> ()
    %cst_94 = arith.constant dense<0.000000e+00> : vector<2x8x32xf32>
    %291 = tpu.matmul %290, %289, %cst_94 {dimension_numbers = #tpu.dot_dimension_numbers<[2], [1], [1], [2], [0, 0, 0, 1, 1, 2], [0], [0]>} : vector<2x8x16xbf16>, vector<2x16x32xbf16>, vector<2x8x32xf32> -> vector<2x8x32xf32>
    "tpu.trace_stop"() : () -> ()
    %292 = arith.addf %270, %291 : vector<2x8x32xf32>
    %293 = vector.extract_strided_slice %2 {offsets = [1, 0, 0], sizes = [1, 1, 32], strides = [1, 1, 1]} : vector<8x1x32xbf16> to vector<1x1x32xbf16>
    %294 = vector.shape_cast %293 : vector<1x1x32xbf16> to vector<1x32xbf16>
    %295 = vector.shape_cast %294 : vector<1x32xbf16> to vector<1x1x32xbf16>
    %296 = vector.broadcast %295 : vector<1x1x32xbf16> to vector<2x8x32xbf16>
    %297 = arith.mulf %265, %296 : vector<2x8x32xbf16>
    "tpu.trace_start"() <{level = 10 : i32, message = "bqd,bkd->bqk"}> : () -> ()
    %cst_95 = arith.constant dense<0.000000e+00> : vector<2x8x16xf32>
    %298 = tpu.matmul %297, %267, %cst_95 {dimension_numbers = #tpu.dot_dimension_numbers<[2], [2], [1], [1], [0, 0, 0, 1, 1, 1], [0], [0]>} : vector<2x8x32xbf16>, vector<2x16x32xbf16>, vector<2x8x16xf32> -> vector<2x8x16xf32>
    "tpu.trace_stop"() : () -> ()
    %cst_96 = arith.constant dense<0xFF800000> : vector<2x8xf32>
    %299 = vector.multi_reduction <maximumf>, %298, %cst_96 [2] : vector<2x8x16xf32> to vector<2x8xf32>
    %300 = vector.shape_cast %299 : vector<2x8xf32> to vector<2x8x1xf32>
    %301 = vector.broadcast %300 : vector<2x8x1xf32> to vector<2x8x16xf32>
    %302 = arith.subf %298, %301 : vector<2x8x16xf32>
    %303 = math.exp %302 : vector<2x8x16xf32>
    %cst_97 = arith.constant dense<0.000000e+00> : vector<2x8xf32>
    %304 = vector.multi_reduction <add>, %303, %cst_97 [2] : vector<2x8x16xf32> to vector<2x8xf32>
    %305 = vector.shape_cast %304 : vector<2x8xf32> to vector<2x8x1xf32>
    %306 = tpu.reciprocal %305 {approx = true} : vector<2x8x1xf32> -> vector<2x8x1xf32>
    %307 = vector.broadcast %306 : vector<2x8x1xf32> to vector<2x8x16xf32>
    %308 = arith.mulf %303, %307 : vector<2x8x16xf32>
    %309 = vector.shape_cast %294 : vector<1x32xbf16> to vector<1x1x32xbf16>
    %310 = vector.broadcast %309 : vector<1x1x32xbf16> to vector<2x16x32xbf16>
    %311 = arith.mulf %269, %310 : vector<2x16x32xbf16>
    %312 = arith.truncf %308 : vector<2x8x16xf32> to vector<2x8x16xbf16>
    "tpu.trace_start"() <{level = 10 : i32, message = "bqk,bkd->bqd"}> : () -> ()
    %cst_98 = arith.constant dense<0.000000e+00> : vector<2x8x32xf32>
    %313 = tpu.matmul %312, %311, %cst_98 {dimension_numbers = #tpu.dot_dimension_numbers<[2], [1], [1], [2], [0, 0, 0, 1, 1, 2], [0], [0]>} : vector<2x8x16xbf16>, vector<2x16x32xbf16>, vector<2x8x32xf32> -> vector<2x8x32xf32>
    "tpu.trace_stop"() : () -> ()
    %314 = arith.addf %292, %313 : vector<2x8x32xf32>
    %315 = vector.extract_strided_slice %2 {offsets = [2, 0, 0], sizes = [1, 1, 32], strides = [1, 1, 1]} : vector<8x1x32xbf16> to vector<1x1x32xbf16>
    %316 = vector.shape_cast %315 : vector<1x1x32xbf16> to vector<1x32xbf16>
    %317 = vector.shape_cast %316 : vector<1x32xbf16> to vector<1x1x32xbf16>
    %318 = vector.broadcast %317 : vector<1x1x32xbf16> to vector<2x8x32xbf16>
    %319 = arith.mulf %265, %318 : vector<2x8x32xbf16>
    "tpu.trace_start"() <{level = 10 : i32, message = "bqd,bkd->bqk"}> : () -> ()
    %cst_99 = arith.constant dense<0.000000e+00> : vector<2x8x16xf32>
    %320 = tpu.matmul %319, %267, %cst_99 {dimension_numbers = #tpu.dot_dimension_numbers<[2], [2], [1], [1], [0, 0, 0, 1, 1, 1], [0], [0]>} : vector<2x8x32xbf16>, vector<2x16x32xbf16>, vector<2x8x16xf32> -> vector<2x8x16xf32>
    "tpu.trace_stop"() : () -> ()
    %cst_100 = arith.constant dense<0xFF800000> : vector<2x8xf32>
    %321 = vector.multi_reduction <maximumf>, %320, %cst_100 [2] : vector<2x8x16xf32> to vector<2x8xf32>
    %322 = vector.shape_cast %321 : vector<2x8xf32> to vector<2x8x1xf32>
    %323 = vector.broadcast %322 : vector<2x8x1xf32> to vector<2x8x16xf32>
    %324 = arith.subf %320, %323 : vector<2x8x16xf32>
    %325 = math.exp %324 : vector<2x8x16xf32>
    %cst_101 = arith.constant dense<0.000000e+00> : vector<2x8xf32>
    %326 = vector.multi_reduction <add>, %325, %cst_101 [2] : vector<2x8x16xf32> to vector<2x8xf32>
    %327 = vector.shape_cast %326 : vector<2x8xf32> to vector<2x8x1xf32>
    %328 = tpu.reciprocal %327 {approx = true} : vector<2x8x1xf32> -> vector<2x8x1xf32>
    %329 = vector.broadcast %328 : vector<2x8x1xf32> to vector<2x8x16xf32>
    %330 = arith.mulf %325, %329 : vector<2x8x16xf32>
    %331 = vector.shape_cast %316 : vector<1x32xbf16> to vector<1x1x32xbf16>
    %332 = vector.broadcast %331 : vector<1x1x32xbf16> to vector<2x16x32xbf16>
    %333 = arith.mulf %269, %332 : vector<2x16x32xbf16>
    %334 = arith.truncf %330 : vector<2x8x16xf32> to vector<2x8x16xbf16>
    "tpu.trace_start"() <{level = 10 : i32, message = "bqk,bkd->bqd"}> : () -> ()
    %cst_102 = arith.constant dense<0.000000e+00> : vector<2x8x32xf32>
    %335 = tpu.matmul %334, %333, %cst_102 {dimension_numbers = #tpu.dot_dimension_numbers<[2], [1], [1], [2], [0, 0, 0, 1, 1, 2], [0], [0]>} : vector<2x8x16xbf16>, vector<2x16x32xbf16>, vector<2x8x32xf32> -> vector<2x8x32xf32>
    "tpu.trace_stop"() : () -> ()
    %336 = arith.addf %314, %335 : vector<2x8x32xf32>
    %337 = vector.extract_strided_slice %2 {offsets = [3, 0, 0], sizes = [1, 1, 32], strides = [1, 1, 1]} : vector<8x1x32xbf16> to vector<1x1x32xbf16>
    %338 = vector.shape_cast %337 : vector<1x1x32xbf16> to vector<1x32xbf16>
    %339 = vector.shape_cast %338 : vector<1x32xbf16> to vector<1x1x32xbf16>
    %340 = vector.broadcast %339 : vector<1x1x32xbf16> to vector<2x8x32xbf16>
    %341 = arith.mulf %265, %340 : vector<2x8x32xbf16>
    "tpu.trace_start"() <{level = 10 : i32, message = "bqd,bkd->bqk"}> : () -> ()
    %cst_103 = arith.constant dense<0.000000e+00> : vector<2x8x16xf32>
    %342 = tpu.matmul %341, %267, %cst_103 {dimension_numbers = #tpu.dot_dimension_numbers<[2], [2], [1], [1], [0, 0, 0, 1, 1, 1], [0], [0]>} : vector<2x8x32xbf16>, vector<2x16x32xbf16>, vector<2x8x16xf32> -> vector<2x8x16xf32>
    "tpu.trace_stop"() : () -> ()
    %cst_104 = arith.constant dense<0xFF800000> : vector<2x8xf32>
    %343 = vector.multi_reduction <maximumf>, %342, %cst_104 [2] : vector<2x8x16xf32> to vector<2x8xf32>
    %344 = vector.shape_cast %343 : vector<2x8xf32> to vector<2x8x1xf32>
    %345 = vector.broadcast %344 : vector<2x8x1xf32> to vector<2x8x16xf32>
    %346 = arith.subf %342, %345 : vector<2x8x16xf32>
    %347 = math.exp %346 : vector<2x8x16xf32>
    %cst_105 = arith.constant dense<0.000000e+00> : vector<2x8xf32>
    %348 = vector.multi_reduction <add>, %347, %cst_105 [2] : vector<2x8x16xf32> to vector<2x8xf32>
    %349 = vector.shape_cast %348 : vector<2x8xf32> to vector<2x8x1xf32>
    %350 = tpu.reciprocal %349 {approx = true} : vector<2x8x1xf32> -> vector<2x8x1xf32>
    %351 = vector.broadcast %350 : vector<2x8x1xf32> to vector<2x8x16xf32>
    %352 = arith.mulf %347, %351 : vector<2x8x16xf32>
    %353 = vector.shape_cast %338 : vector<1x32xbf16> to vector<1x1x32xbf16>
    %354 = vector.broadcast %353 : vector<1x1x32xbf16> to vector<2x16x32xbf16>
    %355 = arith.mulf %269, %354 : vector<2x16x32xbf16>
    %356 = arith.truncf %352 : vector<2x8x16xf32> to vector<2x8x16xbf16>
    "tpu.trace_start"() <{level = 10 : i32, message = "bqk,bkd->bqd"}> : () -> ()
    %cst_106 = arith.constant dense<0.000000e+00> : vector<2x8x32xf32>
    %357 = tpu.matmul %356, %355, %cst_106 {dimension_numbers = #tpu.dot_dimension_numbers<[2], [1], [1], [2], [0, 0, 0, 1, 1, 2], [0], [0]>} : vector<2x8x16xbf16>, vector<2x16x32xbf16>, vector<2x8x32xf32> -> vector<2x8x32xf32>
    "tpu.trace_stop"() : () -> ()
    %358 = arith.addf %336, %357 : vector<2x8x32xf32>
    %359 = vector.extract_strided_slice %2 {offsets = [4, 0, 0], sizes = [1, 1, 32], strides = [1, 1, 1]} : vector<8x1x32xbf16> to vector<1x1x32xbf16>
    %360 = vector.shape_cast %359 : vector<1x1x32xbf16> to vector<1x32xbf16>
    %361 = vector.shape_cast %360 : vector<1x32xbf16> to vector<1x1x32xbf16>
    %362 = vector.broadcast %361 : vector<1x1x32xbf16> to vector<2x8x32xbf16>
    %363 = arith.mulf %265, %362 : vector<2x8x32xbf16>
    "tpu.trace_start"() <{level = 10 : i32, message = "bqd,bkd->bqk"}> : () -> ()
    %cst_107 = arith.constant dense<0.000000e+00> : vector<2x8x16xf32>
    %364 = tpu.matmul %363, %267, %cst_107 {dimension_numbers = #tpu.dot_dimension_numbers<[2], [2], [1], [1], [0, 0, 0, 1, 1, 1], [0], [0]>} : vector<2x8x32xbf16>, vector<2x16x32xbf16>, vector<2x8x16xf32> -> vector<2x8x16xf32>
    "tpu.trace_stop"() : () -> ()
    %cst_108 = arith.constant dense<0xFF800000> : vector<2x8xf32>
    %365 = vector.multi_reduction <maximumf>, %364, %cst_108 [2] : vector<2x8x16xf32> to vector<2x8xf32>
    %366 = vector.shape_cast %365 : vector<2x8xf32> to vector<2x8x1xf32>
    %367 = vector.broadcast %366 : vector<2x8x1xf32> to vector<2x8x16xf32>
    %368 = arith.subf %364, %367 : vector<2x8x16xf32>
    %369 = math.exp %368 : vector<2x8x16xf32>
    %cst_109 = arith.constant dense<0.000000e+00> : vector<2x8xf32>
    %370 = vector.multi_reduction <add>, %369, %cst_109 [2] : vector<2x8x16xf32> to vector<2x8xf32>
    %371 = vector.shape_cast %370 : vector<2x8xf32> to vector<2x8x1xf32>
    %372 = tpu.reciprocal %371 {approx = true} : vector<2x8x1xf32> -> vector<2x8x1xf32>
    %373 = vector.broadcast %372 : vector<2x8x1xf32> to vector<2x8x16xf32>
    %374 = arith.mulf %369, %373 : vector<2x8x16xf32>
    %375 = vector.shape_cast %360 : vector<1x32xbf16> to vector<1x1x32xbf16>
    %376 = vector.broadcast %375 : vector<1x1x32xbf16> to vector<2x16x32xbf16>
    %377 = arith.mulf %269, %376 : vector<2x16x32xbf16>
    %378 = arith.truncf %374 : vector<2x8x16xf32> to vector<2x8x16xbf16>
    "tpu.trace_start"() <{level = 10 : i32, message = "bqk,bkd->bqd"}> : () -> ()
    %cst_110 = arith.constant dense<0.000000e+00> : vector<2x8x32xf32>
    %379 = tpu.matmul %378, %377, %cst_110 {dimension_numbers = #tpu.dot_dimension_numbers<[2], [1], [1], [2], [0, 0, 0, 1, 1, 2], [0], [0]>} : vector<2x8x16xbf16>, vector<2x16x32xbf16>, vector<2x8x32xf32> -> vector<2x8x32xf32>
    "tpu.trace_stop"() : () -> ()
    %380 = arith.addf %358, %379 : vector<2x8x32xf32>
    %381 = vector.extract_strided_slice %2 {offsets = [5, 0, 0], sizes = [1, 1, 32], strides = [1, 1, 1]} : vector<8x1x32xbf16> to vector<1x1x32xbf16>
    %382 = vector.shape_cast %381 : vector<1x1x32xbf16> to vector<1x32xbf16>
    %383 = vector.shape_cast %382 : vector<1x32xbf16> to vector<1x1x32xbf16>
    %384 = vector.broadcast %383 : vector<1x1x32xbf16> to vector<2x8x32xbf16>
    %385 = arith.mulf %265, %384 : vector<2x8x32xbf16>
    "tpu.trace_start"() <{level = 10 : i32, message = "bqd,bkd->bqk"}> : () -> ()
    %cst_111 = arith.constant dense<0.000000e+00> : vector<2x8x16xf32>
    %386 = tpu.matmul %385, %267, %cst_111 {dimension_numbers = #tpu.dot_dimension_numbers<[2], [2], [1], [1], [0, 0, 0, 1, 1, 1], [0], [0]>} : vector<2x8x32xbf16>, vector<2x16x32xbf16>, vector<2x8x16xf32> -> vector<2x8x16xf32>
    "tpu.trace_stop"() : () -> ()
    %cst_112 = arith.constant dense<0xFF800000> : vector<2x8xf32>
    %387 = vector.multi_reduction <maximumf>, %386, %cst_112 [2] : vector<2x8x16xf32> to vector<2x8xf32>
    %388 = vector.shape_cast %387 : vector<2x8xf32> to vector<2x8x1xf32>
    %389 = vector.broadcast %388 : vector<2x8x1xf32> to vector<2x8x16xf32>
    %390 = arith.subf %386, %389 : vector<2x8x16xf32>
    %391 = math.exp %390 : vector<2x8x16xf32>
    %cst_113 = arith.constant dense<0.000000e+00> : vector<2x8xf32>
    %392 = vector.multi_reduction <add>, %391, %cst_113 [2] : vector<2x8x16xf32> to vector<2x8xf32>
    %393 = vector.shape_cast %392 : vector<2x8xf32> to vector<2x8x1xf32>
    %394 = tpu.reciprocal %393 {approx = true} : vector<2x8x1xf32> -> vector<2x8x1xf32>
    %395 = vector.broadcast %394 : vector<2x8x1xf32> to vector<2x8x16xf32>
    %396 = arith.mulf %391, %395 : vector<2x8x16xf32>
    %397 = vector.shape_cast %382 : vector<1x32xbf16> to vector<1x1x32xbf16>
    %398 = vector.broadcast %397 : vector<1x1x32xbf16> to vector<2x16x32xbf16>
    %399 = arith.mulf %269, %398 : vector<2x16x32xbf16>
    %400 = arith.truncf %396 : vector<2x8x16xf32> to vector<2x8x16xbf16>
    "tpu.trace_start"() <{level = 10 : i32, message = "bqk,bkd->bqd"}> : () -> ()
    %cst_114 = arith.constant dense<0.000000e+00> : vector<2x8x32xf32>
    %401 = tpu.matmul %400, %399, %cst_114 {dimension_numbers = #tpu.dot_dimension_numbers<[2], [1], [1], [2], [0, 0, 0, 1, 1, 2], [0], [0]>} : vector<2x8x16xbf16>, vector<2x16x32xbf16>, vector<2x8x32xf32> -> vector<2x8x32xf32>
    "tpu.trace_stop"() : () -> ()
    %402 = arith.addf %380, %401 : vector<2x8x32xf32>
    %403 = vector.extract_strided_slice %2 {offsets = [6, 0, 0], sizes = [1, 1, 32], strides = [1, 1, 1]} : vector<8x1x32xbf16> to vector<1x1x32xbf16>
    %404 = vector.shape_cast %403 : vector<1x1x32xbf16> to vector<1x32xbf16>
    %405 = vector.shape_cast %404 : vector<1x32xbf16> to vector<1x1x32xbf16>
    %406 = vector.broadcast %405 : vector<1x1x32xbf16> to vector<2x8x32xbf16>
    %407 = arith.mulf %265, %406 : vector<2x8x32xbf16>
    "tpu.trace_start"() <{level = 10 : i32, message = "bqd,bkd->bqk"}> : () -> ()
    %cst_115 = arith.constant dense<0.000000e+00> : vector<2x8x16xf32>
    %408 = tpu.matmul %407, %267, %cst_115 {dimension_numbers = #tpu.dot_dimension_numbers<[2], [2], [1], [1], [0, 0, 0, 1, 1, 1], [0], [0]>} : vector<2x8x32xbf16>, vector<2x16x32xbf16>, vector<2x8x16xf32> -> vector<2x8x16xf32>
    "tpu.trace_stop"() : () -> ()
    %cst_116 = arith.constant dense<0xFF800000> : vector<2x8xf32>
    %409 = vector.multi_reduction <maximumf>, %408, %cst_116 [2] : vector<2x8x16xf32> to vector<2x8xf32>
    %410 = vector.shape_cast %409 : vector<2x8xf32> to vector<2x8x1xf32>
    %411 = vector.broadcast %410 : vector<2x8x1xf32> to vector<2x8x16xf32>
    %412 = arith.subf %408, %411 : vector<2x8x16xf32>
    %413 = math.exp %412 : vector<2x8x16xf32>
    %cst_117 = arith.constant dense<0.000000e+00> : vector<2x8xf32>
    %414 = vector.multi_reduction <add>, %413, %cst_117 [2] : vector<2x8x16xf32> to vector<2x8xf32>
    %415 = vector.shape_cast %414 : vector<2x8xf32> to vector<2x8x1xf32>
    %416 = tpu.reciprocal %415 {approx = true} : vector<2x8x1xf32> -> vector<2x8x1xf32>
    %417 = vector.broadcast %416 : vector<2x8x1xf32> to vector<2x8x16xf32>
    %418 = arith.mulf %413, %417 : vector<2x8x16xf32>
    %419 = vector.shape_cast %404 : vector<1x32xbf16> to vector<1x1x32xbf16>
    %420 = vector.broadcast %419 : vector<1x1x32xbf16> to vector<2x16x32xbf16>
    %421 = arith.mulf %269, %420 : vector<2x16x32xbf16>
    %422 = arith.truncf %418 : vector<2x8x16xf32> to vector<2x8x16xbf16>
    "tpu.trace_start"() <{level = 10 : i32, message = "bqk,bkd->bqd"}> : () -> ()
    %cst_118 = arith.constant dense<0.000000e+00> : vector<2x8x32xf32>
    %423 = tpu.matmul %422, %421, %cst_118 {dimension_numbers = #tpu.dot_dimension_numbers<[2], [1], [1], [2], [0, 0, 0, 1, 1, 2], [0], [0]>} : vector<2x8x16xbf16>, vector<2x16x32xbf16>, vector<2x8x32xf32> -> vector<2x8x32xf32>
    "tpu.trace_stop"() : () -> ()
    %424 = arith.addf %402, %423 : vector<2x8x32xf32>
    %425 = vector.extract_strided_slice %2 {offsets = [7, 0, 0], sizes = [1, 1, 32], strides = [1, 1, 1]} : vector<8x1x32xbf16> to vector<1x1x32xbf16>
    %426 = vector.shape_cast %425 : vector<1x1x32xbf16> to vector<1x32xbf16>
    %427 = vector.shape_cast %426 : vector<1x32xbf16> to vector<1x1x32xbf16>
    %428 = vector.broadcast %427 : vector<1x1x32xbf16> to vector<2x8x32xbf16>
    %429 = arith.mulf %265, %428 : vector<2x8x32xbf16>
    "tpu.trace_start"() <{level = 10 : i32, message = "bqd,bkd->bqk"}> : () -> ()
    %cst_119 = arith.constant dense<0.000000e+00> : vector<2x8x16xf32>
    %430 = tpu.matmul %429, %267, %cst_119 {dimension_numbers = #tpu.dot_dimension_numbers<[2], [2], [1], [1], [0, 0, 0, 1, 1, 1], [0], [0]>} : vector<2x8x32xbf16>, vector<2x16x32xbf16>, vector<2x8x16xf32> -> vector<2x8x16xf32>
    "tpu.trace_stop"() : () -> ()
    %cst_120 = arith.constant dense<0xFF800000> : vector<2x8xf32>
    %431 = vector.multi_reduction <maximumf>, %430, %cst_120 [2] : vector<2x8x16xf32> to vector<2x8xf32>
    %432 = vector.shape_cast %431 : vector<2x8xf32> to vector<2x8x1xf32>
    %433 = vector.broadcast %432 : vector<2x8x1xf32> to vector<2x8x16xf32>
    %434 = arith.subf %430, %433 : vector<2x8x16xf32>
    %435 = math.exp %434 : vector<2x8x16xf32>
    %cst_121 = arith.constant dense<0.000000e+00> : vector<2x8xf32>
    %436 = vector.multi_reduction <add>, %435, %cst_121 [2] : vector<2x8x16xf32> to vector<2x8xf32>
    %437 = vector.shape_cast %436 : vector<2x8xf32> to vector<2x8x1xf32>
    %438 = tpu.reciprocal %437 {approx = true} : vector<2x8x1xf32> -> vector<2x8x1xf32>
    %439 = vector.broadcast %438 : vector<2x8x1xf32> to vector<2x8x16xf32>
    %440 = arith.mulf %435, %439 : vector<2x8x16xf32>
    %441 = vector.shape_cast %426 : vector<1x32xbf16> to vector<1x1x32xbf16>
    %442 = vector.broadcast %441 : vector<1x1x32xbf16> to vector<2x16x32xbf16>
    %443 = arith.mulf %269, %442 : vector<2x16x32xbf16>
    %444 = arith.truncf %440 : vector<2x8x16xf32> to vector<2x8x16xbf16>
    "tpu.trace_start"() <{level = 10 : i32, message = "bqk,bkd->bqd"}> : () -> ()
    %cst_122 = arith.constant dense<0.000000e+00> : vector<2x8x32xf32>
    %445 = tpu.matmul %444, %443, %cst_122 {dimension_numbers = #tpu.dot_dimension_numbers<[2], [1], [1], [2], [0, 0, 0, 1, 1, 2], [0], [0]>} : vector<2x8x16xbf16>, vector<2x16x32xbf16>, vector<2x8x32xf32> -> vector<2x8x32xf32>
    "tpu.trace_stop"() : () -> ()
    %446 = arith.addf %424, %445 : vector<2x8x32xf32>
    %447 = vector.shape_cast %446 : vector<2x8x32xf32> to vector<16x32xf32>
    %448 = arith.truncf %447 : vector<16x32xf32> to vector<16x32xbf16>
    %cst_123 = arith.constant dense<0.000000e+00> : vector<16x32xf32>
    %449 = tpu.matmul %448, %247, %cst_123 {dimension_numbers = #tpu.dot_dimension_numbers<[1], [0], [0], [1], [0, 0, 1, 1], [], []>} : vector<16x32xbf16>, vector<32x32xbf16>, vector<16x32xf32> -> vector<16x32xf32>
    %450 = vector.broadcast %248 : vector<1x32xf32> to vector<16x32xf32>
    %451 = arith.addf %449, %450 : vector<16x32xf32>
    %452 = arith.addf %239, %451 : vector<16x32xf32>
    %c0_124 = arith.constant 0 : index
    %c0_125 = arith.constant 0 : index
    %453 = vector.load %arg21[%c0_124, %c0_125] : memref<1x32xf32, #tpu.memory_space<vmem>>, vector<1x32xf32>
    %c0_126 = arith.constant 0 : index
    %c0_127 = arith.constant 0 : index
    %454 = vector.load %arg22[%c0_126, %c0_127] : memref<1x32xf32, #tpu.memory_space<vmem>>, vector<1x32xf32>
    %cst_128 = arith.constant dense<0.000000e+00> : vector<16xf32>
    %455 = vector.multi_reduction <add>, %452, %cst_128 [1] : vector<16x32xf32> to vector<16xf32>
    %456 = vector.shape_cast %455 : vector<16xf32> to vector<16x1xf32>
    %cst_129 = arith.constant 3.200000e+01 : f32
    %457 = vector.broadcast %cst_129 : f32 to vector<16x1xf32>
    %458 = arith.divf %456, %457 : vector<16x1xf32>
    %459 = vector.broadcast %458 : vector<16x1xf32> to vector<16x32xf32>
    %460 = arith.subf %452, %459 : vector<16x32xf32>
    %461 = arith.mulf %460, %460 : vector<16x32xf32>
    %cst_130 = arith.constant dense<0.000000e+00> : vector<16xf32>
    %462 = vector.multi_reduction <add>, %461, %cst_130 [1] : vector<16x32xf32> to vector<16xf32>
    %463 = vector.shape_cast %462 : vector<16xf32> to vector<16x1xf32>
    %cst_131 = arith.constant 3.200000e+01 : f32
    %464 = vector.broadcast %cst_131 : f32 to vector<16x1xf32>
    %465 = arith.divf %463, %464 : vector<16x1xf32>
    %466 = vector.broadcast %458 : vector<16x1xf32> to vector<16x32xf32>
    %467 = arith.subf %452, %466 : vector<16x32xf32>
    %cst_132 = arith.constant 9.99999974E-6 : f32
    %468 = vector.broadcast %cst_132 : f32 to vector<16x1xf32>
    %469 = arith.addf %465, %468 : vector<16x1xf32>
    %470 = math.rsqrt %469 : vector<16x1xf32>
    %471 = vector.broadcast %470 : vector<16x1xf32> to vector<16x32xf32>
    %472 = arith.mulf %467, %471 : vector<16x32xf32>
    %473 = vector.broadcast %453 : vector<1x32xf32> to vector<16x32xf32>
    %474 = arith.mulf %472, %473 : vector<16x32xf32>
    %475 = vector.broadcast %454 : vector<1x32xf32> to vector<16x32xf32>
    %476 = arith.addf %474, %475 : vector<16x32xf32>
    %c0_133 = arith.constant 0 : index
    %c0_134 = arith.constant 0 : index
    %477 = vector.load %arg23[%c0_133, %c0_134] : memref<32x32xbf16, #tpu.memory_space<vmem>>, vector<32x32xbf16>
    %c0_135 = arith.constant 0 : index
    %c0_136 = arith.constant 0 : index
    %478 = vector.load %arg24[%c0_135, %c0_136] : memref<1x32xf32, #tpu.memory_space<vmem>>, vector<1x32xf32>
    %c0_137 = arith.constant 0 : index
    %c0_138 = arith.constant 0 : index
    %479 = vector.load %arg25[%c0_137, %c0_138] : memref<32x32xbf16, #tpu.memory_space<vmem>>, vector<32x32xbf16>
    %c0_139 = arith.constant 0 : index
    %c0_140 = arith.constant 0 : index
    %480 = vector.load %arg26[%c0_139, %c0_140] : memref<1x32xf32, #tpu.memory_space<vmem>>, vector<1x32xf32>
    %481 = arith.truncf %476 : vector<16x32xf32> to vector<16x32xbf16>
    %cst_141 = arith.constant dense<0.000000e+00> : vector<16x32xf32>
    %482 = tpu.matmul %481, %477, %cst_141 {dimension_numbers = #tpu.dot_dimension_numbers<[1], [0], [0], [1], [0, 0, 1, 1], [], []>} : vector<16x32xbf16>, vector<32x32xbf16>, vector<16x32xf32> -> vector<16x32xf32>
    %483 = vector.broadcast %478 : vector<1x32xf32> to vector<16x32xf32>
    %484 = arith.addf %482, %483 : vector<16x32xf32>
    %cst_142 = arith.constant 0.000000e+00 : f32
    %485 = vector.broadcast %cst_142 : f32 to vector<16x32xf32>
    %486 = arith.maximumf %484, %485 : vector<16x32xf32>
    %487 = arith.truncf %486 : vector<16x32xf32> to vector<16x32xbf16>
    %cst_143 = arith.constant dense<0.000000e+00> : vector<16x32xf32>
    %488 = tpu.matmul %487, %479, %cst_143 {dimension_numbers = #tpu.dot_dimension_numbers<[1], [0], [0], [1], [0, 0, 1, 1], [], []>} : vector<16x32xbf16>, vector<32x32xbf16>, vector<16x32xf32> -> vector<16x32xf32>
    %489 = vector.broadcast %480 : vector<1x32xf32> to vector<16x32xf32>
    %490 = arith.addf %488, %489 : vector<16x32xf32>
    %491 = arith.addf %476, %490 : vector<16x32xf32>
    %c0_144 = arith.constant 0 : index
    %c0_145 = arith.constant 0 : index
    %492 = vector.load %arg27[%c0_144, %c0_145] : memref<1x32xf32, #tpu.memory_space<vmem>>, vector<1x32xf32>
    %c0_146 = arith.constant 0 : index
    %c0_147 = arith.constant 0 : index
    %493 = vector.load %arg28[%c0_146, %c0_147] : memref<1x32xf32, #tpu.memory_space<vmem>>, vector<1x32xf32>
    %cst_148 = arith.constant dense<0.000000e+00> : vector<16xf32>
    %494 = vector.multi_reduction <add>, %491, %cst_148 [1] : vector<16x32xf32> to vector<16xf32>
    %495 = vector.shape_cast %494 : vector<16xf32> to vector<16x1xf32>
    %cst_149 = arith.constant 3.200000e+01 : f32
    %496 = vector.broadcast %cst_149 : f32 to vector<16x1xf32>
    %497 = arith.divf %495, %496 : vector<16x1xf32>
    %498 = vector.broadcast %497 : vector<16x1xf32> to vector<16x32xf32>
    %499 = arith.subf %491, %498 : vector<16x32xf32>
    %500 = arith.mulf %499, %499 : vector<16x32xf32>
    %cst_150 = arith.constant dense<0.000000e+00> : vector<16xf32>
    %501 = vector.multi_reduction <add>, %500, %cst_150 [1] : vector<16x32xf32> to vector<16xf32>
    %502 = vector.shape_cast %501 : vector<16xf32> to vector<16x1xf32>
    %cst_151 = arith.constant 3.200000e+01 : f32
    %503 = vector.broadcast %cst_151 : f32 to vector<16x1xf32>
    %504 = arith.divf %502, %503 : vector<16x1xf32>
    %505 = vector.broadcast %497 : vector<16x1xf32> to vector<16x32xf32>
    %506 = arith.subf %491, %505 : vector<16x32xf32>
    %cst_152 = arith.constant 9.99999974E-6 : f32
    %507 = vector.broadcast %cst_152 : f32 to vector<16x1xf32>
    %508 = arith.addf %504, %507 : vector<16x1xf32>
    %509 = math.rsqrt %508 : vector<16x1xf32>
    %510 = vector.broadcast %509 : vector<16x1xf32> to vector<16x32xf32>
    %511 = arith.mulf %506, %510 : vector<16x32xf32>
    %512 = vector.broadcast %492 : vector<1x32xf32> to vector<16x32xf32>
    %513 = arith.mulf %511, %512 : vector<16x32xf32>
    %514 = vector.broadcast %493 : vector<1x32xf32> to vector<16x32xf32>
    %515 = arith.addf %513, %514 : vector<16x32xf32>
    %c0_153 = arith.constant 0 : index
    %c0_154 = arith.constant 0 : index
    %516 = vector.load %arg29[%c0_153, %c0_154] : memref<1x32xf32, #tpu.memory_space<vmem>>, vector<1x32xf32>
    %c0_155 = arith.constant 0 : index
    %c0_156 = arith.constant 0 : index
    %517 = vector.load %arg30[%c0_155, %c0_156] : memref<1x32xf32, #tpu.memory_space<vmem>>, vector<1x32xf32>
    %cst_157 = arith.constant dense<0.000000e+00> : vector<16xf32>
    %518 = vector.multi_reduction <add>, %515, %cst_157 [1] : vector<16x32xf32> to vector<16xf32>
    %519 = vector.shape_cast %518 : vector<16xf32> to vector<16x1xf32>
    %cst_158 = arith.constant 3.200000e+01 : f32
    %520 = vector.broadcast %cst_158 : f32 to vector<16x1xf32>
    %521 = arith.divf %519, %520 : vector<16x1xf32>
    %522 = vector.broadcast %521 : vector<16x1xf32> to vector<16x32xf32>
    %523 = arith.subf %515, %522 : vector<16x32xf32>
    %524 = arith.mulf %523, %523 : vector<16x32xf32>
    %cst_159 = arith.constant dense<0.000000e+00> : vector<16xf32>
    %525 = vector.multi_reduction <add>, %524, %cst_159 [1] : vector<16x32xf32> to vector<16xf32>
    %526 = vector.shape_cast %525 : vector<16xf32> to vector<16x1xf32>
    %cst_160 = arith.constant 3.200000e+01 : f32
    %527 = vector.broadcast %cst_160 : f32 to vector<16x1xf32>
    %528 = arith.divf %526, %527 : vector<16x1xf32>
    %529 = vector.broadcast %521 : vector<16x1xf32> to vector<16x32xf32>
    %530 = arith.subf %515, %529 : vector<16x32xf32>
    %cst_161 = arith.constant 9.99999974E-6 : f32
    %531 = vector.broadcast %cst_161 : f32 to vector<16x1xf32>
    %532 = arith.addf %528, %531 : vector<16x1xf32>
    %533 = math.rsqrt %532 : vector<16x1xf32>
    %534 = vector.broadcast %533 : vector<16x1xf32> to vector<16x32xf32>
    %535 = arith.mulf %530, %534 : vector<16x32xf32>
    %536 = vector.broadcast %516 : vector<1x32xf32> to vector<16x32xf32>
    %537 = arith.mulf %535, %536 : vector<16x32xf32>
    %538 = vector.broadcast %517 : vector<1x32xf32> to vector<16x32xf32>
    %539 = arith.addf %537, %538 : vector<16x32xf32>
    %540 = vector.shape_cast %539 : vector<16x32xf32> to vector<2x8x32xf32>
    %c0_162 = arith.constant 0 : index
    %c0_163 = arith.constant 0 : index
    %c0_164 = arith.constant 0 : index
    %541 = vector.load %arg31[%c0_162, %c0_163, %c0_164] : memref<2x8x32xf32, #tpu.memory_space<vmem>>, vector<2x8x32xf32>
    tpu.vector_store %arg31[%c0_162, %c0_163, %c0_164], %540 {strides = array<i32>} : memref<2x8x32xf32, #tpu.memory_space<vmem>>, vector<2x8x32xf32>,
    return
  }
}

</mosaic_0001>

<llo_original>
// kernel: transformer_relation.2
$region0: #{transformer_relation.2}
  #allocation0 [shape = 'u32[]', space=smem, size = 0x4, offset = 0x4, fixed_abs, tag = 'smem constant byte address 0x4 - core index']
  #allocation1 [shape = 'u32[144,128]{1,0:T(1,128)}', space=vmem, size = 0x12000, scoped, tag = 'internal scratch']
  %s0 = inlined_call_operand.vmem [shape: f32[2,16,32], index: 0, kind: input, shape index: {}]
  %s1 = inlined_call_operand.vmem [shape: bf16[8,1,32], index: 1, kind: input, shape index: {}]
  %s2 = inlined_call_operand.vmem [shape: bf16[32,32], index: 2, kind: input, shape index: {}]
  %s3 = inlined_call_operand.vmem [shape: bf16[32,32], index: 3, kind: input, shape index: {}]
  %s4 = inlined_call_operand.vmem [shape: bf16[32,32], index: 4, kind: input, shape index: {}]
  %s5 = inlined_call_operand.vmem [shape: f32[1,32], index: 5, kind: input, shape index: {}]
  %s6 = inlined_call_operand.vmem [shape: f32[1,32], index: 6, kind: input, shape index: {}]
  %s7 = inlined_call_operand.vmem [shape: f32[1,32], index: 7, kind: input, shape index: {}]
  %s8 = inlined_call_operand.vmem [shape: bf16[32,32], index: 8, kind: input, shape index: {}]
  %s9 = inlined_call_operand.vmem [shape: f32[1,32], index: 9, kind: input, shape index: {}]
  %s10 = inlined_call_operand.vmem [shape: f32[1,32], index: 10, kind: input, shape index: {}]
  %s11 = inlined_call_operand.vmem [shape: f32[1,32], index: 11, kind: input, shape index: {}]
  %s12 = inlined_call_operand.vmem [shape: bf16[32,32], index: 12, kind: input, shape index: {}]
  %s13 = inlined_call_operand.vmem [shape: f32[1,32], index: 13, kind: input, shape index: {}]
  %s14 = inlined_call_operand.vmem [shape: bf16[32,32], index: 14, kind: input, shape index: {}]
  %s15 = inlined_call_operand.vmem [shape: f32[1,32], index: 15, kind: input, shape index: {}]
  %s16 = inlined_call_operand.vmem [shape: f32[1,32], index: 16, kind: input, shape index: {}]
  %s17 = inlined_call_operand.vmem [shape: f32[1,32], index: 17, kind: input, shape index: {}]
  %s18 = inlined_call_operand.vmem [shape: f32[1,32], index: 18, kind: input, shape index: {}]
  %s19 = inlined_call_operand.vmem [shape: f32[1,32], index: 19, kind: input, shape index: {}]
  %s20 = inlined_call_operand.vmem [shape: f32[2,16,32], index: 20, kind: output, shape index: {}]
  %s21 = sld [smem:[#allocation0]]
  $region90: #{transformer_relation.2} parent=0
    _
  %s23 = ssub.s32 1, %s21
  %s24 = scalar_select 0, %s23, %s21
  // Predicated region
  $region2: #{transformer_relation.2} parent=0 // pred_check
    _
  $region3: #{transformer_relation.2} parent=0 // pred_check_branch
    %26 = sbr.rel (0) target = $region5
  $region4: #{transformer_relation.2} parent=0 // pred_region
    _
  $region5: #{transformer_relation.2} parent=0 // pred_fallthru
    _
  // Predicated region
  $region6: #{transformer_relation.2} parent=0 // pred_check
    _
  $region7: #{transformer_relation.2} parent=0 // pred_check_branch
    %28 = sbr.rel (0) target = $region9
  $region8: #{transformer_relation.2} parent=0 // pred_region
    _
  $region9: #{transformer_relation.2} parent=0 // pred_fallthru
    _
  // Predicated region
  $region10: #{transformer_relation.2} parent=0 // pred_check
    _
  $region11: #{transformer_relation.2} parent=0 // pred_check_branch
    %30 = sbr.rel (0) target = $region13
  $region12: #{transformer_relation.2} parent=0 // pred_region
    _
  $region13: #{transformer_relation.2} parent=0 // pred_fallthru
    _
  // Predicated region
  $region14: #{transformer_relation.2} parent=0 // pred_check
    _
  $region15: #{transformer_relation.2} parent=0 // pred_check_branch
    %32 = sbr.rel (0) target = $region17
  $region16: #{transformer_relation.2} parent=0 // pred_region
    _
  $region17: #{transformer_relation.2} parent=0 // pred_fallthru
    _
  // Predicated region
  $region18: #{transformer_relation.2} parent=0 // pred_check
    _
  $region19: #{transformer_relation.2} parent=0 // pred_check_branch
    %34 = sbr.rel (0) target = $region21
  $region20: #{transformer_relation.2} parent=0 // pred_region
    _
  $region21: #{transformer_relation.2} parent=0 // pred_fallthru
    _
  // Predicated region
  $region22: #{transformer_relation.2} parent=0 // pred_check
    _
  $region23: #{transformer_relation.2} parent=0 // pred_check_branch
    %36 = sbr.rel (0) target = $region25
  $region24: #{transformer_relation.2} parent=0 // pred_region
    _
  $region25: #{transformer_relation.2} parent=0 // pred_fallthru
    _
  // Predicated region
  $region26: #{transformer_relation.2} parent=0 // pred_check
    _
  $region27: #{transformer_relation.2} parent=0 // pred_check_branch
    %38 = sbr.rel (0) target = $region29
  $region28: #{transformer_relation.2} parent=0 // pred_region
    _
  $region29: #{transformer_relation.2} parent=0 // pred_fallthru
    _
  // Predicated region
  $region30: #{transformer_relation.2} parent=0 // pred_check
    _
  $region31: #{transformer_relation.2} parent=0 // pred_check_branch
    %40 = sbr.rel (0) target = $region33
  $region32: #{transformer_relation.2} parent=0 // pred_region
    _
  $region33: #{transformer_relation.2} parent=0 // pred_fallthru
    _
  // Predicated region
  $region34: #{transformer_relation.2} parent=0 // pred_check
    _
  $region35: #{transformer_relation.2} parent=0 // pred_check_branch
    %42 = sbr.rel (0) target = $region37
  $region36: #{transformer_relation.2} parent=0 // pred_region
    _
  $region37: #{transformer_relation.2} parent=0 // pred_fallthru
    _
  // Predicated region
  $region38: #{transformer_relation.2} parent=0 // pred_check
    _
  $region39: #{transformer_relation.2} parent=0 // pred_check_branch
    %44 = sbr.rel (0) target = $region41
  $region40: #{transformer_relation.2} parent=0 // pred_region
    _
  $region41: #{transformer_relation.2} parent=0 // pred_fallthru
    _
  // Predicated region
  $region42: #{transformer_relation.2} parent=0 // pred_check
    _
  $region43: #{transformer_relation.2} parent=0 // pred_check_branch
    %46 = sbr.rel (0) target = $region45
  $region44: #{transformer_relation.2} parent=0 // pred_region
    _
  $region45: #{transformer_relation.2} parent=0 // pred_fallthru
    _
  // Predicated region
  $region46: #{transformer_relation.2} parent=0 // pred_check
    _
  $region47: #{transformer_relation.2} parent=0 // pred_check_branch
    %48 = sbr.rel (0) target = $region49
  $region48: #{transformer_relation.2} parent=0 // pred_region
    _
  $region49: #{transformer_relation.2} parent=0 // pred_fallthru
    _
  // Predicated region
  $region50: #{transformer_relation.2} parent=0 // pred_check
    _
  $region51: #{transformer_relation.2} parent=0 // pred_check_branch
    %50 = sbr.rel (0) target = $region53
  $region52: #{transformer_relation.2} parent=0 // pred_region
    _
  $region53: #{transformer_relation.2} parent=0 // pred_fallthru
    _
  // Predicated region
  $region54: #{transformer_relation.2} parent=0 // pred_check
    _
  $region55: #{transformer_relation.2} parent=0 // pred_check_branch
    %52 = sbr.rel (0) target = $region57
  $region56: #{transformer_relation.2} parent=0 // pred_region
    _
  $region57: #{transformer_relation.2} parent=0 // pred_fallthru
    _
  // Predicated region
  $region58: #{transformer_relation.2} parent=0 // pred_check
    _
  $region59: #{transformer_relation.2} parent=0 // pred_check_branch
    %54 = sbr.rel (0) target = $region61
  $region60: #{transformer_relation.2} parent=0 // pred_region
    _
  $region61: #{transformer_relation.2} parent=0 // pred_fallthru
    _
  // Predicated region
  $region62: #{transformer_relation.2} parent=0 // pred_check
    _
  $region63: #{transformer_relation.2} parent=0 // pred_check_branch
    %56 = sbr.rel (0) target = $region65
  $region64: #{transformer_relation.2} parent=0 // pred_region
    _
  $region65: #{transformer_relation.2} parent=0 // pred_fallthru
    _
  // Predicated region
  $region66: #{transformer_relation.2} parent=0 // pred_check
    _
  $region67: #{transformer_relation.2} parent=0 // pred_check_branch
    %58 = sbr.rel (0) target = $region69
  $region68: #{transformer_relation.2} parent=0 // pred_region
    _
  $region69: #{transformer_relation.2} parent=0 // pred_fallthru
    _
  // Predicated region
  $region70: #{transformer_relation.2} parent=0 // pred_check
    _
  $region71: #{transformer_relation.2} parent=0 // pred_check_branch
    %60 = sbr.rel (0) target = $region73
  $region72: #{transformer_relation.2} parent=0 // pred_region
    _
  $region73: #{transformer_relation.2} parent=0 // pred_fallthru
    _
  // Predicated region
  $region74: #{transformer_relation.2} parent=0 // pred_check
    _
  $region75: #{transformer_relation.2} parent=0 // pred_check_branch
    %62 = sbr.rel (0) target = $region77
  $region76: #{transformer_relation.2} parent=0 // pred_region
    _
  $region77: #{transformer_relation.2} parent=0 // pred_fallthru
    _
  // Predicated region
  $region78: #{transformer_relation.2} parent=0 // pred_check
    _
  $region79: #{transformer_relation.2} parent=0 // pred_check_branch
    %64 = sbr.rel (0) target = $region81
  $region80: #{transformer_relation.2} parent=0 // pred_region
    _
  $region81: #{transformer_relation.2} parent=0 // pred_fallthru
    _
  %v66 = vld [vmem:[%s0] sm:$0xff]
  %v67 = vld [vmem:[%s0 + $0x8] sm:$0xff]
  %v68 = vld [vmem:[%s0 + $0x10] sm:$0xff]
  %v69 = vld [vmem:[%s0 + $0x18] sm:$0xff]
  %v70 = vld [vmem:[%s1] sm:$0x1]
  %v71 = vld [vmem:[%s1 + $0x1] sm:$0x1]
  %v72 = vld [vmem:[%s1 + $0x2] sm:$0x1]
  %v73 = vld [vmem:[%s1 + $0x3] sm:$0x1]
  %v74 = vld [vmem:[%s1 + $0x4] sm:$0x1]
  %v75 = vld [vmem:[%s1 + $0x5] sm:$0x1]
  %v76 = vld [vmem:[%s1 + $0x6] sm:$0x1]
  %v77 = vld [vmem:[%s1 + $0x7] sm:$0x1]
  %v78 = vld [vmem:[%s2] sm:$0xf]
  %v79 = vld [vmem:[%s2 + $0x4] sm:$0xf]
  %v80 = vld [vmem:[%s2 + $0x8] sm:$0xf]
  %v81 = vld [vmem:[%s2 + $0xc] sm:$0xf]
  %v82 = vld [vmem:[%s3] sm:$0xf]
  %v83 = vld [vmem:[%s3 + $0x4] sm:$0xf]
  %v84 = vld [vmem:[%s3 + $0x8] sm:$0xf]
  %v85 = vld [vmem:[%s3 + $0xc] sm:$0xf]
  %v86 = vld [vmem:[%s4] sm:$0xf]
  %v87 = vld [vmem:[%s4 + $0x4] sm:$0xf]
  %v88 = vld [vmem:[%s4 + $0x8] sm:$0xf]
  %v89 = vld [vmem:[%s4 + $0xc] sm:$0xf]
  %v90 = vld [vmem:[%s5] sm:$0x1]
  %v91 = vld [vmem:[%s6] sm:$0x1]
  %v92 = vld [vmem:[%s7] sm:$0x1]
  %v93 = vld [vmem:[%s8] sm:$0xf]
  %v94 = vld [vmem:[%s8 + $0x4] sm:$0xf]
  %v95 = vld [vmem:[%s8 + $0x8] sm:$0xf]
  %v96 = vld [vmem:[%s8 + $0xc] sm:$0xf]
  %v97 = vld [vmem:[%s9] sm:$0x1]
  %v98 = vpack.c.bf16 %v67, %v66
  %v99 = vpack.c.bf16 %v69, %v68
  %v101 = vlaneseq
  %v102 = vshrl.u32 %v101, 7
  %v103 = vsub.s32 0, %v102
  %v104 = vrot.slane %v90, %v103
  %v110 = vunpack.c.l.b16 %v78
  %v111 = vunpack.c.l.b16 %v79
  %v112 = vunpack.c.l.b16 %v80
  %v113 = vunpack.c.l.b16 %v81
  %v114 = vpack.c.b16 %v111, %v110
  %v115 = vpack.c.b16 %v113, %v112
  %vm118 = vcmask 261120
  %v120 = vsel %vm118, %v98, 0
  %v123 = vsel %vm118, %v99, 0
  %125 = vmatprep.subr.bf16.mxu0 0
  %126 = vmatpush1.bf16.msra.mxu0 0
  %127 = vmatprep.subr.bf16.mxu0 0
  %128 = vmatpush1.bf16.msra.mxu0 0
  %129 = vmatprep.subr.bf16.mxu0 0
  %130 = vmatpush1.bf16.msra.mxu0 0
  %131 = vmatprep.subr.bf16.mxu0 0
  %132 = vmatpush1.bf16.msra.mxu0 0
  %133 = vmatprep.subr.bf16.mxu0 0
  %134 = vmatpush1.bf16.msra.mxu0 0
  %135 = vmatprep.subr.bf16.mxu0 0
  %136 = vmatpush1.bf16.msra.mxu0 0
  %137 = vmatprep.subr.bf16.mxu0 0
  %138 = vmatpush1.bf16.msra.mxu0 %v115
  %139 = vmatprep.subr.bf16.mxu0 0
  %140 = vmatpush1.bf16.msra.mxu0 %v114
  %141 = vmatprep.subr.bf16.mxu0 0
  %142 = vmatpush2.bf16.msra.mxu0 0
  %143 = vmatprep.subr.bf16.mxu0 0
  %144 = vmatpush2.bf16.msra.mxu0 0
  %145 = vmatprep.subr.bf16.mxu0 0
  %146 = vmatpush2.bf16.msra.mxu0 0
  %147 = vmatprep.subr.bf16.mxu0 0
  %148 = vmatpush2.bf16.msra.mxu0 0
  %149 = vmatprep.subr.bf16.mxu0 0
  %150 = vmatpush2.bf16.msra.mxu0 0
  %151 = vmatprep.subr.bf16.mxu0 0
  %152 = vmatpush2.bf16.msra.mxu0 0
  %153 = vmatprep.subr.bf16.mxu0 0
  %154 = vmatpush2.bf16.msra.mxu0 0
  %155 = vmatprep.subr.bf16.mxu0 0
  %156 = vmatpush2.bf16.msra.mxu0 0
  %157 = vmatprep.mubr.bf16.mxu0 0
  %158 = vmatmul.mubr.bf16.gmra.mxu0 %v120
  %v159 = vpop.f32.mrf.mxu0
  %v160 = vadd.f32 %v104, %v159
  %v161 = vpop.f32.mrf.mxu0
  %v162 = vpop.f32.mrf.mxu0
  %v163 = vadd.f32 %v104, %v162
  %v164 = vpop.f32.mrf.mxu0
  %165 = vmatprep.mubr.bf16.mxu0 0
  %166 = vmatmul.mubr.bf16.gmra.mxu0 %v123
  %v167 = vpop.f32.mrf.mxu0
  %v168 = vadd.f32 %v104, %v167
  %v169 = vpop.f32.mrf.mxu0
  %v170 = vpop.f32.mrf.mxu0
  %v171 = vadd.f32 %v104, %v170
  %v172 = vpop.f32.mrf.mxu0
  %173 = vdwg.mxu0
  %v174 = vmul.f32 %v160, 0.5
  %v175 = vmul.f32 %v163, 0.5
  %v176 = vmul.f32 %v168, 0.5
  %v177 = vmul.f32 %v171, 0.5
  %v179 = vlaneseq
  %v180 = vshrl.u32 %v179, 7
  %v181 = vsub.s32 0, %v180
  %v182 = vrot.slane %v91, %v181
  %v188 = vunpack.c.l.b16 %v82
  %v189 = vunpack.c.l.b16 %v83
  %v190 = vunpack.c.l.b16 %v84
  %v191 = vunpack.c.l.b16 %v85
  %v192 = vpack.c.b16 %v189, %v188
  %v193 = vpack.c.b16 %v191, %v190
  %196 = vmatprep.subr.bf16.mxu0 0
  %197 = vmatpush1.bf16.msra.mxu0 0
  %198 = vmatprep.subr.bf16.mxu0 0
  %199 = vmatpush1.bf16.msra.mxu0 0
  %200 = vmatprep.subr.bf16.mxu0 0
  %201 = vmatpush1.bf16.msra.mxu0 0
  %202 = vmatprep.subr.bf16.mxu0 0
  %203 = vmatpush1.bf16.msra.mxu0 0
  %204 = vmatprep.subr.bf16.mxu0 0
  %205 = vmatpush1.bf16.msra.mxu0 0
  %206 = vmatprep.subr.bf16.mxu0 0
  %207 = vmatpush1.bf16.msra.mxu0 0
  %208 = vmatprep.subr.bf16.mxu0 0
  %209 = vmatpush1.bf16.msra.mxu0 %v193
  %210 = vmatprep.subr.bf16.mxu0 0
  %211 = vmatpush1.bf16.msra.mxu0 %v192
  %212 = vmatprep.subr.bf16.mxu0 0
  %213 = vmatpush2.bf16.msra.mxu0 0
  %214 = vmatprep.subr.bf16.mxu0 0
  %215 = vmatpush2.bf16.msra.mxu0 0
  %216 = vmatprep.subr.bf16.mxu0 0
  %217 = vmatpush2.bf16.msra.mxu0 0
  %218 = vmatprep.subr.bf16.mxu0 0
  %219 = vmatpush2.bf16.msra.mxu0 0
  %220 = vmatprep.subr.bf16.mxu0 0
  %221 = vmatpush2.bf16.msra.mxu0 0
  %222 = vmatprep.subr.bf16.mxu0 0
  %223 = vmatpush2.bf16.msra.mxu0 0
  %224 = vmatprep.subr.bf16.mxu0 0
  %225 = vmatpush2.bf16.msra.mxu0 0
  %226 = vmatprep.subr.bf16.mxu0 0
  %227 = vmatpush2.bf16.msra.mxu0 0
  %228 = vmatprep.mubr.bf16.mxu0 0
  %229 = vmatmul.mubr.bf16.gmra.mxu0 %v120
  %v230 = vpop.f32.mrf.mxu0
  %v231 = vadd.f32 %v182, %v230
  %v232 = vpop.f32.mrf.mxu0
  %v233 = vpop.f32.mrf.mxu0
  %v234 = vadd.f32 %v182, %v233
  %v235 = vpop.f32.mrf.mxu0
  %236 = vmatprep.mubr.bf16.mxu0 0
  %237 = vmatmul.mubr.bf16.gmra.mxu0 %v123
  %v238 = vpop.f32.mrf.mxu0
  %v239 = vadd.f32 %v182, %v238
  %v240 = vpop.f32.mrf.mxu0
  %v241 = vpop.f32.mrf.mxu0
  %v242 = vadd.f32 %v182, %v241
  %v243 = vpop.f32.mrf.mxu0
  %244 = vdwg.mxu0
  %v246 = vlaneseq
  %v247 = vshrl.u32 %v246, 7
  %v248 = vsub.s32 0, %v247
  %v249 = vrot.slane %v92, %v248
  %v255 = vunpack.c.l.b16 %v86
  %v256 = vunpack.c.l.b16 %v87
  %v257 = vunpack.c.l.b16 %v88
  %v258 = vunpack.c.l.b16 %v89
  %v259 = vpack.c.b16 %v256, %v255
  %v260 = vpack.c.b16 %v258, %v257
  %263 = vmatprep.subr.bf16.mxu0 0
  %264 = vmatpush1.bf16.msra.mxu0 0
  %265 = vmatprep.subr.bf16.mxu0 0
  %266 = vmatpush1.bf16.msra.mxu0 0
  %267 = vmatprep.subr.bf16.mxu0 0
  %268 = vmatpush1.bf16.msra.mxu0 0
  %269 = vmatprep.subr.bf16.mxu0 0
  %270 = vmatpush1.bf16.msra.mxu0 0
  %271 = vmatprep.subr.bf16.mxu0 0
  %272 = vmatpush1.bf16.msra.mxu0 0
  %273 = vmatprep.subr.bf16.mxu0 0
  %274 = vmatpush1.bf16.msra.mxu0 0
  %275 = vmatprep.subr.bf16.mxu0 0
  %276 = vmatpush1.bf16.msra.mxu0 %v260
  %277 = vmatprep.subr.bf16.mxu0 0
  %278 = vmatpush1.bf16.msra.mxu0 %v259
  %279 = vmatprep.subr.bf16.mxu0 0
  %280 = vmatpush2.bf16.msra.mxu0 0
  %281 = vmatprep.subr.bf16.mxu0 0
  %282 = vmatpush2.bf16.msra.mxu0 0
  %283 = vmatprep.subr.bf16.mxu0 0
  %284 = vmatpush2.bf16.msra.mxu0 0
  %285 = vmatprep.subr.bf16.mxu0 0
  %286 = vmatpush2.bf16.msra.mxu0 0
  %287 = vmatprep.subr.bf16.mxu0 0
  %288 = vmatpush2.bf16.msra.mxu0 0
  %289 = vmatprep.subr.bf16.mxu0 0
  %290 = vmatpush2.bf16.msra.mxu0 0
  %291 = vmatprep.subr.bf16.mxu0 0
  %292 = vmatpush2.bf16.msra.mxu0 0
  %293 = vmatprep.subr.bf16.mxu0 0
  %294 = vmatpush2.bf16.msra.mxu0 0
  %295 = vmatprep.mubr.bf16.mxu0 0
  %296 = vmatmul.mubr.bf16.gmra.mxu0 %v120
  %v297 = vpop.f32.mrf.mxu0
  %v298 = vadd.f32 %v249, %v297
  %v299 = vpop.f32.mrf.mxu0
  %v300 = vpop.f32.mrf.mxu0
  %v301 = vadd.f32 %v249, %v300
  %v302 = vpop.f32.mrf.mxu0
  %303 = vmatprep.mubr.bf16.mxu0 0
  %304 = vmatmul.mubr.bf16.gmra.mxu0 %v123
  %v305 = vpop.f32.mrf.mxu0
  %v306 = vadd.f32 %v249, %v305
  %v307 = vpop.f32.mrf.mxu0
  %v308 = vpop.f32.mrf.mxu0
  %v309 = vadd.f32 %v249, %v308
  %v310 = vpop.f32.mrf.mxu0
  %311 = vdwg.mxu0
  %v312 = vpack.c.bf16 %v175, %v174
  %v313 = vpack.c.bf16 %v177, %v176
  %v314 = vpack.c.bf16 %v234, %v231
  %v315 = vpack.c.bf16 %v242, %v239
  %v316 = vpack.c.bf16 %v301, %v298
  %v317 = vpack.c.bf16 %v309, %v306
  %v319 = vpack.i.b16 %v70, %v70
  %v321 = vlaneseq
  %v322 = vshrl.u32 %v321, 7
  %v323 = vsub.s32 0, %v322
  %v324 = vrot.slane %v319, %v323
  %v325 = vmul.bf16 %v312, %v324
  %v326 = vmul.bf16 %v313, %v324
  %v328 = vsel %vm118, %v325, 0
  %v331 = vsel %vm118, %v314, 0
  %333 = vmatprep.subr.bf16.mxu0 0
  %334 = vmatpush1.bf16.xpose.msra.mxu0 0
  %335 = vmatprep.subr.bf16.mxu0 0
  %336 = vmatpush1.bf16.xpose.msra.mxu0 0
  %337 = vmatprep.subr.bf16.mxu0 0
  %338 = vmatpush1.bf16.xpose.msra.mxu0 0
  %339 = vmatprep.subr.bf16.mxu0 0
  %340 = vmatpush1.bf16.xpose.msra.mxu0 0
  %341 = vmatprep.subr.bf16.mxu0 0
  %342 = vmatpush1.bf16.xpose.msra.mxu0 0
  %343 = vmatprep.subr.bf16.mxu0 0
  %344 = vmatpush1.bf16.xpose.msra.mxu0 0
  %345 = vmatprep.subr.bf16.mxu0 0
  %346 = vmatpush1.bf16.xpose.msra.mxu0 0
  %347 = vmatprep.subr.bf16.mxu0 0
  %348 = vmatpush1.bf16.xpose.msra.mxu0 %v331
  %349 = vmatprep.subr.bf16.mxu0 0
  %350 = vmatpush2.bf16.xpose.msra.mxu0 0
  %351 = vmatprep.subr.bf16.mxu0 0
  %352 = vmatpush2.bf16.xpose.msra.mxu0 0
  %353 = vmatprep.subr.bf16.mxu0 0
  %354 = vmatpush2.bf16.xpose.msra.mxu0 0
  %355 = vmatprep.subr.bf16.mxu0 0
  %356 = vmatpush2.bf16.xpose.msra.mxu0 0
  %357 = vmatprep.subr.bf16.mxu0 0
  %358 = vmatpush2.bf16.xpose.msra.mxu0 0
  %359 = vmatprep.subr.bf16.mxu0 0
  %360 = vmatpush2.bf16.xpose.msra.mxu0 0
  %361 = vmatprep.subr.bf16.mxu0 0
  %362 = vmatpush2.bf16.xpose.msra.mxu0 0
  %363 = vmatprep.subr.bf16.mxu0 0
  %364 = vmatpush2.bf16.xpose.msra.mxu0 0
  %365 = vmatprep.mubr.bf16.mxu0 0
  %366 = vmatmul.mubr.bf16.gmra.mxu0 %v328
  %v367 = vpop.f32.mrf.mxu0
  %v368 = vadd.f32 0.0, %v367
  %v369 = vpop.f32.mrf.mxu0
  %v370 = vpop.f32.mrf.mxu0
  %v371 = vadd.f32 0.0, %v370
  %v372 = vpop.f32.mrf.mxu0
  %373 = vdwg.mxu0
  %v375 = vsel %vm118, %v326, 0
  %v378 = vsel %vm118, %v315, 0
  %380 = vmatprep.subr.bf16.mxu0 0
  %381 = vmatpush1.bf16.xpose.msra.mxu0 0
  %382 = vmatprep.subr.bf16.mxu0 0
  %383 = vmatpush1.bf16.xpose.msra.mxu0 0
  %384 = vmatprep.subr.bf16.mxu0 0
  %385 = vmatpush1.bf16.xpose.msra.mxu0 0
  %386 = vmatprep.subr.bf16.mxu0 0
  %387 = vmatpush1.bf16.xpose.msra.mxu0 0
  %388 = vmatprep.subr.bf16.mxu0 0
  %389 = vmatpush1.bf16.xpose.msra.mxu0 0
  %390 = vmatprep.subr.bf16.mxu0 0
  %391 = vmatpush1.bf16.xpose.msra.mxu0 0
  %392 = vmatprep.subr.bf16.mxu0 0
  %393 = vmatpush1.bf16.xpose.msra.mxu0 0
  %394 = vmatprep.subr.bf16.mxu0 0
  %395 = vmatpush1.bf16.xpose.msra.mxu0 %v378
  %396 = vmatprep.subr.bf16.mxu0 0
  %397 = vmatpush2.bf16.xpose.msra.mxu0 0
  %398 = vmatprep.subr.bf16.mxu0 0
  %399 = vmatpush2.bf16.xpose.msra.mxu0 0
  %400 = vmatprep.subr.bf16.mxu0 0
  %401 = vmatpush2.bf16.xpose.msra.mxu0 0
  %402 = vmatprep.subr.bf16.mxu0 0
  %403 = vmatpush2.bf16.xpose.msra.mxu0 0
  %404 = vmatprep.subr.bf16.mxu0 0
  %405 = vmatpush2.bf16.xpose.msra.mxu0 0
  %406 = vmatprep.subr.bf16.mxu0 0
  %407 = vmatpush2.bf16.xpose.msra.mxu0 0
  %408 = vmatprep.subr.bf16.mxu0 0
  %409 = vmatpush2.bf16.xpose.msra.mxu0 0
  %410 = vmatprep.subr.bf16.mxu0 0
  %411 = vmatpush2.bf16.xpose.msra.mxu0 0
  %412 = vmatprep.mubr.bf16.mxu0 0
  %413 = vmatmul.mubr.bf16.gmra.mxu0 %v375
  %v414 = vpop.f32.mrf.mxu0
  %v415 = vadd.f32 0.0, %v414
  %v416 = vpop.f32.mrf.mxu0
  %v417 = vpop.f32.mrf.mxu0
  %v418 = vadd.f32 0.0, %v417
  %v419 = vpop.f32.mrf.mxu0
  %420 = vdwg.mxu0
  %vm421 = vcmask 130048
  %v422 = vsel %vm421, %v368, -inf
  %423 = vmax.xlane.f32.xlu0 %v422
  %v424 = vpop.xlane.xlu0 %423
  %v425 = vsel %vm421, %v371, -inf
  %426 = vmax.xlane.f32.xlu0 %v425
  %v427 = vpop.xlane.xlu0 %426
  %v428 = vsel %vm421, %v415, -inf
  %429 = vmax.xlane.f32.xlu0 %v428
  %v430 = vpop.xlane.xlu0 %429
  %v431 = vsel %vm421, %v418, -inf
  %432 = vmax.xlane.f32.xlu0 %v431
  %v433 = vpop.xlane.xlu0 %432
  %v434 = vsub.f32 %v368, %v424
  %v435 = vsub.f32 %v371, %v427
  %v436 = vsub.f32 %v415, %v430
  %v437 = vsub.f32 %v418, %v433
  %v438 = vmul.f32 %v434, 1.442695
  %v439 = vpow.pop %v438
  %v440 = vmul.f32 %v435, 1.442695
  %v441 = vpow.pop %v440
  %v442 = vmul.f32 %v436, 1.442695
  %v443 = vpow.pop %v442
  %v444 = vmul.f32 %v437, 1.442695
  %v445 = vpow.pop %v444
  %v446 = vsel %vm421, %v439, 0.0
  %447 = vadd.xlane.f32.xlu0 %v446
  %v448 = vpop.xlane.xlu0 %447
  %v449 = vsel %vm421, %v441, 0.0
  %450 = vadd.xlane.f32.xlu0 %v449
  %v451 = vpop.xlane.xlu0 %450
  %v452 = vsel %vm421, %v443, 0.0
  %453 = vadd.xlane.f32.xlu0 %v452
  %v454 = vpop.xlane.xlu0 %453
  %v455 = vsel %vm421, %v445, 0.0
  %456 = vadd.xlane.f32.xlu0 %v455
  %v457 = vpop.xlane.xlu0 %456
  %v458 = vrcp.pop %v448
  %v459 = vrcp.pop %v451
  %v460 = vrcp.pop %v454
  %v461 = vrcp.pop %v457
  %v462 = vmul.f32 %v439, %v458
  %v463 = vmul.f32 %v441, %v459
  %v464 = vmul.f32 %v443, %v460
  %v465 = vmul.f32 %v445, %v461
  %v466 = vmul.bf16 %v316, %v324
  %v467 = vmul.bf16 %v317, %v324
  %v468 = vpack.c.bf16 %v463, %v462
  %v469 = vpack.c.bf16 %v465, %v464
  %v471 = vpack.i.b16 %v71, %v71
  %v473 = vlaneseq
  %v474 = vshrl.u32 %v473, 7
  %v475 = vsub.s32 0, %v474
  %v476 = vrot.slane %v471, %v475
  %v477 = vmul.bf16 %v312, %v476
  %v478 = vmul.bf16 %v313, %v476
  %v480 = vsel %vm118, %v477, 0
  %482 = vmatprep.subr.bf16.mxu0 0
  %483 = vmatpush1.bf16.xpose.msra.mxu0 0
  %484 = vmatprep.subr.bf16.mxu0 0
  %485 = vmatpush1.bf16.xpose.msra.mxu0 0
  %486 = vmatprep.subr.bf16.mxu0 0
  %487 = vmatpush1.bf16.xpose.msra.mxu0 0
  %488 = vmatprep.subr.bf16.mxu0 0
  %489 = vmatpush1.bf16.xpose.msra.mxu0 0
  %490 = vmatprep.subr.bf16.mxu0 0
  %491 = vmatpush1.bf16.xpose.msra.mxu0 0
  %492 = vmatprep.subr.bf16.mxu0 0
  %493 = vmatpush1.bf16.xpose.msra.mxu0 0
  %494 = vmatprep.subr.bf16.mxu0 0
  %495 = vmatpush1.bf16.xpose.msra.mxu0 0
  %496 = vmatprep.subr.bf16.mxu0 0
  %497 = vmatpush1.bf16.xpose.msra.mxu0 %v331
  %498 = vmatprep.subr.bf16.mxu0 0
  %499 = vmatpush2.bf16.xpose.msra.mxu0 0
  %500 = vmatprep.subr.bf16.mxu0 0
  %501 = vmatpush2.bf16.xpose.msra.mxu0 0
  %502 = vmatprep.subr.bf16.mxu0 0
  %503 = vmatpush2.bf16.xpose.msra.mxu0 0
  %504 = vmatprep.subr.bf16.mxu0 0
  %505 = vmatpush2.bf16.xpose.msra.mxu0 0
  %506 = vmatprep.subr.bf16.mxu0 0
  %507 = vmatpush2.bf16.xpose.msra.mxu0 0
  %508 = vmatprep.subr.bf16.mxu0 0
  %509 = vmatpush2.bf16.xpose.msra.mxu0 0
  %510 = vmatprep.subr.bf16.mxu0 0
  %511 = vmatpush2.bf16.xpose.msra.mxu0 0
  %512 = vmatprep.subr.bf16.mxu0 0
  %513 = vmatpush2.bf16.xpose.msra.mxu0 0
  %514 = vmatprep.mubr.bf16.mxu0 0
  %515 = vmatmul.mubr.bf16.gmra.mxu0 %v480
  %v516 = vpop.f32.mrf.mxu0
  %v517 = vadd.f32 0.0, %v516
  %v518 = vpop.f32.mrf.mxu0
  %v519 = vpop.f32.mrf.mxu0
  %v520 = vadd.f32 0.0, %v519
  %v521 = vpop.f32.mrf.mxu0
  %522 = vdwg.mxu0
  %v524 = vsel %vm118, %v478, 0
  %526 = vmatprep.subr.bf16.mxu0 0
  %527 = vmatpush1.bf16.xpose.msra.mxu0 0
  %528 = vmatprep.subr.bf16.mxu0 0
  %529 = vmatpush1.bf16.xpose.msra.mxu0 0
  %530 = vmatprep.subr.bf16.mxu0 0
  %531 = vmatpush1.bf16.xpose.msra.mxu0 0
  %532 = vmatprep.subr.bf16.mxu0 0
  %533 = vmatpush1.bf16.xpose.msra.mxu0 0
  %534 = vmatprep.subr.bf16.mxu0 0
  %535 = vmatpush1.bf16.xpose.msra.mxu0 0
  %536 = vmatprep.subr.bf16.mxu0 0
  %537 = vmatpush1.bf16.xpose.msra.mxu0 0
  %538 = vmatprep.subr.bf16.mxu0 0
  %539 = vmatpush1.bf16.xpose.msra.mxu0 0
  %540 = vmatprep.subr.bf16.mxu0 0
  %541 = vmatpush1.bf16.xpose.msra.mxu0 %v378
  %542 = vmatprep.subr.bf16.mxu0 0
  %543 = vmatpush2.bf16.xpose.msra.mxu0 0
  %544 = vmatprep.subr.bf16.mxu0 0
  %545 = vmatpush2.bf16.xpose.msra.mxu0 0
  %546 = vmatprep.subr.bf16.mxu0 0
  %547 = vmatpush2.bf16.xpose.msra.mxu0 0
  %548 = vmatprep.subr.bf16.mxu0 0
  %549 = vmatpush2.bf16.xpose.msra.mxu0 0
  %550 = vmatprep.subr.bf16.mxu0 0
  %551 = vmatpush2.bf16.xpose.msra.mxu0 0
  %552 = vmatprep.subr.bf16.mxu0 0
  %553 = vmatpush2.bf16.xpose.msra.mxu0 0
  %554 = vmatprep.subr.bf16.mxu0 0
  %555 = vmatpush2.bf16.xpose.msra.mxu0 0
  %556 = vmatprep.subr.bf16.mxu0 0
  %557 = vmatpush2.bf16.xpose.msra.mxu0 0
  %558 = vmatprep.mubr.bf16.mxu0 0
  %559 = vmatmul.mubr.bf16.gmra.mxu0 %v524
  %v560 = vpop.f32.mrf.mxu0
  %v561 = vadd.f32 0.0, %v560
  %v562 = vpop.f32.mrf.mxu0
  %v563 = vpop.f32.mrf.mxu0
  %v564 = vadd.f32 0.0, %v563
  %v565 = vpop.f32.mrf.mxu0
  %566 = vdwg.mxu0
  %v567 = vsel %vm421, %v517, -inf
  %568 = vmax.xlane.f32.xlu0 %v567
  %v569 = vpop.xlane.xlu0 %568
  %v570 = vsel %vm421, %v520, -inf
  %571 = vmax.xlane.f32.xlu0 %v570
  %v572 = vpop.xlane.xlu0 %571
  %v573 = vsel %vm421, %v561, -inf
  %574 = vmax.xlane.f32.xlu0 %v573
  %v575 = vpop.xlane.xlu0 %574
  %v576 = vsel %vm421, %v564, -inf
  %577 = vmax.xlane.f32.xlu0 %v576
  %v578 = vpop.xlane.xlu0 %577
  %v579 = vsub.f32 %v517, %v569
  %v580 = vsub.f32 %v520, %v572
  %v581 = vsub.f32 %v561, %v575
  %v582 = vsub.f32 %v564, %v578
  %v583 = vmul.f32 %v579, 1.442695
  %v584 = vpow.pop %v583
  %v585 = vmul.f32 %v580, 1.442695
  %v586 = vpow.pop %v585
  %v587 = vmul.f32 %v581, 1.442695
  %v588 = vpow.pop %v587
  %v589 = vmul.f32 %v582, 1.442695
  %v590 = vpow.pop %v589
  %v591 = vsel %vm421, %v584, 0.0
  %592 = vadd.xlane.f32.xlu0 %v591
  %v593 = vpop.xlane.xlu0 %592
  %v594 = vsel %vm421, %v586, 0.0
  %595 = vadd.xlane.f32.xlu0 %v594
  %v596 = vpop.xlane.xlu0 %595
  %v597 = vsel %vm421, %v588, 0.0
  %598 = vadd.xlane.f32.xlu0 %v597
  %v599 = vpop.xlane.xlu0 %598
  %v600 = vsel %vm421, %v590, 0.0
  %601 = vadd.xlane.f32.xlu0 %v600
  %v602 = vpop.xlane.xlu0 %601
  %v603 = vrcp.pop %v593
  %v604 = vrcp.pop %v596
  %v605 = vrcp.pop %v599
  %v606 = vrcp.pop %v602
  %v607 = vmul.f32 %v584, %v603
  %v608 = vmul.f32 %v586, %v604
  %v609 = vmul.f32 %v588, %v605
  %v610 = vmul.f32 %v590, %v606
  %v611 = vmul.bf16 %v316, %v476
  %v612 = vmul.bf16 %v317, %v476
  %v613 = vpack.c.bf16 %v608, %v607
  %v614 = vpack.c.bf16 %v610, %v609
  %v616 = vsel %vm421, %v613, 0
  %618 = vmatprep.subr.bf16.mxu0 0
  %619 = vmatpush1.bf16.msra.mxu0 0
  %620 = vmatprep.subr.bf16.mxu0 0
  %621 = vmatpush1.bf16.msra.mxu0 0
  %622 = vmatprep.subr.bf16.mxu0 0
  %623 = vmatpush1.bf16.msra.mxu0 0
  %624 = vmatprep.subr.bf16.mxu0 0
  %625 = vmatpush1.bf16.msra.mxu0 0
  %626 = vmatprep.subr.bf16.mxu0 0
  %627 = vmatpush1.bf16.msra.mxu0 0
  %628 = vmatprep.subr.bf16.mxu0 0
  %629 = vmatpush1.bf16.msra.mxu0 0
  %630 = vmatprep.subr.bf16.mxu0 0
  %631 = vmatpush1.bf16.msra.mxu0 0
  %632 = vmatprep.subr.bf16.mxu0 0
  %633 = vmatpush1.bf16.msra.mxu0 %v611
  %634 = vmatprep.subr.bf16.mxu0 0
  %635 = vmatpush2.bf16.msra.mxu0 0
  %636 = vmatprep.subr.bf16.mxu0 0
  %637 = vmatpush2.bf16.msra.mxu0 0
  %638 = vmatprep.subr.bf16.mxu0 0
  %639 = vmatpush2.bf16.msra.mxu0 0
  %640 = vmatprep.subr.bf16.mxu0 0
  %641 = vmatpush2.bf16.msra.mxu0 0
  %642 = vmatprep.subr.bf16.mxu0 0
  %643 = vmatpush2.bf16.msra.mxu0 0
  %644 = vmatprep.subr.bf16.mxu0 0
  %645 = vmatpush2.bf16.msra.mxu0 0
  %646 = vmatprep.subr.bf16.mxu0 0
  %647 = vmatpush2.bf16.msra.mxu0 0
  %648 = vmatprep.subr.bf16.mxu0 0
  %649 = vmatpush2.bf16.msra.mxu0 0
  %650 = vmatprep.mubr.bf16.mxu0 0
  %651 = vmatmul.mubr.bf16.gmra.mxu0 %v616
  %v652 = vpop.f32.mrf.mxu0
  %v653 = vadd.f32 0.0, %v652
  %v654 = vpop.f32.mrf.mxu0
  %v655 = vpop.f32.mrf.mxu0
  %v656 = vadd.f32 0.0, %v655
  %v657 = vpop.f32.mrf.mxu0
  %658 = vdwg.mxu0
  %v660 = vsel %vm421, %v614, 0
  %662 = vmatprep.subr.bf16.mxu0 0
  %663 = vmatpush1.bf16.msra.mxu0 0
  %664 = vmatprep.subr.bf16.mxu0 0
  %665 = vmatpush1.bf16.msra.mxu0 0
  %666 = vmatprep.subr.bf16.mxu0 0
  %667 = vmatpush1.bf16.msra.mxu0 0
  %668 = vmatprep.subr.bf16.mxu0 0
  %669 = vmatpush1.bf16.msra.mxu0 0
  %670 = vmatprep.subr.bf16.mxu0 0
  %671 = vmatpush1.bf16.msra.mxu0 0
  %672 = vmatprep.subr.bf16.mxu0 0
  %673 = vmatpush1.bf16.msra.mxu0 0
  %674 = vmatprep.subr.bf16.mxu0 0
  %675 = vmatpush1.bf16.msra.mxu0 0
  %676 = vmatprep.subr.bf16.mxu0 0
  %677 = vmatpush1.bf16.msra.mxu0 %v612
  %678 = vmatprep.subr.bf16.mxu0 0
  %679 = vmatpush2.bf16.msra.mxu0 0
  %680 = vmatprep.subr.bf16.mxu0 0
  %681 = vmatpush2.bf16.msra.mxu0 0
  %682 = vmatprep.subr.bf16.mxu0 0
  %683 = vmatpush2.bf16.msra.mxu0 0
  %684 = vmatprep.subr.bf16.mxu0 0
  %685 = vmatpush2.bf16.msra.mxu0 0
  %686 = vmatprep.subr.bf16.mxu0 0
  %687 = vmatpush2.bf16.msra.mxu0 0
  %688 = vmatprep.subr.bf16.mxu0 0
  %689 = vmatpush2.bf16.msra.mxu0 0
  %690 = vmatprep.subr.bf16.mxu0 0
  %691 = vmatpush2.bf16.msra.mxu0 0
  %692 = vmatprep.subr.bf16.mxu0 0
  %693 = vmatpush2.bf16.msra.mxu0 0
  %694 = vmatprep.mubr.bf16.mxu0 0
  %695 = vmatmul.mubr.bf16.gmra.mxu0 %v660
  %v696 = vpop.f32.mrf.mxu0
  %v697 = vadd.f32 0.0, %v696
  %v698 = vpop.f32.mrf.mxu0
  %v699 = vpop.f32.mrf.mxu0
  %v700 = vadd.f32 0.0, %v699
  %v701 = vpop.f32.mrf.mxu0
  %702 = vdwg.mxu0
  %v704 = vsel %vm421, %v468, 0
  %706 = vmatprep.subr.bf16.mxu0 0
  %707 = vmatpush1.bf16.msra.mxu0 0
  %708 = vmatprep.subr.bf16.mxu0 0
  %709 = vmatpush1.bf16.msra.mxu0 0
  %710 = vmatprep.subr.bf16.mxu0 0
  %711 = vmatpush1.bf16.msra.mxu0 0
  %712 = vmatprep.subr.bf16.mxu0 0
  %713 = vmatpush1.bf16.msra.mxu0 0
  %714 = vmatprep.subr.bf16.mxu0 0
  %715 = vmatpush1.bf16.msra.mxu0 0
  %716 = vmatprep.subr.bf16.mxu0 0
  %717 = vmatpush1.bf16.msra.mxu0 0
  %718 = vmatprep.subr.bf16.mxu0 0
  %719 = vmatpush1.bf16.msra.mxu0 0
  %720 = vmatprep.subr.bf16.mxu0 0
  %721 = vmatpush1.bf16.msra.mxu0 %v466
  %722 = vmatprep.subr.bf16.mxu0 0
  %723 = vmatpush2.bf16.msra.mxu0 0
  %724 = vmatprep.subr.bf16.mxu0 0
  %725 = vmatpush2.bf16.msra.mxu0 0
  %726 = vmatprep.subr.bf16.mxu0 0
  %727 = vmatpush2.bf16.msra.mxu0 0
  %728 = vmatprep.subr.bf16.mxu0 0
  %729 = vmatpush2.bf16.msra.mxu0 0
  %730 = vmatprep.subr.bf16.mxu0 0
  %731 = vmatpush2.bf16.msra.mxu0 0
  %732 = vmatprep.subr.bf16.mxu0 0
  %733 = vmatpush2.bf16.msra.mxu0 0
  %734 = vmatprep.subr.bf16.mxu0 0
  %735 = vmatpush2.bf16.msra.mxu0 0
  %736 = vmatprep.subr.bf16.mxu0 0
  %737 = vmatpush2.bf16.msra.mxu0 0
  %738 = vmatprep.mubr.bf16.mxu0 0
  %739 = vmatmul.mubr.bf16.gmra.mxu0 %v704
  %v740 = vpop.f32.mrf.mxu0
  %v741 = vadd.f32 %v653, %v740
  %v742 = vpop.f32.mrf.mxu0
  %v743 = vpop.f32.mrf.mxu0
  %v744 = vadd.f32 %v656, %v743
  %v745 = vpop.f32.mrf.mxu0
  %746 = vdwg.mxu0
  %v748 = vsel %vm421, %v469, 0
  %750 = vmatprep.subr.bf16.mxu0 0
  %751 = vmatpush1.bf16.msra.mxu0 0
  %752 = vmatprep.subr.bf16.mxu0 0
  %753 = vmatpush1.bf16.msra.mxu0 0
  %754 = vmatprep.subr.bf16.mxu0 0
  %755 = vmatpush1.bf16.msra.mxu0 0
  %756 = vmatprep.subr.bf16.mxu0 0
  %757 = vmatpush1.bf16.msra.mxu0 0
  %758 = vmatprep.subr.bf16.mxu0 0
  %759 = vmatpush1.bf16.msra.mxu0 0
  %760 = vmatprep.subr.bf16.mxu0 0
  %761 = vmatpush1.bf16.msra.mxu0 0
  %762 = vmatprep.subr.bf16.mxu0 0
  %763 = vmatpush1.bf16.msra.mxu0 0
  %764 = vmatprep.subr.bf16.mxu0 0
  %765 = vmatpush1.bf16.msra.mxu0 %v467
  %766 = vmatprep.subr.bf16.mxu0 0
  %767 = vmatpush2.bf16.msra.mxu0 0
  %768 = vmatprep.subr.bf16.mxu0 0
  %769 = vmatpush2.bf16.msra.mxu0 0
  %770 = vmatprep.subr.bf16.mxu0 0
  %771 = vmatpush2.bf16.msra.mxu0 0
  %772 = vmatprep.subr.bf16.mxu0 0
  %773 = vmatpush2.bf16.msra.mxu0 0
  %774 = vmatprep.subr.bf16.mxu0 0
  %775 = vmatpush2.bf16.msra.mxu0 0
  %776 = vmatprep.subr.bf16.mxu0 0
  %777 = vmatpush2.bf16.msra.mxu0 0
  %778 = vmatprep.subr.bf16.mxu0 0
  %779 = vmatpush2.bf16.msra.mxu0 0
  %780 = vmatprep.subr.bf16.mxu0 0
  %781 = vmatpush2.bf16.msra.mxu0 0
  %782 = vmatprep.mubr.bf16.mxu0 0
  %783 = vmatmul.mubr.bf16.gmra.mxu0 %v748
  %v784 = vpop.f32.mrf.mxu0
  %v785 = vadd.f32 %v697, %v784
  %v786 = vpop.f32.mrf.mxu0
  %v787 = vpop.f32.mrf.mxu0
  %v788 = vadd.f32 %v700, %v787
  %v789 = vpop.f32.mrf.mxu0
  %790 = vdwg.mxu0
  %v792 = vpack.i.b16 %v72, %v72
  %v794 = vlaneseq
  %v795 = vshrl.u32 %v794, 7
  %v796 = vsub.s32 0, %v795
  %v797 = vrot.slane %v792, %v796
  %v798 = vmul.bf16 %v312, %v797
  %v799 = vmul.bf16 %v313, %v797
  %v801 = vsel %vm118, %v798, 0
  %803 = vmatprep.subr.bf16.mxu0 0
  %804 = vmatpush1.bf16.xpose.msra.mxu0 0
  %805 = vmatprep.subr.bf16.mxu0 0
  %806 = vmatpush1.bf16.xpose.msra.mxu0 0
  %807 = vmatprep.subr.bf16.mxu0 0
  %808 = vmatpush1.bf16.xpose.msra.mxu0 0
  %809 = vmatprep.subr.bf16.mxu0 0
  %810 = vmatpush1.bf16.xpose.msra.mxu0 0
  %811 = vmatprep.subr.bf16.mxu0 0
  %812 = vmatpush1.bf16.xpose.msra.mxu0 0
  %813 = vmatprep.subr.bf16.mxu0 0
  %814 = vmatpush1.bf16.xpose.msra.mxu0 0
  %815 = vmatprep.subr.bf16.mxu0 0
  %816 = vmatpush1.bf16.xpose.msra.mxu0 0
  %817 = vmatprep.subr.bf16.mxu0 0
  %818 = vmatpush1.bf16.xpose.msra.mxu0 %v331
  %819 = vmatprep.subr.bf16.mxu0 0
  %820 = vmatpush2.bf16.xpose.msra.mxu0 0
  %821 = vmatprep.subr.bf16.mxu0 0
  %822 = vmatpush2.bf16.xpose.msra.mxu0 0
  %823 = vmatprep.subr.bf16.mxu0 0
  %824 = vmatpush2.bf16.xpose.msra.mxu0 0
  %825 = vmatprep.subr.bf16.mxu0 0
  %826 = vmatpush2.bf16.xpose.msra.mxu0 0
  %827 = vmatprep.subr.bf16.mxu0 0
  %828 = vmatpush2.bf16.xpose.msra.mxu0 0
  %829 = vmatprep.subr.bf16.mxu0 0
  %830 = vmatpush2.bf16.xpose.msra.mxu0 0
  %831 = vmatprep.subr.bf16.mxu0 0
  %832 = vmatpush2.bf16.xpose.msra.mxu0 0
  %833 = vmatprep.subr.bf16.mxu0 0
  %834 = vmatpush2.bf16.xpose.msra.mxu0 0
  %835 = vmatprep.mubr.bf16.mxu0 0
  %836 = vmatmul.mubr.bf16.gmra.mxu0 %v801
  %v837 = vpop.f32.mrf.mxu0
  %v838 = vadd.f32 0.0, %v837
  %v839 = vpop.f32.mrf.mxu0
  %v840 = vpop.f32.mrf.mxu0
  %v841 = vadd.f32 0.0, %v840
  %v842 = vpop.f32.mrf.mxu0
  %843 = vdwg.mxu0
  %v845 = vsel %vm118, %v799, 0
  %847 = vmatprep.subr.bf16.mxu0 0
  %848 = vmatpush1.bf16.xpose.msra.mxu0 0
  %849 = vmatprep.subr.bf16.mxu0 0
  %850 = vmatpush1.bf16.xpose.msra.mxu0 0
  %851 = vmatprep.subr.bf16.mxu0 0
  %852 = vmatpush1.bf16.xpose.msra.mxu0 0
  %853 = vmatprep.subr.bf16.mxu0 0
  %854 = vmatpush1.bf16.xpose.msra.mxu0 0
  %855 = vmatprep.subr.bf16.mxu0 0
  %856 = vmatpush1.bf16.xpose.msra.mxu0 0
  %857 = vmatprep.subr.bf16.mxu0 0
  %858 = vmatpush1.bf16.xpose.msra.mxu0 0
  %859 = vmatprep.subr.bf16.mxu0 0
  %860 = vmatpush1.bf16.xpose.msra.mxu0 0
  %861 = vmatprep.subr.bf16.mxu0 0
  %862 = vmatpush1.bf16.xpose.msra.mxu0 %v378
  %863 = vmatprep.subr.bf16.mxu0 0
  %864 = vmatpush2.bf16.xpose.msra.mxu0 0
  %865 = vmatprep.subr.bf16.mxu0 0
  %866 = vmatpush2.bf16.xpose.msra.mxu0 0
  %867 = vmatprep.subr.bf16.mxu0 0
  %868 = vmatpush2.bf16.xpose.msra.mxu0 0
  %869 = vmatprep.subr.bf16.mxu0 0
  %870 = vmatpush2.bf16.xpose.msra.mxu0 0
  %871 = vmatprep.subr.bf16.mxu0 0
  %872 = vmatpush2.bf16.xpose.msra.mxu0 0
  %873 = vmatprep.subr.bf16.mxu0 0
  %874 = vmatpush2.bf16.xpose.msra.mxu0 0
  %875 = vmatprep.subr.bf16.mxu0 0
  %876 = vmatpush2.bf16.xpose.msra.mxu0 0
  %877 = vmatprep.subr.bf16.mxu0 0
  %878 = vmatpush2.bf16.xpose.msra.mxu0 0
  %879 = vmatprep.mubr.bf16.mxu0 0
  %880 = vmatmul.mubr.bf16.gmra.mxu0 %v845
  %v881 = vpop.f32.mrf.mxu0
  %v882 = vadd.f32 0.0, %v881
  %v883 = vpop.f32.mrf.mxu0
  %v884 = vpop.f32.mrf.mxu0
  %v885 = vadd.f32 0.0, %v884
  %v886 = vpop.f32.mrf.mxu0
  %887 = vdwg.mxu0
  %v888 = vsel %vm421, %v838, -inf
  %889 = vmax.xlane.f32.xlu0 %v888
  %v890 = vpop.xlane.xlu0 %889
  %v891 = vsel %vm421, %v841, -inf
  %892 = vmax.xlane.f32.xlu0 %v891
  %v893 = vpop.xlane.xlu0 %892
  %v894 = vsel %vm421, %v882, -inf
  %895 = vmax.xlane.f32.xlu0 %v894
  %v896 = vpop.xlane.xlu0 %895
  %v897 = vsel %vm421, %v885, -inf
  %898 = vmax.xlane.f32.xlu0 %v897
  %v899 = vpop.xlane.xlu0 %898
  %v900 = vsub.f32 %v838, %v890
  %v901 = vsub.f32 %v841, %v893
  %v902 = vsub.f32 %v882, %v896
  %v903 = vsub.f32 %v885, %v899
  %v904 = vmul.f32 %v900, 1.442695
  %v905 = vpow.pop %v904
  %v906 = vmul.f32 %v901, 1.442695
  %v907 = vpow.pop %v906
  %v908 = vmul.f32 %v902, 1.442695
  %v909 = vpow.pop %v908
  %v910 = vmul.f32 %v903, 1.442695
  %v911 = vpow.pop %v910
  %v912 = vsel %vm421, %v905, 0.0
  %913 = vadd.xlane.f32.xlu0 %v912
  %v914 = vpop.xlane.xlu0 %913
  %v915 = vsel %vm421, %v907, 0.0
  %916 = vadd.xlane.f32.xlu0 %v915
  %v917 = vpop.xlane.xlu0 %916
  %v918 = vsel %vm421, %v909, 0.0
  %919 = vadd.xlane.f32.xlu0 %v918
  %v920 = vpop.xlane.xlu0 %919
  %v921 = vsel %vm421, %v911, 0.0
  %922 = vadd.xlane.f32.xlu0 %v921
  %v923 = vpop.xlane.xlu0 %922
  %v924 = vrcp.pop %v914
  %v925 = vrcp.pop %v917
  %v926 = vrcp.pop %v920
  %v927 = vrcp.pop %v923
  %v928 = vmul.f32 %v905, %v924
  %v929 = vmul.f32 %v907, %v925
  %v930 = vmul.f32 %v909, %v926
  %v931 = vmul.f32 %v911, %v927
  %v932 = vmul.bf16 %v316, %v797
  %v933 = vmul.bf16 %v317, %v797
  %v934 = vpack.c.bf16 %v929, %v928
  %v935 = vpack.c.bf16 %v931, %v930
  %v937 = vsel %vm421, %v934, 0
  %939 = vmatprep.subr.bf16.mxu0 0
  %940 = vmatpush1.bf16.msra.mxu0 0
  %941 = vmatprep.subr.bf16.mxu0 0
  %942 = vmatpush1.bf16.msra.mxu0 0
  %943 = vmatprep.subr.bf16.mxu0 0
  %944 = vmatpush1.bf16.msra.mxu0 0
  %945 = vmatprep.subr.bf16.mxu0 0
  %946 = vmatpush1.bf16.msra.mxu0 0
  %947 = vmatprep.subr.bf16.mxu0 0
  %948 = vmatpush1.bf16.msra.mxu0 0
  %949 = vmatprep.subr.bf16.mxu0 0
  %950 = vmatpush1.bf16.msra.mxu0 0
  %951 = vmatprep.subr.bf16.mxu0 0
  %952 = vmatpush1.bf16.msra.mxu0 0
  %953 = vmatprep.subr.bf16.mxu0 0
  %954 = vmatpush1.bf16.msra.mxu0 %v932
  %955 = vmatprep.subr.bf16.mxu0 0
  %956 = vmatpush2.bf16.msra.mxu0 0
  %957 = vmatprep.subr.bf16.mxu0 0
  %958 = vmatpush2.bf16.msra.mxu0 0
  %959 = vmatprep.subr.bf16.mxu0 0
  %960 = vmatpush2.bf16.msra.mxu0 0
  %961 = vmatprep.subr.bf16.mxu0 0
  %962 = vmatpush2.bf16.msra.mxu0 0
  %963 = vmatprep.subr.bf16.mxu0 0
  %964 = vmatpush2.bf16.msra.mxu0 0
  %965 = vmatprep.subr.bf16.mxu0 0
  %966 = vmatpush2.bf16.msra.mxu0 0
  %967 = vmatprep.subr.bf16.mxu0 0
  %968 = vmatpush2.bf16.msra.mxu0 0
  %969 = vmatprep.subr.bf16.mxu0 0
  %970 = vmatpush2.bf16.msra.mxu0 0
  %971 = vmatprep.mubr.bf16.mxu0 0
  %972 = vmatmul.mubr.bf16.gmra.mxu0 %v937
  %v973 = vpop.f32.mrf.mxu0
  %v974 = vadd.f32 0.0, %v973
  %v975 = vpop.f32.mrf.mxu0
  %v976 = vpop.f32.mrf.mxu0
  %v977 = vadd.f32 0.0, %v976
  %v978 = vpop.f32.mrf.mxu0
  %979 = vdwg.mxu0
  %v981 = vsel %vm421, %v935, 0
  %983 = vmatprep.subr.bf16.mxu0 0
  %984 = vmatpush1.bf16.msra.mxu0 0
  %985 = vmatprep.subr.bf16.mxu0 0
  %986 = vmatpush1.bf16.msra.mxu0 0
  %987 = vmatprep.subr.bf16.mxu0 0
  %988 = vmatpush1.bf16.msra.mxu0 0
  %989 = vmatprep.subr.bf16.mxu0 0
  %990 = vmatpush1.bf16.msra.mxu0 0
  %991 = vmatprep.subr.bf16.mxu0 0
  %992 = vmatpush1.bf16.msra.mxu0 0
  %993 = vmatprep.subr.bf16.mxu0 0
  %994 = vmatpush1.bf16.msra.mxu0 0
  %995 = vmatprep.subr.bf16.mxu0 0
  %996 = vmatpush1.bf16.msra.mxu0 0
  %997 = vmatprep.subr.bf16.mxu0 0
  %998 = vmatpush1.bf16.msra.mxu0 %v933
  %999 = vmatprep.subr.bf16.mxu0 0
  %1000 = vmatpush2.bf16.msra.mxu0 0
  %1001 = vmatprep.subr.bf16.mxu0 0
  %1002 = vmatpush2.bf16.msra.mxu0 0
  %1003 = vmatprep.subr.bf16.mxu0 0
  %1004 = vmatpush2.bf16.msra.mxu0 0
  %1005 = vmatprep.subr.bf16.mxu0 0
  %1006 = vmatpush2.bf16.msra.mxu0 0
  %1007 = vmatprep.subr.bf16.mxu0 0
  %1008 = vmatpush2.bf16.msra.mxu0 0
  %1009 = vmatprep.subr.bf16.mxu0 0
  %1010 = vmatpush2.bf16.msra.mxu0 0
  %1011 = vmatprep.subr.bf16.mxu0 0
  %1012 = vmatpush2.bf16.msra.mxu0 0
  %1013 = vmatprep.subr.bf16.mxu0 0
  %1014 = vmatpush2.bf16.msra.mxu0 0
  %1015 = vmatprep.mubr.bf16.mxu0 0
  %1016 = vmatmul.mubr.bf16.gmra.mxu0 %v981
  %v1017 = vpop.f32.mrf.mxu0
  %v1018 = vadd.f32 0.0, %v1017
  %v1019 = vpop.f32.mrf.mxu0
  %v1020 = vpop.f32.mrf.mxu0
  %v1021 = vadd.f32 0.0, %v1020
  %v1022 = vpop.f32.mrf.mxu0
  %1023 = vdwg.mxu0
  %v1024 = vadd.f32 %v741, %v974
  %v1025 = vadd.f32 %v744, %v977
  %v1026 = vadd.f32 %v785, %v1018
  %v1027 = vadd.f32 %v788, %v1021
  %v1029 = vpack.i.b16 %v73, %v73
  %v1031 = vlaneseq
  %v1032 = vshrl.u32 %v1031, 7
  %v1033 = vsub.s32 0, %v1032
  %v1034 = vrot.slane %v1029, %v1033
  %v1035 = vmul.bf16 %v312, %v1034
  %v1036 = vmul.bf16 %v313, %v1034
  %v1038 = vsel %vm118, %v1035, 0
  %1040 = vmatprep.subr.bf16.mxu0 0
  %1041 = vmatpush1.bf16.xpose.msra.mxu0 0
  %1042 = vmatprep.subr.bf16.mxu0 0
  %1043 = vmatpush1.bf16.xpose.msra.mxu0 0
  %1044 = vmatprep.subr.bf16.mxu0 0
  %1045 = vmatpush1.bf16.xpose.msra.mxu0 0
  %1046 = vmatprep.subr.bf16.mxu0 0
  %1047 = vmatpush1.bf16.xpose.msra.mxu0 0
  %1048 = vmatprep.subr.bf16.mxu0 0
  %1049 = vmatpush1.bf16.xpose.msra.mxu0 0
  %1050 = vmatprep.subr.bf16.mxu0 0
  %1051 = vmatpush1.bf16.xpose.msra.mxu0 0
  %1052 = vmatprep.subr.bf16.mxu0 0
  %1053 = vmatpush1.bf16.xpose.msra.mxu0 0
  %1054 = vmatprep.subr.bf16.mxu0 0
  %1055 = vmatpush1.bf16.xpose.msra.mxu0 %v331
  %1056 = vmatprep.subr.bf16.mxu0 0
  %1057 = vmatpush2.bf16.xpose.msra.mxu0 0
  %1058 = vmatprep.subr.bf16.mxu0 0
  %1059 = vmatpush2.bf16.xpose.msra.mxu0 0
  %1060 = vmatprep.subr.bf16.mxu0 0
  %1061 = vmatpush2.bf16.xpose.msra.mxu0 0
  %1062 = vmatprep.subr.bf16.mxu0 0
  %1063 = vmatpush2.bf16.xpose.msra.mxu0 0
  %1064 = vmatprep.subr.bf16.mxu0 0
  %1065 = vmatpush2.bf16.xpose.msra.mxu0 0
  %1066 = vmatprep.subr.bf16.mxu0 0
  %1067 = vmatpush2.bf16.xpose.msra.mxu0 0
  %1068 = vmatprep.subr.bf16.mxu0 0
  %1069 = vmatpush2.bf16.xpose.msra.mxu0 0
  %1070 = vmatprep.subr.bf16.mxu0 0
  %1071 = vmatpush2.bf16.xpose.msra.mxu0 0
  %1072 = vmatprep.mubr.bf16.mxu0 0
  %1073 = vmatmul.mubr.bf16.gmra.mxu0 %v1038
  %v1074 = vpop.f32.mrf.mxu0
  %v1075 = vadd.f32 0.0, %v1074
  %v1076 = vpop.f32.mrf.mxu0
  %v1077 = vpop.f32.mrf.mxu0
  %v1078 = vadd.f32 0.0, %v1077
  %v1079 = vpop.f32.mrf.mxu0
  %1080 = vdwg.mxu0
  %v1082 = vsel %vm118, %v1036, 0
  %1084 = vmatprep.subr.bf16.mxu0 0
  %1085 = vmatpush1.bf16.xpose.msra.mxu0 0
  %1086 = vmatprep.subr.bf16.mxu0 0
  %1087 = vmatpush1.bf16.xpose.msra.mxu0 0
  %1088 = vmatprep.subr.bf16.mxu0 0
  %1089 = vmatpush1.bf16.xpose.msra.mxu0 0
  %1090 = vmatprep.subr.bf16.mxu0 0
  %1091 = vmatpush1.bf16.xpose.msra.mxu0 0
  %1092 = vmatprep.subr.bf16.mxu0 0
  %1093 = vmatpush1.bf16.xpose.msra.mxu0 0
  %1094 = vmatprep.subr.bf16.mxu0 0
  %1095 = vmatpush1.bf16.xpose.msra.mxu0 0
  %1096 = vmatprep.subr.bf16.mxu0 0
  %1097 = vmatpush1.bf16.xpose.msra.mxu0 0
  %1098 = vmatprep.subr.bf16.mxu0 0
  %1099 = vmatpush1.bf16.xpose.msra.mxu0 %v378
  %1100 = vmatprep.subr.bf16.mxu0 0
  %1101 = vmatpush2.bf16.xpose.msra.mxu0 0
  %1102 = vmatprep.subr.bf16.mxu0 0
  %1103 = vmatpush2.bf16.xpose.msra.mxu0 0
  %1104 = vmatprep.subr.bf16.mxu0 0
  %1105 = vmatpush2.bf16.xpose.msra.mxu0 0
  %1106 = vmatprep.subr.bf16.mxu0 0
  %1107 = vmatpush2.bf16.xpose.msra.mxu0 0
  %1108 = vmatprep.subr.bf16.mxu0 0
  %1109 = vmatpush2.bf16.xpose.msra.mxu0 0
  %1110 = vmatprep.subr.bf16.mxu0 0
  %1111 = vmatpush2.bf16.xpose.msra.mxu0 0
  %1112 = vmatprep.subr.bf16.mxu0 0
  %1113 = vmatpush2.bf16.xpose.msra.mxu0 0
  %1114 = vmatprep.subr.bf16.mxu0 0
  %1115 = vmatpush2.bf16.xpose.msra.mxu0 0
  %1116 = vmatprep.mubr.bf16.mxu0 0
  %1117 = vmatmul.mubr.bf16.gmra.mxu0 %v1082
  %v1118 = vpop.f32.mrf.mxu0
  %v1119 = vadd.f32 0.0, %v1118
  %v1120 = vpop.f32.mrf.mxu0
  %v1121 = vpop.f32.mrf.mxu0
  %v1122 = vadd.f32 0.0, %v1121
  %v1123 = vpop.f32.mrf.mxu0
  %1124 = vdwg.mxu0
  %v1125 = vsel %vm421, %v1075, -inf
  %1126 = vmax.xlane.f32.xlu0 %v1125
  %v1127 = vpop.xlane.xlu0 %1126
  %v1128 = vsel %vm421, %v1078, -inf
  %1129 = vmax.xlane.f32.xlu0 %v1128
  %v1130 = vpop.xlane.xlu0 %1129
  %v1131 = vsel %vm421, %v1119, -inf
  %1132 = vmax.xlane.f32.xlu0 %v1131
  %v1133 = vpop.xlane.xlu0 %1132
  %v1134 = vsel %vm421, %v1122, -inf
  %1135 = vmax.xlane.f32.xlu0 %v1134
  %v1136 = vpop.xlane.xlu0 %1135
  %v1137 = vsub.f32 %v1075, %v1127
  %v1138 = vsub.f32 %v1078, %v1130
  %v1139 = vsub.f32 %v1119, %v1133
  %v1140 = vsub.f32 %v1122, %v1136
  %v1141 = vmul.f32 %v1137, 1.442695
  %v1142 = vpow.pop %v1141
  %v1143 = vmul.f32 %v1138, 1.442695
  %v1144 = vpow.pop %v1143
  %v1145 = vmul.f32 %v1139, 1.442695
  %v1146 = vpow.pop %v1145
  %v1147 = vmul.f32 %v1140, 1.442695
  %v1148 = vpow.pop %v1147
  %v1149 = vsel %vm421, %v1142, 0.0
  %1150 = vadd.xlane.f32.xlu0 %v1149
  %v1151 = vpop.xlane.xlu0 %1150
  %v1152 = vsel %vm421, %v1144, 0.0
  %1153 = vadd.xlane.f32.xlu0 %v1152
  %v1154 = vpop.xlane.xlu0 %1153
  %v1155 = vsel %vm421, %v1146, 0.0
  %1156 = vadd.xlane.f32.xlu0 %v1155
  %v1157 = vpop.xlane.xlu0 %1156
  %v1158 = vsel %vm421, %v1148, 0.0
  %1159 = vadd.xlane.f32.xlu0 %v1158
  %v1160 = vpop.xlane.xlu0 %1159
  %v1161 = vrcp.pop %v1151
  %v1162 = vrcp.pop %v1154
  %v1163 = vrcp.pop %v1157
  %v1164 = vrcp.pop %v1160
  %v1165 = vmul.f32 %v1142, %v1161
  %v1166 = vmul.f32 %v1144, %v1162
  %v1167 = vmul.f32 %v1146, %v1163
  %v1168 = vmul.f32 %v1148, %v1164
  %v1169 = vmul.bf16 %v316, %v1034
  %v1170 = vmul.bf16 %v317, %v1034
  %v1171 = vpack.c.bf16 %v1166, %v1165
  %v1172 = vpack.c.bf16 %v1168, %v1167
  %v1174 = vsel %vm421, %v1171, 0
  %1176 = vmatprep.subr.bf16.mxu0 0
  %1177 = vmatpush1.bf16.msra.mxu0 0
  %1178 = vmatprep.subr.bf16.mxu0 0
  %1179 = vmatpush1.bf16.msra.mxu0 0
  %1180 = vmatprep.subr.bf16.mxu0 0
  %1181 = vmatpush1.bf16.msra.mxu0 0
  %1182 = vmatprep.subr.bf16.mxu0 0
  %1183 = vmatpush1.bf16.msra.mxu0 0
  %1184 = vmatprep.subr.bf16.mxu0 0
  %1185 = vmatpush1.bf16.msra.mxu0 0
  %1186 = vmatprep.subr.bf16.mxu0 0
  %1187 = vmatpush1.bf16.msra.mxu0 0
  %1188 = vmatprep.subr.bf16.mxu0 0
  %1189 = vmatpush1.bf16.msra.mxu0 0
  %1190 = vmatprep.subr.bf16.mxu0 0
  %1191 = vmatpush1.bf16.msra.mxu0 %v1169
  %1192 = vmatprep.subr.bf16.mxu0 0
  %1193 = vmatpush2.bf16.msra.mxu0 0
  %1194 = vmatprep.subr.bf16.mxu0 0
  %1195 = vmatpush2.bf16.msra.mxu0 0
  %1196 = vmatprep.subr.bf16.mxu0 0
  %1197 = vmatpush2.bf16.msra.mxu0 0
  %1198 = vmatprep.subr.bf16.mxu0 0
  %1199 = vmatpush2.bf16.msra.mxu0 0
  %1200 = vmatprep.subr.bf16.mxu0 0
  %1201 = vmatpush2.bf16.msra.mxu0 0
  %1202 = vmatprep.subr.bf16.mxu0 0
  %1203 = vmatpush2.bf16.msra.mxu0 0
  %1204 = vmatprep.subr.bf16.mxu0 0
  %1205 = vmatpush2.bf16.msra.mxu0 0
  %1206 = vmatprep.subr.bf16.mxu0 0
  %1207 = vmatpush2.bf16.msra.mxu0 0
  %1208 = vmatprep.mubr.bf16.mxu0 0
  %1209 = vmatmul.mubr.bf16.gmra.mxu0 %v1174
  %v1210 = vpop.f32.mrf.mxu0
  %v1211 = vadd.f32 0.0, %v1210
  %v1212 = vpop.f32.mrf.mxu0
  %v1213 = vpop.f32.mrf.mxu0
  %v1214 = vadd.f32 0.0, %v1213
  %v1215 = vpop.f32.mrf.mxu0
  %1216 = vdwg.mxu0
  %v1218 = vsel %vm421, %v1172, 0
  %1220 = vmatprep.subr.bf16.mxu0 0
  %1221 = vmatpush1.bf16.msra.mxu0 0
  %1222 = vmatprep.subr.bf16.mxu0 0
  %1223 = vmatpush1.bf16.msra.mxu0 0
  %1224 = vmatprep.subr.bf16.mxu0 0
  %1225 = vmatpush1.bf16.msra.mxu0 0
  %1226 = vmatprep.subr.bf16.mxu0 0
  %1227 = vmatpush1.bf16.msra.mxu0 0
  %1228 = vmatprep.subr.bf16.mxu0 0
  %1229 = vmatpush1.bf16.msra.mxu0 0
  %1230 = vmatprep.subr.bf16.mxu0 0
  %1231 = vmatpush1.bf16.msra.mxu0 0
  %1232 = vmatprep.subr.bf16.mxu0 0
  %1233 = vmatpush1.bf16.msra.mxu0 0
  %1234 = vmatprep.subr.bf16.mxu0 0
  %1235 = vmatpush1.bf16.msra.mxu0 %v1170
  %1236 = vmatprep.subr.bf16.mxu0 0
  %1237 = vmatpush2.bf16.msra.mxu0 0
  %1238 = vmatprep.subr.bf16.mxu0 0
  %1239 = vmatpush2.bf16.msra.mxu0 0
  %1240 = vmatprep.subr.bf16.mxu0 0
  %1241 = vmatpush2.bf16.msra.mxu0 0
  %1242 = vmatprep.subr.bf16.mxu0 0
  %1243 = vmatpush2.bf16.msra.mxu0 0
  %1244 = vmatprep.subr.bf16.mxu0 0
  %1245 = vmatpush2.bf16.msra.mxu0 0
  %1246 = vmatprep.subr.bf16.mxu0 0
  %1247 = vmatpush2.bf16.msra.mxu0 0
  %1248 = vmatprep.subr.bf16.mxu0 0
  %1249 = vmatpush2.bf16.msra.mxu0 0
  %1250 = vmatprep.subr.bf16.mxu0 0
  %1251 = vmatpush2.bf16.msra.mxu0 0
  %1252 = vmatprep.mubr.bf16.mxu0 0
  %1253 = vmatmul.mubr.bf16.gmra.mxu0 %v1218
  %v1254 = vpop.f32.mrf.mxu0
  %v1255 = vadd.f32 0.0, %v1254
  %v1256 = vpop.f32.mrf.mxu0
  %v1257 = vpop.f32.mrf.mxu0
  %v1258 = vadd.f32 0.0, %v1257
  %v1259 = vpop.f32.mrf.mxu0
  %1260 = vdwg.mxu0
  %v1261 = vadd.f32 %v1024, %v1211
  %v1262 = vadd.f32 %v1025, %v1214
  %v1263 = vadd.f32 %v1026, %v1255
  %v1264 = vadd.f32 %v1027, %v1258
  %v1266 = vpack.i.b16 %v74, %v74
  %v1268 = vlaneseq
  %v1269 = vshrl.u32 %v1268, 7
  %v1270 = vsub.s32 0, %v1269
  %v1271 = vrot.slane %v1266, %v1270
  %v1272 = vmul.bf16 %v312, %v1271
  %v1273 = vmul.bf16 %v313, %v1271
  %v1275 = vsel %vm118, %v1272, 0
  %1277 = vmatprep.subr.bf16.mxu0 0
  %1278 = vmatpush1.bf16.xpose.msra.mxu0 0
  %1279 = vmatprep.subr.bf16.mxu0 0
  %1280 = vmatpush1.bf16.xpose.msra.mxu0 0
  %1281 = vmatprep.subr.bf16.mxu0 0
  %1282 = vmatpush1.bf16.xpose.msra.mxu0 0
  %1283 = vmatprep.subr.bf16.mxu0 0
  %1284 = vmatpush1.bf16.xpose.msra.mxu0 0
  %1285 = vmatprep.subr.bf16.mxu0 0
  %1286 = vmatpush1.bf16.xpose.msra.mxu0 0
  %1287 = vmatprep.subr.bf16.mxu0 0
  %1288 = vmatpush1.bf16.xpose.msra.mxu0 0
  %1289 = vmatprep.subr.bf16.mxu0 0
  %1290 = vmatpush1.bf16.xpose.msra.mxu0 0
  %1291 = vmatprep.subr.bf16.mxu0 0
  %1292 = vmatpush1.bf16.xpose.msra.mxu0 %v331
  %1293 = vmatprep.subr.bf16.mxu0 0
  %1294 = vmatpush2.bf16.xpose.msra.mxu0 0
  %1295 = vmatprep.subr.bf16.mxu0 0
  %1296 = vmatpush2.bf16.xpose.msra.mxu0 0
  %1297 = vmatprep.subr.bf16.mxu0 0
  %1298 = vmatpush2.bf16.xpose.msra.mxu0 0
  %1299 = vmatprep.subr.bf16.mxu0 0
  %1300 = vmatpush2.bf16.xpose.msra.mxu0 0
  %1301 = vmatprep.subr.bf16.mxu0 0
  %1302 = vmatpush2.bf16.xpose.msra.mxu0 0
  %1303 = vmatprep.subr.bf16.mxu0 0
  %1304 = vmatpush2.bf16.xpose.msra.mxu0 0
  %1305 = vmatprep.subr.bf16.mxu0 0
  %1306 = vmatpush2.bf16.xpose.msra.mxu0 0
  %1307 = vmatprep.subr.bf16.mxu0 0
  %1308 = vmatpush2.bf16.xpose.msra.mxu0 0
  %1309 = vmatprep.mubr.bf16.mxu0 0
  %1310 = vmatmul.mubr.bf16.gmra.mxu0 %v1275
  %v1311 = vpop.f32.mrf.mxu0
  %v1312 = vadd.f32 0.0, %v1311
  %v1313 = vpop.f32.mrf.mxu0
  %v1314 = vpop.f32.mrf.mxu0
  %v1315 = vadd.f32 0.0, %v1314
  %v1316 = vpop.f32.mrf.mxu0
  %1317 = vdwg.mxu0
  %v1319 = vsel %vm118, %v1273, 0
  %1321 = vmatprep.subr.bf16.mxu0 0
  %1322 = vmatpush1.bf16.xpose.msra.mxu0 0
  %1323 = vmatprep.subr.bf16.mxu0 0
  %1324 = vmatpush1.bf16.xpose.msra.mxu0 0
  %1325 = vmatprep.subr.bf16.mxu0 0
  %1326 = vmatpush1.bf16.xpose.msra.mxu0 0
  %1327 = vmatprep.subr.bf16.mxu0 0
  %1328 = vmatpush1.bf16.xpose.msra.mxu0 0
  %1329 = vmatprep.subr.bf16.mxu0 0
  %1330 = vmatpush1.bf16.xpose.msra.mxu0 0
  %1331 = vmatprep.subr.bf16.mxu0 0
  %1332 = vmatpush1.bf16.xpose.msra.mxu0 0
  %1333 = vmatprep.subr.bf16.mxu0 0
  %1334 = vmatpush1.bf16.xpose.msra.mxu0 0
  %1335 = vmatprep.subr.bf16.mxu0 0
  %1336 = vmatpush1.bf16.xpose.msra.mxu0 %v378
  %1337 = vmatprep.subr.bf16.mxu0 0
  %1338 = vmatpush2.bf16.xpose.msra.mxu0 0
  %1339 = vmatprep.subr.bf16.mxu0 0
  %1340 = vmatpush2.bf16.xpose.msra.mxu0 0
  %1341 = vmatprep.subr.bf16.mxu0 0
  %1342 = vmatpush2.bf16.xpose.msra.mxu0 0
  %1343 = vmatprep.subr.bf16.mxu0 0
  %1344 = vmatpush2.bf16.xpose.msra.mxu0 0
  %1345 = vmatprep.subr.bf16.mxu0 0
  %1346 = vmatpush2.bf16.xpose.msra.mxu0 0
  %1347 = vmatprep.subr.bf16.mxu0 0
  %1348 = vmatpush2.bf16.xpose.msra.mxu0 0
  %1349 = vmatprep.subr.bf16.mxu0 0
  %1350 = vmatpush2.bf16.xpose.msra.mxu0 0
  %1351 = vmatprep.subr.bf16.mxu0 0
  %1352 = vmatpush2.bf16.xpose.msra.mxu0 0
  %1353 = vmatprep.mubr.bf16.mxu0 0
  %1354 = vmatmul.mubr.bf16.gmra.mxu0 %v1319
  %v1355 = vpop.f32.mrf.mxu0
  %v1356 = vadd.f32 0.0, %v1355
  %v1357 = vpop.f32.mrf.mxu0
  %v1358 = vpop.f32.mrf.mxu0
  %v1359 = vadd.f32 0.0, %v1358
  %v1360 = vpop.f32.mrf.mxu0
  %1361 = vdwg.mxu0
  %v1362 = vsel %vm421, %v1312, -inf
  %1363 = vmax.xlane.f32.xlu0 %v1362
  %v1364 = vpop.xlane.xlu0 %1363
  %v1365 = vsel %vm421, %v1315, -inf
  %1366 = vmax.xlane.f32.xlu0 %v1365
  %v1367 = vpop.xlane.xlu0 %1366
  %v1368 = vsel %vm421, %v1356, -inf
  %1369 = vmax.xlane.f32.xlu0 %v1368
  %v1370 = vpop.xlane.xlu0 %1369
  %v1371 = vsel %vm421, %v1359, -inf
  %1372 = vmax.xlane.f32.xlu0 %v1371
  %v1373 = vpop.xlane.xlu0 %1372
  %v1374 = vsub.f32 %v1312, %v1364
  %v1375 = vsub.f32 %v1315, %v1367
  %v1376 = vsub.f32 %v1356, %v1370
  %v1377 = vsub.f32 %v1359, %v1373
  %v1378 = vmul.f32 %v1374, 1.442695
  %v1379 = vpow.pop %v1378
  %v1380 = vmul.f32 %v1375, 1.442695
  %v1381 = vpow.pop %v1380
  %v1382 = vmul.f32 %v1376, 1.442695
  %v1383 = vpow.pop %v1382
  %v1384 = vmul.f32 %v1377, 1.442695
  %v1385 = vpow.pop %v1384
  %v1386 = vsel %vm421, %v1379, 0.0
  %1387 = vadd.xlane.f32.xlu0 %v1386
  %v1388 = vpop.xlane.xlu0 %1387
  %v1389 = vsel %vm421, %v1381, 0.0
  %1390 = vadd.xlane.f32.xlu0 %v1389
  %v1391 = vpop.xlane.xlu0 %1390
  %v1392 = vsel %vm421, %v1383, 0.0
  %1393 = vadd.xlane.f32.xlu0 %v1392
  %v1394 = vpop.xlane.xlu0 %1393
  %v1395 = vsel %vm421, %v1385, 0.0
  %1396 = vadd.xlane.f32.xlu0 %v1395
  %v1397 = vpop.xlane.xlu0 %1396
  %v1398 = vrcp.pop %v1388
  %v1399 = vrcp.pop %v1391
  %v1400 = vrcp.pop %v1394
  %v1401 = vrcp.pop %v1397
  %v1402 = vmul.f32 %v1379, %v1398
  %v1403 = vmul.f32 %v1381, %v1399
  %v1404 = vmul.f32 %v1383, %v1400
  %v1405 = vmul.f32 %v1385, %v1401
  %v1406 = vmul.bf16 %v316, %v1271
  %v1407 = vmul.bf16 %v317, %v1271
  %v1408 = vpack.c.bf16 %v1403, %v1402
  %v1409 = vpack.c.bf16 %v1405, %v1404
  %v1411 = vsel %vm421, %v1408, 0
  %1413 = vmatprep.subr.bf16.mxu0 0
  %1414 = vmatpush1.bf16.msra.mxu0 0
  %1415 = vmatprep.subr.bf16.mxu0 0
  %1416 = vmatpush1.bf16.msra.mxu0 0
  %1417 = vmatprep.subr.bf16.mxu0 0
  %1418 = vmatpush1.bf16.msra.mxu0 0
  %1419 = vmatprep.subr.bf16.mxu0 0
  %1420 = vmatpush1.bf16.msra.mxu0 0
  %1421 = vmatprep.subr.bf16.mxu0 0
  %1422 = vmatpush1.bf16.msra.mxu0 0
  %1423 = vmatprep.subr.bf16.mxu0 0
  %1424 = vmatpush1.bf16.msra.mxu0 0
  %1425 = vmatprep.subr.bf16.mxu0 0
  %1426 = vmatpush1.bf16.msra.mxu0 0
  %1427 = vmatprep.subr.bf16.mxu0 0
  %1428 = vmatpush1.bf16.msra.mxu0 %v1406
  %1429 = vmatprep.subr.bf16.mxu0 0
  %1430 = vmatpush2.bf16.msra.mxu0 0
  %1431 = vmatprep.subr.bf16.mxu0 0
  %1432 = vmatpush2.bf16.msra.mxu0 0
  %1433 = vmatprep.subr.bf16.mxu0 0
  %1434 = vmatpush2.bf16.msra.mxu0 0
  %1435 = vmatprep.subr.bf16.mxu0 0
  %1436 = vmatpush2.bf16.msra.mxu0 0
  %1437 = vmatprep.subr.bf16.mxu0 0
  %1438 = vmatpush2.bf16.msra.mxu0 0
  %1439 = vmatprep.subr.bf16.mxu0 0
  %1440 = vmatpush2.bf16.msra.mxu0 0
  %1441 = vmatprep.subr.bf16.mxu0 0
  %1442 = vmatpush2.bf16.msra.mxu0 0
  %1443 = vmatprep.subr.bf16.mxu0 0
  %1444 = vmatpush2.bf16.msra.mxu0 0
  %1445 = vmatprep.mubr.bf16.mxu0 0
  %1446 = vmatmul.mubr.bf16.gmra.mxu0 %v1411
  %v1447 = vpop.f32.mrf.mxu0
  %v1448 = vadd.f32 0.0, %v1447
  %v1449 = vpop.f32.mrf.mxu0
  %v1450 = vpop.f32.mrf.mxu0
  %v1451 = vadd.f32 0.0, %v1450
  %v1452 = vpop.f32.mrf.mxu0
  %1453 = vdwg.mxu0
  %v1455 = vsel %vm421, %v1409, 0
  %1457 = vmatprep.subr.bf16.mxu0 0
  %1458 = vmatpush1.bf16.msra.mxu0 0
  %1459 = vmatprep.subr.bf16.mxu0 0
  %1460 = vmatpush1.bf16.msra.mxu0 0
  %1461 = vmatprep.subr.bf16.mxu0 0
  %1462 = vmatpush1.bf16.msra.mxu0 0
  %1463 = vmatprep.subr.bf16.mxu0 0
  %1464 = vmatpush1.bf16.msra.mxu0 0
  %1465 = vmatprep.subr.bf16.mxu0 0
  %1466 = vmatpush1.bf16.msra.mxu0 0
  %1467 = vmatprep.subr.bf16.mxu0 0
  %1468 = vmatpush1.bf16.msra.mxu0 0
  %1469 = vmatprep.subr.bf16.mxu0 0
  %1470 = vmatpush1.bf16.msra.mxu0 0
  %1471 = vmatprep.subr.bf16.mxu0 0
  %1472 = vmatpush1.bf16.msra.mxu0 %v1407
  %1473 = vmatprep.subr.bf16.mxu0 0
  %1474 = vmatpush2.bf16.msra.mxu0 0
  %1475 = vmatprep.subr.bf16.mxu0 0
  %1476 = vmatpush2.bf16.msra.mxu0 0
  %1477 = vmatprep.subr.bf16.mxu0 0
  %1478 = vmatpush2.bf16.msra.mxu0 0
  %1479 = vmatprep.subr.bf16.mxu0 0
  %1480 = vmatpush2.bf16.msra.mxu0 0
  %1481 = vmatprep.subr.bf16.mxu0 0
  %1482 = vmatpush2.bf16.msra.mxu0 0
  %1483 = vmatprep.subr.bf16.mxu0 0
  %1484 = vmatpush2.bf16.msra.mxu0 0
  %1485 = vmatprep.subr.bf16.mxu0 0
  %1486 = vmatpush2.bf16.msra.mxu0 0
  %1487 = vmatprep.subr.bf16.mxu0 0
  %1488 = vmatpush2.bf16.msra.mxu0 0
  %1489 = vmatprep.mubr.bf16.mxu0 0
  %1490 = vmatmul.mubr.bf16.gmra.mxu0 %v1455
  %v1491 = vpop.f32.mrf.mxu0
  %v1492 = vadd.f32 0.0, %v1491
  %v1493 = vpop.f32.mrf.mxu0
  %v1494 = vpop.f32.mrf.mxu0
  %v1495 = vadd.f32 0.0, %v1494
  %v1496 = vpop.f32.mrf.mxu0
  %1497 = vdwg.mxu0
  %v1498 = vadd.f32 %v1261, %v1448
  %v1499 = vadd.f32 %v1262, %v1451
  %v1500 = vadd.f32 %v1263, %v1492
  %v1501 = vadd.f32 %v1264, %v1495
  %v1503 = vpack.i.b16 %v75, %v75
  %v1505 = vlaneseq
  %v1506 = vshrl.u32 %v1505, 7
  %v1507 = vsub.s32 0, %v1506
  %v1508 = vrot.slane %v1503, %v1507
  %v1509 = vmul.bf16 %v312, %v1508
  %v1510 = vmul.bf16 %v313, %v1508
  %v1512 = vsel %vm118, %v1509, 0
  %1514 = vmatprep.subr.bf16.mxu0 0
  %1515 = vmatpush1.bf16.xpose.msra.mxu0 0
  %1516 = vmatprep.subr.bf16.mxu0 0
  %1517 = vmatpush1.bf16.xpose.msra.mxu0 0
  %1518 = vmatprep.subr.bf16.mxu0 0
  %1519 = vmatpush1.bf16.xpose.msra.mxu0 0
  %1520 = vmatprep.subr.bf16.mxu0 0
  %1521 = vmatpush1.bf16.xpose.msra.mxu0 0
  %1522 = vmatprep.subr.bf16.mxu0 0
  %1523 = vmatpush1.bf16.xpose.msra.mxu0 0
  %1524 = vmatprep.subr.bf16.mxu0 0
  %1525 = vmatpush1.bf16.xpose.msra.mxu0 0
  %1526 = vmatprep.subr.bf16.mxu0 0
  %1527 = vmatpush1.bf16.xpose.msra.mxu0 0
  %1528 = vmatprep.subr.bf16.mxu0 0
  %1529 = vmatpush1.bf16.xpose.msra.mxu0 %v331
  %1530 = vmatprep.subr.bf16.mxu0 0
  %1531 = vmatpush2.bf16.xpose.msra.mxu0 0
  %1532 = vmatprep.subr.bf16.mxu0 0
  %1533 = vmatpush2.bf16.xpose.msra.mxu0 0
  %1534 = vmatprep.subr.bf16.mxu0 0
  %1535 = vmatpush2.bf16.xpose.msra.mxu0 0
  %1536 = vmatprep.subr.bf16.mxu0 0
  %1537 = vmatpush2.bf16.xpose.msra.mxu0 0
  %1538 = vmatprep.subr.bf16.mxu0 0
  %1539 = vmatpush2.bf16.xpose.msra.mxu0 0
  %1540 = vmatprep.subr.bf16.mxu0 0
  %1541 = vmatpush2.bf16.xpose.msra.mxu0 0
  %1542 = vmatprep.subr.bf16.mxu0 0
  %1543 = vmatpush2.bf16.xpose.msra.mxu0 0
  %1544 = vmatprep.subr.bf16.mxu0 0
  %1545 = vmatpush2.bf16.xpose.msra.mxu0 0
  %1546 = vmatprep.mubr.bf16.mxu0 0
  %1547 = vmatmul.mubr.bf16.gmra.mxu0 %v1512
  %v1548 = vpop.f32.mrf.mxu0
  %v1549 = vadd.f32 0.0, %v1548
  %v1550 = vpop.f32.mrf.mxu0
  %v1551 = vpop.f32.mrf.mxu0
  %v1552 = vadd.f32 0.0, %v1551
  %v1553 = vpop.f32.mrf.mxu0
  %1554 = vdwg.mxu0
  %v1556 = vsel %vm118, %v1510, 0
  %1558 = vmatprep.subr.bf16.mxu0 0
  %1559 = vmatpush1.bf16.xpose.msra.mxu0 0
  %1560 = vmatprep.subr.bf16.mxu0 0
  %1561 = vmatpush1.bf16.xpose.msra.mxu0 0
  %1562 = vmatprep.subr.bf16.mxu0 0
  %1563 = vmatpush1.bf16.xpose.msra.mxu0 0
  %1564 = vmatprep.subr.bf16.mxu0 0
  %1565 = vmatpush1.bf16.xpose.msra.mxu0 0
  %1566 = vmatprep.subr.bf16.mxu0 0
  %1567 = vmatpush1.bf16.xpose.msra.mxu0 0
  %1568 = vmatprep.subr.bf16.mxu0 0
  %1569 = vmatpush1.bf16.xpose.msra.mxu0 0
  %1570 = vmatprep.subr.bf16.mxu0 0
  %1571 = vmatpush1.bf16.xpose.msra.mxu0 0
  %1572 = vmatprep.subr.bf16.mxu0 0
  %1573 = vmatpush1.bf16.xpose.msra.mxu0 %v378
  %1574 = vmatprep.subr.bf16.mxu0 0
  %1575 = vmatpush2.bf16.xpose.msra.mxu0 0
  %1576 = vmatprep.subr.bf16.mxu0 0
  %1577 = vmatpush2.bf16.xpose.msra.mxu0 0
  %1578 = vmatprep.subr.bf16.mxu0 0
  %1579 = vmatpush2.bf16.xpose.msra.mxu0 0
  %1580 = vmatprep.subr.bf16.mxu0 0
  %1581 = vmatpush2.bf16.xpose.msra.mxu0 0
  %1582 = vmatprep.subr.bf16.mxu0 0
  %1583 = vmatpush2.bf16.xpose.msra.mxu0 0
  %1584 = vmatprep.subr.bf16.mxu0 0
  %1585 = vmatpush2.bf16.xpose.msra.mxu0 0
  %1586 = vmatprep.subr.bf16.mxu0 0
  %1587 = vmatpush2.bf16.xpose.msra.mxu0 0
  %1588 = vmatprep.subr.bf16.mxu0 0
  %1589 = vmatpush2.bf16.xpose.msra.mxu0 0
  %1590 = vmatprep.mubr.bf16.mxu0 0
  %1591 = vmatmul.mubr.bf16.gmra.mxu0 %v1556
  %v1592 = vpop.f32.mrf.mxu0
  %v1593 = vadd.f32 0.0, %v1592
  %v1594 = vpop.f32.mrf.mxu0
  %v1595 = vpop.f32.mrf.mxu0
  %v1596 = vadd.f32 0.0, %v1595
  %v1597 = vpop.f32.mrf.mxu0
  %1598 = vdwg.mxu0
  %v1599 = vsel %vm421, %v1549, -inf
  %1600 = vmax.xlane.f32.xlu0 %v1599
  %v1601 = vpop.xlane.xlu0 %1600
  %v1602 = vsel %vm421, %v1552, -inf
  %1603 = vmax.xlane.f32.xlu0 %v1602
  %v1604 = vpop.xlane.xlu0 %1603
  %v1605 = vsel %vm421, %v1593, -inf
  %1606 = vmax.xlane.f32.xlu0 %v1605
  %v1607 = vpop.xlane.xlu0 %1606
  %v1608 = vsel %vm421, %v1596, -inf
  %1609 = vmax.xlane.f32.xlu0 %v1608
  %v1610 = vpop.xlane.xlu0 %1609
  %v1611 = vsub.f32 %v1549, %v1601
  %v1612 = vsub.f32 %v1552, %v1604
  %v1613 = vsub.f32 %v1593, %v1607
  %v1614 = vsub.f32 %v1596, %v1610
  %v1615 = vmul.f32 %v1611, 1.442695
  %v1616 = vpow.pop %v1615
  %v1617 = vmul.f32 %v1612, 1.442695
  %v1618 = vpow.pop %v1617
  %v1619 = vmul.f32 %v1613, 1.442695
  %v1620 = vpow.pop %v1619
  %v1621 = vmul.f32 %v1614, 1.442695
  %v1622 = vpow.pop %v1621
  %v1623 = vsel %vm421, %v1616, 0.0
  %1624 = vadd.xlane.f32.xlu0 %v1623
  %v1625 = vpop.xlane.xlu0 %1624
  %v1626 = vsel %vm421, %v1618, 0.0
  %1627 = vadd.xlane.f32.xlu0 %v1626
  %v1628 = vpop.xlane.xlu0 %1627
  %v1629 = vsel %vm421, %v1620, 0.0
  %1630 = vadd.xlane.f32.xlu0 %v1629
  %v1631 = vpop.xlane.xlu0 %1630
  %v1632 = vsel %vm421, %v1622, 0.0
  %1633 = vadd.xlane.f32.xlu0 %v1632
  %v1634 = vpop.xlane.xlu0 %1633
  %v1635 = vrcp.pop %v1625
  %v1636 = vrcp.pop %v1628
  %v1637 = vrcp.pop %v1631
  %v1638 = vrcp.pop %v1634
  %v1639 = vmul.f32 %v1616, %v1635
  %v1640 = vmul.f32 %v1618, %v1636
  %v1641 = vmul.f32 %v1620, %v1637
  %v1642 = vmul.f32 %v1622, %v1638
  %v1643 = vmul.bf16 %v316, %v1508
  %v1644 = vmul.bf16 %v317, %v1508
  %v1645 = vpack.c.bf16 %v1640, %v1639
  %v1646 = vpack.c.bf16 %v1642, %v1641
  %v1648 = vsel %vm421, %v1645, 0
  %1650 = vmatprep.subr.bf16.mxu0 0
  %1651 = vmatpush1.bf16.msra.mxu0 0
  %1652 = vmatprep.subr.bf16.mxu0 0
  %1653 = vmatpush1.bf16.msra.mxu0 0
  %1654 = vmatprep.subr.bf16.mxu0 0
  %1655 = vmatpush1.bf16.msra.mxu0 0
  %1656 = vmatprep.subr.bf16.mxu0 0
  %1657 = vmatpush1.bf16.msra.mxu0 0
  %1658 = vmatprep.subr.bf16.mxu0 0
  %1659 = vmatpush1.bf16.msra.mxu0 0
  %1660 = vmatprep.subr.bf16.mxu0 0
  %1661 = vmatpush1.bf16.msra.mxu0 0
  %1662 = vmatprep.subr.bf16.mxu0 0
  %1663 = vmatpush1.bf16.msra.mxu0 0
  %1664 = vmatprep.subr.bf16.mxu0 0
  %1665 = vmatpush1.bf16.msra.mxu0 %v1643
  %1666 = vmatprep.subr.bf16.mxu0 0
  %1667 = vmatpush2.bf16.msra.mxu0 0
  %1668 = vmatprep.subr.bf16.mxu0 0
  %1669 = vmatpush2.bf16.msra.mxu0 0
  %1670 = vmatprep.subr.bf16.mxu0 0
  %1671 = vmatpush2.bf16.msra.mxu0 0
  %1672 = vmatprep.subr.bf16.mxu0 0
  %1673 = vmatpush2.bf16.msra.mxu0 0
  %1674 = vmatprep.subr.bf16.mxu0 0
  %1675 = vmatpush2.bf16.msra.mxu0 0
  %1676 = vmatprep.subr.bf16.mxu0 0
  %1677 = vmatpush2.bf16.msra.mxu0 0
  %1678 = vmatprep.subr.bf16.mxu0 0
  %1679 = vmatpush2.bf16.msra.mxu0 0
  %1680 = vmatprep.subr.bf16.mxu0 0
  %1681 = vmatpush2.bf16.msra.mxu0 0
  %1682 = vmatprep.mubr.bf16.mxu0 0
  %1683 = vmatmul.mubr.bf16.gmra.mxu0 %v1648
  %v1684 = vpop.f32.mrf.mxu0
  %v1685 = vadd.f32 0.0, %v1684
  %v1686 = vpop.f32.mrf.mxu0
  %v1687 = vpop.f32.mrf.mxu0
  %v1688 = vadd.f32 0.0, %v1687
  %v1689 = vpop.f32.mrf.mxu0
  %1690 = vdwg.mxu0
  %v1692 = vsel %vm421, %v1646, 0
  %1694 = vmatprep.subr.bf16.mxu0 0
  %1695 = vmatpush1.bf16.msra.mxu0 0
  %1696 = vmatprep.subr.bf16.mxu0 0
  %1697 = vmatpush1.bf16.msra.mxu0 0
  %1698 = vmatprep.subr.bf16.mxu0 0
  %1699 = vmatpush1.bf16.msra.mxu0 0
  %1700 = vmatprep.subr.bf16.mxu0 0
  %1701 = vmatpush1.bf16.msra.mxu0 0
  %1702 = vmatprep.subr.bf16.mxu0 0
  %1703 = vmatpush1.bf16.msra.mxu0 0
  %1704 = vmatprep.subr.bf16.mxu0 0
  %1705 = vmatpush1.bf16.msra.mxu0 0
  %1706 = vmatprep.subr.bf16.mxu0 0
  %1707 = vmatpush1.bf16.msra.mxu0 0
  %1708 = vmatprep.subr.bf16.mxu0 0
  %1709 = vmatpush1.bf16.msra.mxu0 %v1644
  %1710 = vmatprep.subr.bf16.mxu0 0
  %1711 = vmatpush2.bf16.msra.mxu0 0
  %1712 = vmatprep.subr.bf16.mxu0 0
  %1713 = vmatpush2.bf16.msra.mxu0 0
  %1714 = vmatprep.subr.bf16.mxu0 0
  %1715 = vmatpush2.bf16.msra.mxu0 0
  %1716 = vmatprep.subr.bf16.mxu0 0
  %1717 = vmatpush2.bf16.msra.mxu0 0
  %1718 = vmatprep.subr.bf16.mxu0 0
  %1719 = vmatpush2.bf16.msra.mxu0 0
  %1720 = vmatprep.subr.bf16.mxu0 0
  %1721 = vmatpush2.bf16.msra.mxu0 0
  %1722 = vmatprep.subr.bf16.mxu0 0
  %1723 = vmatpush2.bf16.msra.mxu0 0
  %1724 = vmatprep.subr.bf16.mxu0 0
  %1725 = vmatpush2.bf16.msra.mxu0 0
  %1726 = vmatprep.mubr.bf16.mxu0 0
  %1727 = vmatmul.mubr.bf16.gmra.mxu0 %v1692
  %v1728 = vpop.f32.mrf.mxu0
  %v1729 = vadd.f32 0.0, %v1728
  %v1730 = vpop.f32.mrf.mxu0
  %v1731 = vpop.f32.mrf.mxu0
  %v1732 = vadd.f32 0.0, %v1731
  %v1733 = vpop.f32.mrf.mxu0
  %1734 = vdwg.mxu0
  %v1735 = vadd.f32 %v1498, %v1685
  %v1736 = vadd.f32 %v1499, %v1688
  %v1737 = vadd.f32 %v1500, %v1729
  %v1738 = vadd.f32 %v1501, %v1732
  %v1740 = vpack.i.b16 %v76, %v76
  %v1742 = vlaneseq
  %v1743 = vshrl.u32 %v1742, 7
  %v1744 = vsub.s32 0, %v1743
  %v1745 = vrot.slane %v1740, %v1744
  %v1746 = vmul.bf16 %v312, %v1745
  %v1747 = vmul.bf16 %v313, %v1745
  %v1749 = vsel %vm118, %v1746, 0
  %1751 = vmatprep.subr.bf16.mxu0 0
  %1752 = vmatpush1.bf16.xpose.msra.mxu0 0
  %1753 = vmatprep.subr.bf16.mxu0 0
  %1754 = vmatpush1.bf16.xpose.msra.mxu0 0
  %1755 = vmatprep.subr.bf16.mxu0 0
  %1756 = vmatpush1.bf16.xpose.msra.mxu0 0
  %1757 = vmatprep.subr.bf16.mxu0 0
  %1758 = vmatpush1.bf16.xpose.msra.mxu0 0
  %1759 = vmatprep.subr.bf16.mxu0 0
  %1760 = vmatpush1.bf16.xpose.msra.mxu0 0
  %1761 = vmatprep.subr.bf16.mxu0 0
  %1762 = vmatpush1.bf16.xpose.msra.mxu0 0
  %1763 = vmatprep.subr.bf16.mxu0 0
  %1764 = vmatpush1.bf16.xpose.msra.mxu0 0
  %1765 = vmatprep.subr.bf16.mxu0 0
  %1766 = vmatpush1.bf16.xpose.msra.mxu0 %v331
  %1767 = vmatprep.subr.bf16.mxu0 0
  %1768 = vmatpush2.bf16.xpose.msra.mxu0 0
  %1769 = vmatprep.subr.bf16.mxu0 0
  %1770 = vmatpush2.bf16.xpose.msra.mxu0 0
  %1771 = vmatprep.subr.bf16.mxu0 0
  %1772 = vmatpush2.bf16.xpose.msra.mxu0 0
  %1773 = vmatprep.subr.bf16.mxu0 0
  %1774 = vmatpush2.bf16.xpose.msra.mxu0 0
  %1775 = vmatprep.subr.bf16.mxu0 0
  %1776 = vmatpush2.bf16.xpose.msra.mxu0 0
  %1777 = vmatprep.subr.bf16.mxu0 0
  %1778 = vmatpush2.bf16.xpose.msra.mxu0 0
  %1779 = vmatprep.subr.bf16.mxu0 0
  %1780 = vmatpush2.bf16.xpose.msra.mxu0 0
  %1781 = vmatprep.subr.bf16.mxu0 0
  %1782 = vmatpush2.bf16.xpose.msra.mxu0 0
  %1783 = vmatprep.mubr.bf16.mxu0 0
  %1784 = vmatmul.mubr.bf16.gmra.mxu0 %v1749
  %v1785 = vpop.f32.mrf.mxu0
  %v1786 = vadd.f32 0.0, %v1785
  %v1787 = vpop.f32.mrf.mxu0
  %v1788 = vpop.f32.mrf.mxu0
  %v1789 = vadd.f32 0.0, %v1788
  %v1790 = vpop.f32.mrf.mxu0
  %1791 = vdwg.mxu0
  %v1793 = vsel %vm118, %v1747, 0
  %1795 = vmatprep.subr.bf16.mxu0 0
  %1796 = vmatpush1.bf16.xpose.msra.mxu0 0
  %1797 = vmatprep.subr.bf16.mxu0 0
  %1798 = vmatpush1.bf16.xpose.msra.mxu0 0
  %1799 = vmatprep.subr.bf16.mxu0 0
  %1800 = vmatpush1.bf16.xpose.msra.mxu0 0
  %1801 = vmatprep.subr.bf16.mxu0 0
  %1802 = vmatpush1.bf16.xpose.msra.mxu0 0
  %1803 = vmatprep.subr.bf16.mxu0 0
  %1804 = vmatpush1.bf16.xpose.msra.mxu0 0
  %1805 = vmatprep.subr.bf16.mxu0 0
  %1806 = vmatpush1.bf16.xpose.msra.mxu0 0
  %1807 = vmatprep.subr.bf16.mxu0 0
  %1808 = vmatpush1.bf16.xpose.msra.mxu0 0
  %1809 = vmatprep.subr.bf16.mxu0 0
  %1810 = vmatpush1.bf16.xpose.msra.mxu0 %v378
  %1811 = vmatprep.subr.bf16.mxu0 0
  %1812 = vmatpush2.bf16.xpose.msra.mxu0 0
  %1813 = vmatprep.subr.bf16.mxu0 0
  %1814 = vmatpush2.bf16.xpose.msra.mxu0 0
  %1815 = vmatprep.subr.bf16.mxu0 0
  %1816 = vmatpush2.bf16.xpose.msra.mxu0 0
  %1817 = vmatprep.subr.bf16.mxu0 0
  %1818 = vmatpush2.bf16.xpose.msra.mxu0 0
  %1819 = vmatprep.subr.bf16.mxu0 0
  %1820 = vmatpush2.bf16.xpose.msra.mxu0 0
  %1821 = vmatprep.subr.bf16.mxu0 0
  %1822 = vmatpush2.bf16.xpose.msra.mxu0 0
  %1823 = vmatprep.subr.bf16.mxu0 0
  %1824 = vmatpush2.bf16.xpose.msra.mxu0 0
  %1825 = vmatprep.subr.bf16.mxu0 0
  %1826 = vmatpush2.bf16.xpose.msra.mxu0 0
  %1827 = vmatprep.mubr.bf16.mxu0 0
  %1828 = vmatmul.mubr.bf16.gmra.mxu0 %v1793
  %v1829 = vpop.f32.mrf.mxu0
  %v1830 = vadd.f32 0.0, %v1829
  %v1831 = vpop.f32.mrf.mxu0
  %v1832 = vpop.f32.mrf.mxu0
  %v1833 = vadd.f32 0.0, %v1832
  %v1834 = vpop.f32.mrf.mxu0
  %1835 = vdwg.mxu0
  %v1836 = vsel %vm421, %v1786, -inf
  %1837 = vmax.xlane.f32.xlu0 %v1836
  %v1838 = vpop.xlane.xlu0 %1837
  %v1839 = vsel %vm421, %v1789, -inf
  %1840 = vmax.xlane.f32.xlu0 %v1839
  %v1841 = vpop.xlane.xlu0 %1840
  %v1842 = vsel %vm421, %v1830, -inf
  %1843 = vmax.xlane.f32.xlu0 %v1842
  %v1844 = vpop.xlane.xlu0 %1843
  %v1845 = vsel %vm421, %v1833, -inf
  %1846 = vmax.xlane.f32.xlu0 %v1845
  %v1847 = vpop.xlane.xlu0 %1846
  %v1848 = vsub.f32 %v1786, %v1838
  %v1849 = vsub.f32 %v1789, %v1841
  %v1850 = vsub.f32 %v1830, %v1844
  %v1851 = vsub.f32 %v1833, %v1847
  %v1852 = vmul.f32 %v1848, 1.442695
  %v1853 = vpow.pop %v1852
  %v1854 = vmul.f32 %v1849, 1.442695
  %v1855 = vpow.pop %v1854
  %v1856 = vmul.f32 %v1850, 1.442695
  %v1857 = vpow.pop %v1856
  %v1858 = vmul.f32 %v1851, 1.442695
  %v1859 = vpow.pop %v1858
  %v1860 = vsel %vm421, %v1853, 0.0
  %1861 = vadd.xlane.f32.xlu0 %v1860
  %v1862 = vpop.xlane.xlu0 %1861
  %v1863 = vsel %vm421, %v1855, 0.0
  %1864 = vadd.xlane.f32.xlu0 %v1863
  %v1865 = vpop.xlane.xlu0 %1864
  %v1866 = vsel %vm421, %v1857, 0.0
  %1867 = vadd.xlane.f32.xlu0 %v1866
  %v1868 = vpop.xlane.xlu0 %1867
  %v1869 = vsel %vm421, %v1859, 0.0
  %1870 = vadd.xlane.f32.xlu0 %v1869
  %v1871 = vpop.xlane.xlu0 %1870
  %v1872 = vrcp.pop %v1862
  %v1873 = vrcp.pop %v1865
  %v1874 = vrcp.pop %v1868
  %v1875 = vrcp.pop %v1871
  %v1876 = vmul.f32 %v1853, %v1872
  %v1877 = vmul.f32 %v1855, %v1873
  %v1878 = vmul.f32 %v1857, %v1874
  %v1879 = vmul.f32 %v1859, %v1875
  %v1880 = vmul.bf16 %v316, %v1745
  %v1881 = vmul.bf16 %v317, %v1745
  %v1882 = vpack.c.bf16 %v1877, %v1876
  %v1883 = vpack.c.bf16 %v1879, %v1878
  %v1885 = vsel %vm421, %v1882, 0
  %1887 = vmatprep.subr.bf16.mxu0 0
  %1888 = vmatpush1.bf16.msra.mxu0 0
  %1889 = vmatprep.subr.bf16.mxu0 0
  %1890 = vmatpush1.bf16.msra.mxu0 0
  %1891 = vmatprep.subr.bf16.mxu0 0
  %1892 = vmatpush1.bf16.msra.mxu0 0
  %1893 = vmatprep.subr.bf16.mxu0 0
  %1894 = vmatpush1.bf16.msra.mxu0 0
  %1895 = vmatprep.subr.bf16.mxu0 0
  %1896 = vmatpush1.bf16.msra.mxu0 0
  %1897 = vmatprep.subr.bf16.mxu0 0
  %1898 = vmatpush1.bf16.msra.mxu0 0
  %1899 = vmatprep.subr.bf16.mxu0 0
  %1900 = vmatpush1.bf16.msra.mxu0 0
  %1901 = vmatprep.subr.bf16.mxu0 0
  %1902 = vmatpush1.bf16.msra.mxu0 %v1880
  %1903 = vmatprep.subr.bf16.mxu0 0
  %1904 = vmatpush2.bf16.msra.mxu0 0
  %1905 = vmatprep.subr.bf16.mxu0 0
  %1906 = vmatpush2.bf16.msra.mxu0 0
  %1907 = vmatprep.subr.bf16.mxu0 0
  %1908 = vmatpush2.bf16.msra.mxu0 0
  %1909 = vmatprep.subr.bf16.mxu0 0
  %1910 = vmatpush2.bf16.msra.mxu0 0
  %1911 = vmatprep.subr.bf16.mxu0 0
  %1912 = vmatpush2.bf16.msra.mxu0 0
  %1913 = vmatprep.subr.bf16.mxu0 0
  %1914 = vmatpush2.bf16.msra.mxu0 0
  %1915 = vmatprep.subr.bf16.mxu0 0
  %1916 = vmatpush2.bf16.msra.mxu0 0
  %1917 = vmatprep.subr.bf16.mxu0 0
  %1918 = vmatpush2.bf16.msra.mxu0 0
  %1919 = vmatprep.mubr.bf16.mxu0 0
  %1920 = vmatmul.mubr.bf16.gmra.mxu0 %v1885
  %v1921 = vpop.f32.mrf.mxu0
  %v1922 = vadd.f32 0.0, %v1921
  %v1923 = vpop.f32.mrf.mxu0
  %v1924 = vpop.f32.mrf.mxu0
  %v1925 = vadd.f32 0.0, %v1924
  %v1926 = vpop.f32.mrf.mxu0
  %1927 = vdwg.mxu0
  %v1929 = vsel %vm421, %v1883, 0
  %1931 = vmatprep.subr.bf16.mxu0 0
  %1932 = vmatpush1.bf16.msra.mxu0 0
  %1933 = vmatprep.subr.bf16.mxu0 0
  %1934 = vmatpush1.bf16.msra.mxu0 0
  %1935 = vmatprep.subr.bf16.mxu0 0
  %1936 = vmatpush1.bf16.msra.mxu0 0
  %1937 = vmatprep.subr.bf16.mxu0 0
  %1938 = vmatpush1.bf16.msra.mxu0 0
  %1939 = vmatprep.subr.bf16.mxu0 0
  %1940 = vmatpush1.bf16.msra.mxu0 0
  %1941 = vmatprep.subr.bf16.mxu0 0
  %1942 = vmatpush1.bf16.msra.mxu0 0
  %1943 = vmatprep.subr.bf16.mxu0 0
  %1944 = vmatpush1.bf16.msra.mxu0 0
  %1945 = vmatprep.subr.bf16.mxu0 0
  %1946 = vmatpush1.bf16.msra.mxu0 %v1881
  %1947 = vmatprep.subr.bf16.mxu0 0
  %1948 = vmatpush2.bf16.msra.mxu0 0
  %1949 = vmatprep.subr.bf16.mxu0 0
  %1950 = vmatpush2.bf16.msra.mxu0 0
  %1951 = vmatprep.subr.bf16.mxu0 0
  %1952 = vmatpush2.bf16.msra.mxu0 0
  %1953 = vmatprep.subr.bf16.mxu0 0
  %1954 = vmatpush2.bf16.msra.mxu0 0
  %1955 = vmatprep.subr.bf16.mxu0 0
  %1956 = vmatpush2.bf16.msra.mxu0 0
  %1957 = vmatprep.subr.bf16.mxu0 0
  %1958 = vmatpush2.bf16.msra.mxu0 0
  %1959 = vmatprep.subr.bf16.mxu0 0
  %1960 = vmatpush2.bf16.msra.mxu0 0
  %1961 = vmatprep.subr.bf16.mxu0 0
  %1962 = vmatpush2.bf16.msra.mxu0 0
  %1963 = vmatprep.mubr.bf16.mxu0 0
  %1964 = vmatmul.mubr.bf16.gmra.mxu0 %v1929
  %v1965 = vpop.f32.mrf.mxu0
  %v1966 = vadd.f32 0.0, %v1965
  %v1967 = vpop.f32.mrf.mxu0
  %v1968 = vpop.f32.mrf.mxu0
  %v1969 = vadd.f32 0.0, %v1968
  %v1970 = vpop.f32.mrf.mxu0
  %1971 = vdwg.mxu0
  %v1972 = vadd.f32 %v1735, %v1922
  %v1973 = vadd.f32 %v1736, %v1925
  %v1974 = vadd.f32 %v1737, %v1966
  %v1975 = vadd.f32 %v1738, %v1969
  %v1977 = vpack.i.b16 %v77, %v77
  %v1979 = vlaneseq
  %v1980 = vshrl.u32 %v1979, 7
  %v1981 = vsub.s32 0, %v1980
  %v1982 = vrot.slane %v1977, %v1981
  %v1983 = vmul.bf16 %v312, %v1982
  %v1984 = vmul.bf16 %v313, %v1982
  %v1986 = vsel %vm118, %v1983, 0
  %1988 = vmatprep.subr.bf16.mxu0 0
  %1989 = vmatpush1.bf16.xpose.msra.mxu0 0
  %1990 = vmatprep.subr.bf16.mxu0 0
  %1991 = vmatpush1.bf16.xpose.msra.mxu0 0
  %1992 = vmatprep.subr.bf16.mxu0 0
  %1993 = vmatpush1.bf16.xpose.msra.mxu0 0
  %1994 = vmatprep.subr.bf16.mxu0 0
  %1995 = vmatpush1.bf16.xpose.msra.mxu0 0
  %1996 = vmatprep.subr.bf16.mxu0 0
  %1997 = vmatpush1.bf16.xpose.msra.mxu0 0
  %1998 = vmatprep.subr.bf16.mxu0 0
  %1999 = vmatpush1.bf16.xpose.msra.mxu0 0
  %2000 = vmatprep.subr.bf16.mxu0 0
  %2001 = vmatpush1.bf16.xpose.msra.mxu0 0
  %2002 = vmatprep.subr.bf16.mxu0 0
  %2003 = vmatpush1.bf16.xpose.msra.mxu0 %v331
  %2004 = vmatprep.subr.bf16.mxu0 0
  %2005 = vmatpush2.bf16.xpose.msra.mxu0 0
  %2006 = vmatprep.subr.bf16.mxu0 0
  %2007 = vmatpush2.bf16.xpose.msra.mxu0 0
  %2008 = vmatprep.subr.bf16.mxu0 0
  %2009 = vmatpush2.bf16.xpose.msra.mxu0 0
  %2010 = vmatprep.subr.bf16.mxu0 0
  %2011 = vmatpush2.bf16.xpose.msra.mxu0 0
  %2012 = vmatprep.subr.bf16.mxu0 0
  %2013 = vmatpush2.bf16.xpose.msra.mxu0 0
  %2014 = vmatprep.subr.bf16.mxu0 0
  %2015 = vmatpush2.bf16.xpose.msra.mxu0 0
  %2016 = vmatprep.subr.bf16.mxu0 0
  %2017 = vmatpush2.bf16.xpose.msra.mxu0 0
  %2018 = vmatprep.subr.bf16.mxu0 0
  %2019 = vmatpush2.bf16.xpose.msra.mxu0 0
  %2020 = vmatprep.mubr.bf16.mxu0 0
  %2021 = vmatmul.mubr.bf16.gmra.mxu0 %v1986
  %v2022 = vpop.f32.mrf.mxu0
  %v2023 = vadd.f32 0.0, %v2022
  %v2024 = vpop.f32.mrf.mxu0
  %v2025 = vpop.f32.mrf.mxu0
  %v2026 = vadd.f32 0.0, %v2025
  %v2027 = vpop.f32.mrf.mxu0
  %2028 = vdwg.mxu0
  %v2030 = vsel %vm118, %v1984, 0
  %2032 = vmatprep.subr.bf16.mxu0 0
  %2033 = vmatpush1.bf16.xpose.msra.mxu0 0
  %2034 = vmatprep.subr.bf16.mxu0 0
  %2035 = vmatpush1.bf16.xpose.msra.mxu0 0
  %2036 = vmatprep.subr.bf16.mxu0 0
  %2037 = vmatpush1.bf16.xpose.msra.mxu0 0
  %2038 = vmatprep.subr.bf16.mxu0 0
  %2039 = vmatpush1.bf16.xpose.msra.mxu0 0
  %2040 = vmatprep.subr.bf16.mxu0 0
  %2041 = vmatpush1.bf16.xpose.msra.mxu0 0
  %2042 = vmatprep.subr.bf16.mxu0 0
  %2043 = vmatpush1.bf16.xpose.msra.mxu0 0
  %2044 = vmatprep.subr.bf16.mxu0 0
  %2045 = vmatpush1.bf16.xpose.msra.mxu0 0
  %2046 = vmatprep.subr.bf16.mxu0 0
  %2047 = vmatpush1.bf16.xpose.msra.mxu0 %v378
  %2048 = vmatprep.subr.bf16.mxu0 0
  %2049 = vmatpush2.bf16.xpose.msra.mxu0 0
  %2050 = vmatprep.subr.bf16.mxu0 0
  %2051 = vmatpush2.bf16.xpose.msra.mxu0 0
  %2052 = vmatprep.subr.bf16.mxu0 0
  %2053 = vmatpush2.bf16.xpose.msra.mxu0 0
  %2054 = vmatprep.subr.bf16.mxu0 0
  %2055 = vmatpush2.bf16.xpose.msra.mxu0 0
  %2056 = vmatprep.subr.bf16.mxu0 0
  %2057 = vmatpush2.bf16.xpose.msra.mxu0 0
  %2058 = vmatprep.subr.bf16.mxu0 0
  %2059 = vmatpush2.bf16.xpose.msra.mxu0 0
  %2060 = vmatprep.subr.bf16.mxu0 0
  %2061 = vmatpush2.bf16.xpose.msra.mxu0 0
  %2062 = vmatprep.subr.bf16.mxu0 0
  %2063 = vmatpush2.bf16.xpose.msra.mxu0 0
  %2064 = vmatprep.mubr.bf16.mxu0 0
  %2065 = vmatmul.mubr.bf16.gmra.mxu0 %v2030
  %v2066 = vpop.f32.mrf.mxu0
  %v2067 = vadd.f32 0.0, %v2066
  %v2068 = vpop.f32.mrf.mxu0
  %v2069 = vpop.f32.mrf.mxu0
  %v2070 = vadd.f32 0.0, %v2069
  %v2071 = vpop.f32.mrf.mxu0
  %2072 = vdwg.mxu0
  %v2073 = vsel %vm421, %v2023, -inf
  %2074 = vmax.xlane.f32.xlu0 %v2073
  %v2075 = vpop.xlane.xlu0 %2074
  %v2076 = vsel %vm421, %v2026, -inf
  %2077 = vmax.xlane.f32.xlu0 %v2076
  %v2078 = vpop.xlane.xlu0 %2077
  %v2079 = vsel %vm421, %v2067, -inf
  %2080 = vmax.xlane.f32.xlu0 %v2079
  %v2081 = vpop.xlane.xlu0 %2080
  %v2082 = vsel %vm421, %v2070, -inf
  %2083 = vmax.xlane.f32.xlu0 %v2082
  %v2084 = vpop.xlane.xlu0 %2083
  %v2085 = vsub.f32 %v2023, %v2075
  %v2086 = vsub.f32 %v2026, %v2078
  %v2087 = vsub.f32 %v2067, %v2081
  %v2088 = vsub.f32 %v2070, %v2084
  %v2089 = vmul.f32 %v2085, 1.442695
  %v2090 = vpow.pop %v2089
  %v2091 = vmul.f32 %v2086, 1.442695
  %v2092 = vpow.pop %v2091
  %v2093 = vmul.f32 %v2087, 1.442695
  %v2094 = vpow.pop %v2093
  %v2095 = vmul.f32 %v2088, 1.442695
  %v2096 = vpow.pop %v2095
  %v2097 = vsel %vm421, %v2090, 0.0
  %2098 = vadd.xlane.f32.xlu0 %v2097
  %v2099 = vpop.xlane.xlu0 %2098
  %v2100 = vsel %vm421, %v2092, 0.0
  %2101 = vadd.xlane.f32.xlu0 %v2100
  %v2102 = vpop.xlane.xlu0 %2101
  %v2103 = vsel %vm421, %v2094, 0.0
  %2104 = vadd.xlane.f32.xlu0 %v2103
  %v2105 = vpop.xlane.xlu0 %2104
  %v2106 = vsel %vm421, %v2096, 0.0
  %2107 = vadd.xlane.f32.xlu0 %v2106
  %v2108 = vpop.xlane.xlu0 %2107
  %v2109 = vrcp.pop %v2099
  %v2110 = vrcp.pop %v2102
  %v2111 = vrcp.pop %v2105
  %v2112 = vrcp.pop %v2108
  %v2113 = vmul.f32 %v2090, %v2109
  %v2114 = vmul.f32 %v2092, %v2110
  %v2115 = vmul.f32 %v2094, %v2111
  %v2116 = vmul.f32 %v2096, %v2112
  %v2117 = vmul.bf16 %v316, %v1982
  %v2118 = vmul.bf16 %v317, %v1982
  %v2119 = vpack.c.bf16 %v2114, %v2113
  %v2120 = vpack.c.bf16 %v2116, %v2115
  %v2122 = vsel %vm421, %v2119, 0
  %2124 = vmatprep.subr.bf16.mxu0 0
  %2125 = vmatpush1.bf16.msra.mxu0 0
  %2126 = vmatprep.subr.bf16.mxu0 0
  %2127 = vmatpush1.bf16.msra.mxu0 0
  %2128 = vmatprep.subr.bf16.mxu0 0
  %2129 = vmatpush1.bf16.msra.mxu0 0
  %2130 = vmatprep.subr.bf16.mxu0 0
  %2131 = vmatpush1.bf16.msra.mxu0 0
  %2132 = vmatprep.subr.bf16.mxu0 0
  %2133 = vmatpush1.bf16.msra.mxu0 0
  %2134 = vmatprep.subr.bf16.mxu0 0
  %2135 = vmatpush1.bf16.msra.mxu0 0
  %2136 = vmatprep.subr.bf16.mxu0 0
  %2137 = vmatpush1.bf16.msra.mxu0 0
  %2138 = vmatprep.subr.bf16.mxu0 0
  %2139 = vmatpush1.bf16.msra.mxu0 %v2117
  %2140 = vmatprep.subr.bf16.mxu0 0
  %2141 = vmatpush2.bf16.msra.mxu0 0
  %2142 = vmatprep.subr.bf16.mxu0 0
  %2143 = vmatpush2.bf16.msra.mxu0 0
  %2144 = vmatprep.subr.bf16.mxu0 0
  %2145 = vmatpush2.bf16.msra.mxu0 0
  %2146 = vmatprep.subr.bf16.mxu0 0
  %2147 = vmatpush2.bf16.msra.mxu0 0
  %2148 = vmatprep.subr.bf16.mxu0 0
  %2149 = vmatpush2.bf16.msra.mxu0 0
  %2150 = vmatprep.subr.bf16.mxu0 0
  %2151 = vmatpush2.bf16.msra.mxu0 0
  %2152 = vmatprep.subr.bf16.mxu0 0
  %2153 = vmatpush2.bf16.msra.mxu0 0
  %2154 = vmatprep.subr.bf16.mxu0 0
  %2155 = vmatpush2.bf16.msra.mxu0 0
  %2156 = vmatprep.mubr.bf16.mxu0 0
  %2157 = vmatmul.mubr.bf16.gmra.mxu0 %v2122
  %v2158 = vpop.f32.mrf.mxu0
  %v2159 = vadd.f32 0.0, %v2158
  %v2160 = vpop.f32.mrf.mxu0
  %v2161 = vpop.f32.mrf.mxu0
  %v2162 = vadd.f32 0.0, %v2161
  %v2163 = vpop.f32.mrf.mxu0
  %2164 = vdwg.mxu0
  %v2166 = vsel %vm421, %v2120, 0
  %2168 = vmatprep.subr.bf16.mxu0 0
  %2169 = vmatpush1.bf16.msra.mxu0 0
  %2170 = vmatprep.subr.bf16.mxu0 0
  %2171 = vmatpush1.bf16.msra.mxu0 0
  %2172 = vmatprep.subr.bf16.mxu0 0
  %2173 = vmatpush1.bf16.msra.mxu0 0
  %2174 = vmatprep.subr.bf16.mxu0 0
  %2175 = vmatpush1.bf16.msra.mxu0 0
  %2176 = vmatprep.subr.bf16.mxu0 0
  %2177 = vmatpush1.bf16.msra.mxu0 0
  %2178 = vmatprep.subr.bf16.mxu0 0
  %2179 = vmatpush1.bf16.msra.mxu0 0
  %2180 = vmatprep.subr.bf16.mxu0 0
  %2181 = vmatpush1.bf16.msra.mxu0 0
  %2182 = vmatprep.subr.bf16.mxu0 0
  %2183 = vmatpush1.bf16.msra.mxu0 %v2118
  %2184 = vmatprep.subr.bf16.mxu0 0
  %2185 = vmatpush2.bf16.msra.mxu0 0
  %2186 = vmatprep.subr.bf16.mxu0 0
  %2187 = vmatpush2.bf16.msra.mxu0 0
  %2188 = vmatprep.subr.bf16.mxu0 0
  %2189 = vmatpush2.bf16.msra.mxu0 0
  %2190 = vmatprep.subr.bf16.mxu0 0
  %2191 = vmatpush2.bf16.msra.mxu0 0
  %2192 = vmatprep.subr.bf16.mxu0 0
  %2193 = vmatpush2.bf16.msra.mxu0 0
  %2194 = vmatprep.subr.bf16.mxu0 0
  %2195 = vmatpush2.bf16.msra.mxu0 0
  %2196 = vmatprep.subr.bf16.mxu0 0
  %2197 = vmatpush2.bf16.msra.mxu0 0
  %2198 = vmatprep.subr.bf16.mxu0 0
  %2199 = vmatpush2.bf16.msra.mxu0 0
  %2200 = vmatprep.mubr.bf16.mxu0 0
  %2201 = vmatmul.mubr.bf16.gmra.mxu0 %v2166
  %v2202 = vpop.f32.mrf.mxu0
  %v2203 = vadd.f32 0.0, %v2202
  %v2204 = vpop.f32.mrf.mxu0
  %v2205 = vpop.f32.mrf.mxu0
  %v2206 = vadd.f32 0.0, %v2205
  %v2207 = vpop.f32.mrf.mxu0
  %2208 = vdwg.mxu0
  %v2209 = vadd.f32 %v1972, %v2159
  %v2210 = vadd.f32 %v1973, %v2162
  %v2211 = vadd.f32 %v1974, %v2203
  %v2212 = vadd.f32 %v1975, %v2206
  %v2213 = vpack.c.bf16 %v2210, %v2209
  %v2214 = vpack.c.bf16 %v2212, %v2211
  %v2216 = vlaneseq
  %v2217 = vshrl.u32 %v2216, 7
  %v2218 = vsub.s32 0, %v2217
  %v2219 = vrot.slane %v97, %v2218
  %v2225 = vunpack.c.l.b16 %v93
  %v2226 = vunpack.c.l.b16 %v94
  %v2227 = vunpack.c.l.b16 %v95
  %v2228 = vunpack.c.l.b16 %v96
  %v2229 = vpack.c.b16 %v2226, %v2225
  %v2230 = vpack.c.b16 %v2228, %v2227
  %v2234 = vsel %vm118, %v2213, 0
  %v2237 = vsel %vm118, %v2214, 0
  %2239 = vmatprep.subr.bf16.mxu0 0
  %2240 = vmatpush1.bf16.msra.mxu0 0
  %2241 = vmatprep.subr.bf16.mxu0 0
  %2242 = vmatpush1.bf16.msra.mxu0 0
  %2243 = vmatprep.subr.bf16.mxu0 0
  %2244 = vmatpush1.bf16.msra.mxu0 0
  %2245 = vmatprep.subr.bf16.mxu0 0
  %2246 = vmatpush1.bf16.msra.mxu0 0
  %2247 = vmatprep.subr.bf16.mxu0 0
  %2248 = vmatpush1.bf16.msra.mxu0 0
  %2249 = vmatprep.subr.bf16.mxu0 0
  %2250 = vmatpush1.bf16.msra.mxu0 0
  %2251 = vmatprep.subr.bf16.mxu0 0
  %2252 = vmatpush1.bf16.msra.mxu0 %v2230
  %2253 = vmatprep.subr.bf16.mxu0 0
  %2254 = vmatpush1.bf16.msra.mxu0 %v2229
  %2255 = vmatprep.subr.bf16.mxu0 0
  %2256 = vmatpush2.bf16.msra.mxu0 0
  %2257 = vmatprep.subr.bf16.mxu0 0
  %2258 = vmatpush2.bf16.msra.mxu0 0
  %2259 = vmatprep.subr.bf16.mxu0 0
  %2260 = vmatpush2.bf16.msra.mxu0 0
  %2261 = vmatprep.subr.bf16.mxu0 0
  %2262 = vmatpush2.bf16.msra.mxu0 0
  %2263 = vmatprep.subr.bf16.mxu0 0
  %2264 = vmatpush2.bf16.msra.mxu0 0
  %2265 = vmatprep.subr.bf16.mxu0 0
  %2266 = vmatpush2.bf16.msra.mxu0 0
  %2267 = vmatprep.subr.bf16.mxu0 0
  %2268 = vmatpush2.bf16.msra.mxu0 0
  %2269 = vmatprep.subr.bf16.mxu0 0
  %2270 = vmatpush2.bf16.msra.mxu0 0
  %2271 = vmatprep.mubr.bf16.mxu0 0
  %2272 = vmatmul.mubr.bf16.gmra.mxu0 %v2234
  %v2273 = vpop.f32.mrf.mxu0
  %v2274 = vadd.f32 %v2219, %v2273
  %v2275 = vpop.f32.mrf.mxu0
  %v2276 = vpop.f32.mrf.mxu0
  %v2277 = vadd.f32 %v2219, %v2276
  %v2278 = vpop.f32.mrf.mxu0
  %2279 = vmatprep.mubr.bf16.mxu0 0
  %2280 = vmatmul.mubr.bf16.gmra.mxu0 %v2237
  %v2281 = vpop.f32.mrf.mxu0
  %v2282 = vadd.f32 %v2219, %v2281
  %v2283 = vpop.f32.mrf.mxu0
  %v2284 = vpop.f32.mrf.mxu0
  %v2285 = vadd.f32 %v2219, %v2284
  %v2286 = vpop.f32.mrf.mxu0
  %2287 = vdwg.mxu0
  %v2288 = vadd.f32 %v66, %v2274
  %v2289 = vadd.f32 %v67, %v2277
  %v2290 = vadd.f32 %v68, %v2282
  %v2291 = vadd.f32 %v69, %v2285
  %v2292 = vld [vmem:[%s10] sm:$0x1]
  %v2293 = vld [vmem:[%s11] sm:$0x1]
  %v2294 = vsel %vm118, %v2288, 0.0
  %2295 = vadd.xlane.f32.xlu0 %v2294
  %v2296 = vpop.xlane.xlu0 %2295
  %v2297 = vsel %vm118, %v2289, 0.0
  %2298 = vadd.xlane.f32.xlu0 %v2297
  %v2299 = vpop.xlane.xlu0 %2298
  %v2300 = vsel %vm118, %v2290, 0.0
  %2301 = vadd.xlane.f32.xlu0 %v2300
  %v2302 = vpop.xlane.xlu0 %2301
  %v2303 = vsel %vm118, %v2291, 0.0
  %2304 = vadd.xlane.f32.xlu0 %v2303
  %v2305 = vpop.xlane.xlu0 %2304
  %v2306 = vrcp.pop 32.0
  %v2307 = vmul.f32 %v2296, %v2306
  %v2308 = vmul.f32 %v2299, %v2306
  %v2309 = vmul.f32 %v2302, %v2306
  %v2310 = vmul.f32 %v2305, %v2306
  %v2311 = vsub.f32 %v2288, %v2307
  %v2312 = vsub.f32 %v2289, %v2308
  %v2313 = vsub.f32 %v2290, %v2309
  %v2314 = vsub.f32 %v2291, %v2310
  %v2315 = vmul.f32 %v2311, %v2311
  %v2316 = vmul.f32 %v2312, %v2312
  %v2317 = vmul.f32 %v2313, %v2313
  %v2318 = vmul.f32 %v2314, %v2314
  %v2319 = vsel %vm118, %v2315, 0.0
  %2320 = vadd.xlane.f32.xlu0 %v2319
  %v2321 = vpop.xlane.xlu0 %2320
  %v2322 = vsel %vm118, %v2316, 0.0
  %2323 = vadd.xlane.f32.xlu0 %v2322
  %v2324 = vpop.xlane.xlu0 %2323
  %v2325 = vsel %vm118, %v2317, 0.0
  %2326 = vadd.xlane.f32.xlu0 %v2325
  %v2327 = vpop.xlane.xlu0 %2326
  %v2328 = vsel %vm118, %v2318, 0.0
  %2329 = vadd.xlane.f32.xlu0 %v2328
  %v2330 = vpop.xlane.xlu0 %2329
  %v2331 = vmul.f32 %v2321, %v2306
  %v2332 = vmul.f32 %v2324, %v2306
  %v2333 = vmul.f32 %v2327, %v2306
  %v2334 = vmul.f32 %v2330, %v2306
  %v2335 = vadd.f32 %v2331, 1e-05
  %v2336 = vadd.f32 %v2332, 1e-05
  %v2337 = vadd.f32 %v2333, 1e-05
  %v2338 = vadd.f32 %v2334, 1e-05
  %v2339 = vrsqrt.pop %v2335
  %v2340 = vrsqrt.pop %v2336
  %v2341 = vrsqrt.pop %v2337
  %v2342 = vrsqrt.pop %v2338
  %v2343 = vmul.f32 %v2311, %v2339
  %v2344 = vmul.f32 %v2312, %v2340
  %v2345 = vmul.f32 %v2313, %v2341
  %v2346 = vmul.f32 %v2314, %v2342
  %v2348 = vlaneseq
  %v2349 = vshrl.u32 %v2348, 7
  %v2350 = vsub.s32 0, %v2349
  %v2351 = vrot.slane %v2292, %v2350
  %v2353 = vmul.f32 %v2343, %v2351
  %v2354 = vmul.f32 %v2344, %v2351
  %v2355 = vmul.f32 %v2345, %v2351
  %v2356 = vmul.f32 %v2346, %v2351
  %v2358 = vlaneseq
  %v2359 = vshrl.u32 %v2358, 7
  %v2360 = vsub.s32 0, %v2359
  %v2361 = vrot.slane %v2293, %v2360
  %v2363 = vadd.f32 %v2353, %v2361
  %v2364 = vadd.f32 %v2354, %v2361
  %v2365 = vadd.f32 %v2355, %v2361
  %v2366 = vadd.f32 %v2356, %v2361
  %v2367 = vld [vmem:[%s12] sm:$0xf]
  %v2368 = vld [vmem:[%s12 + $0x4] sm:$0xf]
  %v2369 = vld [vmem:[%s12 + $0x8] sm:$0xf]
  %v2370 = vld [vmem:[%s12 + $0xc] sm:$0xf]
  %v2371 = vld [vmem:[%s13] sm:$0x1]
  %v2372 = vld [vmem:[%s14] sm:$0xf]
  %v2373 = vld [vmem:[%s14 + $0x4] sm:$0xf]
  %v2374 = vld [vmem:[%s14 + $0x8] sm:$0xf]
  %v2375 = vld [vmem:[%s14 + $0xc] sm:$0xf]
  %v2376 = vld [vmem:[%s15] sm:$0x1]
  %v2377 = vpack.c.bf16 %v2364, %v2363
  %v2378 = vpack.c.bf16 %v2366, %v2365
  %v2380 = vlaneseq
  %v2381 = vshrl.u32 %v2380, 7
  %v2382 = vsub.s32 0, %v2381
  %v2383 = vrot.slane %v2371, %v2382
  %v2389 = vunpack.c.l.b16 %v2367
  %v2390 = vunpack.c.l.b16 %v2368
  %v2391 = vunpack.c.l.b16 %v2369
  %v2392 = vunpack.c.l.b16 %v2370
  %v2393 = vpack.c.b16 %v2390, %v2389
  %v2394 = vpack.c.b16 %v2392, %v2391
  %v2398 = vsel %vm118, %v2377, 0
  %v2401 = vsel %vm118, %v2378, 0
  %2403 = vmatprep.subr.bf16.mxu0 0
  %2404 = vmatpush1.bf16.msra.mxu0 0
  %2405 = vmatprep.subr.bf16.mxu0 0
  %2406 = vmatpush1.bf16.msra.mxu0 0
  %2407 = vmatprep.subr.bf16.mxu0 0
  %2408 = vmatpush1.bf16.msra.mxu0 0
  %2409 = vmatprep.subr.bf16.mxu0 0
  %2410 = vmatpush1.bf16.msra.mxu0 0
  %2411 = vmatprep.subr.bf16.mxu0 0
  %2412 = vmatpush1.bf16.msra.mxu0 0
  %2413 = vmatprep.subr.bf16.mxu0 0
  %2414 = vmatpush1.bf16.msra.mxu0 0
  %2415 = vmatprep.subr.bf16.mxu0 0
  %2416 = vmatpush1.bf16.msra.mxu0 %v2394
  %2417 = vmatprep.subr.bf16.mxu0 0
  %2418 = vmatpush1.bf16.msra.mxu0 %v2393
  %2419 = vmatprep.subr.bf16.mxu0 0
  %2420 = vmatpush2.bf16.msra.mxu0 0
  %2421 = vmatprep.subr.bf16.mxu0 0
  %2422 = vmatpush2.bf16.msra.mxu0 0
  %2423 = vmatprep.subr.bf16.mxu0 0
  %2424 = vmatpush2.bf16.msra.mxu0 0
  %2425 = vmatprep.subr.bf16.mxu0 0
  %2426 = vmatpush2.bf16.msra.mxu0 0
  %2427 = vmatprep.subr.bf16.mxu0 0
  %2428 = vmatpush2.bf16.msra.mxu0 0
  %2429 = vmatprep.subr.bf16.mxu0 0
  %2430 = vmatpush2.bf16.msra.mxu0 0
  %2431 = vmatprep.subr.bf16.mxu0 0
  %2432 = vmatpush2.bf16.msra.mxu0 0
  %2433 = vmatprep.subr.bf16.mxu0 0
  %2434 = vmatpush2.bf16.msra.mxu0 0
  %2435 = vmatprep.mubr.bf16.mxu0 0
  %2436 = vmatmul.mubr.bf16.gmra.mxu0 %v2398
  %v2437 = vpop.f32.mrf.mxu0
  %v2438 = vadd.f32 %v2383, %v2437
  %v2439 = vpop.f32.mrf.mxu0
  %v2440 = vpop.f32.mrf.mxu0
  %v2441 = vadd.f32 %v2383, %v2440
  %v2442 = vpop.f32.mrf.mxu0
  %2443 = vmatprep.mubr.bf16.mxu0 0
  %2444 = vmatmul.mubr.bf16.gmra.mxu0 %v2401
  %v2445 = vpop.f32.mrf.mxu0
  %v2446 = vadd.f32 %v2383, %v2445
  %v2447 = vpop.f32.mrf.mxu0
  %v2448 = vpop.f32.mrf.mxu0
  %v2449 = vadd.f32 %v2383, %v2448
  %v2450 = vpop.f32.mrf.mxu0
  %2451 = vdwg.mxu0
  %v2452 = vmax.f32 %v2438, 0.0
  %v2453 = vmax.f32 %v2441, 0.0
  %v2454 = vmax.f32 %v2446, 0.0
  %v2455 = vmax.f32 %v2449, 0.0
  %v2456 = vpack.c.bf16 %v2453, %v2452
  %v2457 = vpack.c.bf16 %v2455, %v2454
  %v2459 = vlaneseq
  %v2460 = vshrl.u32 %v2459, 7
  %v2461 = vsub.s32 0, %v2460
  %v2462 = vrot.slane %v2376, %v2461
  %v2468 = vunpack.c.l.b16 %v2372
  %v2469 = vunpack.c.l.b16 %v2373
  %v2470 = vunpack.c.l.b16 %v2374
  %v2471 = vunpack.c.l.b16 %v2375
  %v2472 = vpack.c.b16 %v2469, %v2468
  %v2473 = vpack.c.b16 %v2471, %v2470
  %v2477 = vsel %vm118, %v2456, 0
  %v2480 = vsel %vm118, %v2457, 0
  %2482 = vmatprep.subr.bf16.mxu0 0
  %2483 = vmatpush1.bf16.msra.mxu0 0
  %2484 = vmatprep.subr.bf16.mxu0 0
  %2485 = vmatpush1.bf16.msra.mxu0 0
  %2486 = vmatprep.subr.bf16.mxu0 0
  %2487 = vmatpush1.bf16.msra.mxu0 0
  %2488 = vmatprep.subr.bf16.mxu0 0
  %2489 = vmatpush1.bf16.msra.mxu0 0
  %2490 = vmatprep.subr.bf16.mxu0 0
  %2491 = vmatpush1.bf16.msra.mxu0 0
  %2492 = vmatprep.subr.bf16.mxu0 0
  %2493 = vmatpush1.bf16.msra.mxu0 0
  %2494 = vmatprep.subr.bf16.mxu0 0
  %2495 = vmatpush1.bf16.msra.mxu0 %v2473
  %2496 = vmatprep.subr.bf16.mxu0 0
  %2497 = vmatpush1.bf16.msra.mxu0 %v2472
  %2498 = vmatprep.subr.bf16.mxu0 0
  %2499 = vmatpush2.bf16.msra.mxu0 0
  %2500 = vmatprep.subr.bf16.mxu0 0
  %2501 = vmatpush2.bf16.msra.mxu0 0
  %2502 = vmatprep.subr.bf16.mxu0 0
  %2503 = vmatpush2.bf16.msra.mxu0 0
  %2504 = vmatprep.subr.bf16.mxu0 0
  %2505 = vmatpush2.bf16.msra.mxu0 0
  %2506 = vmatprep.subr.bf16.mxu0 0
  %2507 = vmatpush2.bf16.msra.mxu0 0
  %2508 = vmatprep.subr.bf16.mxu0 0
  %2509 = vmatpush2.bf16.msra.mxu0 0
  %2510 = vmatprep.subr.bf16.mxu0 0
  %2511 = vmatpush2.bf16.msra.mxu0 0
  %2512 = vmatprep.subr.bf16.mxu0 0
  %2513 = vmatpush2.bf16.msra.mxu0 0
  %2514 = vmatprep.mubr.bf16.mxu0 0
  %2515 = vmatmul.mubr.bf16.gmra.mxu0 %v2477
  %v2516 = vpop.f32.mrf.mxu0
  %v2517 = vadd.f32 %v2462, %v2516
  %v2518 = vpop.f32.mrf.mxu0
  %v2519 = vpop.f32.mrf.mxu0
  %v2520 = vadd.f32 %v2462, %v2519
  %v2521 = vpop.f32.mrf.mxu0
  %2522 = vmatprep.mubr.bf16.mxu0 0
  %2523 = vmatmul.mubr.bf16.gmra.mxu0 %v2480
  %v2524 = vpop.f32.mrf.mxu0
  %v2525 = vadd.f32 %v2462, %v2524
  %v2526 = vpop.f32.mrf.mxu0
  %v2527 = vpop.f32.mrf.mxu0
  %v2528 = vadd.f32 %v2462, %v2527
  %v2529 = vpop.f32.mrf.mxu0
  %2530 = vdwg.mxu0
  %v2531 = vadd.f32 %v2363, %v2517
  %v2532 = vadd.f32 %v2364, %v2520
  %v2533 = vadd.f32 %v2365, %v2525
  %v2534 = vadd.f32 %v2366, %v2528
  %v2535 = vld [vmem:[%s16] sm:$0x1]
  %v2536 = vld [vmem:[%s17] sm:$0x1]
  %v2537 = vsel %vm118, %v2531, 0.0
  %2538 = vadd.xlane.f32.xlu0 %v2537
  %v2539 = vpop.xlane.xlu0 %2538
  %v2540 = vsel %vm118, %v2532, 0.0
  %2541 = vadd.xlane.f32.xlu0 %v2540
  %v2542 = vpop.xlane.xlu0 %2541
  %v2543 = vsel %vm118, %v2533, 0.0
  %2544 = vadd.xlane.f32.xlu0 %v2543
  %v2545 = vpop.xlane.xlu0 %2544
  %v2546 = vsel %vm118, %v2534, 0.0
  %2547 = vadd.xlane.f32.xlu0 %v2546
  %v2548 = vpop.xlane.xlu0 %2547
  %v2549 = vmul.f32 %v2539, %v2306
  %v2550 = vmul.f32 %v2542, %v2306
  %v2551 = vmul.f32 %v2545, %v2306
  %v2552 = vmul.f32 %v2548, %v2306
  %v2553 = vsub.f32 %v2531, %v2549
  %v2554 = vsub.f32 %v2532, %v2550
  %v2555 = vsub.f32 %v2533, %v2551
  %v2556 = vsub.f32 %v2534, %v2552
  %v2557 = vmul.f32 %v2553, %v2553
  %v2558 = vmul.f32 %v2554, %v2554
  %v2559 = vmul.f32 %v2555, %v2555
  %v2560 = vmul.f32 %v2556, %v2556
  %v2561 = vsel %vm118, %v2557, 0.0
  %2562 = vadd.xlane.f32.xlu0 %v2561
  %v2563 = vpop.xlane.xlu0 %2562
  %v2564 = vsel %vm118, %v2558, 0.0
  %2565 = vadd.xlane.f32.xlu0 %v2564
  %v2566 = vpop.xlane.xlu0 %2565
  %v2567 = vsel %vm118, %v2559, 0.0
  %2568 = vadd.xlane.f32.xlu0 %v2567
  %v2569 = vpop.xlane.xlu0 %2568
  %v2570 = vsel %vm118, %v2560, 0.0
  %2571 = vadd.xlane.f32.xlu0 %v2570
  %v2572 = vpop.xlane.xlu0 %2571
  %v2573 = vmul.f32 %v2563, %v2306
  %v2574 = vmul.f32 %v2566, %v2306
  %v2575 = vmul.f32 %v2569, %v2306
  %v2576 = vmul.f32 %v2572, %v2306
  %v2577 = vadd.f32 %v2573, 1e-05
  %v2578 = vadd.f32 %v2574, 1e-05
  %v2579 = vadd.f32 %v2575, 1e-05
  %v2580 = vadd.f32 %v2576, 1e-05
  %v2581 = vrsqrt.pop %v2577
  %v2582 = vrsqrt.pop %v2578
  %v2583 = vrsqrt.pop %v2579
  %v2584 = vrsqrt.pop %v2580
  %v2585 = vmul.f32 %v2553, %v2581
  %v2586 = vmul.f32 %v2554, %v2582
  %v2587 = vmul.f32 %v2555, %v2583
  %v2588 = vmul.f32 %v2556, %v2584
  %v2590 = vlaneseq
  %v2591 = vshrl.u32 %v2590, 7
  %v2592 = vsub.s32 0, %v2591
  %v2593 = vrot.slane %v2535, %v2592
  %v2595 = vmul.f32 %v2585, %v2593
  %v2596 = vmul.f32 %v2586, %v2593
  %v2597 = vmul.f32 %v2587, %v2593
  %v2598 = vmul.f32 %v2588, %v2593
  %v2600 = vlaneseq
  %v2601 = vshrl.u32 %v2600, 7
  %v2602 = vsub.s32 0, %v2601
  %v2603 = vrot.slane %v2536, %v2602
  %v2605 = vadd.f32 %v2595, %v2603
  %v2606 = vadd.f32 %v2596, %v2603
  %v2607 = vadd.f32 %v2597, %v2603
  %v2608 = vadd.f32 %v2598, %v2603
  %v2609 = vld [vmem:[%s18] sm:$0x1]
  %v2610 = vld [vmem:[%s19] sm:$0x1]
  %v2611 = vsel %vm118, %v2605, 0.0
  %2612 = vadd.xlane.f32.xlu0 %v2611
  %v2613 = vpop.xlane.xlu0 %2612
  %v2614 = vsel %vm118, %v2606, 0.0
  %2615 = vadd.xlane.f32.xlu0 %v2614
  %v2616 = vpop.xlane.xlu0 %2615
  %v2617 = vsel %vm118, %v2607, 0.0
  %2618 = vadd.xlane.f32.xlu0 %v2617
  %v2619 = vpop.xlane.xlu0 %2618
  %v2620 = vsel %vm118, %v2608, 0.0
  %2621 = vadd.xlane.f32.xlu0 %v2620
  %v2622 = vpop.xlane.xlu0 %2621
  %v2623 = vmul.f32 %v2613, %v2306
  %v2624 = vmul.f32 %v2616, %v2306
  %v2625 = vmul.f32 %v2619, %v2306
  %v2626 = vmul.f32 %v2622, %v2306
  %v2627 = vsub.f32 %v2605, %v2623
  %v2628 = vsub.f32 %v2606, %v2624
  %v2629 = vsub.f32 %v2607, %v2625
  %v2630 = vsub.f32 %v2608, %v2626
  %v2631 = vmul.f32 %v2627, %v2627
  %v2632 = vmul.f32 %v2628, %v2628
  %v2633 = vmul.f32 %v2629, %v2629
  %v2634 = vmul.f32 %v2630, %v2630
  %v2635 = vsel %vm118, %v2631, 0.0
  %2636 = vadd.xlane.f32.xlu0 %v2635
  %v2637 = vpop.xlane.xlu0 %2636
  %v2638 = vsel %vm118, %v2632, 0.0
  %2639 = vadd.xlane.f32.xlu0 %v2638
  %v2640 = vpop.xlane.xlu0 %2639
  %v2641 = vsel %vm118, %v2633, 0.0
  %2642 = vadd.xlane.f32.xlu0 %v2641
  %v2643 = vpop.xlane.xlu0 %2642
  %v2644 = vsel %vm118, %v2634, 0.0
  %2645 = vadd.xlane.f32.xlu0 %v2644
  %v2646 = vpop.xlane.xlu0 %2645
  %v2647 = vmul.f32 %v2637, %v2306
  %v2648 = vmul.f32 %v2640, %v2306
  %v2649 = vmul.f32 %v2643, %v2306
  %v2650 = vmul.f32 %v2646, %v2306
  %v2651 = vadd.f32 %v2647, 1e-05
  %v2652 = vadd.f32 %v2648, 1e-05
  %v2653 = vadd.f32 %v2649, 1e-05
  %v2654 = vadd.f32 %v2650, 1e-05
  %v2655 = vrsqrt.pop %v2651
  %v2656 = vrsqrt.pop %v2652
  %v2657 = vrsqrt.pop %v2653
  %v2658 = vrsqrt.pop %v2654
  %v2659 = vmul.f32 %v2627, %v2655
  %v2660 = vmul.f32 %v2628, %v2656
  %v2661 = vmul.f32 %v2629, %v2657
  %v2662 = vmul.f32 %v2630, %v2658
  %v2664 = vlaneseq
  %v2665 = vshrl.u32 %v2664, 7
  %v2666 = vsub.s32 0, %v2665
  %v2667 = vrot.slane %v2609, %v2666
  %v2669 = vmul.f32 %v2659, %v2667
  %v2670 = vmul.f32 %v2660, %v2667
  %v2671 = vmul.f32 %v2661, %v2667
  %v2672 = vmul.f32 %v2662, %v2667
  %v2674 = vlaneseq
  %v2675 = vshrl.u32 %v2674, 7
  %v2676 = vsub.s32 0, %v2675
  %v2677 = vrot.slane %v2610, %v2676
  %v2679 = vadd.f32 %v2669, %v2677
  %v2680 = vadd.f32 %v2670, %v2677
  %v2681 = vadd.f32 %v2671, %v2677
  %v2682 = vadd.f32 %v2672, %v2677
  %2683 = vst.msk [vmem:[%s20] sm:$0xff] %vm118, %v2679
  %2684 = vst.msk [vmem:[%s20 + $0x8] sm:$0xff] %vm118, %v2680
  %2685 = vst.msk [vmem:[%s20 + $0x10] sm:$0xff] %vm118, %v2681
  %2686 = vst.msk [vmem:[%s20 + $0x18] sm:$0xff] %vm118, %v2682
  // Predicated region
  $region82: #{transformer_relation.2} parent=0 // pred_check
    _
  $region83: #{transformer_relation.2} parent=0 // pred_check_branch
    %2688 = sbr.rel (0) target = $region85
  $region84: #{transformer_relation.2} parent=0 // pred_region
    _
  $region85: #{transformer_relation.2} parent=0 // pred_fallthru
    _
  // Predicated region
  $region86: #{transformer_relation.2} parent=0 // pred_check
    _
  $region87: #{transformer_relation.2} parent=0 // pred_check_branch
    %2690 = sbr.rel (0) target = $region89
  $region88: #{transformer_relation.2} parent=0 // pred_region
    _
  $region89: #{transformer_relation.2} parent=0 // pred_fallthru
    _

// kernel: transformer_relation.3
$region0: #{transformer_relation.3}
  #allocation0 [shape = 'u32[]', space=smem, size = 0x4, offset = 0x4, fixed_abs, tag = 'smem constant byte address 0x4 - core index']
  #allocation1 [shape = 'u32[144,128]{1,0:T(1,128)}', space=vmem, size = 0x12000, scoped, tag = 'internal scratch']
  %s0 = inlined_call_operand.smem [shape: u32[32], index: -1, kind: input, shape index: {}]
  %s1 = sld [smem:[%s0]]
  %s2 = scalar_lea.smem %s0, 1
  %s3 = sld [smem:[%s2]]
  %s4 = scalar_lea.smem %s0, 2
  %s5 = sld [smem:[%s4]]
  %s6 = scalar_lea.smem %s0, 3
  %s7 = sld [smem:[%s6]]
  %s8 = scalar_lea.smem %s0, 4
  %s9 = sld [smem:[%s8]]
  %s10 = scalar_lea.smem %s0, 5
  %s11 = sld [smem:[%s10]]
  %s12 = scalar_lea.smem %s0, 6
  %s13 = sld [smem:[%s12]]
  %s14 = scalar_lea.smem %s0, 7
  %s15 = sld [smem:[%s14]]
  %s16 = scalar_lea.smem %s0, 8
  %s17 = sld [smem:[%s16]]
  %s18 = scalar_lea.smem %s0, 9
  %s19 = sld [smem:[%s18]]
  %s20 = scalar_lea.smem %s0, 10
  %s21 = sld [smem:[%s20]]
  %s22 = scalar_lea.smem %s0, 11
  %s23 = sld [smem:[%s22]]
  %s24 = scalar_lea.smem %s0, 12
  %s25 = sld [smem:[%s24]]
  %s26 = scalar_lea.smem %s0, 13
  %s27 = sld [smem:[%s26]]
  %s28 = scalar_lea.smem %s0, 14
  %s29 = sld [smem:[%s28]]
  %s30 = scalar_lea.smem %s0, 15
  %s31 = sld [smem:[%s30]]
  %s32 = scalar_lea.smem %s0, 16
  %s33 = sld [smem:[%s32]]
  %s34 = scalar_lea.smem %s0, 17
  %s35 = sld [smem:[%s34]]
  %s36 = scalar_lea.smem %s0, 18
  %s37 = sld [smem:[%s36]]
  %s38 = scalar_lea.smem %s0, 19
  %s39 = sld [smem:[%s38]]
  %s40 = scalar_lea.smem %s0, 20
  %s41 = sld [smem:[%s40]]
  %s42 = scalar_lea.smem %s0, 21
  %s43 = sld [smem:[%s42]]
  %s44 = scalar_lea.smem %s0, 22
  %s45 = sld [smem:[%s44]]
  %s46 = scalar_lea.smem %s0, 23
  %s47 = sld [smem:[%s46]]
  %s48 = scalar_lea.smem %s0, 24
  %s49 = sld [smem:[%s48]]
  %s50 = scalar_lea.smem %s0, 25
  %s51 = sld [smem:[%s50]]
  %s52 = scalar_lea.smem %s0, 26
  %s53 = sld [smem:[%s52]]
  %s54 = scalar_lea.smem %s0, 27
  %s55 = sld [smem:[%s54]]
  %s56 = scalar_lea.smem %s0, 28
  %s57 = sld [smem:[%s56]]
  %s58 = scalar_lea.smem %s0, 29
  %s59 = sld [smem:[%s58]]
  %s60 = scalar_lea.smem %s0, 30
  %s61 = sld [smem:[%s60]]
  %s62 = scalar_lea.smem %s0, 31
  %s63 = sld [smem:[%s62]]
  %s64 = sld [smem:[#allocation0]]
  $region134: #{transformer_relation.3} parent=0
    _
  %s66 = ssub.s32 1, %s64
  %s67 = scalar_select 0, %s66, %s64
  $region1: #{transformer_relation.3} parent=0
    #allocation2 [shape = 'u8[8192]{0}', space=vmem, size = 0x2000, scoped, tag = 'output window, operand 0, single buffered']
    #allocation3 [shape = 's32[1]{0}', space=sflag, size = 0x4, scoped, tag = 'scoped memory for transformer_relation.3']
    %68 = vsyncpa [#allocation3], 0
    // Predicated region
    $region2: #{transformer_relation.3} parent=1 // pred_check
      _
    $region3: #{transformer_relation.3} parent=1 // pred_check_branch
      %70 = sbr.rel (0) target = $region5
    $region4: #{transformer_relation.3} parent=1 // pred_region
      _
    $region5: #{transformer_relation.3} parent=1 // pred_fallthru
      _
    // Predicated region
    $region6: #{transformer_relation.3} parent=1 // pred_check
      _
    $region7: #{transformer_relation.3} parent=1 // pred_check_branch
      %72 = sbr.rel (0) target = $region9
    $region8: #{transformer_relation.3} parent=1 // pred_region
      _
    $region9: #{transformer_relation.3} parent=1 // pred_fallthru
      _
    // Predicated region
    $region10: #{transformer_relation.3} parent=1 // pred_check
      _
    $region11: #{transformer_relation.3} parent=1 // pred_check_branch
      %74 = sbr.rel (0) target = $region13
    $region12: #{transformer_relation.3} parent=1 // pred_region
      _
    $region13: #{transformer_relation.3} parent=1 // pred_fallthru
      _
    // Predicated region
    $region14: #{transformer_relation.3} parent=1 // pred_check
      _
    $region15: #{transformer_relation.3} parent=1 // pred_check_branch
      %76 = sbr.rel (0) target = $region17
    $region16: #{transformer_relation.3} parent=1 // pred_region
      _
    $region17: #{transformer_relation.3} parent=1 // pred_fallthru
      _
    // Predicated region
    $region18: #{transformer_relation.3} parent=1 // pred_check
      _
    $region19: #{transformer_relation.3} parent=1 // pred_check_branch
      %78 = sbr.rel (0) target = $region21
    $region20: #{transformer_relation.3} parent=1 // pred_region
      _
    $region21: #{transformer_relation.3} parent=1 // pred_fallthru
      _
    // Predicated region
    $region22: #{transformer_relation.3} parent=1 // pred_check
      _
    $region23: #{transformer_relation.3} parent=1 // pred_check_branch
      %80 = sbr.rel (0) target = $region25
    $region24: #{transformer_relation.3} parent=1 // pred_region
      _
    $region25: #{transformer_relation.3} parent=1 // pred_fallthru
      _
    // Predicated region
    $region26: #{transformer_relation.3} parent=1 // pred_check
      _
    $region27: #{transformer_relation.3} parent=1 // pred_check_branch
      %82 = sbr.rel (0) target = $region29
    $region28: #{transformer_relation.3} parent=1 // pred_region
      _
    $region29: #{transformer_relation.3} parent=1 // pred_fallthru
      _
    // Predicated region
    $region30: #{transformer_relation.3} parent=1 // pred_check
      _
    $region31: #{transformer_relation.3} parent=1 // pred_check_branch
      %84 = sbr.rel (0) target = $region33
    $region32: #{transformer_relation.3} parent=1 // pred_region
      _
    $region33: #{transformer_relation.3} parent=1 // pred_fallthru
      _
    // Predicated region
    $region34: #{transformer_relation.3} parent=1 // pred_check
      _
    $region35: #{transformer_relation.3} parent=1 // pred_check_branch
      %86 = sbr.rel (0) target = $region37
    $region36: #{transformer_relation.3} parent=1 // pred_region
      _
    $region37: #{transformer_relation.3} parent=1 // pred_fallthru
      _
    // Predicated region
    $region38: #{transformer_relation.3} parent=1 // pred_check
      _
    $region39: #{transformer_relation.3} parent=1 // pred_check_branch
      %88 = sbr.rel (0) target = $region41
    $region40: #{transformer_relation.3} parent=1 // pred_region
      _
    $region41: #{transformer_relation.3} parent=1 // pred_fallthru
      _
    // Predicated region
    $region42: #{transformer_relation.3} parent=1 // pred_check
      _
    $region43: #{transformer_relation.3} parent=1 // pred_check_branch
      %90 = sbr.rel (0) target = $region45
    $region44: #{transformer_relation.3} parent=1 // pred_region
      _
    $region45: #{transformer_relation.3} parent=1 // pred_fallthru
      _
    // Predicated region
    $region46: #{transformer_relation.3} parent=1 // pred_check
      _
    $region47: #{transformer_relation.3} parent=1 // pred_check_branch
      %92 = sbr.rel (0) target = $region49
    $region48: #{transformer_relation.3} parent=1 // pred_region
      _
    $region49: #{transformer_relation.3} parent=1 // pred_fallthru
      _
    // Predicated region
    $region50: #{transformer_relation.3} parent=1 // pred_check
      _
    $region51: #{transformer_relation.3} parent=1 // pred_check_branch
      %94 = sbr.rel (0) target = $region53
    $region52: #{transformer_relation.3} parent=1 // pred_region
      _
    $region53: #{transformer_relation.3} parent=1 // pred_fallthru
      _
    // Predicated region
    $region54: #{transformer_relation.3} parent=1 // pred_check
      _
    $region55: #{transformer_relation.3} parent=1 // pred_check_branch
      %96 = sbr.rel (0) target = $region57
    $region56: #{transformer_relation.3} parent=1 // pred_region
      _
    $region57: #{transformer_relation.3} parent=1 // pred_fallthru
      _
    // Predicated region
    $region58: #{transformer_relation.3} parent=1 // pred_check
      _
    $region59: #{transformer_relation.3} parent=1 // pred_check_branch
      %98 = sbr.rel (0) target = $region61
    $region60: #{transformer_relation.3} parent=1 // pred_region
      _
    $region61: #{transformer_relation.3} parent=1 // pred_fallthru
      _
    // Predicated region
    $region62: #{transformer_relation.3} parent=1 // pred_check
      _
    $region63: #{transformer_relation.3} parent=1 // pred_check_branch
      %100 = sbr.rel (0) target = $region65
    $region64: #{transformer_relation.3} parent=1 // pred_region
      _
    $region65: #{transformer_relation.3} parent=1 // pred_fallthru
      _
    // Predicated region
    $region66: #{transformer_relation.3} parent=1 // pred_check
      _
    $region67: #{transformer_relation.3} parent=1 // pred_check_branch
      %102 = sbr.rel (0) target = $region69
    $region68: #{transformer_relation.3} parent=1 // pred_region
      _
    $region69: #{transformer_relation.3} parent=1 // pred_fallthru
      _
    // Predicated region
    $region70: #{transformer_relation.3} parent=1 // pred_check
      _
    $region71: #{transformer_relation.3} parent=1 // pred_check_branch
      %104 = sbr.rel (0) target = $region73
    $region72: #{transformer_relation.3} parent=1 // pred_region
      _
    $region73: #{transformer_relation.3} parent=1 // pred_fallthru
      _
    // Predicated region
    $region74: #{transformer_relation.3} parent=1 // pred_check
      _
    $region75: #{transformer_relation.3} parent=1 // pred_check_branch
      %106 = sbr.rel (0) target = $region77
    $region76: #{transformer_relation.3} parent=1 // pred_region
      _
    $region77: #{transformer_relation.3} parent=1 // pred_fallthru
      _
    // Predicated region
    $region78: #{transformer_relation.3} parent=1 // pred_check
      _
    $region79: #{transformer_relation.3} parent=1 // pred_check_branch
      %108 = sbr.rel (0) target = $region81
    $region80: #{transformer_relation.3} parent=1 // pred_region
      _
    $region81: #{transformer_relation.3} parent=1 // pred_fallthru
      _
    // Predicated region
    $region82: #{transformer_relation.3} parent=1 // pred_check
      _
    $region83: #{transformer_relation.3} parent=1 // pred_check_branch
      %110 = sbr.rel (0) target = $region85
    $region84: #{transformer_relation.3} parent=1 // pred_region
      _
    $region85: #{transformer_relation.3} parent=1 // pred_fallthru
      _
    // Predicated region
    $region86: #{transformer_relation.3} parent=1 // pred_check
      _
    $region87: #{transformer_relation.3} parent=1 // pred_check_branch
      %112 = sbr.rel (0) target = $region89
    $region88: #{transformer_relation.3} parent=1 // pred_region
      _
    $region89: #{transformer_relation.3} parent=1 // pred_fallthru
      _
    // Predicated region
    $region90: #{transformer_relation.3} parent=1 // pred_check
      _
    $region91: #{transformer_relation.3} parent=1 // pred_check_branch
      %114 = sbr.rel (0) target = $region93
    $region92: #{transformer_relation.3} parent=1 // pred_region
      _
    $region93: #{transformer_relation.3} parent=1 // pred_fallthru
      _
    // Predicated region
    $region94: #{transformer_relation.3} parent=1 // pred_check
      _
    $region95: #{transformer_relation.3} parent=1 // pred_check_branch
      %116 = sbr.rel (0) target = $region97
    $region96: #{transformer_relation.3} parent=1 // pred_region
      _
    $region97: #{transformer_relation.3} parent=1 // pred_fallthru
      _
    // Predicated region
    $region98: #{transformer_relation.3} parent=1 // pred_check
      _
    $region99: #{transformer_relation.3} parent=1 // pred_check_branch
      %118 = sbr.rel (0) target = $region101
    $region100: #{transformer_relation.3} parent=1 // pred_region
      _
    $region101: #{transformer_relation.3} parent=1 // pred_fallthru
      _
    // Predicated region
    $region102: #{transformer_relation.3} parent=1 // pred_check
      _
    $region103: #{transformer_relation.3} parent=1 // pred_check_branch
      %120 = sbr.rel (0) target = $region105
    $region104: #{transformer_relation.3} parent=1 // pred_region
      _
    $region105: #{transformer_relation.3} parent=1 // pred_fallthru
      _
    // Predicated region
    $region106: #{transformer_relation.3} parent=1 // pred_check
      _
    $region107: #{transformer_relation.3} parent=1 // pred_check_branch
      %122 = sbr.rel (0) target = $region109
    $region108: #{transformer_relation.3} parent=1 // pred_region
      _
    $region109: #{transformer_relation.3} parent=1 // pred_fallthru
      _
    // Predicated region
    $region110: #{transformer_relation.3} parent=1 // pred_check
      _
    $region111: #{transformer_relation.3} parent=1 // pred_check_branch
      %124 = sbr.rel (0) target = $region113
    $region112: #{transformer_relation.3} parent=1 // pred_region
      _
    $region113: #{transformer_relation.3} parent=1 // pred_fallthru
      _
    // Predicated region
    $region114: #{transformer_relation.3} parent=1 // pred_check
      _
    $region115: #{transformer_relation.3} parent=1 // pred_check_branch
      %126 = sbr.rel (0) target = $region117
    $region116: #{transformer_relation.3} parent=1 // pred_region
      _
    $region117: #{transformer_relation.3} parent=1 // pred_fallthru
      _
    // Predicated region
    $region118: #{transformer_relation.3} parent=1 // pred_check
      _
    $region119: #{transformer_relation.3} parent=1 // pred_check_branch
      %128 = sbr.rel (0) target = $region121
    $region120: #{transformer_relation.3} parent=1 // pred_region
      _
    $region121: #{transformer_relation.3} parent=1 // pred_fallthru
      _
    // Predicated region
    $region122: #{transformer_relation.3} parent=1 // pred_check
      _
    $region123: #{transformer_relation.3} parent=1 // pred_check_branch
      %130 = sbr.rel (0) target = $region125
    $region124: #{transformer_relation.3} parent=1 // pred_region
      _
    $region125: #{transformer_relation.3} parent=1 // pred_fallthru
      _
    %v132 = vld [vmem:[%s1] sm:$0xff]
    %v133 = vld [vmem:[%s1 + $0x8] sm:$0xff]
    %v134 = vld [vmem:[%s3] sm:$0xff]
    %v135 = vld [vmem:[%s3 + $0x8] sm:$0xff]
    %v136 = vld [vmem:[%s3 + $0x10] sm:$0xff]
    %v137 = vld [vmem:[%s3 + $0x18] sm:$0xff]
    %v138 = vld [vmem:[%s5] sm:$0x1]
    %v139 = vld [vmem:[%s5 + $0x1] sm:$0x1]
    %v140 = vld [vmem:[%s5 + $0x2] sm:$0x1]
    %v141 = vld [vmem:[%s5 + $0x3] sm:$0x1]
    %v142 = vld [vmem:[%s5 + $0x4] sm:$0x1]
    %v143 = vld [vmem:[%s5 + $0x5] sm:$0x1]
    %v144 = vld [vmem:[%s5 + $0x6] sm:$0x1]
    %v145 = vld [vmem:[%s5 + $0x7] sm:$0x1]
    %v146 = vld [vmem:[%s7] sm:$0xf]
    %v147 = vld [vmem:[%s7 + $0x4] sm:$0xf]
    %v148 = vld [vmem:[%s7 + $0x8] sm:$0xf]
    %v149 = vld [vmem:[%s7 + $0xc] sm:$0xf]
    %v150 = vld [vmem:[%s9] sm:$0xf]
    %v151 = vld [vmem:[%s9 + $0x4] sm:$0xf]
    %v152 = vld [vmem:[%s9 + $0x8] sm:$0xf]
    %v153 = vld [vmem:[%s9 + $0xc] sm:$0xf]
    %v154 = vld [vmem:[%s11] sm:$0xf]
    %v155 = vld [vmem:[%s11 + $0x4] sm:$0xf]
    %v156 = vld [vmem:[%s11 + $0x8] sm:$0xf]
    %v157 = vld [vmem:[%s11 + $0xc] sm:$0xf]
    %v158 = vld [vmem:[%s13] sm:$0x1]
    %v159 = vld [vmem:[%s15] sm:$0x1]
    %v160 = vld [vmem:[%s17] sm:$0x1]
    %v161 = vld [vmem:[%s19] sm:$0xf]
    %v162 = vld [vmem:[%s19 + $0x4] sm:$0xf]
    %v163 = vld [vmem:[%s19 + $0x8] sm:$0xf]
    %v164 = vld [vmem:[%s19 + $0xc] sm:$0xf]
    %v165 = vld [vmem:[%s21] sm:$0x1]
    %v166 = vpack.c.bf16 %v133, %v132
    %v168 = vlaneseq
    %v169 = vshrl.u32 %v168, 7
    %v170 = vsub.s32 0, %v169
    %v171 = vrot.slane %v158, %v170
    %v177 = vunpack.c.l.b16 %v146
    %v178 = vunpack.c.l.b16 %v147
    %v179 = vunpack.c.l.b16 %v148
    %v180 = vunpack.c.l.b16 %v149
    %v181 = vpack.c.b16 %v178, %v177
    %v182 = vpack.c.b16 %v180, %v179
    %vm185 = vcmask 261120
    %v187 = vsel %vm185, %v166, 0
    %189 = vmatprep.subr.bf16.mxu0 0
    %190 = vmatpush1.bf16.msra.mxu0 0
    %191 = vmatprep.subr.bf16.mxu0 0
    %192 = vmatpush1.bf16.msra.mxu0 0
    %193 = vmatprep.subr.bf16.mxu0 0
    %194 = vmatpush1.bf16.msra.mxu0 0
    %195 = vmatprep.subr.bf16.mxu0 0
    %196 = vmatpush1.bf16.msra.mxu0 0
    %197 = vmatprep.subr.bf16.mxu0 0
    %198 = vmatpush1.bf16.msra.mxu0 0
    %199 = vmatprep.subr.bf16.mxu0 0
    %200 = vmatpush1.bf16.msra.mxu0 0
    %201 = vmatprep.subr.bf16.mxu0 0
    %202 = vmatpush1.bf16.msra.mxu0 %v182
    %203 = vmatprep.subr.bf16.mxu0 0
    %204 = vmatpush1.bf16.msra.mxu0 %v181
    %205 = vmatprep.subr.bf16.mxu0 0
    %206 = vmatpush2.bf16.msra.mxu0 0
    %207 = vmatprep.subr.bf16.mxu0 0
    %208 = vmatpush2.bf16.msra.mxu0 0
    %209 = vmatprep.subr.bf16.mxu0 0
    %210 = vmatpush2.bf16.msra.mxu0 0
    %211 = vmatprep.subr.bf16.mxu0 0
    %212 = vmatpush2.bf16.msra.mxu0 0
    %213 = vmatprep.subr.bf16.mxu0 0
    %214 = vmatpush2.bf16.msra.mxu0 0
    %215 = vmatprep.subr.bf16.mxu0 0
    %216 = vmatpush2.bf16.msra.mxu0 0
    %217 = vmatprep.subr.bf16.mxu0 0
    %218 = vmatpush2.bf16.msra.mxu0 0
    %219 = vmatprep.subr.bf16.mxu0 0
    %220 = vmatpush2.bf16.msra.mxu0 0
    %221 = vmatprep.mubr.bf16.mxu0 0
    %222 = vmatmul.mubr.bf16.gmra.mxu0 %v187
    %v223 = vpop.f32.mrf.mxu0
    %v224 = vadd.f32 %v171, %v223
    %v225 = vpop.f32.mrf.mxu0
    %v226 = vpop.f32.mrf.mxu0
    %v227 = vadd.f32 %v171, %v226
    %v228 = vpop.f32.mrf.mxu0
    %229 = vdwg.mxu0
    %v230 = vmul.f32 %v224, 0.5
    %v231 = vmul.f32 %v227, 0.5
    %v233 = vlaneseq
    %v234 = vshrl.u32 %v233, 7
    %v235 = vsub.s32 0, %v234
    %v236 = vrot.slane %v159, %v235
    %v242 = vunpack.c.l.b16 %v150
    %v243 = vunpack.c.l.b16 %v151
    %v244 = vunpack.c.l.b16 %v152
    %v245 = vunpack.c.l.b16 %v153
    %v246 = vpack.c.b16 %v243, %v242
    %v247 = vpack.c.b16 %v245, %v244
    %250 = vmatprep.subr.bf16.mxu0 0
    %251 = vmatpush1.bf16.msra.mxu0 0
    %252 = vmatprep.subr.bf16.mxu0 0
    %253 = vmatpush1.bf16.msra.mxu0 0
    %254 = vmatprep.subr.bf16.mxu0 0
    %255 = vmatpush1.bf16.msra.mxu0 0
    %256 = vmatprep.subr.bf16.mxu0 0
    %257 = vmatpush1.bf16.msra.mxu0 0
    %258 = vmatprep.subr.bf16.mxu0 0
    %259 = vmatpush1.bf16.msra.mxu0 0
    %260 = vmatprep.subr.bf16.mxu0 0
    %261 = vmatpush1.bf16.msra.mxu0 0
    %262 = vmatprep.subr.bf16.mxu0 0
    %263 = vmatpush1.bf16.msra.mxu0 %v247
    %264 = vmatprep.subr.bf16.mxu0 0
    %265 = vmatpush1.bf16.msra.mxu0 %v246
    %266 = vmatprep.subr.bf16.mxu0 0
    %267 = vmatpush2.bf16.msra.mxu0 0
    %268 = vmatprep.subr.bf16.mxu0 0
    %269 = vmatpush2.bf16.msra.mxu0 0
    %270 = vmatprep.subr.bf16.mxu0 0
    %271 = vmatpush2.bf16.msra.mxu0 0
    %272 = vmatprep.subr.bf16.mxu0 0
    %273 = vmatpush2.bf16.msra.mxu0 0
    %274 = vmatprep.subr.bf16.mxu0 0
    %275 = vmatpush2.bf16.msra.mxu0 0
    %276 = vmatprep.subr.bf16.mxu0 0
    %277 = vmatpush2.bf16.msra.mxu0 0
    %278 = vmatprep.subr.bf16.mxu0 0
    %279 = vmatpush2.bf16.msra.mxu0 0
    %280 = vmatprep.subr.bf16.mxu0 0
    %281 = vmatpush2.bf16.msra.mxu0 0
    %282 = vmatprep.mubr.bf16.mxu0 0
    %283 = vmatmul.mubr.bf16.gmra.mxu0 %v187
    %v284 = vpop.f32.mrf.mxu0
    %v285 = vadd.f32 %v236, %v284
    %v286 = vpop.f32.mrf.mxu0
    %v287 = vpop.f32.mrf.mxu0
    %v288 = vadd.f32 %v236, %v287
    %v289 = vpop.f32.mrf.mxu0
    %290 = vdwg.mxu0
    %v292 = vlaneseq
    %v293 = vshrl.u32 %v292, 7
    %v294 = vsub.s32 0, %v293
    %v295 = vrot.slane %v160, %v294
    %v301 = vunpack.c.l.b16 %v154
    %v302 = vunpack.c.l.b16 %v155
    %v303 = vunpack.c.l.b16 %v156
    %v304 = vunpack.c.l.b16 %v157
    %v305 = vpack.c.b16 %v302, %v301
    %v306 = vpack.c.b16 %v304, %v303
    %309 = vmatprep.subr.bf16.mxu0 0
    %310 = vmatpush1.bf16.msra.mxu0 0
    %311 = vmatprep.subr.bf16.mxu0 0
    %312 = vmatpush1.bf16.msra.mxu0 0
    %313 = vmatprep.subr.bf16.mxu0 0
    %314 = vmatpush1.bf16.msra.mxu0 0
    %315 = vmatprep.subr.bf16.mxu0 0
    %316 = vmatpush1.bf16.msra.mxu0 0
    %317 = vmatprep.subr.bf16.mxu0 0
    %318 = vmatpush1.bf16.msra.mxu0 0
    %319 = vmatprep.subr.bf16.mxu0 0
    %320 = vmatpush1.bf16.msra.mxu0 0
    %321 = vmatprep.subr.bf16.mxu0 0
    %322 = vmatpush1.bf16.msra.mxu0 %v306
    %323 = vmatprep.subr.bf16.mxu0 0
    %324 = vmatpush1.bf16.msra.mxu0 %v305
    %325 = vmatprep.subr.bf16.mxu0 0
    %326 = vmatpush2.bf16.msra.mxu0 0
    %327 = vmatprep.subr.bf16.mxu0 0
    %328 = vmatpush2.bf16.msra.mxu0 0
    %329 = vmatprep.subr.bf16.mxu0 0
    %330 = vmatpush2.bf16.msra.mxu0 0
    %331 = vmatprep.subr.bf16.mxu0 0
    %332 = vmatpush2.bf16.msra.mxu0 0
    %333 = vmatprep.subr.bf16.mxu0 0
    %334 = vmatpush2.bf16.msra.mxu0 0
    %335 = vmatprep.subr.bf16.mxu0 0
    %336 = vmatpush2.bf16.msra.mxu0 0
    %337 = vmatprep.subr.bf16.mxu0 0
    %338 = vmatpush2.bf16.msra.mxu0 0
    %339 = vmatprep.subr.bf16.mxu0 0
    %340 = vmatpush2.bf16.msra.mxu0 0
    %341 = vmatprep.mubr.bf16.mxu0 0
    %342 = vmatmul.mubr.bf16.gmra.mxu0 %v187
    %v343 = vpop.f32.mrf.mxu0
    %v344 = vadd.f32 %v295, %v343
    %v345 = vpop.f32.mrf.mxu0
    %v346 = vpop.f32.mrf.mxu0
    %v347 = vadd.f32 %v295, %v346
    %v348 = vpop.f32.mrf.mxu0
    %349 = vdwg.mxu0
    %v350 = vpack.c.bf16 %v230, %v230
    %v351 = vpack.c.bf16 %v231, %v231
    %v352 = vpack.c.bf16 %v285, %v285
    %v353 = vpack.c.bf16 %v288, %v288
    %v354 = vpack.c.bf16 %v344, %v344
    %v355 = vpack.c.bf16 %v347, %v347
    %v357 = vpack.i.b16 %v138, %v138
    %v359 = vlaneseq
    %v360 = vshrl.u32 %v359, 7
    %v361 = vsub.s32 0, %v360
    %v362 = vrot.slane %v357, %v361
    %v363 = vmul.bf16 %v350, %v362
    %v364 = vmul.bf16 %v351, %v362
    %v366 = vsel %vm185, %v363, 0
    %v369 = vsel %vm185, %v352, 0
    %371 = vmatprep.subr.bf16.mxu0 0
    %372 = vmatpush1.bf16.xpose.msra.mxu0 0
    %373 = vmatprep.subr.bf16.mxu0 0
    %374 = vmatpush1.bf16.xpose.msra.mxu0 0
    %375 = vmatprep.subr.bf16.mxu0 0
    %376 = vmatpush1.bf16.xpose.msra.mxu0 0
    %377 = vmatprep.subr.bf16.mxu0 0
    %378 = vmatpush1.bf16.xpose.msra.mxu0 0
    %379 = vmatprep.subr.bf16.mxu0 0
    %380 = vmatpush1.bf16.xpose.msra.mxu0 0
    %381 = vmatprep.subr.bf16.mxu0 0
    %382 = vmatpush1.bf16.xpose.msra.mxu0 0
    %383 = vmatprep.subr.bf16.mxu0 0
    %384 = vmatpush1.bf16.xpose.msra.mxu0 0
    %385 = vmatprep.subr.bf16.mxu0 0
    %386 = vmatpush1.bf16.xpose.msra.mxu0 %v369
    %387 = vmatprep.subr.bf16.mxu0 0
    %388 = vmatpush2.bf16.xpose.msra.mxu0 0
    %389 = vmatprep.subr.bf16.mxu0 0
    %390 = vmatpush2.bf16.xpose.msra.mxu0 0
    %391 = vmatprep.subr.bf16.mxu0 0
    %392 = vmatpush2.bf16.xpose.msra.mxu0 0
    %393 = vmatprep.subr.bf16.mxu0 0
    %394 = vmatpush2.bf16.xpose.msra.mxu0 0
    %395 = vmatprep.subr.bf16.mxu0 0
    %396 = vmatpush2.bf16.xpose.msra.mxu0 0
    %397 = vmatprep.subr.bf16.mxu0 0
    %398 = vmatpush2.bf16.xpose.msra.mxu0 0
    %399 = vmatprep.subr.bf16.mxu0 0
    %400 = vmatpush2.bf16.xpose.msra.mxu0 0
    %401 = vmatprep.subr.bf16.mxu0 0
    %402 = vmatpush2.bf16.xpose.msra.mxu0 0
    %403 = vmatprep.mubr.bf16.mxu0 0
    %404 = vmatmul.mubr.bf16.gmra.mxu0 %v366
    %v405 = vpop.f32.mrf.mxu0
    %v406 = vadd.f32 0.0, %v405
    %v407 = vpop.f32.mrf.mxu0
    %v408 = vpop.f32.mrf.mxu0
    %v409 = vpop.f32.mrf.mxu0
    %410 = vdwg.mxu0
    %v412 = vsel %vm185, %v364, 0
    %v415 = vsel %vm185, %v353, 0
    %417 = vmatprep.subr.bf16.mxu0 0
    %418 = vmatpush1.bf16.xpose.msra.mxu0 0
    %419 = vmatprep.subr.bf16.mxu0 0
    %420 = vmatpush1.bf16.xpose.msra.mxu0 0
    %421 = vmatprep.subr.bf16.mxu0 0
    %422 = vmatpush1.bf16.xpose.msra.mxu0 0
    %423 = vmatprep.subr.bf16.mxu0 0
    %424 = vmatpush1.bf16.xpose.msra.mxu0 0
    %425 = vmatprep.subr.bf16.mxu0 0
    %426 = vmatpush1.bf16.xpose.msra.mxu0 0
    %427 = vmatprep.subr.bf16.mxu0 0
    %428 = vmatpush1.bf16.xpose.msra.mxu0 0
    %429 = vmatprep.subr.bf16.mxu0 0
    %430 = vmatpush1.bf16.xpose.msra.mxu0 0
    %431 = vmatprep.subr.bf16.mxu0 0
    %432 = vmatpush1.bf16.xpose.msra.mxu0 %v415
    %433 = vmatprep.subr.bf16.mxu0 0
    %434 = vmatpush2.bf16.xpose.msra.mxu0 0
    %435 = vmatprep.subr.bf16.mxu0 0
    %436 = vmatpush2.bf16.xpose.msra.mxu0 0
    %437 = vmatprep.subr.bf16.mxu0 0
    %438 = vmatpush2.bf16.xpose.msra.mxu0 0
    %439 = vmatprep.subr.bf16.mxu0 0
    %440 = vmatpush2.bf16.xpose.msra.mxu0 0
    %441 = vmatprep.subr.bf16.mxu0 0
    %442 = vmatpush2.bf16.xpose.msra.mxu0 0
    %443 = vmatprep.subr.bf16.mxu0 0
    %444 = vmatpush2.bf16.xpose.msra.mxu0 0
    %445 = vmatprep.subr.bf16.mxu0 0
    %446 = vmatpush2.bf16.xpose.msra.mxu0 0
    %447 = vmatprep.subr.bf16.mxu0 0
    %448 = vmatpush2.bf16.xpose.msra.mxu0 0
    %449 = vmatprep.mubr.bf16.mxu0 0
    %450 = vmatmul.mubr.bf16.gmra.mxu0 %v412
    %v451 = vpop.f32.mrf.mxu0
    %v452 = vadd.f32 0.0, %v451
    %v453 = vpop.f32.mrf.mxu0
    %v454 = vpop.f32.mrf.mxu0
    %v455 = vpop.f32.mrf.mxu0
    %456 = vdwg.mxu0
    %vm457 = vcmask 64512
    %v458 = vsel %vm457, %v406, -inf
    %459 = vmax.xlane.f32.xlu0 %v458
    %v460 = vpop.xlane.xlu0 %459
    %v461 = vsel %vm457, %v452, -inf
    %462 = vmax.xlane.f32.xlu0 %v461
    %v463 = vpop.xlane.xlu0 %462
    %v464 = vsub.f32 %v406, %v460
    %v465 = vsub.f32 %v452, %v463
    %v466 = vmul.f32 %v464, 1.442695
    %v467 = vpow.pop %v466
    %v468 = vmul.f32 %v465, 1.442695
    %v469 = vpow.pop %v468
    %v470 = vsel %vm457, %v467, 0.0
    %471 = vadd.xlane.f32.xlu0 %v470
    %v472 = vpop.xlane.xlu0 %471
    %v473 = vsel %vm457, %v469, 0.0
    %474 = vadd.xlane.f32.xlu0 %v473
    %v475 = vpop.xlane.xlu0 %474
    %v476 = vrcp.pop %v472
    %v477 = vrcp.pop %v475
    %v478 = vmul.f32 %v467, %v476
    %v479 = vmul.f32 %v469, %v477
    %v480 = vmul.bf16 %v354, %v362
    %v481 = vmul.bf16 %v355, %v362
    %v482 = vpack.c.bf16 %v478, %v478
    %v483 = vpack.c.bf16 %v479, %v479
    %v485 = vpack.i.b16 %v139, %v139
    %v487 = vlaneseq
    %v488 = vshrl.u32 %v487, 7
    %v489 = vsub.s32 0, %v488
    %v490 = vrot.slane %v485, %v489
    %v491 = vmul.bf16 %v350, %v490
    %v492 = vmul.bf16 %v351, %v490
    %v494 = vsel %vm185, %v491, 0
    %496 = vmatprep.subr.bf16.mxu0 0
    %497 = vmatpush1.bf16.xpose.msra.mxu0 0
    %498 = vmatprep.subr.bf16.mxu0 0
    %499 = vmatpush1.bf16.xpose.msra.mxu0 0
    %500 = vmatprep.subr.bf16.mxu0 0
    %501 = vmatpush1.bf16.xpose.msra.mxu0 0
    %502 = vmatprep.subr.bf16.mxu0 0
    %503 = vmatpush1.bf16.xpose.msra.mxu0 0
    %504 = vmatprep.subr.bf16.mxu0 0
    %505 = vmatpush1.bf16.xpose.msra.mxu0 0
    %506 = vmatprep.subr.bf16.mxu0 0
    %507 = vmatpush1.bf16.xpose.msra.mxu0 0
    %508 = vmatprep.subr.bf16.mxu0 0
    %509 = vmatpush1.bf16.xpose.msra.mxu0 0
    %510 = vmatprep.subr.bf16.mxu0 0
    %511 = vmatpush1.bf16.xpose.msra.mxu0 %v369
    %512 = vmatprep.subr.bf16.mxu0 0
    %513 = vmatpush2.bf16.xpose.msra.mxu0 0
    %514 = vmatprep.subr.bf16.mxu0 0
    %515 = vmatpush2.bf16.xpose.msra.mxu0 0
    %516 = vmatprep.subr.bf16.mxu0 0
    %517 = vmatpush2.bf16.xpose.msra.mxu0 0
    %518 = vmatprep.subr.bf16.mxu0 0
    %519 = vmatpush2.bf16.xpose.msra.mxu0 0
    %520 = vmatprep.subr.bf16.mxu0 0
    %521 = vmatpush2.bf16.xpose.msra.mxu0 0
    %522 = vmatprep.subr.bf16.mxu0 0
    %523 = vmatpush2.bf16.xpose.msra.mxu0 0
    %524 = vmatprep.subr.bf16.mxu0 0
    %525 = vmatpush2.bf16.xpose.msra.mxu0 0
    %526 = vmatprep.subr.bf16.mxu0 0
    %527 = vmatpush2.bf16.xpose.msra.mxu0 0
    %528 = vmatprep.mubr.bf16.mxu0 0
    %529 = vmatmul.mubr.bf16.gmra.mxu0 %v494
    %v530 = vpop.f32.mrf.mxu0
    %v531 = vadd.f32 0.0, %v530
    %v532 = vpop.f32.mrf.mxu0
    %v533 = vpop.f32.mrf.mxu0
    %v534 = vpop.f32.mrf.mxu0
    %535 = vdwg.mxu0
    %v537 = vsel %vm185, %v492, 0
    %539 = vmatprep.subr.bf16.mxu0 0
    %540 = vmatpush1.bf16.xpose.msra.mxu0 0
    %541 = vmatprep.subr.bf16.mxu0 0
    %542 = vmatpush1.bf16.xpose.msra.mxu0 0
    %543 = vmatprep.subr.bf16.mxu0 0
    %544 = vmatpush1.bf16.xpose.msra.mxu0 0
    %545 = vmatprep.subr.bf16.mxu0 0
    %546 = vmatpush1.bf16.xpose.msra.mxu0 0
    %547 = vmatprep.subr.bf16.mxu0 0
    %548 = vmatpush1.bf16.xpose.msra.mxu0 0
    %549 = vmatprep.subr.bf16.mxu0 0
    %550 = vmatpush1.bf16.xpose.msra.mxu0 0
    %551 = vmatprep.subr.bf16.mxu0 0
    %552 = vmatpush1.bf16.xpose.msra.mxu0 0
    %553 = vmatprep.subr.bf16.mxu0 0
    %554 = vmatpush1.bf16.xpose.msra.mxu0 %v415
    %555 = vmatprep.subr.bf16.mxu0 0
    %556 = vmatpush2.bf16.xpose.msra.mxu0 0
    %557 = vmatprep.subr.bf16.mxu0 0
    %558 = vmatpush2.bf16.xpose.msra.mxu0 0
    %559 = vmatprep.subr.bf16.mxu0 0
    %560 = vmatpush2.bf16.xpose.msra.mxu0 0
    %561 = vmatprep.subr.bf16.mxu0 0
    %562 = vmatpush2.bf16.xpose.msra.mxu0 0
    %563 = vmatprep.subr.bf16.mxu0 0
    %564 = vmatpush2.bf16.xpose.msra.mxu0 0
    %565 = vmatprep.subr.bf16.mxu0 0
    %566 = vmatpush2.bf16.xpose.msra.mxu0 0
    %567 = vmatprep.subr.bf16.mxu0 0
    %568 = vmatpush2.bf16.xpose.msra.mxu0 0
    %569 = vmatprep.subr.bf16.mxu0 0
    %570 = vmatpush2.bf16.xpose.msra.mxu0 0
    %571 = vmatprep.mubr.bf16.mxu0 0
    %572 = vmatmul.mubr.bf16.gmra.mxu0 %v537
    %v573 = vpop.f32.mrf.mxu0
    %v574 = vadd.f32 0.0, %v573
    %v575 = vpop.f32.mrf.mxu0
    %v576 = vpop.f32.mrf.mxu0
    %v577 = vpop.f32.mrf.mxu0
    %578 = vdwg.mxu0
    %v579 = vsel %vm457, %v531, -inf
    %580 = vmax.xlane.f32.xlu0 %v579
    %v581 = vpop.xlane.xlu0 %580
    %v582 = vsel %vm457, %v574, -inf
    %583 = vmax.xlane.f32.xlu0 %v582
    %v584 = vpop.xlane.xlu0 %583
    %v585 = vsub.f32 %v531, %v581
    %v586 = vsub.f32 %v574, %v584
    %v587 = vmul.f32 %v585, 1.442695
    %v588 = vpow.pop %v587
    %v589 = vmul.f32 %v586, 1.442695
    %v590 = vpow.pop %v589
    %v591 = vsel %vm457, %v588, 0.0
    %592 = vadd.xlane.f32.xlu0 %v591
    %v593 = vpop.xlane.xlu0 %592
    %v594 = vsel %vm457, %v590, 0.0
    %595 = vadd.xlane.f32.xlu0 %v594
    %v596 = vpop.xlane.xlu0 %595
    %v597 = vrcp.pop %v593
    %v598 = vrcp.pop %v596
    %v599 = vmul.f32 %v588, %v597
    %v600 = vmul.f32 %v590, %v598
    %v601 = vmul.bf16 %v354, %v490
    %v602 = vmul.bf16 %v355, %v490
    %v603 = vpack.c.bf16 %v599, %v599
    %v604 = vpack.c.bf16 %v600, %v600
    %v606 = vsel %vm457, %v603, 0
    %vm608 = vcmask 1043456
    %v610 = vsel %vm608, %v601, 0
    %612 = vmatprep.subr.bf16.mxu0 0
    %613 = vmatpush1.bf16.msra.mxu0 0
    %614 = vmatprep.subr.bf16.mxu0 0
    %615 = vmatpush1.bf16.msra.mxu0 0
    %616 = vmatprep.subr.bf16.mxu0 0
    %617 = vmatpush1.bf16.msra.mxu0 0
    %618 = vmatprep.subr.bf16.mxu0 0
    %619 = vmatpush1.bf16.msra.mxu0 0
    %620 = vmatprep.subr.bf16.mxu0 0
    %621 = vmatpush1.bf16.msra.mxu0 0
    %622 = vmatprep.subr.bf16.mxu0 0
    %623 = vmatpush1.bf16.msra.mxu0 0
    %624 = vmatprep.subr.bf16.mxu0 0
    %625 = vmatpush1.bf16.msra.mxu0 0
    %626 = vmatprep.subr.bf16.mxu0 0
    %627 = vmatpush1.bf16.msra.mxu0 %v610
    %628 = vmatprep.subr.bf16.mxu0 0
    %629 = vmatpush2.bf16.msra.mxu0 0
    %630 = vmatprep.subr.bf16.mxu0 0
    %631 = vmatpush2.bf16.msra.mxu0 0
    %632 = vmatprep.subr.bf16.mxu0 0
    %633 = vmatpush2.bf16.msra.mxu0 0
    %634 = vmatprep.subr.bf16.mxu0 0
    %635 = vmatpush2.bf16.msra.mxu0 0
    %636 = vmatprep.subr.bf16.mxu0 0
    %637 = vmatpush2.bf16.msra.mxu0 0
    %638 = vmatprep.subr.bf16.mxu0 0
    %639 = vmatpush2.bf16.msra.mxu0 0
    %640 = vmatprep.subr.bf16.mxu0 0
    %641 = vmatpush2.bf16.msra.mxu0 0
    %642 = vmatprep.subr.bf16.mxu0 0
    %643 = vmatpush2.bf16.msra.mxu0 0
    %644 = vmatprep.mubr.bf16.mxu0 0
    %645 = vmatmul.mubr.bf16.gmra.mxu0 %v606
    %v646 = vpop.f32.mrf.mxu0
    %v647 = vadd.f32 0.0, %v646
    %v648 = vpop.f32.mrf.mxu0
    %v649 = vpop.f32.mrf.mxu0
    %v650 = vpop.f32.mrf.mxu0
    %651 = vdwg.mxu0
    %v653 = vsel %vm457, %v604, 0
    %v656 = vsel %vm608, %v602, 0
    %658 = vmatprep.subr.bf16.mxu0 0
    %659 = vmatpush1.bf16.msra.mxu0 0
    %660 = vmatprep.subr.bf16.mxu0 0
    %661 = vmatpush1.bf16.msra.mxu0 0
    %662 = vmatprep.subr.bf16.mxu0 0
    %663 = vmatpush1.bf16.msra.mxu0 0
    %664 = vmatprep.subr.bf16.mxu0 0
    %665 = vmatpush1.bf16.msra.mxu0 0
    %666 = vmatprep.subr.bf16.mxu0 0
    %667 = vmatpush1.bf16.msra.mxu0 0
    %668 = vmatprep.subr.bf16.mxu0 0
    %669 = vmatpush1.bf16.msra.mxu0 0
    %670 = vmatprep.subr.bf16.mxu0 0
    %671 = vmatpush1.bf16.msra.mxu0 0
    %672 = vmatprep.subr.bf16.mxu0 0
    %673 = vmatpush1.bf16.msra.mxu0 %v656
    %674 = vmatprep.subr.bf16.mxu0 0
    %675 = vmatpush2.bf16.msra.mxu0 0
    %676 = vmatprep.subr.bf16.mxu0 0
    %677 = vmatpush2.bf16.msra.mxu0 0
    %678 = vmatprep.subr.bf16.mxu0 0
    %679 = vmatpush2.bf16.msra.mxu0 0
    %680 = vmatprep.subr.bf16.mxu0 0
    %681 = vmatpush2.bf16.msra.mxu0 0
    %682 = vmatprep.subr.bf16.mxu0 0
    %683 = vmatpush2.bf16.msra.mxu0 0
    %684 = vmatprep.subr.bf16.mxu0 0
    %685 = vmatpush2.bf16.msra.mxu0 0
    %686 = vmatprep.subr.bf16.mxu0 0
    %687 = vmatpush2.bf16.msra.mxu0 0
    %688 = vmatprep.subr.bf16.mxu0 0
    %689 = vmatpush2.bf16.msra.mxu0 0
    %690 = vmatprep.mubr.bf16.mxu0 0
    %691 = vmatmul.mubr.bf16.gmra.mxu0 %v653
    %v692 = vpop.f32.mrf.mxu0
    %v693 = vadd.f32 0.0, %v692
    %v694 = vpop.f32.mrf.mxu0
    %v695 = vpop.f32.mrf.mxu0
    %v696 = vpop.f32.mrf.mxu0
    %697 = vdwg.mxu0
    %v699 = vsel %vm457, %v482, 0
    %v702 = vsel %vm608, %v480, 0
    %704 = vmatprep.subr.bf16.mxu0 0
    %705 = vmatpush1.bf16.msra.mxu0 0
    %706 = vmatprep.subr.bf16.mxu0 0
    %707 = vmatpush1.bf16.msra.mxu0 0
    %708 = vmatprep.subr.bf16.mxu0 0
    %709 = vmatpush1.bf16.msra.mxu0 0
    %710 = vmatprep.subr.bf16.mxu0 0
    %711 = vmatpush1.bf16.msra.mxu0 0
    %712 = vmatprep.subr.bf16.mxu0 0
    %713 = vmatpush1.bf16.msra.mxu0 0
    %714 = vmatprep.subr.bf16.mxu0 0
    %715 = vmatpush1.bf16.msra.mxu0 0
    %716 = vmatprep.subr.bf16.mxu0 0
    %717 = vmatpush1.bf16.msra.mxu0 0
    %718 = vmatprep.subr.bf16.mxu0 0
    %719 = vmatpush1.bf16.msra.mxu0 %v702
    %720 = vmatprep.subr.bf16.mxu0 0
    %721 = vmatpush2.bf16.msra.mxu0 0
    %722 = vmatprep.subr.bf16.mxu0 0
    %723 = vmatpush2.bf16.msra.mxu0 0
    %724 = vmatprep.subr.bf16.mxu0 0
    %725 = vmatpush2.bf16.msra.mxu0 0
    %726 = vmatprep.subr.bf16.mxu0 0
    %727 = vmatpush2.bf16.msra.mxu0 0
    %728 = vmatprep.subr.bf16.mxu0 0
    %729 = vmatpush2.bf16.msra.mxu0 0
    %730 = vmatprep.subr.bf16.mxu0 0
    %731 = vmatpush2.bf16.msra.mxu0 0
    %732 = vmatprep.subr.bf16.mxu0 0
    %733 = vmatpush2.bf16.msra.mxu0 0
    %734 = vmatprep.subr.bf16.mxu0 0
    %735 = vmatpush2.bf16.msra.mxu0 0
    %736 = vmatprep.mubr.bf16.mxu0 0
    %737 = vmatmul.mubr.bf16.gmra.mxu0 %v699
    %v738 = vpop.f32.mrf.mxu0
    %v739 = vadd.f32 %v647, %v738
    %v740 = vpop.f32.mrf.mxu0
    %v741 = vpop.f32.mrf.mxu0
    %v742 = vpop.f32.mrf.mxu0
    %743 = vdwg.mxu0
    %v745 = vsel %vm457, %v483, 0
    %v748 = vsel %vm608, %v481, 0
    %750 = vmatprep.subr.bf16.mxu0 0
    %751 = vmatpush1.bf16.msra.mxu0 0
    %752 = vmatprep.subr.bf16.mxu0 0
    %753 = vmatpush1.bf16.msra.mxu0 0
    %754 = vmatprep.subr.bf16.mxu0 0
    %755 = vmatpush1.bf16.msra.mxu0 0
    %756 = vmatprep.subr.bf16.mxu0 0
    %757 = vmatpush1.bf16.msra.mxu0 0
    %758 = vmatprep.subr.bf16.mxu0 0
    %759 = vmatpush1.bf16.msra.mxu0 0
    %760 = vmatprep.subr.bf16.mxu0 0
    %761 = vmatpush1.bf16.msra.mxu0 0
    %762 = vmatprep.subr.bf16.mxu0 0
    %763 = vmatpush1.bf16.msra.mxu0 0
    %764 = vmatprep.subr.bf16.mxu0 0
    %765 = vmatpush1.bf16.msra.mxu0 %v748
    %766 = vmatprep.subr.bf16.mxu0 0
    %767 = vmatpush2.bf16.msra.mxu0 0
    %768 = vmatprep.subr.bf16.mxu0 0
    %769 = vmatpush2.bf16.msra.mxu0 0
    %770 = vmatprep.subr.bf16.mxu0 0
    %771 = vmatpush2.bf16.msra.mxu0 0
    %772 = vmatprep.subr.bf16.mxu0 0
    %773 = vmatpush2.bf16.msra.mxu0 0
    %774 = vmatprep.subr.bf16.mxu0 0
    %775 = vmatpush2.bf16.msra.mxu0 0
    %776 = vmatprep.subr.bf16.mxu0 0
    %777 = vmatpush2.bf16.msra.mxu0 0
    %778 = vmatprep.subr.bf16.mxu0 0
    %779 = vmatpush2.bf16.msra.mxu0 0
    %780 = vmatprep.subr.bf16.mxu0 0
    %781 = vmatpush2.bf16.msra.mxu0 0
    %782 = vmatprep.mubr.bf16.mxu0 0
    %783 = vmatmul.mubr.bf16.gmra.mxu0 %v745
    %v784 = vpop.f32.mrf.mxu0
    %v785 = vadd.f32 %v693, %v784
    %v786 = vpop.f32.mrf.mxu0
    %v787 = vpop.f32.mrf.mxu0
    %v788 = vpop.f32.mrf.mxu0
    %789 = vdwg.mxu0
    %v791 = vpack.i.b16 %v140, %v140
    %v793 = vlaneseq
    %v794 = vshrl.u32 %v793, 7
    %v795 = vsub.s32 0, %v794
    %v796 = vrot.slane %v791, %v795
    %v797 = vmul.bf16 %v350, %v796
    %v798 = vmul.bf16 %v351, %v796
    %v800 = vsel %vm185, %v797, 0
    %802 = vmatprep.subr.bf16.mxu0 0
    %803 = vmatpush1.bf16.xpose.msra.mxu0 0
    %804 = vmatprep.subr.bf16.mxu0 0
    %805 = vmatpush1.bf16.xpose.msra.mxu0 0
    %806 = vmatprep.subr.bf16.mxu0 0
    %807 = vmatpush1.bf16.xpose.msra.mxu0 0
    %808 = vmatprep.subr.bf16.mxu0 0
    %809 = vmatpush1.bf16.xpose.msra.mxu0 0
    %810 = vmatprep.subr.bf16.mxu0 0
    %811 = vmatpush1.bf16.xpose.msra.mxu0 0
    %812 = vmatprep.subr.bf16.mxu0 0
    %813 = vmatpush1.bf16.xpose.msra.mxu0 0
    %814 = vmatprep.subr.bf16.mxu0 0
    %815 = vmatpush1.bf16.xpose.msra.mxu0 0
    %816 = vmatprep.subr.bf16.mxu0 0
    %817 = vmatpush1.bf16.xpose.msra.mxu0 %v369
    %818 = vmatprep.subr.bf16.mxu0 0
    %819 = vmatpush2.bf16.xpose.msra.mxu0 0
    %820 = vmatprep.subr.bf16.mxu0 0
    %821 = vmatpush2.bf16.xpose.msra.mxu0 0
    %822 = vmatprep.subr.bf16.mxu0 0
    %823 = vmatpush2.bf16.xpose.msra.mxu0 0
    %824 = vmatprep.subr.bf16.mxu0 0
    %825 = vmatpush2.bf16.xpose.msra.mxu0 0
    %826 = vmatprep.subr.bf16.mxu0 0
    %827 = vmatpush2.bf16.xpose.msra.mxu0 0
    %828 = vmatprep.subr.bf16.mxu0 0
    %829 = vmatpush2.bf16.xpose.msra.mxu0 0
    %830 = vmatprep.subr.bf16.mxu0 0
    %831 = vmatpush2.bf16.xpose.msra.mxu0 0
    %832 = vmatprep.subr.bf16.mxu0 0
    %833 = vmatpush2.bf16.xpose.msra.mxu0 0
    %834 = vmatprep.mubr.bf16.mxu0 0
    %835 = vmatmul.mubr.bf16.gmra.mxu0 %v800
    %v836 = vpop.f32.mrf.mxu0
    %v837 = vadd.f32 0.0, %v836
    %v838 = vpop.f32.mrf.mxu0
    %v839 = vpop.f32.mrf.mxu0
    %v840 = vpop.f32.mrf.mxu0
    %841 = vdwg.mxu0
    %v843 = vsel %vm185, %v798, 0
    %845 = vmatprep.subr.bf16.mxu0 0
    %846 = vmatpush1.bf16.xpose.msra.mxu0 0
    %847 = vmatprep.subr.bf16.mxu0 0
    %848 = vmatpush1.bf16.xpose.msra.mxu0 0
    %849 = vmatprep.subr.bf16.mxu0 0
    %850 = vmatpush1.bf16.xpose.msra.mxu0 0
    %851 = vmatprep.subr.bf16.mxu0 0
    %852 = vmatpush1.bf16.xpose.msra.mxu0 0
    %853 = vmatprep.subr.bf16.mxu0 0
    %854 = vmatpush1.bf16.xpose.msra.mxu0 0
    %855 = vmatprep.subr.bf16.mxu0 0
    %856 = vmatpush1.bf16.xpose.msra.mxu0 0
    %857 = vmatprep.subr.bf16.mxu0 0
    %858 = vmatpush1.bf16.xpose.msra.mxu0 0
    %859 = vmatprep.subr.bf16.mxu0 0
    %860 = vmatpush1.bf16.xpose.msra.mxu0 %v415
    %861 = vmatprep.subr.bf16.mxu0 0
    %862 = vmatpush2.bf16.xpose.msra.mxu0 0
    %863 = vmatprep.subr.bf16.mxu0 0
    %864 = vmatpush2.bf16.xpose.msra.mxu0 0
    %865 = vmatprep.subr.bf16.mxu0 0
    %866 = vmatpush2.bf16.xpose.msra.mxu0 0
    %867 = vmatprep.subr.bf16.mxu0 0
    %868 = vmatpush2.bf16.xpose.msra.mxu0 0
    %869 = vmatprep.subr.bf16.mxu0 0
    %870 = vmatpush2.bf16.xpose.msra.mxu0 0
    %871 = vmatprep.subr.bf16.mxu0 0
    %872 = vmatpush2.bf16.xpose.msra.mxu0 0
    %873 = vmatprep.subr.bf16.mxu0 0
    %874 = vmatpush2.bf16.xpose.msra.mxu0 0
    %875 = vmatprep.subr.bf16.mxu0 0
    %876 = vmatpush2.bf16.xpose.msra.mxu0 0
    %877 = vmatprep.mubr.bf16.mxu0 0
    %878 = vmatmul.mubr.bf16.gmra.mxu0 %v843
    %v879 = vpop.f32.mrf.mxu0
    %v880 = vadd.f32 0.0, %v879
    %v881 = vpop.f32.mrf.mxu0
    %v882 = vpop.f32.mrf.mxu0
    %v883 = vpop.f32.mrf.mxu0
    %884 = vdwg.mxu0
    %v885 = vsel %vm457, %v837, -inf
    %886 = vmax.xlane.f32.xlu0 %v885
    %v887 = vpop.xlane.xlu0 %886
    %v888 = vsel %vm457, %v880, -inf
    %889 = vmax.xlane.f32.xlu0 %v888
    %v890 = vpop.xlane.xlu0 %889
    %v891 = vsub.f32 %v837, %v887
    %v892 = vsub.f32 %v880, %v890
    %v893 = vmul.f32 %v891, 1.442695
    %v894 = vpow.pop %v893
    %v895 = vmul.f32 %v892, 1.442695
    %v896 = vpow.pop %v895
    %v897 = vsel %vm457, %v894, 0.0
    %898 = vadd.xlane.f32.xlu0 %v897
    %v899 = vpop.xlane.xlu0 %898
    %v900 = vsel %vm457, %v896, 0.0
    %901 = vadd.xlane.f32.xlu0 %v900
    %v902 = vpop.xlane.xlu0 %901
    %v903 = vrcp.pop %v899
    %v904 = vrcp.pop %v902
    %v905 = vmul.f32 %v894, %v903
    %v906 = vmul.f32 %v896, %v904
    %v907 = vmul.bf16 %v354, %v796
    %v908 = vmul.bf16 %v355, %v796
    %v909 = vpack.c.bf16 %v905, %v905
    %v910 = vpack.c.bf16 %v906, %v906
    %v912 = vsel %vm457, %v909, 0
    %v915 = vsel %vm608, %v907, 0
    %917 = vmatprep.subr.bf16.mxu0 0
    %918 = vmatpush1.bf16.msra.mxu0 0
    %919 = vmatprep.subr.bf16.mxu0 0
    %920 = vmatpush1.bf16.msra.mxu0 0
    %921 = vmatprep.subr.bf16.mxu0 0
    %922 = vmatpush1.bf16.msra.mxu0 0
    %923 = vmatprep.subr.bf16.mxu0 0
    %924 = vmatpush1.bf16.msra.mxu0 0
    %925 = vmatprep.subr.bf16.mxu0 0
    %926 = vmatpush1.bf16.msra.mxu0 0
    %927 = vmatprep.subr.bf16.mxu0 0
    %928 = vmatpush1.bf16.msra.mxu0 0
    %929 = vmatprep.subr.bf16.mxu0 0
    %930 = vmatpush1.bf16.msra.mxu0 0
    %931 = vmatprep.subr.bf16.mxu0 0
    %932 = vmatpush1.bf16.msra.mxu0 %v915
    %933 = vmatprep.subr.bf16.mxu0 0
    %934 = vmatpush2.bf16.msra.mxu0 0
    %935 = vmatprep.subr.bf16.mxu0 0
    %936 = vmatpush2.bf16.msra.mxu0 0
    %937 = vmatprep.subr.bf16.mxu0 0
    %938 = vmatpush2.bf16.msra.mxu0 0
    %939 = vmatprep.subr.bf16.mxu0 0
    %940 = vmatpush2.bf16.msra.mxu0 0
    %941 = vmatprep.subr.bf16.mxu0 0
    %942 = vmatpush2.bf16.msra.mxu0 0
    %943 = vmatprep.subr.bf16.mxu0 0
    %944 = vmatpush2.bf16.msra.mxu0 0
    %945 = vmatprep.subr.bf16.mxu0 0
    %946 = vmatpush2.bf16.msra.mxu0 0
    %947 = vmatprep.subr.bf16.mxu0 0
    %948 = vmatpush2.bf16.msra.mxu0 0
    %949 = vmatprep.mubr.bf16.mxu0 0
    %950 = vmatmul.mubr.bf16.gmra.mxu0 %v912
    %v951 = vpop.f32.mrf.mxu0
    %v952 = vadd.f32 0.0, %v951
    %v953 = vpop.f32.mrf.mxu0
    %v954 = vpop.f32.mrf.mxu0
    %v955 = vpop.f32.mrf.mxu0
    %956 = vdwg.mxu0
    %v958 = vsel %vm457, %v910, 0
    %v961 = vsel %vm608, %v908, 0
    %963 = vmatprep.subr.bf16.mxu0 0
    %964 = vmatpush1.bf16.msra.mxu0 0
    %965 = vmatprep.subr.bf16.mxu0 0
    %966 = vmatpush1.bf16.msra.mxu0 0
    %967 = vmatprep.subr.bf16.mxu0 0
    %968 = vmatpush1.bf16.msra.mxu0 0
    %969 = vmatprep.subr.bf16.mxu0 0
    %970 = vmatpush1.bf16.msra.mxu0 0
    %971 = vmatprep.subr.bf16.mxu0 0
    %972 = vmatpush1.bf16.msra.mxu0 0
    %973 = vmatprep.subr.bf16.mxu0 0
    %974 = vmatpush1.bf16.msra.mxu0 0
    %975 = vmatprep.subr.bf16.mxu0 0
    %976 = vmatpush1.bf16.msra.mxu0 0
    %977 = vmatprep.subr.bf16.mxu0 0
    %978 = vmatpush1.bf16.msra.mxu0 %v961
    %979 = vmatprep.subr.bf16.mxu0 0
    %980 = vmatpush2.bf16.msra.mxu0 0
    %981 = vmatprep.subr.bf16.mxu0 0
    %982 = vmatpush2.bf16.msra.mxu0 0
    %983 = vmatprep.subr.bf16.mxu0 0
    %984 = vmatpush2.bf16.msra.mxu0 0
    %985 = vmatprep.subr.bf16.mxu0 0
    %986 = vmatpush2.bf16.msra.mxu0 0
    %987 = vmatprep.subr.bf16.mxu0 0
    %988 = vmatpush2.bf16.msra.mxu0 0
    %989 = vmatprep.subr.bf16.mxu0 0
    %990 = vmatpush2.bf16.msra.mxu0 0
    %991 = vmatprep.subr.bf16.mxu0 0
    %992 = vmatpush2.bf16.msra.mxu0 0
    %993 = vmatprep.subr.bf16.mxu0 0
    %994 = vmatpush2.bf16.msra.mxu0 0
    %995 = vmatprep.mubr.bf16.mxu0 0
    %996 = vmatmul.mubr.bf16.gmra.mxu0 %v958
    %v997 = vpop.f32.mrf.mxu0
    %v998 = vadd.f32 0.0, %v997
    %v999 = vpop.f32.mrf.mxu0
    %v1000 = vpop.f32.mrf.mxu0
    %v1001 = vpop.f32.mrf.mxu0
    %1002 = vdwg.mxu0
    %v1003 = vadd.f32 %v739, %v952
    %v1004 = vadd.f32 %v785, %v998
    %v1006 = vpack.i.b16 %v141, %v141
    %v1008 = vlaneseq
    %v1009 = vshrl.u32 %v1008, 7
    %v1010 = vsub.s32 0, %v1009
    %v1011 = vrot.slane %v1006, %v1010
    %v1012 = vmul.bf16 %v350, %v1011
    %v1013 = vmul.bf16 %v351, %v1011
    %v1015 = vsel %vm185, %v1012, 0
    %1017 = vmatprep.subr.bf16.mxu0 0
    %1018 = vmatpush1.bf16.xpose.msra.mxu0 0
    %1019 = vmatprep.subr.bf16.mxu0 0
    %1020 = vmatpush1.bf16.xpose.msra.mxu0 0
    %1021 = vmatprep.subr.bf16.mxu0 0
    %1022 = vmatpush1.bf16.xpose.msra.mxu0 0
    %1023 = vmatprep.subr.bf16.mxu0 0
    %1024 = vmatpush1.bf16.xpose.msra.mxu0 0
    %1025 = vmatprep.subr.bf16.mxu0 0
    %1026 = vmatpush1.bf16.xpose.msra.mxu0 0
    %1027 = vmatprep.subr.bf16.mxu0 0
    %1028 = vmatpush1.bf16.xpose.msra.mxu0 0
    %1029 = vmatprep.subr.bf16.mxu0 0
    %1030 = vmatpush1.bf16.xpose.msra.mxu0 0
    %1031 = vmatprep.subr.bf16.mxu0 0
    %1032 = vmatpush1.bf16.xpose.msra.mxu0 %v369
    %1033 = vmatprep.subr.bf16.mxu0 0
    %1034 = vmatpush2.bf16.xpose.msra.mxu0 0
    %1035 = vmatprep.subr.bf16.mxu0 0
    %1036 = vmatpush2.bf16.xpose.msra.mxu0 0
    %1037 = vmatprep.subr.bf16.mxu0 0
    %1038 = vmatpush2.bf16.xpose.msra.mxu0 0
    %1039 = vmatprep.subr.bf16.mxu0 0
    %1040 = vmatpush2.bf16.xpose.msra.mxu0 0
    %1041 = vmatprep.subr.bf16.mxu0 0
    %1042 = vmatpush2.bf16.xpose.msra.mxu0 0
    %1043 = vmatprep.subr.bf16.mxu0 0
    %1044 = vmatpush2.bf16.xpose.msra.mxu0 0
    %1045 = vmatprep.subr.bf16.mxu0 0
    %1046 = vmatpush2.bf16.xpose.msra.mxu0 0
    %1047 = vmatprep.subr.bf16.mxu0 0
    %1048 = vmatpush2.bf16.xpose.msra.mxu0 0
    %1049 = vmatprep.mubr.bf16.mxu0 0
    %1050 = vmatmul.mubr.bf16.gmra.mxu0 %v1015
    %v1051 = vpop.f32.mrf.mxu0
    %v1052 = vadd.f32 0.0, %v1051
    %v1053 = vpop.f32.mrf.mxu0
    %v1054 = vpop.f32.mrf.mxu0
    %v1055 = vpop.f32.mrf.mxu0
    %1056 = vdwg.mxu0
    %v1058 = vsel %vm185, %v1013, 0
    %1060 = vmatprep.subr.bf16.mxu0 0
    %1061 = vmatpush1.bf16.xpose.msra.mxu0 0
    %1062 = vmatprep.subr.bf16.mxu0 0
    %1063 = vmatpush1.bf16.xpose.msra.mxu0 0
    %1064 = vmatprep.subr.bf16.mxu0 0
    %1065 = vmatpush1.bf16.xpose.msra.mxu0 0
    %1066 = vmatprep.subr.bf16.mxu0 0
    %1067 = vmatpush1.bf16.xpose.msra.mxu0 0
    %1068 = vmatprep.subr.bf16.mxu0 0
    %1069 = vmatpush1.bf16.xpose.msra.mxu0 0
    %1070 = vmatprep.subr.bf16.mxu0 0
    %1071 = vmatpush1.bf16.xpose.msra.mxu0 0
    %1072 = vmatprep.subr.bf16.mxu0 0
    %1073 = vmatpush1.bf16.xpose.msra.mxu0 0
    %1074 = vmatprep.subr.bf16.mxu0 0
    %1075 = vmatpush1.bf16.xpose.msra.mxu0 %v415
    %1076 = vmatprep.subr.bf16.mxu0 0
    %1077 = vmatpush2.bf16.xpose.msra.mxu0 0
    %1078 = vmatprep.subr.bf16.mxu0 0
    %1079 = vmatpush2.bf16.xpose.msra.mxu0 0
    %1080 = vmatprep.subr.bf16.mxu0 0
    %1081 = vmatpush2.bf16.xpose.msra.mxu0 0
    %1082 = vmatprep.subr.bf16.mxu0 0
    %1083 = vmatpush2.bf16.xpose.msra.mxu0 0
    %1084 = vmatprep.subr.bf16.mxu0 0
    %1085 = vmatpush2.bf16.xpose.msra.mxu0 0
    %1086 = vmatprep.subr.bf16.mxu0 0
    %1087 = vmatpush2.bf16.xpose.msra.mxu0 0
    %1088 = vmatprep.subr.bf16.mxu0 0
    %1089 = vmatpush2.bf16.xpose.msra.mxu0 0
    %1090 = vmatprep.subr.bf16.mxu0 0
    %1091 = vmatpush2.bf16.xpose.msra.mxu0 0
    %1092 = vmatprep.mubr.bf16.mxu0 0
    %1093 = vmatmul.mubr.bf16.gmra.mxu0 %v1058
    %v1094 = vpop.f32.mrf.mxu0
    %v1095 = vadd.f32 0.0, %v1094
    %v1096 = vpop.f32.mrf.mxu0
    %v1097 = vpop.f32.mrf.mxu0
    %v1098 = vpop.f32.mrf.mxu0
    %1099 = vdwg.mxu0
    %v1100 = vsel %vm457, %v1052, -inf
    %1101 = vmax.xlane.f32.xlu0 %v1100
    %v1102 = vpop.xlane.xlu0 %1101
    %v1103 = vsel %vm457, %v1095, -inf
    %1104 = vmax.xlane.f32.xlu0 %v1103
    %v1105 = vpop.xlane.xlu0 %1104
    %v1106 = vsub.f32 %v1052, %v1102
    %v1107 = vsub.f32 %v1095, %v1105
    %v1108 = vmul.f32 %v1106, 1.442695
    %v1109 = vpow.pop %v1108
    %v1110 = vmul.f32 %v1107, 1.442695
    %v1111 = vpow.pop %v1110
    %v1112 = vsel %vm457, %v1109, 0.0
    %1113 = vadd.xlane.f32.xlu0 %v1112
    %v1114 = vpop.xlane.xlu0 %1113
    %v1115 = vsel %vm457, %v1111, 0.0
    %1116 = vadd.xlane.f32.xlu0 %v1115
    %v1117 = vpop.xlane.xlu0 %1116
    %v1118 = vrcp.pop %v1114
    %v1119 = vrcp.pop %v1117
    %v1120 = vmul.f32 %v1109, %v1118
    %v1121 = vmul.f32 %v1111, %v1119
    %v1122 = vmul.bf16 %v354, %v1011
    %v1123 = vmul.bf16 %v355, %v1011
    %v1124 = vpack.c.bf16 %v1120, %v1120
    %v1125 = vpack.c.bf16 %v1121, %v1121
    %v1127 = vsel %vm457, %v1124, 0
    %v1130 = vsel %vm608, %v1122, 0
    %1132 = vmatprep.subr.bf16.mxu0 0
    %1133 = vmatpush1.bf16.msra.mxu0 0
    %1134 = vmatprep.subr.bf16.mxu0 0
    %1135 = vmatpush1.bf16.msra.mxu0 0
    %1136 = vmatprep.subr.bf16.mxu0 0
    %1137 = vmatpush1.bf16.msra.mxu0 0
    %1138 = vmatprep.subr.bf16.mxu0 0
    %1139 = vmatpush1.bf16.msra.mxu0 0
    %1140 = vmatprep.subr.bf16.mxu0 0
    %1141 = vmatpush1.bf16.msra.mxu0 0
    %1142 = vmatprep.subr.bf16.mxu0 0
    %1143 = vmatpush1.bf16.msra.mxu0 0
    %1144 = vmatprep.subr.bf16.mxu0 0
    %1145 = vmatpush1.bf16.msra.mxu0 0
    %1146 = vmatprep.subr.bf16.mxu0 0
    %1147 = vmatpush1.bf16.msra.mxu0 %v1130
    %1148 = vmatprep.subr.bf16.mxu0 0
    %1149 = vmatpush2.bf16.msra.mxu0 0
    %1150 = vmatprep.subr.bf16.mxu0 0
    %1151 = vmatpush2.bf16.msra.mxu0 0
    %1152 = vmatprep.subr.bf16.mxu0 0
    %1153 = vmatpush2.bf16.msra.mxu0 0
    %1154 = vmatprep.subr.bf16.mxu0 0
    %1155 = vmatpush2.bf16.msra.mxu0 0
    %1156 = vmatprep.subr.bf16.mxu0 0
    %1157 = vmatpush2.bf16.msra.mxu0 0
    %1158 = vmatprep.subr.bf16.mxu0 0
    %1159 = vmatpush2.bf16.msra.mxu0 0
    %1160 = vmatprep.subr.bf16.mxu0 0
    %1161 = vmatpush2.bf16.msra.mxu0 0
    %1162 = vmatprep.subr.bf16.mxu0 0
    %1163 = vmatpush2.bf16.msra.mxu0 0
    %1164 = vmatprep.mubr.bf16.mxu0 0
    %1165 = vmatmul.mubr.bf16.gmra.mxu0 %v1127
    %v1166 = vpop.f32.mrf.mxu0
    %v1167 = vadd.f32 0.0, %v1166
    %v1168 = vpop.f32.mrf.mxu0
    %v1169 = vpop.f32.mrf.mxu0
    %v1170 = vpop.f32.mrf.mxu0
    %1171 = vdwg.mxu0
    %v1173 = vsel %vm457, %v1125, 0
    %v1176 = vsel %vm608, %v1123, 0
    %1178 = vmatprep.subr.bf16.mxu0 0
    %1179 = vmatpush1.bf16.msra.mxu0 0
    %1180 = vmatprep.subr.bf16.mxu0 0
    %1181 = vmatpush1.bf16.msra.mxu0 0
    %1182 = vmatprep.subr.bf16.mxu0 0
    %1183 = vmatpush1.bf16.msra.mxu0 0
    %1184 = vmatprep.subr.bf16.mxu0 0
    %1185 = vmatpush1.bf16.msra.mxu0 0
    %1186 = vmatprep.subr.bf16.mxu0 0
    %1187 = vmatpush1.bf16.msra.mxu0 0
    %1188 = vmatprep.subr.bf16.mxu0 0
    %1189 = vmatpush1.bf16.msra.mxu0 0
    %1190 = vmatprep.subr.bf16.mxu0 0
    %1191 = vmatpush1.bf16.msra.mxu0 0
    %1192 = vmatprep.subr.bf16.mxu0 0
    %1193 = vmatpush1.bf16.msra.mxu0 %v1176
    %1194 = vmatprep.subr.bf16.mxu0 0
    %1195 = vmatpush2.bf16.msra.mxu0 0
    %1196 = vmatprep.subr.bf16.mxu0 0
    %1197 = vmatpush2.bf16.msra.mxu0 0
    %1198 = vmatprep.subr.bf16.mxu0 0
    %1199 = vmatpush2.bf16.msra.mxu0 0
    %1200 = vmatprep.subr.bf16.mxu0 0
    %1201 = vmatpush2.bf16.msra.mxu0 0
    %1202 = vmatprep.subr.bf16.mxu0 0
    %1203 = vmatpush2.bf16.msra.mxu0 0
    %1204 = vmatprep.subr.bf16.mxu0 0
    %1205 = vmatpush2.bf16.msra.mxu0 0
    %1206 = vmatprep.subr.bf16.mxu0 0
    %1207 = vmatpush2.bf16.msra.mxu0 0
    %1208 = vmatprep.subr.bf16.mxu0 0
    %1209 = vmatpush2.bf16.msra.mxu0 0
    %1210 = vmatprep.mubr.bf16.mxu0 0
    %1211 = vmatmul.mubr.bf16.gmra.mxu0 %v1173
    %v1212 = vpop.f32.mrf.mxu0
    %v1213 = vadd.f32 0.0, %v1212
    %v1214 = vpop.f32.mrf.mxu0
    %v1215 = vpop.f32.mrf.mxu0
    %v1216 = vpop.f32.mrf.mxu0
    %1217 = vdwg.mxu0
    %v1218 = vadd.f32 %v1003, %v1167
    %v1219 = vadd.f32 %v1004, %v1213
    %v1221 = vpack.i.b16 %v142, %v142
    %v1223 = vlaneseq
    %v1224 = vshrl.u32 %v1223, 7
    %v1225 = vsub.s32 0, %v1224
    %v1226 = vrot.slane %v1221, %v1225
    %v1227 = vmul.bf16 %v350, %v1226
    %v1228 = vmul.bf16 %v351, %v1226
    %v1230 = vsel %vm185, %v1227, 0
    %1232 = vmatprep.subr.bf16.mxu0 0
    %1233 = vmatpush1.bf16.xpose.msra.mxu0 0
    %1234 = vmatprep.subr.bf16.mxu0 0
    %1235 = vmatpush1.bf16.xpose.msra.mxu0 0
    %1236 = vmatprep.subr.bf16.mxu0 0
    %1237 = vmatpush1.bf16.xpose.msra.mxu0 0
    %1238 = vmatprep.subr.bf16.mxu0 0
    %1239 = vmatpush1.bf16.xpose.msra.mxu0 0
    %1240 = vmatprep.subr.bf16.mxu0 0
    %1241 = vmatpush1.bf16.xpose.msra.mxu0 0
    %1242 = vmatprep.subr.bf16.mxu0 0
    %1243 = vmatpush1.bf16.xpose.msra.mxu0 0
    %1244 = vmatprep.subr.bf16.mxu0 0
    %1245 = vmatpush1.bf16.xpose.msra.mxu0 0
    %1246 = vmatprep.subr.bf16.mxu0 0
    %1247 = vmatpush1.bf16.xpose.msra.mxu0 %v369
    %1248 = vmatprep.subr.bf16.mxu0 0
    %1249 = vmatpush2.bf16.xpose.msra.mxu0 0
    %1250 = vmatprep.subr.bf16.mxu0 0
    %1251 = vmatpush2.bf16.xpose.msra.mxu0 0
    %1252 = vmatprep.subr.bf16.mxu0 0
    %1253 = vmatpush2.bf16.xpose.msra.mxu0 0
    %1254 = vmatprep.subr.bf16.mxu0 0
    %1255 = vmatpush2.bf16.xpose.msra.mxu0 0
    %1256 = vmatprep.subr.bf16.mxu0 0
    %1257 = vmatpush2.bf16.xpose.msra.mxu0 0
    %1258 = vmatprep.subr.bf16.mxu0 0
    %1259 = vmatpush2.bf16.xpose.msra.mxu0 0
    %1260 = vmatprep.subr.bf16.mxu0 0
    %1261 = vmatpush2.bf16.xpose.msra.mxu0 0
    %1262 = vmatprep.subr.bf16.mxu0 0
    %1263 = vmatpush2.bf16.xpose.msra.mxu0 0
    %1264 = vmatprep.mubr.bf16.mxu0 0
    %1265 = vmatmul.mubr.bf16.gmra.mxu0 %v1230
    %v1266 = vpop.f32.mrf.mxu0
    %v1267 = vadd.f32 0.0, %v1266
    %v1268 = vpop.f32.mrf.mxu0
    %v1269 = vpop.f32.mrf.mxu0
    %v1270 = vpop.f32.mrf.mxu0
    %1271 = vdwg.mxu0
    %v1273 = vsel %vm185, %v1228, 0
    %1275 = vmatprep.subr.bf16.mxu0 0
    %1276 = vmatpush1.bf16.xpose.msra.mxu0 0
    %1277 = vmatprep.subr.bf16.mxu0 0
    %1278 = vmatpush1.bf16.xpose.msra.mxu0 0
    %1279 = vmatprep.subr.bf16.mxu0 0
    %1280 = vmatpush1.bf16.xpose.msra.mxu0 0
    %1281 = vmatprep.subr.bf16.mxu0 0
    %1282 = vmatpush1.bf16.xpose.msra.mxu0 0
    %1283 = vmatprep.subr.bf16.mxu0 0
    %1284 = vmatpush1.bf16.xpose.msra.mxu0 0
    %1285 = vmatprep.subr.bf16.mxu0 0
    %1286 = vmatpush1.bf16.xpose.msra.mxu0 0
    %1287 = vmatprep.subr.bf16.mxu0 0
    %1288 = vmatpush1.bf16.xpose.msra.mxu0 0
    %1289 = vmatprep.subr.bf16.mxu0 0
    %1290 = vmatpush1.bf16.xpose.msra.mxu0 %v415
    %1291 = vmatprep.subr.bf16.mxu0 0
    %1292 = vmatpush2.bf16.xpose.msra.mxu0 0
    %1293 = vmatprep.subr.bf16.mxu0 0
    %1294 = vmatpush2.bf16.xpose.msra.mxu0 0
    %1295 = vmatprep.subr.bf16.mxu0 0
    %1296 = vmatpush2.bf16.xpose.msra.mxu0 0
    %1297 = vmatprep.subr.bf16.mxu0 0
    %1298 = vmatpush2.bf16.xpose.msra.mxu0 0
    %1299 = vmatprep.subr.bf16.mxu0 0
    %1300 = vmatpush2.bf16.xpose.msra.mxu0 0
    %1301 = vmatprep.subr.bf16.mxu0 0
    %1302 = vmatpush2.bf16.xpose.msra.mxu0 0
    %1303 = vmatprep.subr.bf16.mxu0 0
    %1304 = vmatpush2.bf16.xpose.msra.mxu0 0
    %1305 = vmatprep.subr.bf16.mxu0 0
    %1306 = vmatpush2.bf16.xpose.msra.mxu0 0
    %1307 = vmatprep.mubr.bf16.mxu0 0
    %1308 = vmatmul.mubr.bf16.gmra.mxu0 %v1273
    %v1309 = vpop.f32.mrf.mxu0
    %v1310 = vadd.f32 0.0, %v1309
    %v1311 = vpop.f32.mrf.mxu0
    %v1312 = vpop.f32.mrf.mxu0
    %v1313 = vpop.f32.mrf.mxu0
    %1314 = vdwg.mxu0
    %v1315 = vsel %vm457, %v1267, -inf
    %1316 = vmax.xlane.f32.xlu0 %v1315
    %v1317 = vpop.xlane.xlu0 %1316
    %v1318 = vsel %vm457, %v1310, -inf
    %1319 = vmax.xlane.f32.xlu0 %v1318
    %v1320 = vpop.xlane.xlu0 %1319
    %v1321 = vsub.f32 %v1267, %v1317
    %v1322 = vsub.f32 %v1310, %v1320
    %v1323 = vmul.f32 %v1321, 1.442695
    %v1324 = vpow.pop %v1323
    %v1325 = vmul.f32 %v1322, 1.442695
    %v1326 = vpow.pop %v1325
    %v1327 = vsel %vm457, %v1324, 0.0
    %1328 = vadd.xlane.f32.xlu0 %v1327
    %v1329 = vpop.xlane.xlu0 %1328
    %v1330 = vsel %vm457, %v1326, 0.0
    %1331 = vadd.xlane.f32.xlu0 %v1330
    %v1332 = vpop.xlane.xlu0 %1331
    %v1333 = vrcp.pop %v1329
    %v1334 = vrcp.pop %v1332
    %v1335 = vmul.f32 %v1324, %v1333
    %v1336 = vmul.f32 %v1326, %v1334
    %v1337 = vmul.bf16 %v354, %v1226
    %v1338 = vmul.bf16 %v355, %v1226
    %v1339 = vpack.c.bf16 %v1335, %v1335
    %v1340 = vpack.c.bf16 %v1336, %v1336
    %v1342 = vsel %vm457, %v1339, 0
    %v1345 = vsel %vm608, %v1337, 0
    %1347 = vmatprep.subr.bf16.mxu0 0
    %1348 = vmatpush1.bf16.msra.mxu0 0
    %1349 = vmatprep.subr.bf16.mxu0 0
    %1350 = vmatpush1.bf16.msra.mxu0 0
    %1351 = vmatprep.subr.bf16.mxu0 0
    %1352 = vmatpush1.bf16.msra.mxu0 0
    %1353 = vmatprep.subr.bf16.mxu0 0
    %1354 = vmatpush1.bf16.msra.mxu0 0
    %1355 = vmatprep.subr.bf16.mxu0 0
    %1356 = vmatpush1.bf16.msra.mxu0 0
    %1357 = vmatprep.subr.bf16.mxu0 0
    %1358 = vmatpush1.bf16.msra.mxu0 0
    %1359 = vmatprep.subr.bf16.mxu0 0
    %1360 = vmatpush1.bf16.msra.mxu0 0
    %1361 = vmatprep.subr.bf16.mxu0 0
    %1362 = vmatpush1.bf16.msra.mxu0 %v1345
    %1363 = vmatprep.subr.bf16.mxu0 0
    %1364 = vmatpush2.bf16.msra.mxu0 0
    %1365 = vmatprep.subr.bf16.mxu0 0
    %1366 = vmatpush2.bf16.msra.mxu0 0
    %1367 = vmatprep.subr.bf16.mxu0 0
    %1368 = vmatpush2.bf16.msra.mxu0 0
    %1369 = vmatprep.subr.bf16.mxu0 0
    %1370 = vmatpush2.bf16.msra.mxu0 0
    %1371 = vmatprep.subr.bf16.mxu0 0
    %1372 = vmatpush2.bf16.msra.mxu0 0
    %1373 = vmatprep.subr.bf16.mxu0 0
    %1374 = vmatpush2.bf16.msra.mxu0 0
    %1375 = vmatprep.subr.bf16.mxu0 0
    %1376 = vmatpush2.bf16.msra.mxu0 0
    %1377 = vmatprep.subr.bf16.mxu0 0
    %1378 = vmatpush2.bf16.msra.mxu0 0
    %1379 = vmatprep.mubr.bf16.mxu0 0
    %1380 = vmatmul.mubr.bf16.gmra.mxu0 %v1342
    %v1381 = vpop.f32.mrf.mxu0
    %v1382 = vadd.f32 0.0, %v1381
    %v1383 = vpop.f32.mrf.mxu0
    %v1384 = vpop.f32.mrf.mxu0
    %v1385 = vpop.f32.mrf.mxu0
    %1386 = vdwg.mxu0
    %v1388 = vsel %vm457, %v1340, 0
    %v1391 = vsel %vm608, %v1338, 0
    %1393 = vmatprep.subr.bf16.mxu0 0
    %1394 = vmatpush1.bf16.msra.mxu0 0
    %1395 = vmatprep.subr.bf16.mxu0 0
    %1396 = vmatpush1.bf16.msra.mxu0 0
    %1397 = vmatprep.subr.bf16.mxu0 0
    %1398 = vmatpush1.bf16.msra.mxu0 0
    %1399 = vmatprep.subr.bf16.mxu0 0
    %1400 = vmatpush1.bf16.msra.mxu0 0
    %1401 = vmatprep.subr.bf16.mxu0 0
    %1402 = vmatpush1.bf16.msra.mxu0 0
    %1403 = vmatprep.subr.bf16.mxu0 0
    %1404 = vmatpush1.bf16.msra.mxu0 0
    %1405 = vmatprep.subr.bf16.mxu0 0
    %1406 = vmatpush1.bf16.msra.mxu0 0
    %1407 = vmatprep.subr.bf16.mxu0 0
    %1408 = vmatpush1.bf16.msra.mxu0 %v1391
    %1409 = vmatprep.subr.bf16.mxu0 0
    %1410 = vmatpush2.bf16.msra.mxu0 0
    %1411 = vmatprep.subr.bf16.mxu0 0
    %1412 = vmatpush2.bf16.msra.mxu0 0
    %1413 = vmatprep.subr.bf16.mxu0 0
    %1414 = vmatpush2.bf16.msra.mxu0 0
    %1415 = vmatprep.subr.bf16.mxu0 0
    %1416 = vmatpush2.bf16.msra.mxu0 0
    %1417 = vmatprep.subr.bf16.mxu0 0
    %1418 = vmatpush2.bf16.msra.mxu0 0
    %1419 = vmatprep.subr.bf16.mxu0 0
    %1420 = vmatpush2.bf16.msra.mxu0 0
    %1421 = vmatprep.subr.bf16.mxu0 0
    %1422 = vmatpush2.bf16.msra.mxu0 0
    %1423 = vmatprep.subr.bf16.mxu0 0
    %1424 = vmatpush2.bf16.msra.mxu0 0
    %1425 = vmatprep.mubr.bf16.mxu0 0
    %1426 = vmatmul.mubr.bf16.gmra.mxu0 %v1388
    %v1427 = vpop.f32.mrf.mxu0
    %v1428 = vadd.f32 0.0, %v1427
    %v1429 = vpop.f32.mrf.mxu0
    %v1430 = vpop.f32.mrf.mxu0
    %v1431 = vpop.f32.mrf.mxu0
    %1432 = vdwg.mxu0
    %v1433 = vadd.f32 %v1218, %v1382
    %v1434 = vadd.f32 %v1219, %v1428
    %v1436 = vpack.i.b16 %v143, %v143
    %v1438 = vlaneseq
    %v1439 = vshrl.u32 %v1438, 7
    %v1440 = vsub.s32 0, %v1439
    %v1441 = vrot.slane %v1436, %v1440
    %v1442 = vmul.bf16 %v350, %v1441
    %v1443 = vmul.bf16 %v351, %v1441
    %v1445 = vsel %vm185, %v1442, 0
    %1447 = vmatprep.subr.bf16.mxu0 0
    %1448 = vmatpush1.bf16.xpose.msra.mxu0 0
    %1449 = vmatprep.subr.bf16.mxu0 0
    %1450 = vmatpush1.bf16.xpose.msra.mxu0 0
    %1451 = vmatprep.subr.bf16.mxu0 0
    %1452 = vmatpush1.bf16.xpose.msra.mxu0 0
    %1453 = vmatprep.subr.bf16.mxu0 0
    %1454 = vmatpush1.bf16.xpose.msra.mxu0 0
    %1455 = vmatprep.subr.bf16.mxu0 0
    %1456 = vmatpush1.bf16.xpose.msra.mxu0 0
    %1457 = vmatprep.subr.bf16.mxu0 0
    %1458 = vmatpush1.bf16.xpose.msra.mxu0 0
    %1459 = vmatprep.subr.bf16.mxu0 0
    %1460 = vmatpush1.bf16.xpose.msra.mxu0 0
    %1461 = vmatprep.subr.bf16.mxu0 0
    %1462 = vmatpush1.bf16.xpose.msra.mxu0 %v369
    %1463 = vmatprep.subr.bf16.mxu0 0
    %1464 = vmatpush2.bf16.xpose.msra.mxu0 0
    %1465 = vmatprep.subr.bf16.mxu0 0
    %1466 = vmatpush2.bf16.xpose.msra.mxu0 0
    %1467 = vmatprep.subr.bf16.mxu0 0
    %1468 = vmatpush2.bf16.xpose.msra.mxu0 0
    %1469 = vmatprep.subr.bf16.mxu0 0
    %1470 = vmatpush2.bf16.xpose.msra.mxu0 0
    %1471 = vmatprep.subr.bf16.mxu0 0
    %1472 = vmatpush2.bf16.xpose.msra.mxu0 0
    %1473 = vmatprep.subr.bf16.mxu0 0
    %1474 = vmatpush2.bf16.xpose.msra.mxu0 0
    %1475 = vmatprep.subr.bf16.mxu0 0
    %1476 = vmatpush2.bf16.xpose.msra.mxu0 0
    %1477 = vmatprep.subr.bf16.mxu0 0
    %1478 = vmatpush2.bf16.xpose.msra.mxu0 0
    %1479 = vmatprep.mubr.bf16.mxu0 0
    %1480 = vmatmul.mubr.bf16.gmra.mxu0 %v1445
    %v1481 = vpop.f32.mrf.mxu0
    %v1482 = vadd.f32 0.0, %v1481
    %v1483 = vpop.f32.mrf.mxu0
    %v1484 = vpop.f32.mrf.mxu0
    %v1485 = vpop.f32.mrf.mxu0
    %1486 = vdwg.mxu0
    %v1488 = vsel %vm185, %v1443, 0
    %1490 = vmatprep.subr.bf16.mxu0 0
    %1491 = vmatpush1.bf16.xpose.msra.mxu0 0
    %1492 = vmatprep.subr.bf16.mxu0 0
    %1493 = vmatpush1.bf16.xpose.msra.mxu0 0
    %1494 = vmatprep.subr.bf16.mxu0 0
    %1495 = vmatpush1.bf16.xpose.msra.mxu0 0
    %1496 = vmatprep.subr.bf16.mxu0 0
    %1497 = vmatpush1.bf16.xpose.msra.mxu0 0
    %1498 = vmatprep.subr.bf16.mxu0 0
    %1499 = vmatpush1.bf16.xpose.msra.mxu0 0
    %1500 = vmatprep.subr.bf16.mxu0 0
    %1501 = vmatpush1.bf16.xpose.msra.mxu0 0
    %1502 = vmatprep.subr.bf16.mxu0 0
    %1503 = vmatpush1.bf16.xpose.msra.mxu0 0
    %1504 = vmatprep.subr.bf16.mxu0 0
    %1505 = vmatpush1.bf16.xpose.msra.mxu0 %v415
    %1506 = vmatprep.subr.bf16.mxu0 0
    %1507 = vmatpush2.bf16.xpose.msra.mxu0 0
    %1508 = vmatprep.subr.bf16.mxu0 0
    %1509 = vmatpush2.bf16.xpose.msra.mxu0 0
    %1510 = vmatprep.subr.bf16.mxu0 0
    %1511 = vmatpush2.bf16.xpose.msra.mxu0 0
    %1512 = vmatprep.subr.bf16.mxu0 0
    %1513 = vmatpush2.bf16.xpose.msra.mxu0 0
    %1514 = vmatprep.subr.bf16.mxu0 0
    %1515 = vmatpush2.bf16.xpose.msra.mxu0 0
    %1516 = vmatprep.subr.bf16.mxu0 0
    %1517 = vmatpush2.bf16.xpose.msra.mxu0 0
    %1518 = vmatprep.subr.bf16.mxu0 0
    %1519 = vmatpush2.bf16.xpose.msra.mxu0 0
    %1520 = vmatprep.subr.bf16.mxu0 0
    %1521 = vmatpush2.bf16.xpose.msra.mxu0 0
    %1522 = vmatprep.mubr.bf16.mxu0 0
    %1523 = vmatmul.mubr.bf16.gmra.mxu0 %v1488
    %v1524 = vpop.f32.mrf.mxu0
    %v1525 = vadd.f32 0.0, %v1524
    %v1526 = vpop.f32.mrf.mxu0
    %v1527 = vpop.f32.mrf.mxu0
    %v1528 = vpop.f32.mrf.mxu0
    %1529 = vdwg.mxu0
    %v1530 = vsel %vm457, %v1482, -inf
    %1531 = vmax.xlane.f32.xlu0 %v1530
    %v1532 = vpop.xlane.xlu0 %1531
    %v1533 = vsel %vm457, %v1525, -inf
    %1534 = vmax.xlane.f32.xlu0 %v1533
    %v1535 = vpop.xlane.xlu0 %1534
    %v1536 = vsub.f32 %v1482, %v1532
    %v1537 = vsub.f32 %v1525, %v1535
    %v1538 = vmul.f32 %v1536, 1.442695
    %v1539 = vpow.pop %v1538
    %v1540 = vmul.f32 %v1537, 1.442695
    %v1541 = vpow.pop %v1540
    %v1542 = vsel %vm457, %v1539, 0.0
    %1543 = vadd.xlane.f32.xlu0 %v1542
    %v1544 = vpop.xlane.xlu0 %1543
    %v1545 = vsel %vm457, %v1541, 0.0
    %1546 = vadd.xlane.f32.xlu0 %v1545
    %v1547 = vpop.xlane.xlu0 %1546
    %v1548 = vrcp.pop %v1544
    %v1549 = vrcp.pop %v1547
    %v1550 = vmul.f32 %v1539, %v1548
    %v1551 = vmul.f32 %v1541, %v1549
    %v1552 = vmul.bf16 %v354, %v1441
    %v1553 = vmul.bf16 %v355, %v1441
    %v1554 = vpack.c.bf16 %v1550, %v1550
    %v1555 = vpack.c.bf16 %v1551, %v1551
    %v1557 = vsel %vm457, %v1554, 0
    %v1560 = vsel %vm608, %v1552, 0
    %1562 = vmatprep.subr.bf16.mxu0 0
    %1563 = vmatpush1.bf16.msra.mxu0 0
    %1564 = vmatprep.subr.bf16.mxu0 0
    %1565 = vmatpush1.bf16.msra.mxu0 0
    %1566 = vmatprep.subr.bf16.mxu0 0
    %1567 = vmatpush1.bf16.msra.mxu0 0
    %1568 = vmatprep.subr.bf16.mxu0 0
    %1569 = vmatpush1.bf16.msra.mxu0 0
    %1570 = vmatprep.subr.bf16.mxu0 0
    %1571 = vmatpush1.bf16.msra.mxu0 0
    %1572 = vmatprep.subr.bf16.mxu0 0
    %1573 = vmatpush1.bf16.msra.mxu0 0
    %1574 = vmatprep.subr.bf16.mxu0 0
    %1575 = vmatpush1.bf16.msra.mxu0 0
    %1576 = vmatprep.subr.bf16.mxu0 0
    %1577 = vmatpush1.bf16.msra.mxu0 %v1560
    %1578 = vmatprep.subr.bf16.mxu0 0
    %1579 = vmatpush2.bf16.msra.mxu0 0
    %1580 = vmatprep.subr.bf16.mxu0 0
    %1581 = vmatpush2.bf16.msra.mxu0 0
    %1582 = vmatprep.subr.bf16.mxu0 0
    %1583 = vmatpush2.bf16.msra.mxu0 0
    %1584 = vmatprep.subr.bf16.mxu0 0
    %1585 = vmatpush2.bf16.msra.mxu0 0
    %1586 = vmatprep.subr.bf16.mxu0 0
    %1587 = vmatpush2.bf16.msra.mxu0 0
    %1588 = vmatprep.subr.bf16.mxu0 0
    %1589 = vmatpush2.bf16.msra.mxu0 0
    %1590 = vmatprep.subr.bf16.mxu0 0
    %1591 = vmatpush2.bf16.msra.mxu0 0
    %1592 = vmatprep.subr.bf16.mxu0 0
    %1593 = vmatpush2.bf16.msra.mxu0 0
    %1594 = vmatprep.mubr.bf16.mxu0 0
    %1595 = vmatmul.mubr.bf16.gmra.mxu0 %v1557
    %v1596 = vpop.f32.mrf.mxu0
    %v1597 = vadd.f32 0.0, %v1596
    %v1598 = vpop.f32.mrf.mxu0
    %v1599 = vpop.f32.mrf.mxu0
    %v1600 = vpop.f32.mrf.mxu0
    %1601 = vdwg.mxu0
    %v1603 = vsel %vm457, %v1555, 0
    %v1606 = vsel %vm608, %v1553, 0
    %1608 = vmatprep.subr.bf16.mxu0 0
    %1609 = vmatpush1.bf16.msra.mxu0 0
    %1610 = vmatprep.subr.bf16.mxu0 0
    %1611 = vmatpush1.bf16.msra.mxu0 0
    %1612 = vmatprep.subr.bf16.mxu0 0
    %1613 = vmatpush1.bf16.msra.mxu0 0
    %1614 = vmatprep.subr.bf16.mxu0 0
    %1615 = vmatpush1.bf16.msra.mxu0 0
    %1616 = vmatprep.subr.bf16.mxu0 0
    %1617 = vmatpush1.bf16.msra.mxu0 0
    %1618 = vmatprep.subr.bf16.mxu0 0
    %1619 = vmatpush1.bf16.msra.mxu0 0
    %1620 = vmatprep.subr.bf16.mxu0 0
    %1621 = vmatpush1.bf16.msra.mxu0 0
    %1622 = vmatprep.subr.bf16.mxu0 0
    %1623 = vmatpush1.bf16.msra.mxu0 %v1606
    %1624 = vmatprep.subr.bf16.mxu0 0
    %1625 = vmatpush2.bf16.msra.mxu0 0
    %1626 = vmatprep.subr.bf16.mxu0 0
    %1627 = vmatpush2.bf16.msra.mxu0 0
    %1628 = vmatprep.subr.bf16.mxu0 0
    %1629 = vmatpush2.bf16.msra.mxu0 0
    %1630 = vmatprep.subr.bf16.mxu0 0
    %1631 = vmatpush2.bf16.msra.mxu0 0
    %1632 = vmatprep.subr.bf16.mxu0 0
    %1633 = vmatpush2.bf16.msra.mxu0 0
    %1634 = vmatprep.subr.bf16.mxu0 0
    %1635 = vmatpush2.bf16.msra.mxu0 0
    %1636 = vmatprep.subr.bf16.mxu0 0
    %1637 = vmatpush2.bf16.msra.mxu0 0
    %1638 = vmatprep.subr.bf16.mxu0 0
    %1639 = vmatpush2.bf16.msra.mxu0 0
    %1640 = vmatprep.mubr.bf16.mxu0 0
    %1641 = vmatmul.mubr.bf16.gmra.mxu0 %v1603
    %v1642 = vpop.f32.mrf.mxu0
    %v1643 = vadd.f32 0.0, %v1642
    %v1644 = vpop.f32.mrf.mxu0
    %v1645 = vpop.f32.mrf.mxu0
    %v1646 = vpop.f32.mrf.mxu0
    %1647 = vdwg.mxu0
    %v1648 = vadd.f32 %v1433, %v1597
    %v1649 = vadd.f32 %v1434, %v1643
    %v1651 = vpack.i.b16 %v144, %v144
    %v1653 = vlaneseq
    %v1654 = vshrl.u32 %v1653, 7
    %v1655 = vsub.s32 0, %v1654
    %v1656 = vrot.slane %v1651, %v1655
    %v1657 = vmul.bf16 %v350, %v1656
    %v1658 = vmul.bf16 %v351, %v1656
    %v1660 = vsel %vm185, %v1657, 0
    %1662 = vmatprep.subr.bf16.mxu0 0
    %1663 = vmatpush1.bf16.xpose.msra.mxu0 0
    %1664 = vmatprep.subr.bf16.mxu0 0
    %1665 = vmatpush1.bf16.xpose.msra.mxu0 0
    %1666 = vmatprep.subr.bf16.mxu0 0
    %1667 = vmatpush1.bf16.xpose.msra.mxu0 0
    %1668 = vmatprep.subr.bf16.mxu0 0
    %1669 = vmatpush1.bf16.xpose.msra.mxu0 0
    %1670 = vmatprep.subr.bf16.mxu0 0
    %1671 = vmatpush1.bf16.xpose.msra.mxu0 0
    %1672 = vmatprep.subr.bf16.mxu0 0
    %1673 = vmatpush1.bf16.xpose.msra.mxu0 0
    %1674 = vmatprep.subr.bf16.mxu0 0
    %1675 = vmatpush1.bf16.xpose.msra.mxu0 0
    %1676 = vmatprep.subr.bf16.mxu0 0
    %1677 = vmatpush1.bf16.xpose.msra.mxu0 %v369
    %1678 = vmatprep.subr.bf16.mxu0 0
    %1679 = vmatpush2.bf16.xpose.msra.mxu0 0
    %1680 = vmatprep.subr.bf16.mxu0 0
    %1681 = vmatpush2.bf16.xpose.msra.mxu0 0
    %1682 = vmatprep.subr.bf16.mxu0 0
    %1683 = vmatpush2.bf16.xpose.msra.mxu0 0
    %1684 = vmatprep.subr.bf16.mxu0 0
    %1685 = vmatpush2.bf16.xpose.msra.mxu0 0
    %1686 = vmatprep.subr.bf16.mxu0 0
    %1687 = vmatpush2.bf16.xpose.msra.mxu0 0
    %1688 = vmatprep.subr.bf16.mxu0 0
    %1689 = vmatpush2.bf16.xpose.msra.mxu0 0
    %1690 = vmatprep.subr.bf16.mxu0 0
    %1691 = vmatpush2.bf16.xpose.msra.mxu0 0
    %1692 = vmatprep.subr.bf16.mxu0 0
    %1693 = vmatpush2.bf16.xpose.msra.mxu0 0
    %1694 = vmatprep.mubr.bf16.mxu0 0
    %1695 = vmatmul.mubr.bf16.gmra.mxu0 %v1660
    %v1696 = vpop.f32.mrf.mxu0
    %v1697 = vadd.f32 0.0, %v1696
    %v1698 = vpop.f32.mrf.mxu0
    %v1699 = vpop.f32.mrf.mxu0
    %v1700 = vpop.f32.mrf.mxu0
    %1701 = vdwg.mxu0
    %v1703 = vsel %vm185, %v1658, 0
    %1705 = vmatprep.subr.bf16.mxu0 0
    %1706 = vmatpush1.bf16.xpose.msra.mxu0 0
    %1707 = vmatprep.subr.bf16.mxu0 0
    %1708 = vmatpush1.bf16.xpose.msra.mxu0 0
    %1709 = vmatprep.subr.bf16.mxu0 0
    %1710 = vmatpush1.bf16.xpose.msra.mxu0 0
    %1711 = vmatprep.subr.bf16.mxu0 0
    %1712 = vmatpush1.bf16.xpose.msra.mxu0 0
    %1713 = vmatprep.subr.bf16.mxu0 0
    %1714 = vmatpush1.bf16.xpose.msra.mxu0 0
    %1715 = vmatprep.subr.bf16.mxu0 0
    %1716 = vmatpush1.bf16.xpose.msra.mxu0 0
    %1717 = vmatprep.subr.bf16.mxu0 0
    %1718 = vmatpush1.bf16.xpose.msra.mxu0 0
    %1719 = vmatprep.subr.bf16.mxu0 0
    %1720 = vmatpush1.bf16.xpose.msra.mxu0 %v415
    %1721 = vmatprep.subr.bf16.mxu0 0
    %1722 = vmatpush2.bf16.xpose.msra.mxu0 0
    %1723 = vmatprep.subr.bf16.mxu0 0
    %1724 = vmatpush2.bf16.xpose.msra.mxu0 0
    %1725 = vmatprep.subr.bf16.mxu0 0
    %1726 = vmatpush2.bf16.xpose.msra.mxu0 0
    %1727 = vmatprep.subr.bf16.mxu0 0
    %1728 = vmatpush2.bf16.xpose.msra.mxu0 0
    %1729 = vmatprep.subr.bf16.mxu0 0
    %1730 = vmatpush2.bf16.xpose.msra.mxu0 0
    %1731 = vmatprep.subr.bf16.mxu0 0
    %1732 = vmatpush2.bf16.xpose.msra.mxu0 0
    %1733 = vmatprep.subr.bf16.mxu0 0
    %1734 = vmatpush2.bf16.xpose.msra.mxu0 0
    %1735 = vmatprep.subr.bf16.mxu0 0
    %1736 = vmatpush2.bf16.xpose.msra.mxu0 0
    %1737 = vmatprep.mubr.bf16.mxu0 0
    %1738 = vmatmul.mubr.bf16.gmra.mxu0 %v1703
    %v1739 = vpop.f32.mrf.mxu0
    %v1740 = vadd.f32 0.0, %v1739
    %v1741 = vpop.f32.mrf.mxu0
    %v1742 = vpop.f32.mrf.mxu0
    %v1743 = vpop.f32.mrf.mxu0
    %1744 = vdwg.mxu0
    %v1745 = vsel %vm457, %v1697, -inf
    %1746 = vmax.xlane.f32.xlu0 %v1745
    %v1747 = vpop.xlane.xlu0 %1746
    %v1748 = vsel %vm457, %v1740, -inf
    %1749 = vmax.xlane.f32.xlu0 %v1748
    %v1750 = vpop.xlane.xlu0 %1749
    %v1751 = vsub.f32 %v1697, %v1747
    %v1752 = vsub.f32 %v1740, %v1750
    %v1753 = vmul.f32 %v1751, 1.442695
    %v1754 = vpow.pop %v1753
    %v1755 = vmul.f32 %v1752, 1.442695
    %v1756 = vpow.pop %v1755
    %v1757 = vsel %vm457, %v1754, 0.0
    %1758 = vadd.xlane.f32.xlu0 %v1757
    %v1759 = vpop.xlane.xlu0 %1758
    %v1760 = vsel %vm457, %v1756, 0.0
    %1761 = vadd.xlane.f32.xlu0 %v1760
    %v1762 = vpop.xlane.xlu0 %1761
    %v1763 = vrcp.pop %v1759
    %v1764 = vrcp.pop %v1762
    %v1765 = vmul.f32 %v1754, %v1763
    %v1766 = vmul.f32 %v1756, %v1764
    %v1767 = vmul.bf16 %v354, %v1656
    %v1768 = vmul.bf16 %v355, %v1656
    %v1769 = vpack.c.bf16 %v1765, %v1765
    %v1770 = vpack.c.bf16 %v1766, %v1766
    %v1772 = vsel %vm457, %v1769, 0
    %v1775 = vsel %vm608, %v1767, 0
    %1777 = vmatprep.subr.bf16.mxu0 0
    %1778 = vmatpush1.bf16.msra.mxu0 0
    %1779 = vmatprep.subr.bf16.mxu0 0
    %1780 = vmatpush1.bf16.msra.mxu0 0
    %1781 = vmatprep.subr.bf16.mxu0 0
    %1782 = vmatpush1.bf16.msra.mxu0 0
    %1783 = vmatprep.subr.bf16.mxu0 0
    %1784 = vmatpush1.bf16.msra.mxu0 0
    %1785 = vmatprep.subr.bf16.mxu0 0
    %1786 = vmatpush1.bf16.msra.mxu0 0
    %1787 = vmatprep.subr.bf16.mxu0 0
    %1788 = vmatpush1.bf16.msra.mxu0 0
    %1789 = vmatprep.subr.bf16.mxu0 0
    %1790 = vmatpush1.bf16.msra.mxu0 0
    %1791 = vmatprep.subr.bf16.mxu0 0
    %1792 = vmatpush1.bf16.msra.mxu0 %v1775
    %1793 = vmatprep.subr.bf16.mxu0 0
    %1794 = vmatpush2.bf16.msra.mxu0 0
    %1795 = vmatprep.subr.bf16.mxu0 0
    %1796 = vmatpush2.bf16.msra.mxu0 0
    %1797 = vmatprep.subr.bf16.mxu0 0
    %1798 = vmatpush2.bf16.msra.mxu0 0
    %1799 = vmatprep.subr.bf16.mxu0 0
    %1800 = vmatpush2.bf16.msra.mxu0 0
    %1801 = vmatprep.subr.bf16.mxu0 0
    %1802 = vmatpush2.bf16.msra.mxu0 0
    %1803 = vmatprep.subr.bf16.mxu0 0
    %1804 = vmatpush2.bf16.msra.mxu0 0
    %1805 = vmatprep.subr.bf16.mxu0 0
    %1806 = vmatpush2.bf16.msra.mxu0 0
    %1807 = vmatprep.subr.bf16.mxu0 0
    %1808 = vmatpush2.bf16.msra.mxu0 0
    %1809 = vmatprep.mubr.bf16.mxu0 0
    %1810 = vmatmul.mubr.bf16.gmra.mxu0 %v1772
    %v1811 = vpop.f32.mrf.mxu0
    %v1812 = vadd.f32 0.0, %v1811
    %v1813 = vpop.f32.mrf.mxu0
    %v1814 = vpop.f32.mrf.mxu0
    %v1815 = vpop.f32.mrf.mxu0
    %1816 = vdwg.mxu0
    %v1818 = vsel %vm457, %v1770, 0
    %v1821 = vsel %vm608, %v1768, 0
    %1823 = vmatprep.subr.bf16.mxu0 0
    %1824 = vmatpush1.bf16.msra.mxu0 0
    %1825 = vmatprep.subr.bf16.mxu0 0
    %1826 = vmatpush1.bf16.msra.mxu0 0
    %1827 = vmatprep.subr.bf16.mxu0 0
    %1828 = vmatpush1.bf16.msra.mxu0 0
    %1829 = vmatprep.subr.bf16.mxu0 0
    %1830 = vmatpush1.bf16.msra.mxu0 0
    %1831 = vmatprep.subr.bf16.mxu0 0
    %1832 = vmatpush1.bf16.msra.mxu0 0
    %1833 = vmatprep.subr.bf16.mxu0 0
    %1834 = vmatpush1.bf16.msra.mxu0 0
    %1835 = vmatprep.subr.bf16.mxu0 0
    %1836 = vmatpush1.bf16.msra.mxu0 0
    %1837 = vmatprep.subr.bf16.mxu0 0
    %1838 = vmatpush1.bf16.msra.mxu0 %v1821
    %1839 = vmatprep.subr.bf16.mxu0 0
    %1840 = vmatpush2.bf16.msra.mxu0 0
    %1841 = vmatprep.subr.bf16.mxu0 0
    %1842 = vmatpush2.bf16.msra.mxu0 0
    %1843 = vmatprep.subr.bf16.mxu0 0
    %1844 = vmatpush2.bf16.msra.mxu0 0
    %1845 = vmatprep.subr.bf16.mxu0 0
    %1846 = vmatpush2.bf16.msra.mxu0 0
    %1847 = vmatprep.subr.bf16.mxu0 0
    %1848 = vmatpush2.bf16.msra.mxu0 0
    %1849 = vmatprep.subr.bf16.mxu0 0
    %1850 = vmatpush2.bf16.msra.mxu0 0
    %1851 = vmatprep.subr.bf16.mxu0 0
    %1852 = vmatpush2.bf16.msra.mxu0 0
    %1853 = vmatprep.subr.bf16.mxu0 0
    %1854 = vmatpush2.bf16.msra.mxu0 0
    %1855 = vmatprep.mubr.bf16.mxu0 0
    %1856 = vmatmul.mubr.bf16.gmra.mxu0 %v1818
    %v1857 = vpop.f32.mrf.mxu0
    %v1858 = vadd.f32 0.0, %v1857
    %v1859 = vpop.f32.mrf.mxu0
    %v1860 = vpop.f32.mrf.mxu0
    %v1861 = vpop.f32.mrf.mxu0
    %1862 = vdwg.mxu0
    %v1863 = vadd.f32 %v1648, %v1812
    %v1864 = vadd.f32 %v1649, %v1858
    %v1866 = vpack.i.b16 %v145, %v145
    %v1868 = vlaneseq
    %v1869 = vshrl.u32 %v1868, 7
    %v1870 = vsub.s32 0, %v1869
    %v1871 = vrot.slane %v1866, %v1870
    %v1872 = vmul.bf16 %v350, %v1871
    %v1873 = vmul.bf16 %v351, %v1871
    %v1875 = vsel %vm185, %v1872, 0
    %1877 = vmatprep.subr.bf16.mxu0 0
    %1878 = vmatpush1.bf16.xpose.msra.mxu0 0
    %1879 = vmatprep.subr.bf16.mxu0 0
    %1880 = vmatpush1.bf16.xpose.msra.mxu0 0
    %1881 = vmatprep.subr.bf16.mxu0 0
    %1882 = vmatpush1.bf16.xpose.msra.mxu0 0
    %1883 = vmatprep.subr.bf16.mxu0 0
    %1884 = vmatpush1.bf16.xpose.msra.mxu0 0
    %1885 = vmatprep.subr.bf16.mxu0 0
    %1886 = vmatpush1.bf16.xpose.msra.mxu0 0
    %1887 = vmatprep.subr.bf16.mxu0 0
    %1888 = vmatpush1.bf16.xpose.msra.mxu0 0
    %1889 = vmatprep.subr.bf16.mxu0 0
    %1890 = vmatpush1.bf16.xpose.msra.mxu0 0
    %1891 = vmatprep.subr.bf16.mxu0 0
    %1892 = vmatpush1.bf16.xpose.msra.mxu0 %v369
    %1893 = vmatprep.subr.bf16.mxu0 0
    %1894 = vmatpush2.bf16.xpose.msra.mxu0 0
    %1895 = vmatprep.subr.bf16.mxu0 0
    %1896 = vmatpush2.bf16.xpose.msra.mxu0 0
    %1897 = vmatprep.subr.bf16.mxu0 0
    %1898 = vmatpush2.bf16.xpose.msra.mxu0 0
    %1899 = vmatprep.subr.bf16.mxu0 0
    %1900 = vmatpush2.bf16.xpose.msra.mxu0 0
    %1901 = vmatprep.subr.bf16.mxu0 0
    %1902 = vmatpush2.bf16.xpose.msra.mxu0 0
    %1903 = vmatprep.subr.bf16.mxu0 0
    %1904 = vmatpush2.bf16.xpose.msra.mxu0 0
    %1905 = vmatprep.subr.bf16.mxu0 0
    %1906 = vmatpush2.bf16.xpose.msra.mxu0 0
    %1907 = vmatprep.subr.bf16.mxu0 0
    %1908 = vmatpush2.bf16.xpose.msra.mxu0 0
    %1909 = vmatprep.mubr.bf16.mxu0 0
    %1910 = vmatmul.mubr.bf16.gmra.mxu0 %v1875
    %v1911 = vpop.f32.mrf.mxu0
    %v1912 = vadd.f32 0.0, %v1911
    %v1913 = vpop.f32.mrf.mxu0
    %v1914 = vpop.f32.mrf.mxu0
    %v1915 = vpop.f32.mrf.mxu0
    %1916 = vdwg.mxu0
    %v1918 = vsel %vm185, %v1873, 0
    %1920 = vmatprep.subr.bf16.mxu0 0
    %1921 = vmatpush1.bf16.xpose.msra.mxu0 0
    %1922 = vmatprep.subr.bf16.mxu0 0
    %1923 = vmatpush1.bf16.xpose.msra.mxu0 0
    %1924 = vmatprep.subr.bf16.mxu0 0
    %1925 = vmatpush1.bf16.xpose.msra.mxu0 0
    %1926 = vmatprep.subr.bf16.mxu0 0
    %1927 = vmatpush1.bf16.xpose.msra.mxu0 0
    %1928 = vmatprep.subr.bf16.mxu0 0
    %1929 = vmatpush1.bf16.xpose.msra.mxu0 0
    %1930 = vmatprep.subr.bf16.mxu0 0
    %1931 = vmatpush1.bf16.xpose.msra.mxu0 0
    %1932 = vmatprep.subr.bf16.mxu0 0
    %1933 = vmatpush1.bf16.xpose.msra.mxu0 0
    %1934 = vmatprep.subr.bf16.mxu0 0
    %1935 = vmatpush1.bf16.xpose.msra.mxu0 %v415
    %1936 = vmatprep.subr.bf16.mxu0 0
    %1937 = vmatpush2.bf16.xpose.msra.mxu0 0
    %1938 = vmatprep.subr.bf16.mxu0 0
    %1939 = vmatpush2.bf16.xpose.msra.mxu0 0
    %1940 = vmatprep.subr.bf16.mxu0 0
    %1941 = vmatpush2.bf16.xpose.msra.mxu0 0
    %1942 = vmatprep.subr.bf16.mxu0 0
    %1943 = vmatpush2.bf16.xpose.msra.mxu0 0
    %1944 = vmatprep.subr.bf16.mxu0 0
    %1945 = vmatpush2.bf16.xpose.msra.mxu0 0
    %1946 = vmatprep.subr.bf16.mxu0 0
    %1947 = vmatpush2.bf16.xpose.msra.mxu0 0
    %1948 = vmatprep.subr.bf16.mxu0 0
    %1949 = vmatpush2.bf16.xpose.msra.mxu0 0
    %1950 = vmatprep.subr.bf16.mxu0 0
    %1951 = vmatpush2.bf16.xpose.msra.mxu0 0
    %1952 = vmatprep.mubr.bf16.mxu0 0
    %1953 = vmatmul.mubr.bf16.gmra.mxu0 %v1918
    %v1954 = vpop.f32.mrf.mxu0
    %v1955 = vadd.f32 0.0, %v1954
    %v1956 = vpop.f32.mrf.mxu0
    %v1957 = vpop.f32.mrf.mxu0
    %v1958 = vpop.f32.mrf.mxu0
    %1959 = vdwg.mxu0
    %v1960 = vsel %vm457, %v1912, -inf
    %1961 = vmax.xlane.f32.xlu0 %v1960
    %v1962 = vpop.xlane.xlu0 %1961
    %v1963 = vsel %vm457, %v1955, -inf
    %1964 = vmax.xlane.f32.xlu0 %v1963
    %v1965 = vpop.xlane.xlu0 %1964
    %v1966 = vsub.f32 %v1912, %v1962
    %v1967 = vsub.f32 %v1955, %v1965
    %v1968 = vmul.f32 %v1966, 1.442695
    %v1969 = vpow.pop %v1968
    %v1970 = vmul.f32 %v1967, 1.442695
    %v1971 = vpow.pop %v1970
    %v1972 = vsel %vm457, %v1969, 0.0
    %1973 = vadd.xlane.f32.xlu0 %v1972
    %v1974 = vpop.xlane.xlu0 %1973
    %v1975 = vsel %vm457, %v1971, 0.0
    %1976 = vadd.xlane.f32.xlu0 %v1975
    %v1977 = vpop.xlane.xlu0 %1976
    %v1978 = vrcp.pop %v1974
    %v1979 = vrcp.pop %v1977
    %v1980 = vmul.f32 %v1969, %v1978
    %v1981 = vmul.f32 %v1971, %v1979
    %v1982 = vmul.bf16 %v354, %v1871
    %v1983 = vmul.bf16 %v355, %v1871
    %v1984 = vpack.c.bf16 %v1980, %v1980
    %v1985 = vpack.c.bf16 %v1981, %v1981
    %v1987 = vsel %vm457, %v1984, 0
    %v1990 = vsel %vm608, %v1982, 0
    %1992 = vmatprep.subr.bf16.mxu0 0
    %1993 = vmatpush1.bf16.msra.mxu0 0
    %1994 = vmatprep.subr.bf16.mxu0 0
    %1995 = vmatpush1.bf16.msra.mxu0 0
    %1996 = vmatprep.subr.bf16.mxu0 0
    %1997 = vmatpush1.bf16.msra.mxu0 0
    %1998 = vmatprep.subr.bf16.mxu0 0
    %1999 = vmatpush1.bf16.msra.mxu0 0
    %2000 = vmatprep.subr.bf16.mxu0 0
    %2001 = vmatpush1.bf16.msra.mxu0 0
    %2002 = vmatprep.subr.bf16.mxu0 0
    %2003 = vmatpush1.bf16.msra.mxu0 0
    %2004 = vmatprep.subr.bf16.mxu0 0
    %2005 = vmatpush1.bf16.msra.mxu0 0
    %2006 = vmatprep.subr.bf16.mxu0 0
    %2007 = vmatpush1.bf16.msra.mxu0 %v1990
    %2008 = vmatprep.subr.bf16.mxu0 0
    %2009 = vmatpush2.bf16.msra.mxu0 0
    %2010 = vmatprep.subr.bf16.mxu0 0
    %2011 = vmatpush2.bf16.msra.mxu0 0
    %2012 = vmatprep.subr.bf16.mxu0 0
    %2013 = vmatpush2.bf16.msra.mxu0 0
    %2014 = vmatprep.subr.bf16.mxu0 0
    %2015 = vmatpush2.bf16.msra.mxu0 0
    %2016 = vmatprep.subr.bf16.mxu0 0
    %2017 = vmatpush2.bf16.msra.mxu0 0
    %2018 = vmatprep.subr.bf16.mxu0 0
    %2019 = vmatpush2.bf16.msra.mxu0 0
    %2020 = vmatprep.subr.bf16.mxu0 0
    %2021 = vmatpush2.bf16.msra.mxu0 0
    %2022 = vmatprep.subr.bf16.mxu0 0
    %2023 = vmatpush2.bf16.msra.mxu0 0
    %2024 = vmatprep.mubr.bf16.mxu0 0
    %2025 = vmatmul.mubr.bf16.gmra.mxu0 %v1987
    %v2026 = vpop.f32.mrf.mxu0
    %v2027 = vadd.f32 0.0, %v2026
    %v2028 = vpop.f32.mrf.mxu0
    %v2029 = vpop.f32.mrf.mxu0
    %v2030 = vpop.f32.mrf.mxu0
    %2031 = vdwg.mxu0
    %v2033 = vsel %vm457, %v1985, 0
    %v2036 = vsel %vm608, %v1983, 0
    %2038 = vmatprep.subr.bf16.mxu0 0
    %2039 = vmatpush1.bf16.msra.mxu0 0
    %2040 = vmatprep.subr.bf16.mxu0 0
    %2041 = vmatpush1.bf16.msra.mxu0 0
    %2042 = vmatprep.subr.bf16.mxu0 0
    %2043 = vmatpush1.bf16.msra.mxu0 0
    %2044 = vmatprep.subr.bf16.mxu0 0
    %2045 = vmatpush1.bf16.msra.mxu0 0
    %2046 = vmatprep.subr.bf16.mxu0 0
    %2047 = vmatpush1.bf16.msra.mxu0 0
    %2048 = vmatprep.subr.bf16.mxu0 0
    %2049 = vmatpush1.bf16.msra.mxu0 0
    %2050 = vmatprep.subr.bf16.mxu0 0
    %2051 = vmatpush1.bf16.msra.mxu0 0
    %2052 = vmatprep.subr.bf16.mxu0 0
    %2053 = vmatpush1.bf16.msra.mxu0 %v2036
    %2054 = vmatprep.subr.bf16.mxu0 0
    %2055 = vmatpush2.bf16.msra.mxu0 0
    %2056 = vmatprep.subr.bf16.mxu0 0
    %2057 = vmatpush2.bf16.msra.mxu0 0
    %2058 = vmatprep.subr.bf16.mxu0 0
    %2059 = vmatpush2.bf16.msra.mxu0 0
    %2060 = vmatprep.subr.bf16.mxu0 0
    %2061 = vmatpush2.bf16.msra.mxu0 0
    %2062 = vmatprep.subr.bf16.mxu0 0
    %2063 = vmatpush2.bf16.msra.mxu0 0
    %2064 = vmatprep.subr.bf16.mxu0 0
    %2065 = vmatpush2.bf16.msra.mxu0 0
    %2066 = vmatprep.subr.bf16.mxu0 0
    %2067 = vmatpush2.bf16.msra.mxu0 0
    %2068 = vmatprep.subr.bf16.mxu0 0
    %2069 = vmatpush2.bf16.msra.mxu0 0
    %2070 = vmatprep.mubr.bf16.mxu0 0
    %2071 = vmatmul.mubr.bf16.gmra.mxu0 %v2033
    %v2072 = vpop.f32.mrf.mxu0
    %v2073 = vadd.f32 0.0, %v2072
    %v2074 = vpop.f32.mrf.mxu0
    %v2075 = vpop.f32.mrf.mxu0
    %v2076 = vpop.f32.mrf.mxu0
    %2077 = vdwg.mxu0
    %v2078 = vadd.f32 %v1863, %v2027
    %v2079 = vadd.f32 %v1864, %v2073
    %v2080 = vpack.c.bf16 %v2079, %v2078
    %v2082 = vlaneseq
    %v2083 = vshrl.u32 %v2082, 7
    %v2084 = vsub.s32 0, %v2083
    %v2085 = vrot.slane %v165, %v2084
    %v2091 = vunpack.c.l.b16 %v161
    %v2092 = vunpack.c.l.b16 %v162
    %v2093 = vunpack.c.l.b16 %v163
    %v2094 = vunpack.c.l.b16 %v164
    %v2095 = vpack.c.b16 %v2092, %v2091
    %v2096 = vpack.c.b16 %v2094, %v2093
    %v2100 = vsel %vm185, %v2080, 0
    %2102 = vmatprep.subr.bf16.mxu0 0
    %2103 = vmatpush1.bf16.msra.mxu0 0
    %2104 = vmatprep.subr.bf16.mxu0 0
    %2105 = vmatpush1.bf16.msra.mxu0 0
    %2106 = vmatprep.subr.bf16.mxu0 0
    %2107 = vmatpush1.bf16.msra.mxu0 0
    %2108 = vmatprep.subr.bf16.mxu0 0
    %2109 = vmatpush1.bf16.msra.mxu0 0
    %2110 = vmatprep.subr.bf16.mxu0 0
    %2111 = vmatpush1.bf16.msra.mxu0 0
    %2112 = vmatprep.subr.bf16.mxu0 0
    %2113 = vmatpush1.bf16.msra.mxu0 0
    %2114 = vmatprep.subr.bf16.mxu0 0
    %2115 = vmatpush1.bf16.msra.mxu0 %v2096
    %2116 = vmatprep.subr.bf16.mxu0 0
    %2117 = vmatpush1.bf16.msra.mxu0 %v2095
    %2118 = vmatprep.subr.bf16.mxu0 0
    %2119 = vmatpush2.bf16.msra.mxu0 0
    %2120 = vmatprep.subr.bf16.mxu0 0
    %2121 = vmatpush2.bf16.msra.mxu0 0
    %2122 = vmatprep.subr.bf16.mxu0 0
    %2123 = vmatpush2.bf16.msra.mxu0 0
    %2124 = vmatprep.subr.bf16.mxu0 0
    %2125 = vmatpush2.bf16.msra.mxu0 0
    %2126 = vmatprep.subr.bf16.mxu0 0
    %2127 = vmatpush2.bf16.msra.mxu0 0
    %2128 = vmatprep.subr.bf16.mxu0 0
    %2129 = vmatpush2.bf16.msra.mxu0 0
    %2130 = vmatprep.subr.bf16.mxu0 0
    %2131 = vmatpush2.bf16.msra.mxu0 0
    %2132 = vmatprep.subr.bf16.mxu0 0
    %2133 = vmatpush2.bf16.msra.mxu0 0
    %2134 = vmatprep.mubr.bf16.mxu0 0
    %2135 = vmatmul.mubr.bf16.gmra.mxu0 %v2100
    %v2136 = vpop.f32.mrf.mxu0
    %v2137 = vadd.f32 %v2085, %v2136
    %v2138 = vpop.f32.mrf.mxu0
    %v2139 = vpop.f32.mrf.mxu0
    %v2140 = vadd.f32 %v2085, %v2139
    %v2141 = vpop.f32.mrf.mxu0
    %2142 = vdwg.mxu0
    %v2143 = vadd.f32 %v132, %v2137
    %v2144 = vadd.f32 %v133, %v2140
    %v2145 = vld [vmem:[%s23] sm:$0x1]
    %v2146 = vld [vmem:[%s25] sm:$0x1]
    %v2147 = vsel %vm185, %v2143, 0.0
    %2148 = vadd.xlane.f32.xlu0 %v2147
    %v2149 = vpop.xlane.xlu0 %2148
    %v2150 = vsel %vm185, %v2144, 0.0
    %2151 = vadd.xlane.f32.xlu0 %v2150
    %v2152 = vpop.xlane.xlu0 %2151
    %v2153 = vrcp.pop 32.0
    %v2154 = vmul.f32 %v2149, %v2153
    %v2155 = vmul.f32 %v2152, %v2153
    %v2156 = vsub.f32 %v2143, %v2154
    %v2157 = vsub.f32 %v2144, %v2155
    %v2158 = vmul.f32 %v2156, %v2156
    %v2159 = vmul.f32 %v2157, %v2157
    %v2160 = vsel %vm185, %v2158, 0.0
    %2161 = vadd.xlane.f32.xlu0 %v2160
    %v2162 = vpop.xlane.xlu0 %2161
    %v2163 = vsel %vm185, %v2159, 0.0
    %2164 = vadd.xlane.f32.xlu0 %v2163
    %v2165 = vpop.xlane.xlu0 %2164
    %v2166 = vmul.f32 %v2162, %v2153
    %v2167 = vmul.f32 %v2165, %v2153
    %v2168 = vadd.f32 %v2166, 1e-05
    %v2169 = vadd.f32 %v2167, 1e-05
    %v2170 = vrsqrt.pop %v2168
    %v2171 = vrsqrt.pop %v2169
    %v2172 = vmul.f32 %v2156, %v2170
    %v2173 = vmul.f32 %v2157, %v2171
    %v2175 = vlaneseq
    %v2176 = vshrl.u32 %v2175, 7
    %v2177 = vsub.s32 0, %v2176
    %v2178 = vrot.slane %v2145, %v2177
    %v2180 = vmul.f32 %v2172, %v2178
    %v2181 = vmul.f32 %v2173, %v2178
    %v2183 = vlaneseq
    %v2184 = vshrl.u32 %v2183, 7
    %v2185 = vsub.s32 0, %v2184
    %v2186 = vrot.slane %v2146, %v2185
    %v2188 = vadd.f32 %v2180, %v2186
    %v2189 = vadd.f32 %v2181, %v2186
    %v2190 = vld [vmem:[%s27] sm:$0xf]
    %v2191 = vld [vmem:[%s27 + $0x4] sm:$0xf]
    %v2192 = vld [vmem:[%s27 + $0x8] sm:$0xf]
    %v2193 = vld [vmem:[%s27 + $0xc] sm:$0xf]
    %v2194 = vld [vmem:[%s29] sm:$0xf]
    %v2195 = vld [vmem:[%s29 + $0x4] sm:$0xf]
    %v2196 = vld [vmem:[%s29 + $0x8] sm:$0xf]
    %v2197 = vld [vmem:[%s29 + $0xc] sm:$0xf]
    %v2198 = vld [vmem:[%s31] sm:$0xf]
    %v2199 = vld [vmem:[%s31 + $0x4] sm:$0xf]
    %v2200 = vld [vmem:[%s31 + $0x8] sm:$0xf]
    %v2201 = vld [vmem:[%s31 + $0xc] sm:$0xf]
    %v2202 = vld [vmem:[%s33] sm:$0x1]
    %v2203 = vld [vmem:[%s35] sm:$0x1]
    %v2204 = vld [vmem:[%s37] sm:$0x1]
    %v2205 = vld [vmem:[%s39] sm:$0xf]
    %v2206 = vld [vmem:[%s39 + $0x4] sm:$0xf]
    %v2207 = vld [vmem:[%s39 + $0x8] sm:$0xf]
    %v2208 = vld [vmem:[%s39 + $0xc] sm:$0xf]
    %v2209 = vld [vmem:[%s41] sm:$0x1]
    %v2210 = vpack.c.bf16 %v2189, %v2188
    %v2211 = vpack.c.bf16 %v135, %v134
    %v2212 = vpack.c.bf16 %v137, %v136
    %v2214 = vlaneseq
    %v2215 = vshrl.u32 %v2214, 7
    %v2216 = vsub.s32 0, %v2215
    %v2217 = vrot.slane %v2202, %v2216
    %v2223 = vunpack.c.l.b16 %v2190
    %v2224 = vunpack.c.l.b16 %v2191
    %v2225 = vunpack.c.l.b16 %v2192
    %v2226 = vunpack.c.l.b16 %v2193
    %v2227 = vpack.c.b16 %v2224, %v2223
    %v2228 = vpack.c.b16 %v2226, %v2225
    %v2232 = vsel %vm185, %v2210, 0
    %2234 = vmatprep.subr.bf16.mxu0 0
    %2235 = vmatpush1.bf16.msra.mxu0 0
    %2236 = vmatprep.subr.bf16.mxu0 0
    %2237 = vmatpush1.bf16.msra.mxu0 0
    %2238 = vmatprep.subr.bf16.mxu0 0
    %2239 = vmatpush1.bf16.msra.mxu0 0
    %2240 = vmatprep.subr.bf16.mxu0 0
    %2241 = vmatpush1.bf16.msra.mxu0 0
    %2242 = vmatprep.subr.bf16.mxu0 0
    %2243 = vmatpush1.bf16.msra.mxu0 0
    %2244 = vmatprep.subr.bf16.mxu0 0
    %2245 = vmatpush1.bf16.msra.mxu0 0
    %2246 = vmatprep.subr.bf16.mxu0 0
    %2247 = vmatpush1.bf16.msra.mxu0 %v2228
    %2248 = vmatprep.subr.bf16.mxu0 0
    %2249 = vmatpush1.bf16.msra.mxu0 %v2227
    %2250 = vmatprep.subr.bf16.mxu0 0
    %2251 = vmatpush2.bf16.msra.mxu0 0
    %2252 = vmatprep.subr.bf16.mxu0 0
    %2253 = vmatpush2.bf16.msra.mxu0 0
    %2254 = vmatprep.subr.bf16.mxu0 0
    %2255 = vmatpush2.bf16.msra.mxu0 0
    %2256 = vmatprep.subr.bf16.mxu0 0
    %2257 = vmatpush2.bf16.msra.mxu0 0
    %2258 = vmatprep.subr.bf16.mxu0 0
    %2259 = vmatpush2.bf16.msra.mxu0 0
    %2260 = vmatprep.subr.bf16.mxu0 0
    %2261 = vmatpush2.bf16.msra.mxu0 0
    %2262 = vmatprep.subr.bf16.mxu0 0
    %2263 = vmatpush2.bf16.msra.mxu0 0
    %2264 = vmatprep.subr.bf16.mxu0 0
    %2265 = vmatpush2.bf16.msra.mxu0 0
    %2266 = vmatprep.mubr.bf16.mxu0 0
    %2267 = vmatmul.mubr.bf16.gmra.mxu0 %v2232
    %v2268 = vpop.f32.mrf.mxu0
    %v2269 = vadd.f32 %v2217, %v2268
    %v2270 = vpop.f32.mrf.mxu0
    %v2271 = vpop.f32.mrf.mxu0
    %v2272 = vadd.f32 %v2217, %v2271
    %v2273 = vpop.f32.mrf.mxu0
    %2274 = vdwg.mxu0
    %v2275 = vmul.f32 %v2269, 0.5
    %v2276 = vmul.f32 %v2272, 0.5
    %v2278 = vlaneseq
    %v2279 = vshrl.u32 %v2278, 7
    %v2280 = vsub.s32 0, %v2279
    %v2281 = vrot.slane %v2203, %v2280
    %v2287 = vunpack.c.l.b16 %v2194
    %v2288 = vunpack.c.l.b16 %v2195
    %v2289 = vunpack.c.l.b16 %v2196
    %v2290 = vunpack.c.l.b16 %v2197
    %v2291 = vpack.c.b16 %v2288, %v2287
    %v2292 = vpack.c.b16 %v2290, %v2289
    %v2296 = vsel %vm185, %v2211, 0
    %v2299 = vsel %vm185, %v2212, 0
    %2301 = vmatprep.subr.bf16.mxu0 0
    %2302 = vmatpush1.bf16.msra.mxu0 0
    %2303 = vmatprep.subr.bf16.mxu0 0
    %2304 = vmatpush1.bf16.msra.mxu0 0
    %2305 = vmatprep.subr.bf16.mxu0 0
    %2306 = vmatpush1.bf16.msra.mxu0 0
    %2307 = vmatprep.subr.bf16.mxu0 0
    %2308 = vmatpush1.bf16.msra.mxu0 0
    %2309 = vmatprep.subr.bf16.mxu0 0
    %2310 = vmatpush1.bf16.msra.mxu0 0
    %2311 = vmatprep.subr.bf16.mxu0 0
    %2312 = vmatpush1.bf16.msra.mxu0 0
    %2313 = vmatprep.subr.bf16.mxu0 0
    %2314 = vmatpush1.bf16.msra.mxu0 %v2292
    %2315 = vmatprep.subr.bf16.mxu0 0
    %2316 = vmatpush1.bf16.msra.mxu0 %v2291
    %2317 = vmatprep.subr.bf16.mxu0 0
    %2318 = vmatpush2.bf16.msra.mxu0 0
    %2319 = vmatprep.subr.bf16.mxu0 0
    %2320 = vmatpush2.bf16.msra.mxu0 0
    %2321 = vmatprep.subr.bf16.mxu0 0
    %2322 = vmatpush2.bf16.msra.mxu0 0
    %2323 = vmatprep.subr.bf16.mxu0 0
    %2324 = vmatpush2.bf16.msra.mxu0 0
    %2325 = vmatprep.subr.bf16.mxu0 0
    %2326 = vmatpush2.bf16.msra.mxu0 0
    %2327 = vmatprep.subr.bf16.mxu0 0
    %2328 = vmatpush2.bf16.msra.mxu0 0
    %2329 = vmatprep.subr.bf16.mxu0 0
    %2330 = vmatpush2.bf16.msra.mxu0 0
    %2331 = vmatprep.subr.bf16.mxu0 0
    %2332 = vmatpush2.bf16.msra.mxu0 0
    %2333 = vmatprep.mubr.bf16.mxu0 0
    %2334 = vmatmul.mubr.bf16.gmra.mxu0 %v2296
    %v2335 = vpop.f32.mrf.mxu0
    %v2336 = vadd.f32 %v2281, %v2335
    %v2337 = vpop.f32.mrf.mxu0
    %v2338 = vpop.f32.mrf.mxu0
    %v2339 = vadd.f32 %v2281, %v2338
    %v2340 = vpop.f32.mrf.mxu0
    %2341 = vmatprep.mubr.bf16.mxu0 0
    %2342 = vmatmul.mubr.bf16.gmra.mxu0 %v2299
    %v2343 = vpop.f32.mrf.mxu0
    %v2344 = vadd.f32 %v2281, %v2343
    %v2345 = vpop.f32.mrf.mxu0
    %v2346 = vpop.f32.mrf.mxu0
    %v2347 = vadd.f32 %v2281, %v2346
    %v2348 = vpop.f32.mrf.mxu0
    %2349 = vdwg.mxu0
    %v2351 = vlaneseq
    %v2352 = vshrl.u32 %v2351, 7
    %v2353 = vsub.s32 0, %v2352
    %v2354 = vrot.slane %v2204, %v2353
    %v2360 = vunpack.c.l.b16 %v2198
    %v2361 = vunpack.c.l.b16 %v2199
    %v2362 = vunpack.c.l.b16 %v2200
    %v2363 = vunpack.c.l.b16 %v2201
    %v2364 = vpack.c.b16 %v2361, %v2360
    %v2365 = vpack.c.b16 %v2363, %v2362
    %2368 = vmatprep.subr.bf16.mxu0 0
    %2369 = vmatpush1.bf16.msra.mxu0 0
    %2370 = vmatprep.subr.bf16.mxu0 0
    %2371 = vmatpush1.bf16.msra.mxu0 0
    %2372 = vmatprep.subr.bf16.mxu0 0
    %2373 = vmatpush1.bf16.msra.mxu0 0
    %2374 = vmatprep.subr.bf16.mxu0 0
    %2375 = vmatpush1.bf16.msra.mxu0 0
    %2376 = vmatprep.subr.bf16.mxu0 0
    %2377 = vmatpush1.bf16.msra.mxu0 0
    %2378 = vmatprep.subr.bf16.mxu0 0
    %2379 = vmatpush1.bf16.msra.mxu0 0
    %2380 = vmatprep.subr.bf16.mxu0 0
    %2381 = vmatpush1.bf16.msra.mxu0 %v2365
    %2382 = vmatprep.subr.bf16.mxu0 0
    %2383 = vmatpush1.bf16.msra.mxu0 %v2364
    %2384 = vmatprep.subr.bf16.mxu0 0
    %2385 = vmatpush2.bf16.msra.mxu0 0
    %2386 = vmatprep.subr.bf16.mxu0 0
    %2387 = vmatpush2.bf16.msra.mxu0 0
    %2388 = vmatprep.subr.bf16.mxu0 0
    %2389 = vmatpush2.bf16.msra.mxu0 0
    %2390 = vmatprep.subr.bf16.mxu0 0
    %2391 = vmatpush2.bf16.msra.mxu0 0
    %2392 = vmatprep.subr.bf16.mxu0 0
    %2393 = vmatpush2.bf16.msra.mxu0 0
    %2394 = vmatprep.subr.bf16.mxu0 0
    %2395 = vmatpush2.bf16.msra.mxu0 0
    %2396 = vmatprep.subr.bf16.mxu0 0
    %2397 = vmatpush2.bf16.msra.mxu0 0
    %2398 = vmatprep.subr.bf16.mxu0 0
    %2399 = vmatpush2.bf16.msra.mxu0 0
    %2400 = vmatprep.mubr.bf16.mxu0 0
    %2401 = vmatmul.mubr.bf16.gmra.mxu0 %v2296
    %v2402 = vpop.f32.mrf.mxu0
    %v2403 = vadd.f32 %v2354, %v2402
    %v2404 = vpop.f32.mrf.mxu0
    %v2405 = vpop.f32.mrf.mxu0
    %v2406 = vadd.f32 %v2354, %v2405
    %v2407 = vpop.f32.mrf.mxu0
    %2408 = vmatprep.mubr.bf16.mxu0 0
    %2409 = vmatmul.mubr.bf16.gmra.mxu0 %v2299
    %v2410 = vpop.f32.mrf.mxu0
    %v2411 = vadd.f32 %v2354, %v2410
    %v2412 = vpop.f32.mrf.mxu0
    %v2413 = vpop.f32.mrf.mxu0
    %v2414 = vadd.f32 %v2354, %v2413
    %v2415 = vpop.f32.mrf.mxu0
    %2416 = vdwg.mxu0
    %v2417 = vpack.c.bf16 %v2275, %v2275
    %v2418 = vpack.c.bf16 %v2276, %v2276
    %v2419 = vpack.c.bf16 %v2339, %v2336
    %v2420 = vpack.c.bf16 %v2347, %v2344
    %v2421 = vpack.c.bf16 %v2406, %v2403
    %v2422 = vpack.c.bf16 %v2414, %v2411
    %v2423 = vmul.bf16 %v2417, %v362
    %v2424 = vmul.bf16 %v2418, %v362
    %v2426 = vsel %vm185, %v2423, 0
    %v2429 = vsel %vm185, %v2419, 0
    %2431 = vmatprep.subr.bf16.mxu0 0
    %2432 = vmatpush1.bf16.xpose.msra.mxu0 0
    %2433 = vmatprep.subr.bf16.mxu0 0
    %2434 = vmatpush1.bf16.xpose.msra.mxu0 0
    %2435 = vmatprep.subr.bf16.mxu0 0
    %2436 = vmatpush1.bf16.xpose.msra.mxu0 0
    %2437 = vmatprep.subr.bf16.mxu0 0
    %2438 = vmatpush1.bf16.xpose.msra.mxu0 0
    %2439 = vmatprep.subr.bf16.mxu0 0
    %2440 = vmatpush1.bf16.xpose.msra.mxu0 0
    %2441 = vmatprep.subr.bf16.mxu0 0
    %2442 = vmatpush1.bf16.xpose.msra.mxu0 0
    %2443 = vmatprep.subr.bf16.mxu0 0
    %2444 = vmatpush1.bf16.xpose.msra.mxu0 0
    %2445 = vmatprep.subr.bf16.mxu0 0
    %2446 = vmatpush1.bf16.xpose.msra.mxu0 %v2429
    %2447 = vmatprep.subr.bf16.mxu0 0
    %2448 = vmatpush2.bf16.xpose.msra.mxu0 0
    %2449 = vmatprep.subr.bf16.mxu0 0
    %2450 = vmatpush2.bf16.xpose.msra.mxu0 0
    %2451 = vmatprep.subr.bf16.mxu0 0
    %2452 = vmatpush2.bf16.xpose.msra.mxu0 0
    %2453 = vmatprep.subr.bf16.mxu0 0
    %2454 = vmatpush2.bf16.xpose.msra.mxu0 0
    %2455 = vmatprep.subr.bf16.mxu0 0
    %2456 = vmatpush2.bf16.xpose.msra.mxu0 0
    %2457 = vmatprep.subr.bf16.mxu0 0
    %2458 = vmatpush2.bf16.xpose.msra.mxu0 0
    %2459 = vmatprep.subr.bf16.mxu0 0
    %2460 = vmatpush2.bf16.xpose.msra.mxu0 0
    %2461 = vmatprep.subr.bf16.mxu0 0
    %2462 = vmatpush2.bf16.xpose.msra.mxu0 0
    %2463 = vmatprep.mubr.bf16.mxu0 0
    %2464 = vmatmul.mubr.bf16.gmra.mxu0 %v2426
    %v2465 = vpop.f32.mrf.mxu0
    %v2466 = vadd.f32 0.0, %v2465
    %v2467 = vpop.f32.mrf.mxu0
    %v2468 = vpop.f32.mrf.mxu0
    %v2469 = vpop.f32.mrf.mxu0
    %2470 = vdwg.mxu0
    %v2472 = vsel %vm185, %v2424, 0
    %v2475 = vsel %vm185, %v2420, 0
    %2477 = vmatprep.subr.bf16.mxu0 0
    %2478 = vmatpush1.bf16.xpose.msra.mxu0 0
    %2479 = vmatprep.subr.bf16.mxu0 0
    %2480 = vmatpush1.bf16.xpose.msra.mxu0 0
    %2481 = vmatprep.subr.bf16.mxu0 0
    %2482 = vmatpush1.bf16.xpose.msra.mxu0 0
    %2483 = vmatprep.subr.bf16.mxu0 0
    %2484 = vmatpush1.bf16.xpose.msra.mxu0 0
    %2485 = vmatprep.subr.bf16.mxu0 0
    %2486 = vmatpush1.bf16.xpose.msra.mxu0 0
    %2487 = vmatprep.subr.bf16.mxu0 0
    %2488 = vmatpush1.bf16.xpose.msra.mxu0 0
    %2489 = vmatprep.subr.bf16.mxu0 0
    %2490 = vmatpush1.bf16.xpose.msra.mxu0 0
    %2491 = vmatprep.subr.bf16.mxu0 0
    %2492 = vmatpush1.bf16.xpose.msra.mxu0 %v2475
    %2493 = vmatprep.subr.bf16.mxu0 0
    %2494 = vmatpush2.bf16.xpose.msra.mxu0 0
    %2495 = vmatprep.subr.bf16.mxu0 0
    %2496 = vmatpush2.bf16.xpose.msra.mxu0 0
    %2497 = vmatprep.subr.bf16.mxu0 0
    %2498 = vmatpush2.bf16.xpose.msra.mxu0 0
    %2499 = vmatprep.subr.bf16.mxu0 0
    %2500 = vmatpush2.bf16.xpose.msra.mxu0 0
    %2501 = vmatprep.subr.bf16.mxu0 0
    %2502 = vmatpush2.bf16.xpose.msra.mxu0 0
    %2503 = vmatprep.subr.bf16.mxu0 0
    %2504 = vmatpush2.bf16.xpose.msra.mxu0 0
    %2505 = vmatprep.subr.bf16.mxu0 0
    %2506 = vmatpush2.bf16.xpose.msra.mxu0 0
    %2507 = vmatprep.subr.bf16.mxu0 0
    %2508 = vmatpush2.bf16.xpose.msra.mxu0 0
    %2509 = vmatprep.mubr.bf16.mxu0 0
    %2510 = vmatmul.mubr.bf16.gmra.mxu0 %v2472
    %v2511 = vpop.f32.mrf.mxu0
    %v2512 = vadd.f32 0.0, %v2511
    %v2513 = vpop.f32.mrf.mxu0
    %v2514 = vpop.f32.mrf.mxu0
    %v2515 = vpop.f32.mrf.mxu0
    %2516 = vdwg.mxu0
    %vm2517 = vcmask 130048
    %v2518 = vsel %vm2517, %v2466, -inf
    %2519 = vmax.xlane.f32.xlu0 %v2518
    %v2520 = vpop.xlane.xlu0 %2519
    %v2521 = vsel %vm2517, %v2512, -inf
    %2522 = vmax.xlane.f32.xlu0 %v2521
    %v2523 = vpop.xlane.xlu0 %2522
    %v2524 = vsub.f32 %v2466, %v2520
    %v2525 = vsub.f32 %v2512, %v2523
    %v2526 = vmul.f32 %v2524, 1.442695
    %v2527 = vpow.pop %v2526
    %v2528 = vmul.f32 %v2525, 1.442695
    %v2529 = vpow.pop %v2528
    %v2530 = vsel %vm2517, %v2527, 0.0
    %2531 = vadd.xlane.f32.xlu0 %v2530
    %v2532 = vpop.xlane.xlu0 %2531
    %v2533 = vsel %vm2517, %v2529, 0.0
    %2534 = vadd.xlane.f32.xlu0 %v2533
    %v2535 = vpop.xlane.xlu0 %2534
    %v2536 = vrcp.pop %v2532
    %v2537 = vrcp.pop %v2535
    %v2538 = vmul.f32 %v2527, %v2536
    %v2539 = vmul.f32 %v2529, %v2537
    %v2540 = vmul.bf16 %v2421, %v362
    %v2541 = vmul.bf16 %v2422, %v362
    %v2542 = vpack.c.bf16 %v2538, %v2538
    %v2543 = vpack.c.bf16 %v2539, %v2539
    %v2544 = vmul.bf16 %v2417, %v490
    %v2545 = vmul.bf16 %v2418, %v490
    %v2547 = vsel %vm185, %v2544, 0
    %2549 = vmatprep.subr.bf16.mxu0 0
    %2550 = vmatpush1.bf16.xpose.msra.mxu0 0
    %2551 = vmatprep.subr.bf16.mxu0 0
    %2552 = vmatpush1.bf16.xpose.msra.mxu0 0
    %2553 = vmatprep.subr.bf16.mxu0 0
    %2554 = vmatpush1.bf16.xpose.msra.mxu0 0
    %2555 = vmatprep.subr.bf16.mxu0 0
    %2556 = vmatpush1.bf16.xpose.msra.mxu0 0
    %2557 = vmatprep.subr.bf16.mxu0 0
    %2558 = vmatpush1.bf16.xpose.msra.mxu0 0
    %2559 = vmatprep.subr.bf16.mxu0 0
    %2560 = vmatpush1.bf16.xpose.msra.mxu0 0
    %2561 = vmatprep.subr.bf16.mxu0 0
    %2562 = vmatpush1.bf16.xpose.msra.mxu0 0
    %2563 = vmatprep.subr.bf16.mxu0 0
    %2564 = vmatpush1.bf16.xpose.msra.mxu0 %v2429
    %2565 = vmatprep.subr.bf16.mxu0 0
    %2566 = vmatpush2.bf16.xpose.msra.mxu0 0
    %2567 = vmatprep.subr.bf16.mxu0 0
    %2568 = vmatpush2.bf16.xpose.msra.mxu0 0
    %2569 = vmatprep.subr.bf16.mxu0 0
    %2570 = vmatpush2.bf16.xpose.msra.mxu0 0
    %2571 = vmatprep.subr.bf16.mxu0 0
    %2572 = vmatpush2.bf16.xpose.msra.mxu0 0
    %2573 = vmatprep.subr.bf16.mxu0 0
    %2574 = vmatpush2.bf16.xpose.msra.mxu0 0
    %2575 = vmatprep.subr.bf16.mxu0 0
    %2576 = vmatpush2.bf16.xpose.msra.mxu0 0
    %2577 = vmatprep.subr.bf16.mxu0 0
    %2578 = vmatpush2.bf16.xpose.msra.mxu0 0
    %2579 = vmatprep.subr.bf16.mxu0 0
    %2580 = vmatpush2.bf16.xpose.msra.mxu0 0
    %2581 = vmatprep.mubr.bf16.mxu0 0
    %2582 = vmatmul.mubr.bf16.gmra.mxu0 %v2547
    %v2583 = vpop.f32.mrf.mxu0
    %v2584 = vadd.f32 0.0, %v2583
    %v2585 = vpop.f32.mrf.mxu0
    %v2586 = vpop.f32.mrf.mxu0
    %v2587 = vpop.f32.mrf.mxu0
    %2588 = vdwg.mxu0
    %v2590 = vsel %vm185, %v2545, 0
    %2592 = vmatprep.subr.bf16.mxu0 0
    %2593 = vmatpush1.bf16.xpose.msra.mxu0 0
    %2594 = vmatprep.subr.bf16.mxu0 0
    %2595 = vmatpush1.bf16.xpose.msra.mxu0 0
    %2596 = vmatprep.subr.bf16.mxu0 0
    %2597 = vmatpush1.bf16.xpose.msra.mxu0 0
    %2598 = vmatprep.subr.bf16.mxu0 0
    %2599 = vmatpush1.bf16.xpose.msra.mxu0 0
    %2600 = vmatprep.subr.bf16.mxu0 0
    %2601 = vmatpush1.bf16.xpose.msra.mxu0 0
    %2602 = vmatprep.subr.bf16.mxu0 0
    %2603 = vmatpush1.bf16.xpose.msra.mxu0 0
    %2604 = vmatprep.subr.bf16.mxu0 0
    %2605 = vmatpush1.bf16.xpose.msra.mxu0 0
    %2606 = vmatprep.subr.bf16.mxu0 0
    %2607 = vmatpush1.bf16.xpose.msra.mxu0 %v2475
    %2608 = vmatprep.subr.bf16.mxu0 0
    %2609 = vmatpush2.bf16.xpose.msra.mxu0 0
    %2610 = vmatprep.subr.bf16.mxu0 0
    %2611 = vmatpush2.bf16.xpose.msra.mxu0 0
    %2612 = vmatprep.subr.bf16.mxu0 0
    %2613 = vmatpush2.bf16.xpose.msra.mxu0 0
    %2614 = vmatprep.subr.bf16.mxu0 0
    %2615 = vmatpush2.bf16.xpose.msra.mxu0 0
    %2616 = vmatprep.subr.bf16.mxu0 0
    %2617 = vmatpush2.bf16.xpose.msra.mxu0 0
    %2618 = vmatprep.subr.bf16.mxu0 0
    %2619 = vmatpush2.bf16.xpose.msra.mxu0 0
    %2620 = vmatprep.subr.bf16.mxu0 0
    %2621 = vmatpush2.bf16.xpose.msra.mxu0 0
    %2622 = vmatprep.subr.bf16.mxu0 0
    %2623 = vmatpush2.bf16.xpose.msra.mxu0 0
    %2624 = vmatprep.mubr.bf16.mxu0 0
    %2625 = vmatmul.mubr.bf16.gmra.mxu0 %v2590
    %v2626 = vpop.f32.mrf.mxu0
    %v2627 = vadd.f32 0.0, %v2626
    %v2628 = vpop.f32.mrf.mxu0
    %v2629 = vpop.f32.mrf.mxu0
    %v2630 = vpop.f32.mrf.mxu0
    %2631 = vdwg.mxu0
    %v2632 = vsel %vm2517, %v2584, -inf
    %2633 = vmax.xlane.f32.xlu0 %v2632
    %v2634 = vpop.xlane.xlu0 %2633
    %v2635 = vsel %vm2517, %v2627, -inf
    %2636 = vmax.xlane.f32.xlu0 %v2635
    %v2637 = vpop.xlane.xlu0 %2636
    %v2638 = vsub.f32 %v2584, %v2634
    %v2639 = vsub.f32 %v2627, %v2637
    %v2640 = vmul.f32 %v2638, 1.442695
    %v2641 = vpow.pop %v2640
    %v2642 = vmul.f32 %v2639, 1.442695
    %v2643 = vpow.pop %v2642
    %v2644 = vsel %vm2517, %v2641, 0.0
    %2645 = vadd.xlane.f32.xlu0 %v2644
    %v2646 = vpop.xlane.xlu0 %2645
    %v2647 = vsel %vm2517, %v2643, 0.0
    %2648 = vadd.xlane.f32.xlu0 %v2647
    %v2649 = vpop.xlane.xlu0 %2648
    %v2650 = vrcp.pop %v2646
    %v2651 = vrcp.pop %v2649
    %v2652 = vmul.f32 %v2641, %v2650
    %v2653 = vmul.f32 %v2643, %v2651
    %v2654 = vmul.bf16 %v2421, %v490
    %v2655 = vmul.bf16 %v2422, %v490
    %v2656 = vpack.c.bf16 %v2652, %v2652
    %v2657 = vpack.c.bf16 %v2653, %v2653
    %v2659 = vsel %vm2517, %v2656, 0
    %2661 = vmatprep.subr.bf16.mxu0 0
    %2662 = vmatpush1.bf16.msra.mxu0 0
    %2663 = vmatprep.subr.bf16.mxu0 0
    %2664 = vmatpush1.bf16.msra.mxu0 0
    %2665 = vmatprep.subr.bf16.mxu0 0
    %2666 = vmatpush1.bf16.msra.mxu0 0
    %2667 = vmatprep.subr.bf16.mxu0 0
    %2668 = vmatpush1.bf16.msra.mxu0 0
    %2669 = vmatprep.subr.bf16.mxu0 0
    %2670 = vmatpush1.bf16.msra.mxu0 0
    %2671 = vmatprep.subr.bf16.mxu0 0
    %2672 = vmatpush1.bf16.msra.mxu0 0
    %2673 = vmatprep.subr.bf16.mxu0 0
    %2674 = vmatpush1.bf16.msra.mxu0 0
    %2675 = vmatprep.subr.bf16.mxu0 0
    %2676 = vmatpush1.bf16.msra.mxu0 %v2654
    %2677 = vmatprep.subr.bf16.mxu0 0
    %2678 = vmatpush2.bf16.msra.mxu0 0
    %2679 = vmatprep.subr.bf16.mxu0 0
    %2680 = vmatpush2.bf16.msra.mxu0 0
    %2681 = vmatprep.subr.bf16.mxu0 0
    %2682 = vmatpush2.bf16.msra.mxu0 0
    %2683 = vmatprep.subr.bf16.mxu0 0
    %2684 = vmatpush2.bf16.msra.mxu0 0
    %2685 = vmatprep.subr.bf16.mxu0 0
    %2686 = vmatpush2.bf16.msra.mxu0 0
    %2687 = vmatprep.subr.bf16.mxu0 0
    %2688 = vmatpush2.bf16.msra.mxu0 0
    %2689 = vmatprep.subr.bf16.mxu0 0
    %2690 = vmatpush2.bf16.msra.mxu0 0
    %2691 = vmatprep.subr.bf16.mxu0 0
    %2692 = vmatpush2.bf16.msra.mxu0 0
    %2693 = vmatprep.mubr.bf16.mxu0 0
    %2694 = vmatmul.mubr.bf16.gmra.mxu0 %v2659
    %v2695 = vpop.f32.mrf.mxu0
    %v2696 = vadd.f32 0.0, %v2695
    %v2697 = vpop.f32.mrf.mxu0
    %v2698 = vpop.f32.mrf.mxu0
    %v2699 = vpop.f32.mrf.mxu0
    %2700 = vdwg.mxu0
    %v2702 = vsel %vm2517, %v2657, 0
    %2704 = vmatprep.subr.bf16.mxu0 0
    %2705 = vmatpush1.bf16.msra.mxu0 0
    %2706 = vmatprep.subr.bf16.mxu0 0
    %2707 = vmatpush1.bf16.msra.mxu0 0
    %2708 = vmatprep.subr.bf16.mxu0 0
    %2709 = vmatpush1.bf16.msra.mxu0 0
    %2710 = vmatprep.subr.bf16.mxu0 0
    %2711 = vmatpush1.bf16.msra.mxu0 0
    %2712 = vmatprep.subr.bf16.mxu0 0
    %2713 = vmatpush1.bf16.msra.mxu0 0
    %2714 = vmatprep.subr.bf16.mxu0 0
    %2715 = vmatpush1.bf16.msra.mxu0 0
    %2716 = vmatprep.subr.bf16.mxu0 0
    %2717 = vmatpush1.bf16.msra.mxu0 0
    %2718 = vmatprep.subr.bf16.mxu0 0
    %2719 = vmatpush1.bf16.msra.mxu0 %v2655
    %2720 = vmatprep.subr.bf16.mxu0 0
    %2721 = vmatpush2.bf16.msra.mxu0 0
    %2722 = vmatprep.subr.bf16.mxu0 0
    %2723 = vmatpush2.bf16.msra.mxu0 0
    %2724 = vmatprep.subr.bf16.mxu0 0
    %2725 = vmatpush2.bf16.msra.mxu0 0
    %2726 = vmatprep.subr.bf16.mxu0 0
    %2727 = vmatpush2.bf16.msra.mxu0 0
    %2728 = vmatprep.subr.bf16.mxu0 0
    %2729 = vmatpush2.bf16.msra.mxu0 0
    %2730 = vmatprep.subr.bf16.mxu0 0
    %2731 = vmatpush2.bf16.msra.mxu0 0
    %2732 = vmatprep.subr.bf16.mxu0 0
    %2733 = vmatpush2.bf16.msra.mxu0 0
    %2734 = vmatprep.subr.bf16.mxu0 0
    %2735 = vmatpush2.bf16.msra.mxu0 0
    %2736 = vmatprep.mubr.bf16.mxu0 0
    %2737 = vmatmul.mubr.bf16.gmra.mxu0 %v2702
    %v2738 = vpop.f32.mrf.mxu0
    %v2739 = vadd.f32 0.0, %v2738
    %v2740 = vpop.f32.mrf.mxu0
    %v2741 = vpop.f32.mrf.mxu0
    %v2742 = vpop.f32.mrf.mxu0
    %2743 = vdwg.mxu0
    %v2745 = vsel %vm2517, %v2542, 0
    %2747 = vmatprep.subr.bf16.mxu0 0
    %2748 = vmatpush1.bf16.msra.mxu0 0
    %2749 = vmatprep.subr.bf16.mxu0 0
    %2750 = vmatpush1.bf16.msra.mxu0 0
    %2751 = vmatprep.subr.bf16.mxu0 0
    %2752 = vmatpush1.bf16.msra.mxu0 0
    %2753 = vmatprep.subr.bf16.mxu0 0
    %2754 = vmatpush1.bf16.msra.mxu0 0
    %2755 = vmatprep.subr.bf16.mxu0 0
    %2756 = vmatpush1.bf16.msra.mxu0 0
    %2757 = vmatprep.subr.bf16.mxu0 0
    %2758 = vmatpush1.bf16.msra.mxu0 0
    %2759 = vmatprep.subr.bf16.mxu0 0
    %2760 = vmatpush1.bf16.msra.mxu0 0
    %2761 = vmatprep.subr.bf16.mxu0 0
    %2762 = vmatpush1.bf16.msra.mxu0 %v2540
    %2763 = vmatprep.subr.bf16.mxu0 0
    %2764 = vmatpush2.bf16.msra.mxu0 0
    %2765 = vmatprep.subr.bf16.mxu0 0
    %2766 = vmatpush2.bf16.msra.mxu0 0
    %2767 = vmatprep.subr.bf16.mxu0 0
    %2768 = vmatpush2.bf16.msra.mxu0 0
    %2769 = vmatprep.subr.bf16.mxu0 0
    %2770 = vmatpush2.bf16.msra.mxu0 0
    %2771 = vmatprep.subr.bf16.mxu0 0
    %2772 = vmatpush2.bf16.msra.mxu0 0
    %2773 = vmatprep.subr.bf16.mxu0 0
    %2774 = vmatpush2.bf16.msra.mxu0 0
    %2775 = vmatprep.subr.bf16.mxu0 0
    %2776 = vmatpush2.bf16.msra.mxu0 0
    %2777 = vmatprep.subr.bf16.mxu0 0
    %2778 = vmatpush2.bf16.msra.mxu0 0
    %2779 = vmatprep.mubr.bf16.mxu0 0
    %2780 = vmatmul.mubr.bf16.gmra.mxu0 %v2745
    %v2781 = vpop.f32.mrf.mxu0
    %v2782 = vadd.f32 %v2696, %v2781
    %v2783 = vpop.f32.mrf.mxu0
    %v2784 = vpop.f32.mrf.mxu0
    %v2785 = vpop.f32.mrf.mxu0
    %2786 = vdwg.mxu0
    %v2788 = vsel %vm2517, %v2543, 0
    %2790 = vmatprep.subr.bf16.mxu0 0
    %2791 = vmatpush1.bf16.msra.mxu0 0
    %2792 = vmatprep.subr.bf16.mxu0 0
    %2793 = vmatpush1.bf16.msra.mxu0 0
    %2794 = vmatprep.subr.bf16.mxu0 0
    %2795 = vmatpush1.bf16.msra.mxu0 0
    %2796 = vmatprep.subr.bf16.mxu0 0
    %2797 = vmatpush1.bf16.msra.mxu0 0
    %2798 = vmatprep.subr.bf16.mxu0 0
    %2799 = vmatpush1.bf16.msra.mxu0 0
    %2800 = vmatprep.subr.bf16.mxu0 0
    %2801 = vmatpush1.bf16.msra.mxu0 0
    %2802 = vmatprep.subr.bf16.mxu0 0
    %2803 = vmatpush1.bf16.msra.mxu0 0
    %2804 = vmatprep.subr.bf16.mxu0 0
    %2805 = vmatpush1.bf16.msra.mxu0 %v2541
    %2806 = vmatprep.subr.bf16.mxu0 0
    %2807 = vmatpush2.bf16.msra.mxu0 0
    %2808 = vmatprep.subr.bf16.mxu0 0
    %2809 = vmatpush2.bf16.msra.mxu0 0
    %2810 = vmatprep.subr.bf16.mxu0 0
    %2811 = vmatpush2.bf16.msra.mxu0 0
    %2812 = vmatprep.subr.bf16.mxu0 0
    %2813 = vmatpush2.bf16.msra.mxu0 0
    %2814 = vmatprep.subr.bf16.mxu0 0
    %2815 = vmatpush2.bf16.msra.mxu0 0
    %2816 = vmatprep.subr.bf16.mxu0 0
    %2817 = vmatpush2.bf16.msra.mxu0 0
    %2818 = vmatprep.subr.bf16.mxu0 0
    %2819 = vmatpush2.bf16.msra.mxu0 0
    %2820 = vmatprep.subr.bf16.mxu0 0
    %2821 = vmatpush2.bf16.msra.mxu0 0
    %2822 = vmatprep.mubr.bf16.mxu0 0
    %2823 = vmatmul.mubr.bf16.gmra.mxu0 %v2788
    %v2824 = vpop.f32.mrf.mxu0
    %v2825 = vadd.f32 %v2739, %v2824
    %v2826 = vpop.f32.mrf.mxu0
    %v2827 = vpop.f32.mrf.mxu0
    %v2828 = vpop.f32.mrf.mxu0
    %2829 = vdwg.mxu0
    %v2830 = vmul.bf16 %v2417, %v796
    %v2831 = vmul.bf16 %v2418, %v796
    %v2833 = vsel %vm185, %v2830, 0
    %2835 = vmatprep.subr.bf16.mxu0 0
    %2836 = vmatpush1.bf16.xpose.msra.mxu0 0
    %2837 = vmatprep.subr.bf16.mxu0 0
    %2838 = vmatpush1.bf16.xpose.msra.mxu0 0
    %2839 = vmatprep.subr.bf16.mxu0 0
    %2840 = vmatpush1.bf16.xpose.msra.mxu0 0
    %2841 = vmatprep.subr.bf16.mxu0 0
    %2842 = vmatpush1.bf16.xpose.msra.mxu0 0
    %2843 = vmatprep.subr.bf16.mxu0 0
    %2844 = vmatpush1.bf16.xpose.msra.mxu0 0
    %2845 = vmatprep.subr.bf16.mxu0 0
    %2846 = vmatpush1.bf16.xpose.msra.mxu0 0
    %2847 = vmatprep.subr.bf16.mxu0 0
    %2848 = vmatpush1.bf16.xpose.msra.mxu0 0
    %2849 = vmatprep.subr.bf16.mxu0 0
    %2850 = vmatpush1.bf16.xpose.msra.mxu0 %v2429
    %2851 = vmatprep.subr.bf16.mxu0 0
    %2852 = vmatpush2.bf16.xpose.msra.mxu0 0
    %2853 = vmatprep.subr.bf16.mxu0 0
    %2854 = vmatpush2.bf16.xpose.msra.mxu0 0
    %2855 = vmatprep.subr.bf16.mxu0 0
    %2856 = vmatpush2.bf16.xpose.msra.mxu0 0
    %2857 = vmatprep.subr.bf16.mxu0 0
    %2858 = vmatpush2.bf16.xpose.msra.mxu0 0
    %2859 = vmatprep.subr.bf16.mxu0 0
    %2860 = vmatpush2.bf16.xpose.msra.mxu0 0
    %2861 = vmatprep.subr.bf16.mxu0 0
    %2862 = vmatpush2.bf16.xpose.msra.mxu0 0
    %2863 = vmatprep.subr.bf16.mxu0 0
    %2864 = vmatpush2.bf16.xpose.msra.mxu0 0
    %2865 = vmatprep.subr.bf16.mxu0 0
    %2866 = vmatpush2.bf16.xpose.msra.mxu0 0
    %2867 = vmatprep.mubr.bf16.mxu0 0
    %2868 = vmatmul.mubr.bf16.gmra.mxu0 %v2833
    %v2869 = vpop.f32.mrf.mxu0
    %v2870 = vadd.f32 0.0, %v2869
    %v2871 = vpop.f32.mrf.mxu0
    %v2872 = vpop.f32.mrf.mxu0
    %v2873 = vpop.f32.mrf.mxu0
    %2874 = vdwg.mxu0
    %v2876 = vsel %vm185, %v2831, 0
    %2878 = vmatprep.subr.bf16.mxu0 0
    %2879 = vmatpush1.bf16.xpose.msra.mxu0 0
    %2880 = vmatprep.subr.bf16.mxu0 0
    %2881 = vmatpush1.bf16.xpose.msra.mxu0 0
    %2882 = vmatprep.subr.bf16.mxu0 0
    %2883 = vmatpush1.bf16.xpose.msra.mxu0 0
    %2884 = vmatprep.subr.bf16.mxu0 0
    %2885 = vmatpush1.bf16.xpose.msra.mxu0 0
    %2886 = vmatprep.subr.bf16.mxu0 0
    %2887 = vmatpush1.bf16.xpose.msra.mxu0 0
    %2888 = vmatprep.subr.bf16.mxu0 0
    %2889 = vmatpush1.bf16.xpose.msra.mxu0 0
    %2890 = vmatprep.subr.bf16.mxu0 0
    %2891 = vmatpush1.bf16.xpose.msra.mxu0 0
    %2892 = vmatprep.subr.bf16.mxu0 0
    %2893 = vmatpush1.bf16.xpose.msra.mxu0 %v2475
    %2894 = vmatprep.subr.bf16.mxu0 0
    %2895 = vmatpush2.bf16.xpose.msra.mxu0 0
    %2896 = vmatprep.subr.bf16.mxu0 0
    %2897 = vmatpush2.bf16.xpose.msra.mxu0 0
    %2898 = vmatprep.subr.bf16.mxu0 0
    %2899 = vmatpush2.bf16.xpose.msra.mxu0 0
    %2900 = vmatprep.subr.bf16.mxu0 0
    %2901 = vmatpush2.bf16.xpose.msra.mxu0 0
    %2902 = vmatprep.subr.bf16.mxu0 0
    %2903 = vmatpush2.bf16.xpose.msra.mxu0 0
    %2904 = vmatprep.subr.bf16.mxu0 0
    %2905 = vmatpush2.bf16.xpose.msra.mxu0 0
    %2906 = vmatprep.subr.bf16.mxu0 0
    %2907 = vmatpush2.bf16.xpose.msra.mxu0 0
    %2908 = vmatprep.subr.bf16.mxu0 0
    %2909 = vmatpush2.bf16.xpose.msra.mxu0 0
    %2910 = vmatprep.mubr.bf16.mxu0 0
    %2911 = vmatmul.mubr.bf16.gmra.mxu0 %v2876
    %v2912 = vpop.f32.mrf.mxu0
    %v2913 = vadd.f32 0.0, %v2912
    %v2914 = vpop.f32.mrf.mxu0
    %v2915 = vpop.f32.mrf.mxu0
    %v2916 = vpop.f32.mrf.mxu0
    %2917 = vdwg.mxu0
    %v2918 = vsel %vm2517, %v2870, -inf
    %2919 = vmax.xlane.f32.xlu0 %v2918
    %v2920 = vpop.xlane.xlu0 %2919
    %v2921 = vsel %vm2517, %v2913, -inf
    %2922 = vmax.xlane.f32.xlu0 %v2921
    %v2923 = vpop.xlane.xlu0 %2922
    %v2924 = vsub.f32 %v2870, %v2920
    %v2925 = vsub.f32 %v2913, %v2923
    %v2926 = vmul.f32 %v2924, 1.442695
    %v2927 = vpow.pop %v2926
    %v2928 = vmul.f32 %v2925, 1.442695
    %v2929 = vpow.pop %v2928
    %v2930 = vsel %vm2517, %v2927, 0.0
    %2931 = vadd.xlane.f32.xlu0 %v2930
    %v2932 = vpop.xlane.xlu0 %2931
    %v2933 = vsel %vm2517, %v2929, 0.0
    %2934 = vadd.xlane.f32.xlu0 %v2933
    %v2935 = vpop.xlane.xlu0 %2934
    %v2936 = vrcp.pop %v2932
    %v2937 = vrcp.pop %v2935
    %v2938 = vmul.f32 %v2927, %v2936
    %v2939 = vmul.f32 %v2929, %v2937
    %v2940 = vmul.bf16 %v2421, %v796
    %v2941 = vmul.bf16 %v2422, %v796
    %v2942 = vpack.c.bf16 %v2938, %v2938
    %v2943 = vpack.c.bf16 %v2939, %v2939
    %v2945 = vsel %vm2517, %v2942, 0
    %2947 = vmatprep.subr.bf16.mxu0 0
    %2948 = vmatpush1.bf16.msra.mxu0 0
    %2949 = vmatprep.subr.bf16.mxu0 0
    %2950 = vmatpush1.bf16.msra.mxu0 0
    %2951 = vmatprep.subr.bf16.mxu0 0
    %2952 = vmatpush1.bf16.msra.mxu0 0
    %2953 = vmatprep.subr.bf16.mxu0 0
    %2954 = vmatpush1.bf16.msra.mxu0 0
    %2955 = vmatprep.subr.bf16.mxu0 0
    %2956 = vmatpush1.bf16.msra.mxu0 0
    %2957 = vmatprep.subr.bf16.mxu0 0
    %2958 = vmatpush1.bf16.msra.mxu0 0
    %2959 = vmatprep.subr.bf16.mxu0 0
    %2960 = vmatpush1.bf16.msra.mxu0 0
    %2961 = vmatprep.subr.bf16.mxu0 0
    %2962 = vmatpush1.bf16.msra.mxu0 %v2940
    %2963 = vmatprep.subr.bf16.mxu0 0
    %2964 = vmatpush2.bf16.msra.mxu0 0
    %2965 = vmatprep.subr.bf16.mxu0 0
    %2966 = vmatpush2.bf16.msra.mxu0 0
    %2967 = vmatprep.subr.bf16.mxu0 0
    %2968 = vmatpush2.bf16.msra.mxu0 0
    %2969 = vmatprep.subr.bf16.mxu0 0
    %2970 = vmatpush2.bf16.msra.mxu0 0
    %2971 = vmatprep.subr.bf16.mxu0 0
    %2972 = vmatpush2.bf16.msra.mxu0 0
    %2973 = vmatprep.subr.bf16.mxu0 0
    %2974 = vmatpush2.bf16.msra.mxu0 0
    %2975 = vmatprep.subr.bf16.mxu0 0
    %2976 = vmatpush2.bf16.msra.mxu0 0
    %2977 = vmatprep.subr.bf16.mxu0 0
    %2978 = vmatpush2.bf16.msra.mxu0 0
    %2979 = vmatprep.mubr.bf16.mxu0 0
    %2980 = vmatmul.mubr.bf16.gmra.mxu0 %v2945
    %v2981 = vpop.f32.mrf.mxu0
    %v2982 = vadd.f32 0.0, %v2981
    %v2983 = vpop.f32.mrf.mxu0
    %v2984 = vpop.f32.mrf.mxu0
    %v2985 = vpop.f32.mrf.mxu0
    %2986 = vdwg.mxu0
    %v2988 = vsel %vm2517, %v2943, 0
    %2990 = vmatprep.subr.bf16.mxu0 0
    %2991 = vmatpush1.bf16.msra.mxu0 0
    %2992 = vmatprep.subr.bf16.mxu0 0
    %2993 = vmatpush1.bf16.msra.mxu0 0
    %2994 = vmatprep.subr.bf16.mxu0 0
    %2995 = vmatpush1.bf16.msra.mxu0 0
    %2996 = vmatprep.subr.bf16.mxu0 0
    %2997 = vmatpush1.bf16.msra.mxu0 0
    %2998 = vmatprep.subr.bf16.mxu0 0
    %2999 = vmatpush1.bf16.msra.mxu0 0
    %3000 = vmatprep.subr.bf16.mxu0 0
    %3001 = vmatpush1.bf16.msra.mxu0 0
    %3002 = vmatprep.subr.bf16.mxu0 0
    %3003 = vmatpush1.bf16.msra.mxu0 0
    %3004 = vmatprep.subr.bf16.mxu0 0
    %3005 = vmatpush1.bf16.msra.mxu0 %v2941
    %3006 = vmatprep.subr.bf16.mxu0 0
    %3007 = vmatpush2.bf16.msra.mxu0 0
    %3008 = vmatprep.subr.bf16.mxu0 0
    %3009 = vmatpush2.bf16.msra.mxu0 0
    %3010 = vmatprep.subr.bf16.mxu0 0
    %3011 = vmatpush2.bf16.msra.mxu0 0
    %3012 = vmatprep.subr.bf16.mxu0 0
    %3013 = vmatpush2.bf16.msra.mxu0 0
    %3014 = vmatprep.subr.bf16.mxu0 0
    %3015 = vmatpush2.bf16.msra.mxu0 0
    %3016 = vmatprep.subr.bf16.mxu0 0
    %3017 = vmatpush2.bf16.msra.mxu0 0
    %3018 = vmatprep.subr.bf16.mxu0 0
    %3019 = vmatpush2.bf16.msra.mxu0 0
    %3020 = vmatprep.subr.bf16.mxu0 0
    %3021 = vmatpush2.bf16.msra.mxu0 0
    %3022 = vmatprep.mubr.bf16.mxu0 0
    %3023 = vmatmul.mubr.bf16.gmra.mxu0 %v2988
    %v3024 = vpop.f32.mrf.mxu0
    %v3025 = vadd.f32 0.0, %v3024
    %v3026 = vpop.f32.mrf.mxu0
    %v3027 = vpop.f32.mrf.mxu0
    %v3028 = vpop.f32.mrf.mxu0
    %3029 = vdwg.mxu0
    %v3030 = vadd.f32 %v2782, %v2982
    %v3031 = vadd.f32 %v2825, %v3025
    %v3032 = vmul.bf16 %v2417, %v1011
    %v3033 = vmul.bf16 %v2418, %v1011
    %v3035 = vsel %vm185, %v3032, 0
    %3037 = vmatprep.subr.bf16.mxu0 0
    %3038 = vmatpush1.bf16.xpose.msra.mxu0 0
    %3039 = vmatprep.subr.bf16.mxu0 0
    %3040 = vmatpush1.bf16.xpose.msra.mxu0 0
    %3041 = vmatprep.subr.bf16.mxu0 0
    %3042 = vmatpush1.bf16.xpose.msra.mxu0 0
    %3043 = vmatprep.subr.bf16.mxu0 0
    %3044 = vmatpush1.bf16.xpose.msra.mxu0 0
    %3045 = vmatprep.subr.bf16.mxu0 0
    %3046 = vmatpush1.bf16.xpose.msra.mxu0 0
    %3047 = vmatprep.subr.bf16.mxu0 0
    %3048 = vmatpush1.bf16.xpose.msra.mxu0 0
    %3049 = vmatprep.subr.bf16.mxu0 0
    %3050 = vmatpush1.bf16.xpose.msra.mxu0 0
    %3051 = vmatprep.subr.bf16.mxu0 0
    %3052 = vmatpush1.bf16.xpose.msra.mxu0 %v2429
    %3053 = vmatprep.subr.bf16.mxu0 0
    %3054 = vmatpush2.bf16.xpose.msra.mxu0 0
    %3055 = vmatprep.subr.bf16.mxu0 0
    %3056 = vmatpush2.bf16.xpose.msra.mxu0 0
    %3057 = vmatprep.subr.bf16.mxu0 0
    %3058 = vmatpush2.bf16.xpose.msra.mxu0 0
    %3059 = vmatprep.subr.bf16.mxu0 0
    %3060 = vmatpush2.bf16.xpose.msra.mxu0 0
    %3061 = vmatprep.subr.bf16.mxu0 0
    %3062 = vmatpush2.bf16.xpose.msra.mxu0 0
    %3063 = vmatprep.subr.bf16.mxu0 0
    %3064 = vmatpush2.bf16.xpose.msra.mxu0 0
    %3065 = vmatprep.subr.bf16.mxu0 0
    %3066 = vmatpush2.bf16.xpose.msra.mxu0 0
    %3067 = vmatprep.subr.bf16.mxu0 0
    %3068 = vmatpush2.bf16.xpose.msra.mxu0 0
    %3069 = vmatprep.mubr.bf16.mxu0 0
    %3070 = vmatmul.mubr.bf16.gmra.mxu0 %v3035
    %v3071 = vpop.f32.mrf.mxu0
    %v3072 = vadd.f32 0.0, %v3071
    %v3073 = vpop.f32.mrf.mxu0
    %v3074 = vpop.f32.mrf.mxu0
    %v3075 = vpop.f32.mrf.mxu0
    %3076 = vdwg.mxu0
    %v3078 = vsel %vm185, %v3033, 0
    %3080 = vmatprep.subr.bf16.mxu0 0
    %3081 = vmatpush1.bf16.xpose.msra.mxu0 0
    %3082 = vmatprep.subr.bf16.mxu0 0
    %3083 = vmatpush1.bf16.xpose.msra.mxu0 0
    %3084 = vmatprep.subr.bf16.mxu0 0
    %3085 = vmatpush1.bf16.xpose.msra.mxu0 0
    %3086 = vmatprep.subr.bf16.mxu0 0
    %3087 = vmatpush1.bf16.xpose.msra.mxu0 0
    %3088 = vmatprep.subr.bf16.mxu0 0
    %3089 = vmatpush1.bf16.xpose.msra.mxu0 0
    %3090 = vmatprep.subr.bf16.mxu0 0
    %3091 = vmatpush1.bf16.xpose.msra.mxu0 0
    %3092 = vmatprep.subr.bf16.mxu0 0
    %3093 = vmatpush1.bf16.xpose.msra.mxu0 0
    %3094 = vmatprep.subr.bf16.mxu0 0
    %3095 = vmatpush1.bf16.xpose.msra.mxu0 %v2475
    %3096 = vmatprep.subr.bf16.mxu0 0
    %3097 = vmatpush2.bf16.xpose.msra.mxu0 0
    %3098 = vmatprep.subr.bf16.mxu0 0
    %3099 = vmatpush2.bf16.xpose.msra.mxu0 0
    %3100 = vmatprep.subr.bf16.mxu0 0
    %3101 = vmatpush2.bf16.xpose.msra.mxu0 0
    %3102 = vmatprep.subr.bf16.mxu0 0
    %3103 = vmatpush2.bf16.xpose.msra.mxu0 0
    %3104 = vmatprep.subr.bf16.mxu0 0
    %3105 = vmatpush2.bf16.xpose.msra.mxu0 0
    %3106 = vmatprep.subr.bf16.mxu0 0
    %3107 = vmatpush2.bf16.xpose.msra.mxu0 0
    %3108 = vmatprep.subr.bf16.mxu0 0
    %3109 = vmatpush2.bf16.xpose.msra.mxu0 0
    %3110 = vmatprep.subr.bf16.mxu0 0
    %3111 = vmatpush2.bf16.xpose.msra.mxu0 0
    %3112 = vmatprep.mubr.bf16.mxu0 0
    %3113 = vmatmul.mubr.bf16.gmra.mxu0 %v3078
    %v3114 = vpop.f32.mrf.mxu0
    %v3115 = vadd.f32 0.0, %v3114
    %v3116 = vpop.f32.mrf.mxu0
    %v3117 = vpop.f32.mrf.mxu0
    %v3118 = vpop.f32.mrf.mxu0
    %3119 = vdwg.mxu0
    %v3120 = vsel %vm2517, %v3072, -inf
    %3121 = vmax.xlane.f32.xlu0 %v3120
    %v3122 = vpop.xlane.xlu0 %3121
    %v3123 = vsel %vm2517, %v3115, -inf
    %3124 = vmax.xlane.f32.xlu0 %v3123
    %v3125 = vpop.xlane.xlu0 %3124
    %v3126 = vsub.f32 %v3072, %v3122
    %v3127 = vsub.f32 %v3115, %v3125
    %v3128 = vmul.f32 %v3126, 1.442695
    %v3129 = vpow.pop %v3128
    %v3130 = vmul.f32 %v3127, 1.442695
    %v3131 = vpow.pop %v3130
    %v3132 = vsel %vm2517, %v3129, 0.0
    %3133 = vadd.xlane.f32.xlu0 %v3132
    %v3134 = vpop.xlane.xlu0 %3133
    %v3135 = vsel %vm2517, %v3131, 0.0
    %3136 = vadd.xlane.f32.xlu0 %v3135
    %v3137 = vpop.xlane.xlu0 %3136
    %v3138 = vrcp.pop %v3134
    %v3139 = vrcp.pop %v3137
    %v3140 = vmul.f32 %v3129, %v3138
    %v3141 = vmul.f32 %v3131, %v3139
    %v3142 = vmul.bf16 %v2421, %v1011
    %v3143 = vmul.bf16 %v2422, %v1011
    %v3144 = vpack.c.bf16 %v3140, %v3140
    %v3145 = vpack.c.bf16 %v3141, %v3141
    %v3147 = vsel %vm2517, %v3144, 0
    %3149 = vmatprep.subr.bf16.mxu0 0
    %3150 = vmatpush1.bf16.msra.mxu0 0
    %3151 = vmatprep.subr.bf16.mxu0 0
    %3152 = vmatpush1.bf16.msra.mxu0 0
    %3153 = vmatprep.subr.bf16.mxu0 0
    %3154 = vmatpush1.bf16.msra.mxu0 0
    %3155 = vmatprep.subr.bf16.mxu0 0
    %3156 = vmatpush1.bf16.msra.mxu0 0
    %3157 = vmatprep.subr.bf16.mxu0 0
    %3158 = vmatpush1.bf16.msra.mxu0 0
    %3159 = vmatprep.subr.bf16.mxu0 0
    %3160 = vmatpush1.bf16.msra.mxu0 0
    %3161 = vmatprep.subr.bf16.mxu0 0
    %3162 = vmatpush1.bf16.msra.mxu0 0
    %3163 = vmatprep.subr.bf16.mxu0 0
    %3164 = vmatpush1.bf16.msra.mxu0 %v3142
    %3165 = vmatprep.subr.bf16.mxu0 0
    %3166 = vmatpush2.bf16.msra.mxu0 0
    %3167 = vmatprep.subr.bf16.mxu0 0
    %3168 = vmatpush2.bf16.msra.mxu0 0
    %3169 = vmatprep.subr.bf16.mxu0 0
    %3170 = vmatpush2.bf16.msra.mxu0 0
    %3171 = vmatprep.subr.bf16.mxu0 0
    %3172 = vmatpush2.bf16.msra.mxu0 0
    %3173 = vmatprep.subr.bf16.mxu0 0
    %3174 = vmatpush2.bf16.msra.mxu0 0
    %3175 = vmatprep.subr.bf16.mxu0 0
    %3176 = vmatpush2.bf16.msra.mxu0 0
    %3177 = vmatprep.subr.bf16.mxu0 0
    %3178 = vmatpush2.bf16.msra.mxu0 0
    %3179 = vmatprep.subr.bf16.mxu0 0
    %3180 = vmatpush2.bf16.msra.mxu0 0
    %3181 = vmatprep.mubr.bf16.mxu0 0
    %3182 = vmatmul.mubr.bf16.gmra.mxu0 %v3147
    %v3183 = vpop.f32.mrf.mxu0
    %v3184 = vadd.f32 0.0, %v3183
    %v3185 = vpop.f32.mrf.mxu0
    %v3186 = vpop.f32.mrf.mxu0
    %v3187 = vpop.f32.mrf.mxu0
    %3188 = vdwg.mxu0
    %v3190 = vsel %vm2517, %v3145, 0
    %3192 = vmatprep.subr.bf16.mxu0 0
    %3193 = vmatpush1.bf16.msra.mxu0 0
    %3194 = vmatprep.subr.bf16.mxu0 0
    %3195 = vmatpush1.bf16.msra.mxu0 0
    %3196 = vmatprep.subr.bf16.mxu0 0
    %3197 = vmatpush1.bf16.msra.mxu0 0
    %3198 = vmatprep.subr.bf16.mxu0 0
    %3199 = vmatpush1.bf16.msra.mxu0 0
    %3200 = vmatprep.subr.bf16.mxu0 0
    %3201 = vmatpush1.bf16.msra.mxu0 0
    %3202 = vmatprep.subr.bf16.mxu0 0
    %3203 = vmatpush1.bf16.msra.mxu0 0
    %3204 = vmatprep.subr.bf16.mxu0 0
    %3205 = vmatpush1.bf16.msra.mxu0 0
    %3206 = vmatprep.subr.bf16.mxu0 0
    %3207 = vmatpush1.bf16.msra.mxu0 %v3143
    %3208 = vmatprep.subr.bf16.mxu0 0
    %3209 = vmatpush2.bf16.msra.mxu0 0
    %3210 = vmatprep.subr.bf16.mxu0 0
    %3211 = vmatpush2.bf16.msra.mxu0 0
    %3212 = vmatprep.subr.bf16.mxu0 0
    %3213 = vmatpush2.bf16.msra.mxu0 0
    %3214 = vmatprep.subr.bf16.mxu0 0
    %3215 = vmatpush2.bf16.msra.mxu0 0
    %3216 = vmatprep.subr.bf16.mxu0 0
    %3217 = vmatpush2.bf16.msra.mxu0 0
    %3218 = vmatprep.subr.bf16.mxu0 0
    %3219 = vmatpush2.bf16.msra.mxu0 0
    %3220 = vmatprep.subr.bf16.mxu0 0
    %3221 = vmatpush2.bf16.msra.mxu0 0
    %3222 = vmatprep.subr.bf16.mxu0 0
    %3223 = vmatpush2.bf16.msra.mxu0 0
    %3224 = vmatprep.mubr.bf16.mxu0 0
    %3225 = vmatmul.mubr.bf16.gmra.mxu0 %v3190
    %v3226 = vpop.f32.mrf.mxu0
    %v3227 = vadd.f32 0.0, %v3226
    %v3228 = vpop.f32.mrf.mxu0
    %v3229 = vpop.f32.mrf.mxu0
    %v3230 = vpop.f32.mrf.mxu0
    %3231 = vdwg.mxu0
    %v3232 = vadd.f32 %v3030, %v3184
    %v3233 = vadd.f32 %v3031, %v3227
    %v3234 = vmul.bf16 %v2417, %v1226
    %v3235 = vmul.bf16 %v2418, %v1226
    %v3237 = vsel %vm185, %v3234, 0
    %3239 = vmatprep.subr.bf16.mxu0 0
    %3240 = vmatpush1.bf16.xpose.msra.mxu0 0
    %3241 = vmatprep.subr.bf16.mxu0 0
    %3242 = vmatpush1.bf16.xpose.msra.mxu0 0
    %3243 = vmatprep.subr.bf16.mxu0 0
    %3244 = vmatpush1.bf16.xpose.msra.mxu0 0
    %3245 = vmatprep.subr.bf16.mxu0 0
    %3246 = vmatpush1.bf16.xpose.msra.mxu0 0
    %3247 = vmatprep.subr.bf16.mxu0 0
    %3248 = vmatpush1.bf16.xpose.msra.mxu0 0
    %3249 = vmatprep.subr.bf16.mxu0 0
    %3250 = vmatpush1.bf16.xpose.msra.mxu0 0
    %3251 = vmatprep.subr.bf16.mxu0 0
    %3252 = vmatpush1.bf16.xpose.msra.mxu0 0
    %3253 = vmatprep.subr.bf16.mxu0 0
    %3254 = vmatpush1.bf16.xpose.msra.mxu0 %v2429
    %3255 = vmatprep.subr.bf16.mxu0 0
    %3256 = vmatpush2.bf16.xpose.msra.mxu0 0
    %3257 = vmatprep.subr.bf16.mxu0 0
    %3258 = vmatpush2.bf16.xpose.msra.mxu0 0
    %3259 = vmatprep.subr.bf16.mxu0 0
    %3260 = vmatpush2.bf16.xpose.msra.mxu0 0
    %3261 = vmatprep.subr.bf16.mxu0 0
    %3262 = vmatpush2.bf16.xpose.msra.mxu0 0
    %3263 = vmatprep.subr.bf16.mxu0 0
    %3264 = vmatpush2.bf16.xpose.msra.mxu0 0
    %3265 = vmatprep.subr.bf16.mxu0 0
    %3266 = vmatpush2.bf16.xpose.msra.mxu0 0
    %3267 = vmatprep.subr.bf16.mxu0 0
    %3268 = vmatpush2.bf16.xpose.msra.mxu0 0
    %3269 = vmatprep.subr.bf16.mxu0 0
    %3270 = vmatpush2.bf16.xpose.msra.mxu0 0
    %3271 = vmatprep.mubr.bf16.mxu0 0
    %3272 = vmatmul.mubr.bf16.gmra.mxu0 %v3237
    %v3273 = vpop.f32.mrf.mxu0
    %v3274 = vadd.f32 0.0, %v3273
    %v3275 = vpop.f32.mrf.mxu0
    %v3276 = vpop.f32.mrf.mxu0
    %v3277 = vpop.f32.mrf.mxu0
    %3278 = vdwg.mxu0
    %v3280 = vsel %vm185, %v3235, 0
    %3282 = vmatprep.subr.bf16.mxu0 0
    %3283 = vmatpush1.bf16.xpose.msra.mxu0 0
    %3284 = vmatprep.subr.bf16.mxu0 0
    %3285 = vmatpush1.bf16.xpose.msra.mxu0 0
    %3286 = vmatprep.subr.bf16.mxu0 0
    %3287 = vmatpush1.bf16.xpose.msra.mxu0 0
    %3288 = vmatprep.subr.bf16.mxu0 0
    %3289 = vmatpush1.bf16.xpose.msra.mxu0 0
    %3290 = vmatprep.subr.bf16.mxu0 0
    %3291 = vmatpush1.bf16.xpose.msra.mxu0 0
    %3292 = vmatprep.subr.bf16.mxu0 0
    %3293 = vmatpush1.bf16.xpose.msra.mxu0 0
    %3294 = vmatprep.subr.bf16.mxu0 0
    %3295 = vmatpush1.bf16.xpose.msra.mxu0 0
    %3296 = vmatprep.subr.bf16.mxu0 0
    %3297 = vmatpush1.bf16.xpose.msra.mxu0 %v2475
    %3298 = vmatprep.subr.bf16.mxu0 0
    %3299 = vmatpush2.bf16.xpose.msra.mxu0 0
    %3300 = vmatprep.subr.bf16.mxu0 0
    %3301 = vmatpush2.bf16.xpose.msra.mxu0 0
    %3302 = vmatprep.subr.bf16.mxu0 0
    %3303 = vmatpush2.bf16.xpose.msra.mxu0 0
    %3304 = vmatprep.subr.bf16.mxu0 0
    %3305 = vmatpush2.bf16.xpose.msra.mxu0 0
    %3306 = vmatprep.subr.bf16.mxu0 0
    %3307 = vmatpush2.bf16.xpose.msra.mxu0 0
    %3308 = vmatprep.subr.bf16.mxu0 0
    %3309 = vmatpush2.bf16.xpose.msra.mxu0 0
    %3310 = vmatprep.subr.bf16.mxu0 0
    %3311 = vmatpush2.bf16.xpose.msra.mxu0 0
    %3312 = vmatprep.subr.bf16.mxu0 0
    %3313 = vmatpush2.bf16.xpose.msra.mxu0 0
    %3314 = vmatprep.mubr.bf16.mxu0 0
    %3315 = vmatmul.mubr.bf16.gmra.mxu0 %v3280
    %v3316 = vpop.f32.mrf.mxu0
    %v3317 = vadd.f32 0.0, %v3316
    %v3318 = vpop.f32.mrf.mxu0
    %v3319 = vpop.f32.mrf.mxu0
    %v3320 = vpop.f32.mrf.mxu0
    %3321 = vdwg.mxu0
    %v3322 = vsel %vm2517, %v3274, -inf
    %3323 = vmax.xlane.f32.xlu0 %v3322
    %v3324 = vpop.xlane.xlu0 %3323
    %v3325 = vsel %vm2517, %v3317, -inf
    %3326 = vmax.xlane.f32.xlu0 %v3325
    %v3327 = vpop.xlane.xlu0 %3326
    %v3328 = vsub.f32 %v3274, %v3324
    %v3329 = vsub.f32 %v3317, %v3327
    %v3330 = vmul.f32 %v3328, 1.442695
    %v3331 = vpow.pop %v3330
    %v3332 = vmul.f32 %v3329, 1.442695
    %v3333 = vpow.pop %v3332
    %v3334 = vsel %vm2517, %v3331, 0.0
    %3335 = vadd.xlane.f32.xlu0 %v3334
    %v3336 = vpop.xlane.xlu0 %3335
    %v3337 = vsel %vm2517, %v3333, 0.0
    %3338 = vadd.xlane.f32.xlu0 %v3337
    %v3339 = vpop.xlane.xlu0 %3338
    %v3340 = vrcp.pop %v3336
    %v3341 = vrcp.pop %v3339
    %v3342 = vmul.f32 %v3331, %v3340
    %v3343 = vmul.f32 %v3333, %v3341
    %v3344 = vmul.bf16 %v2421, %v1226
    %v3345 = vmul.bf16 %v2422, %v1226
    %v3346 = vpack.c.bf16 %v3342, %v3342
    %v3347 = vpack.c.bf16 %v3343, %v3343
    %v3349 = vsel %vm2517, %v3346, 0
    %3351 = vmatprep.subr.bf16.mxu0 0
    %3352 = vmatpush1.bf16.msra.mxu0 0
    %3353 = vmatprep.subr.bf16.mxu0 0
    %3354 = vmatpush1.bf16.msra.mxu0 0
    %3355 = vmatprep.subr.bf16.mxu0 0
    %3356 = vmatpush1.bf16.msra.mxu0 0
    %3357 = vmatprep.subr.bf16.mxu0 0
    %3358 = vmatpush1.bf16.msra.mxu0 0
    %3359 = vmatprep.subr.bf16.mxu0 0
    %3360 = vmatpush1.bf16.msra.mxu0 0
    %3361 = vmatprep.subr.bf16.mxu0 0
    %3362 = vmatpush1.bf16.msra.mxu0 0
    %3363 = vmatprep.subr.bf16.mxu0 0
    %3364 = vmatpush1.bf16.msra.mxu0 0
    %3365 = vmatprep.subr.bf16.mxu0 0
    %3366 = vmatpush1.bf16.msra.mxu0 %v3344
    %3367 = vmatprep.subr.bf16.mxu0 0
    %3368 = vmatpush2.bf16.msra.mxu0 0
    %3369 = vmatprep.subr.bf16.mxu0 0
    %3370 = vmatpush2.bf16.msra.mxu0 0
    %3371 = vmatprep.subr.bf16.mxu0 0
    %3372 = vmatpush2.bf16.msra.mxu0 0
    %3373 = vmatprep.subr.bf16.mxu0 0
    %3374 = vmatpush2.bf16.msra.mxu0 0
    %3375 = vmatprep.subr.bf16.mxu0 0
    %3376 = vmatpush2.bf16.msra.mxu0 0
    %3377 = vmatprep.subr.bf16.mxu0 0
    %3378 = vmatpush2.bf16.msra.mxu0 0
    %3379 = vmatprep.subr.bf16.mxu0 0
    %3380 = vmatpush2.bf16.msra.mxu0 0
    %3381 = vmatprep.subr.bf16.mxu0 0
    %3382 = vmatpush2.bf16.msra.mxu0 0
    %3383 = vmatprep.mubr.bf16.mxu0 0
    %3384 = vmatmul.mubr.bf16.gmra.mxu0 %v3349
    %v3385 = vpop.f32.mrf.mxu0
    %v3386 = vadd.f32 0.0, %v3385
    %v3387 = vpop.f32.mrf.mxu0
    %v3388 = vpop.f32.mrf.mxu0
    %v3389 = vpop.f32.mrf.mxu0
    %3390 = vdwg.mxu0
    %v3392 = vsel %vm2517, %v3347, 0
    %3394 = vmatprep.subr.bf16.mxu0 0
    %3395 = vmatpush1.bf16.msra.mxu0 0
    %3396 = vmatprep.subr.bf16.mxu0 0
    %3397 = vmatpush1.bf16.msra.mxu0 0
    %3398 = vmatprep.subr.bf16.mxu0 0
    %3399 = vmatpush1.bf16.msra.mxu0 0
    %3400 = vmatprep.subr.bf16.mxu0 0
    %3401 = vmatpush1.bf16.msra.mxu0 0
    %3402 = vmatprep.subr.bf16.mxu0 0
    %3403 = vmatpush1.bf16.msra.mxu0 0
    %3404 = vmatprep.subr.bf16.mxu0 0
    %3405 = vmatpush1.bf16.msra.mxu0 0
    %3406 = vmatprep.subr.bf16.mxu0 0
    %3407 = vmatpush1.bf16.msra.mxu0 0
    %3408 = vmatprep.subr.bf16.mxu0 0
    %3409 = vmatpush1.bf16.msra.mxu0 %v3345
    %3410 = vmatprep.subr.bf16.mxu0 0
    %3411 = vmatpush2.bf16.msra.mxu0 0
    %3412 = vmatprep.subr.bf16.mxu0 0
    %3413 = vmatpush2.bf16.msra.mxu0 0
    %3414 = vmatprep.subr.bf16.mxu0 0
    %3415 = vmatpush2.bf16.msra.mxu0 0
    %3416 = vmatprep.subr.bf16.mxu0 0
    %3417 = vmatpush2.bf16.msra.mxu0 0
    %3418 = vmatprep.subr.bf16.mxu0 0
    %3419 = vmatpush2.bf16.msra.mxu0 0
    %3420 = vmatprep.subr.bf16.mxu0 0
    %3421 = vmatpush2.bf16.msra.mxu0 0
    %3422 = vmatprep.subr.bf16.mxu0 0
    %3423 = vmatpush2.bf16.msra.mxu0 0
    %3424 = vmatprep.subr.bf16.mxu0 0
    %3425 = vmatpush2.bf16.msra.mxu0 0
    %3426 = vmatprep.mubr.bf16.mxu0 0
    %3427 = vmatmul.mubr.bf16.gmra.mxu0 %v3392
    %v3428 = vpop.f32.mrf.mxu0
    %v3429 = vadd.f32 0.0, %v3428
    %v3430 = vpop.f32.mrf.mxu0
    %v3431 = vpop.f32.mrf.mxu0
    %v3432 = vpop.f32.mrf.mxu0
    %3433 = vdwg.mxu0
    %v3434 = vadd.f32 %v3232, %v3386
    %v3435 = vadd.f32 %v3233, %v3429
    %v3436 = vmul.bf16 %v2417, %v1441
    %v3437 = vmul.bf16 %v2418, %v1441
    %v3439 = vsel %vm185, %v3436, 0
    %3441 = vmatprep.subr.bf16.mxu0 0
    %3442 = vmatpush1.bf16.xpose.msra.mxu0 0
    %3443 = vmatprep.subr.bf16.mxu0 0
    %3444 = vmatpush1.bf16.xpose.msra.mxu0 0
    %3445 = vmatprep.subr.bf16.mxu0 0
    %3446 = vmatpush1.bf16.xpose.msra.mxu0 0
    %3447 = vmatprep.subr.bf16.mxu0 0
    %3448 = vmatpush1.bf16.xpose.msra.mxu0 0
    %3449 = vmatprep.subr.bf16.mxu0 0
    %3450 = vmatpush1.bf16.xpose.msra.mxu0 0
    %3451 = vmatprep.subr.bf16.mxu0 0
    %3452 = vmatpush1.bf16.xpose.msra.mxu0 0
    %3453 = vmatprep.subr.bf16.mxu0 0
    %3454 = vmatpush1.bf16.xpose.msra.mxu0 0
    %3455 = vmatprep.subr.bf16.mxu0 0
    %3456 = vmatpush1.bf16.xpose.msra.mxu0 %v2429
    %3457 = vmatprep.subr.bf16.mxu0 0
    %3458 = vmatpush2.bf16.xpose.msra.mxu0 0
    %3459 = vmatprep.subr.bf16.mxu0 0
    %3460 = vmatpush2.bf16.xpose.msra.mxu0 0
    %3461 = vmatprep.subr.bf16.mxu0 0
    %3462 = vmatpush2.bf16.xpose.msra.mxu0 0
    %3463 = vmatprep.subr.bf16.mxu0 0
    %3464 = vmatpush2.bf16.xpose.msra.mxu0 0
    %3465 = vmatprep.subr.bf16.mxu0 0
    %3466 = vmatpush2.bf16.xpose.msra.mxu0 0
    %3467 = vmatprep.subr.bf16.mxu0 0
    %3468 = vmatpush2.bf16.xpose.msra.mxu0 0
    %3469 = vmatprep.subr.bf16.mxu0 0
    %3470 = vmatpush2.bf16.xpose.msra.mxu0 0
    %3471 = vmatprep.subr.bf16.mxu0 0
    %3472 = vmatpush2.bf16.xpose.msra.mxu0 0
    %3473 = vmatprep.mubr.bf16.mxu0 0
    %3474 = vmatmul.mubr.bf16.gmra.mxu0 %v3439
    %v3475 = vpop.f32.mrf.mxu0
    %v3476 = vadd.f32 0.0, %v3475
    %v3477 = vpop.f32.mrf.mxu0
    %v3478 = vpop.f32.mrf.mxu0
    %v3479 = vpop.f32.mrf.mxu0
    %3480 = vdwg.mxu0
    %v3482 = vsel %vm185, %v3437, 0
    %3484 = vmatprep.subr.bf16.mxu0 0
    %3485 = vmatpush1.bf16.xpose.msra.mxu0 0
    %3486 = vmatprep.subr.bf16.mxu0 0
    %3487 = vmatpush1.bf16.xpose.msra.mxu0 0
    %3488 = vmatprep.subr.bf16.mxu0 0
    %3489 = vmatpush1.bf16.xpose.msra.mxu0 0
    %3490 = vmatprep.subr.bf16.mxu0 0
    %3491 = vmatpush1.bf16.xpose.msra.mxu0 0
    %3492 = vmatprep.subr.bf16.mxu0 0
    %3493 = vmatpush1.bf16.xpose.msra.mxu0 0
    %3494 = vmatprep.subr.bf16.mxu0 0
    %3495 = vmatpush1.bf16.xpose.msra.mxu0 0
    %3496 = vmatprep.subr.bf16.mxu0 0
    %3497 = vmatpush1.bf16.xpose.msra.mxu0 0
    %3498 = vmatprep.subr.bf16.mxu0 0
    %3499 = vmatpush1.bf16.xpose.msra.mxu0 %v2475
    %3500 = vmatprep.subr.bf16.mxu0 0
    %3501 = vmatpush2.bf16.xpose.msra.mxu0 0
    %3502 = vmatprep.subr.bf16.mxu0 0
    %3503 = vmatpush2.bf16.xpose.msra.mxu0 0
    %3504 = vmatprep.subr.bf16.mxu0 0
    %3505 = vmatpush2.bf16.xpose.msra.mxu0 0
    %3506 = vmatprep.subr.bf16.mxu0 0
    %3507 = vmatpush2.bf16.xpose.msra.mxu0 0
    %3508 = vmatprep.subr.bf16.mxu0 0
    %3509 = vmatpush2.bf16.xpose.msra.mxu0 0
    %3510 = vmatprep.subr.bf16.mxu0 0
    %3511 = vmatpush2.bf16.xpose.msra.mxu0 0
    %3512 = vmatprep.subr.bf16.mxu0 0
    %3513 = vmatpush2.bf16.xpose.msra.mxu0 0
    %3514 = vmatprep.subr.bf16.mxu0 0
    %3515 = vmatpush2.bf16.xpose.msra.mxu0 0
    %3516 = vmatprep.mubr.bf16.mxu0 0
    %3517 = vmatmul.mubr.bf16.gmra.mxu0 %v3482
    %v3518 = vpop.f32.mrf.mxu0
    %v3519 = vadd.f32 0.0, %v3518
    %v3520 = vpop.f32.mrf.mxu0
    %v3521 = vpop.f32.mrf.mxu0
    %v3522 = vpop.f32.mrf.mxu0
    %3523 = vdwg.mxu0
    %v3524 = vsel %vm2517, %v3476, -inf
    %3525 = vmax.xlane.f32.xlu0 %v3524
    %v3526 = vpop.xlane.xlu0 %3525
    %v3527 = vsel %vm2517, %v3519, -inf
    %3528 = vmax.xlane.f32.xlu0 %v3527
    %v3529 = vpop.xlane.xlu0 %3528
    %v3530 = vsub.f32 %v3476, %v3526
    %v3531 = vsub.f32 %v3519, %v3529
    %v3532 = vmul.f32 %v3530, 1.442695
    %v3533 = vpow.pop %v3532
    %v3534 = vmul.f32 %v3531, 1.442695
    %v3535 = vpow.pop %v3534
    %v3536 = vsel %vm2517, %v3533, 0.0
    %3537 = vadd.xlane.f32.xlu0 %v3536
    %v3538 = vpop.xlane.xlu0 %3537
    %v3539 = vsel %vm2517, %v3535, 0.0
    %3540 = vadd.xlane.f32.xlu0 %v3539
    %v3541 = vpop.xlane.xlu0 %3540
    %v3542 = vrcp.pop %v3538
    %v3543 = vrcp.pop %v3541
    %v3544 = vmul.f32 %v3533, %v3542
    %v3545 = vmul.f32 %v3535, %v3543
    %v3546 = vmul.bf16 %v2421, %v1441
    %v3547 = vmul.bf16 %v2422, %v1441
    %v3548 = vpack.c.bf16 %v3544, %v3544
    %v3549 = vpack.c.bf16 %v3545, %v3545
    %v3551 = vsel %vm2517, %v3548, 0
    %3553 = vmatprep.subr.bf16.mxu0 0
    %3554 = vmatpush1.bf16.msra.mxu0 0
    %3555 = vmatprep.subr.bf16.mxu0 0
    %3556 = vmatpush1.bf16.msra.mxu0 0
    %3557 = vmatprep.subr.bf16.mxu0 0
    %3558 = vmatpush1.bf16.msra.mxu0 0
    %3559 = vmatprep.subr.bf16.mxu0 0
    %3560 = vmatpush1.bf16.msra.mxu0 0
    %3561 = vmatprep.subr.bf16.mxu0 0
    %3562 = vmatpush1.bf16.msra.mxu0 0
    %3563 = vmatprep.subr.bf16.mxu0 0
    %3564 = vmatpush1.bf16.msra.mxu0 0
    %3565 = vmatprep.subr.bf16.mxu0 0
    %3566 = vmatpush1.bf16.msra.mxu0 0
    %3567 = vmatprep.subr.bf16.mxu0 0
    %3568 = vmatpush1.bf16.msra.mxu0 %v3546
    %3569 = vmatprep.subr.bf16.mxu0 0
    %3570 = vmatpush2.bf16.msra.mxu0 0
    %3571 = vmatprep.subr.bf16.mxu0 0
    %3572 = vmatpush2.bf16.msra.mxu0 0
    %3573 = vmatprep.subr.bf16.mxu0 0
    %3574 = vmatpush2.bf16.msra.mxu0 0
    %3575 = vmatprep.subr.bf16.mxu0 0
    %3576 = vmatpush2.bf16.msra.mxu0 0
    %3577 = vmatprep.subr.bf16.mxu0 0
    %3578 = vmatpush2.bf16.msra.mxu0 0
    %3579 = vmatprep.subr.bf16.mxu0 0
    %3580 = vmatpush2.bf16.msra.mxu0 0
    %3581 = vmatprep.subr.bf16.mxu0 0
    %3582 = vmatpush2.bf16.msra.mxu0 0
    %3583 = vmatprep.subr.bf16.mxu0 0
    %3584 = vmatpush2.bf16.msra.mxu0 0
    %3585 = vmatprep.mubr.bf16.mxu0 0
    %3586 = vmatmul.mubr.bf16.gmra.mxu0 %v3551
    %v3587 = vpop.f32.mrf.mxu0
    %v3588 = vadd.f32 0.0, %v3587
    %v3589 = vpop.f32.mrf.mxu0
    %v3590 = vpop.f32.mrf.mxu0
    %v3591 = vpop.f32.mrf.mxu0
    %3592 = vdwg.mxu0
    %v3594 = vsel %vm2517, %v3549, 0
    %3596 = vmatprep.subr.bf16.mxu0 0
    %3597 = vmatpush1.bf16.msra.mxu0 0
    %3598 = vmatprep.subr.bf16.mxu0 0
    %3599 = vmatpush1.bf16.msra.mxu0 0
    %3600 = vmatprep.subr.bf16.mxu0 0
    %3601 = vmatpush1.bf16.msra.mxu0 0
    %3602 = vmatprep.subr.bf16.mxu0 0
    %3603 = vmatpush1.bf16.msra.mxu0 0
    %3604 = vmatprep.subr.bf16.mxu0 0
    %3605 = vmatpush1.bf16.msra.mxu0 0
    %3606 = vmatprep.subr.bf16.mxu0 0
    %3607 = vmatpush1.bf16.msra.mxu0 0
    %3608 = vmatprep.subr.bf16.mxu0 0
    %3609 = vmatpush1.bf16.msra.mxu0 0
    %3610 = vmatprep.subr.bf16.mxu0 0
    %3611 = vmatpush1.bf16.msra.mxu0 %v3547
    %3612 = vmatprep.subr.bf16.mxu0 0
    %3613 = vmatpush2.bf16.msra.mxu0 0
    %3614 = vmatprep.subr.bf16.mxu0 0
    %3615 = vmatpush2.bf16.msra.mxu0 0
    %3616 = vmatprep.subr.bf16.mxu0 0
    %3617 = vmatpush2.bf16.msra.mxu0 0
    %3618 = vmatprep.subr.bf16.mxu0 0
    %3619 = vmatpush2.bf16.msra.mxu0 0
    %3620 = vmatprep.subr.bf16.mxu0 0
    %3621 = vmatpush2.bf16.msra.mxu0 0
    %3622 = vmatprep.subr.bf16.mxu0 0
    %3623 = vmatpush2.bf16.msra.mxu0 0
    %3624 = vmatprep.subr.bf16.mxu0 0
    %3625 = vmatpush2.bf16.msra.mxu0 0
    %3626 = vmatprep.subr.bf16.mxu0 0
    %3627 = vmatpush2.bf16.msra.mxu0 0
    %3628 = vmatprep.mubr.bf16.mxu0 0
    %3629 = vmatmul.mubr.bf16.gmra.mxu0 %v3594
    %v3630 = vpop.f32.mrf.mxu0
    %v3631 = vadd.f32 0.0, %v3630
    %v3632 = vpop.f32.mrf.mxu0
    %v3633 = vpop.f32.mrf.mxu0
    %v3634 = vpop.f32.mrf.mxu0
    %3635 = vdwg.mxu0
    %v3636 = vadd.f32 %v3434, %v3588
    %v3637 = vadd.f32 %v3435, %v3631
    %v3638 = vmul.bf16 %v2417, %v1656
    %v3639 = vmul.bf16 %v2418, %v1656
    %v3641 = vsel %vm185, %v3638, 0
    %3643 = vmatprep.subr.bf16.mxu0 0
    %3644 = vmatpush1.bf16.xpose.msra.mxu0 0
    %3645 = vmatprep.subr.bf16.mxu0 0
    %3646 = vmatpush1.bf16.xpose.msra.mxu0 0
    %3647 = vmatprep.subr.bf16.mxu0 0
    %3648 = vmatpush1.bf16.xpose.msra.mxu0 0
    %3649 = vmatprep.subr.bf16.mxu0 0
    %3650 = vmatpush1.bf16.xpose.msra.mxu0 0
    %3651 = vmatprep.subr.bf16.mxu0 0
    %3652 = vmatpush1.bf16.xpose.msra.mxu0 0
    %3653 = vmatprep.subr.bf16.mxu0 0
    %3654 = vmatpush1.bf16.xpose.msra.mxu0 0
    %3655 = vmatprep.subr.bf16.mxu0 0
    %3656 = vmatpush1.bf16.xpose.msra.mxu0 0
    %3657 = vmatprep.subr.bf16.mxu0 0
    %3658 = vmatpush1.bf16.xpose.msra.mxu0 %v2429
    %3659 = vmatprep.subr.bf16.mxu0 0
    %3660 = vmatpush2.bf16.xpose.msra.mxu0 0
    %3661 = vmatprep.subr.bf16.mxu0 0
    %3662 = vmatpush2.bf16.xpose.msra.mxu0 0
    %3663 = vmatprep.subr.bf16.mxu0 0
    %3664 = vmatpush2.bf16.xpose.msra.mxu0 0
    %3665 = vmatprep.subr.bf16.mxu0 0
    %3666 = vmatpush2.bf16.xpose.msra.mxu0 0
    %3667 = vmatprep.subr.bf16.mxu0 0
    %3668 = vmatpush2.bf16.xpose.msra.mxu0 0
    %3669 = vmatprep.subr.bf16.mxu0 0
    %3670 = vmatpush2.bf16.xpose.msra.mxu0 0
    %3671 = vmatprep.subr.bf16.mxu0 0
    %3672 = vmatpush2.bf16.xpose.msra.mxu0 0
    %3673 = vmatprep.subr.bf16.mxu0 0
    %3674 = vmatpush2.bf16.xpose.msra.mxu0 0
    %3675 = vmatprep.mubr.bf16.mxu0 0
    %3676 = vmatmul.mubr.bf16.gmra.mxu0 %v3641
    %v3677 = vpop.f32.mrf.mxu0
    %v3678 = vadd.f32 0.0, %v3677
    %v3679 = vpop.f32.mrf.mxu0
    %v3680 = vpop.f32.mrf.mxu0
    %v3681 = vpop.f32.mrf.mxu0
    %3682 = vdwg.mxu0
    %v3684 = vsel %vm185, %v3639, 0
    %3686 = vmatprep.subr.bf16.mxu0 0
    %3687 = vmatpush1.bf16.xpose.msra.mxu0 0
    %3688 = vmatprep.subr.bf16.mxu0 0
    %3689 = vmatpush1.bf16.xpose.msra.mxu0 0
    %3690 = vmatprep.subr.bf16.mxu0 0
    %3691 = vmatpush1.bf16.xpose.msra.mxu0 0
    %3692 = vmatprep.subr.bf16.mxu0 0
    %3693 = vmatpush1.bf16.xpose.msra.mxu0 0
    %3694 = vmatprep.subr.bf16.mxu0 0
    %3695 = vmatpush1.bf16.xpose.msra.mxu0 0
    %3696 = vmatprep.subr.bf16.mxu0 0
    %3697 = vmatpush1.bf16.xpose.msra.mxu0 0
    %3698 = vmatprep.subr.bf16.mxu0 0
    %3699 = vmatpush1.bf16.xpose.msra.mxu0 0
    %3700 = vmatprep.subr.bf16.mxu0 0
    %3701 = vmatpush1.bf16.xpose.msra.mxu0 %v2475
    %3702 = vmatprep.subr.bf16.mxu0 0
    %3703 = vmatpush2.bf16.xpose.msra.mxu0 0
    %3704 = vmatprep.subr.bf16.mxu0 0
    %3705 = vmatpush2.bf16.xpose.msra.mxu0 0
    %3706 = vmatprep.subr.bf16.mxu0 0
    %3707 = vmatpush2.bf16.xpose.msra.mxu0 0
    %3708 = vmatprep.subr.bf16.mxu0 0
    %3709 = vmatpush2.bf16.xpose.msra.mxu0 0
    %3710 = vmatprep.subr.bf16.mxu0 0
    %3711 = vmatpush2.bf16.xpose.msra.mxu0 0
    %3712 = vmatprep.subr.bf16.mxu0 0
    %3713 = vmatpush2.bf16.xpose.msra.mxu0 0
    %3714 = vmatprep.subr.bf16.mxu0 0
    %3715 = vmatpush2.bf16.xpose.msra.mxu0 0
    %3716 = vmatprep.subr.bf16.mxu0 0
    %3717 = vmatpush2.bf16.xpose.msra.mxu0 0
    %3718 = vmatprep.mubr.bf16.mxu0 0
    %3719 = vmatmul.mubr.bf16.gmra.mxu0 %v3684
    %v3720 = vpop.f32.mrf.mxu0
    %v3721 = vadd.f32 0.0, %v3720
    %v3722 = vpop.f32.mrf.mxu0
    %v3723 = vpop.f32.mrf.mxu0
    %v3724 = vpop.f32.mrf.mxu0
    %3725 = vdwg.mxu0
    %v3726 = vsel %vm2517, %v3678, -inf
    %3727 = vmax.xlane.f32.xlu0 %v3726
    %v3728 = vpop.xlane.xlu0 %3727
    %v3729 = vsel %vm2517, %v3721, -inf
    %3730 = vmax.xlane.f32.xlu0 %v3729
    %v3731 = vpop.xlane.xlu0 %3730
    %v3732 = vsub.f32 %v3678, %v3728
    %v3733 = vsub.f32 %v3721, %v3731
    %v3734 = vmul.f32 %v3732, 1.442695
    %v3735 = vpow.pop %v3734
    %v3736 = vmul.f32 %v3733, 1.442695
    %v3737 = vpow.pop %v3736
    %v3738 = vsel %vm2517, %v3735, 0.0
    %3739 = vadd.xlane.f32.xlu0 %v3738
    %v3740 = vpop.xlane.xlu0 %3739
    %v3741 = vsel %vm2517, %v3737, 0.0
    %3742 = vadd.xlane.f32.xlu0 %v3741
    %v3743 = vpop.xlane.xlu0 %3742
    %v3744 = vrcp.pop %v3740
    %v3745 = vrcp.pop %v3743
    %v3746 = vmul.f32 %v3735, %v3744
    %v3747 = vmul.f32 %v3737, %v3745
    %v3748 = vmul.bf16 %v2421, %v1656
    %v3749 = vmul.bf16 %v2422, %v1656
    %v3750 = vpack.c.bf16 %v3746, %v3746
    %v3751 = vpack.c.bf16 %v3747, %v3747
    %v3753 = vsel %vm2517, %v3750, 0
    %3755 = vmatprep.subr.bf16.mxu0 0
    %3756 = vmatpush1.bf16.msra.mxu0 0
    %3757 = vmatprep.subr.bf16.mxu0 0
    %3758 = vmatpush1.bf16.msra.mxu0 0
    %3759 = vmatprep.subr.bf16.mxu0 0
    %3760 = vmatpush1.bf16.msra.mxu0 0
    %3761 = vmatprep.subr.bf16.mxu0 0
    %3762 = vmatpush1.bf16.msra.mxu0 0
    %3763 = vmatprep.subr.bf16.mxu0 0
    %3764 = vmatpush1.bf16.msra.mxu0 0
    %3765 = vmatprep.subr.bf16.mxu0 0
    %3766 = vmatpush1.bf16.msra.mxu0 0
    %3767 = vmatprep.subr.bf16.mxu0 0
    %3768 = vmatpush1.bf16.msra.mxu0 0
    %3769 = vmatprep.subr.bf16.mxu0 0
    %3770 = vmatpush1.bf16.msra.mxu0 %v3748
    %3771 = vmatprep.subr.bf16.mxu0 0
    %3772 = vmatpush2.bf16.msra.mxu0 0
    %3773 = vmatprep.subr.bf16.mxu0 0
    %3774 = vmatpush2.bf16.msra.mxu0 0
    %3775 = vmatprep.subr.bf16.mxu0 0
    %3776 = vmatpush2.bf16.msra.mxu0 0
    %3777 = vmatprep.subr.bf16.mxu0 0
    %3778 = vmatpush2.bf16.msra.mxu0 0
    %3779 = vmatprep.subr.bf16.mxu0 0
    %3780 = vmatpush2.bf16.msra.mxu0 0
    %3781 = vmatprep.subr.bf16.mxu0 0
    %3782 = vmatpush2.bf16.msra.mxu0 0
    %3783 = vmatprep.subr.bf16.mxu0 0
    %3784 = vmatpush2.bf16.msra.mxu0 0
    %3785 = vmatprep.subr.bf16.mxu0 0
    %3786 = vmatpush2.bf16.msra.mxu0 0
    %3787 = vmatprep.mubr.bf16.mxu0 0
    %3788 = vmatmul.mubr.bf16.gmra.mxu0 %v3753
    %v3789 = vpop.f32.mrf.mxu0
    %v3790 = vadd.f32 0.0, %v3789
    %v3791 = vpop.f32.mrf.mxu0
    %v3792 = vpop.f32.mrf.mxu0
    %v3793 = vpop.f32.mrf.mxu0
    %3794 = vdwg.mxu0
    %v3796 = vsel %vm2517, %v3751, 0
    %3798 = vmatprep.subr.bf16.mxu0 0
    %3799 = vmatpush1.bf16.msra.mxu0 0
    %3800 = vmatprep.subr.bf16.mxu0 0
    %3801 = vmatpush1.bf16.msra.mxu0 0
    %3802 = vmatprep.subr.bf16.mxu0 0
    %3803 = vmatpush1.bf16.msra.mxu0 0
    %3804 = vmatprep.subr.bf16.mxu0 0
    %3805 = vmatpush1.bf16.msra.mxu0 0
    %3806 = vmatprep.subr.bf16.mxu0 0
    %3807 = vmatpush1.bf16.msra.mxu0 0
    %3808 = vmatprep.subr.bf16.mxu0 0
    %3809 = vmatpush1.bf16.msra.mxu0 0
    %3810 = vmatprep.subr.bf16.mxu0 0
    %3811 = vmatpush1.bf16.msra.mxu0 0
    %3812 = vmatprep.subr.bf16.mxu0 0
    %3813 = vmatpush1.bf16.msra.mxu0 %v3749
    %3814 = vmatprep.subr.bf16.mxu0 0
    %3815 = vmatpush2.bf16.msra.mxu0 0
    %3816 = vmatprep.subr.bf16.mxu0 0
    %3817 = vmatpush2.bf16.msra.mxu0 0
    %3818 = vmatprep.subr.bf16.mxu0 0
    %3819 = vmatpush2.bf16.msra.mxu0 0
    %3820 = vmatprep.subr.bf16.mxu0 0
    %3821 = vmatpush2.bf16.msra.mxu0 0
    %3822 = vmatprep.subr.bf16.mxu0 0
    %3823 = vmatpush2.bf16.msra.mxu0 0
    %3824 = vmatprep.subr.bf16.mxu0 0
    %3825 = vmatpush2.bf16.msra.mxu0 0
    %3826 = vmatprep.subr.bf16.mxu0 0
    %3827 = vmatpush2.bf16.msra.mxu0 0
    %3828 = vmatprep.subr.bf16.mxu0 0
    %3829 = vmatpush2.bf16.msra.mxu0 0
    %3830 = vmatprep.mubr.bf16.mxu0 0
    %3831 = vmatmul.mubr.bf16.gmra.mxu0 %v3796
    %v3832 = vpop.f32.mrf.mxu0
    %v3833 = vadd.f32 0.0, %v3832
    %v3834 = vpop.f32.mrf.mxu0
    %v3835 = vpop.f32.mrf.mxu0
    %v3836 = vpop.f32.mrf.mxu0
    %3837 = vdwg.mxu0
    %v3838 = vadd.f32 %v3636, %v3790
    %v3839 = vadd.f32 %v3637, %v3833
    %v3840 = vmul.bf16 %v2417, %v1871
    %v3841 = vmul.bf16 %v2418, %v1871
    %v3843 = vsel %vm185, %v3840, 0
    %3845 = vmatprep.subr.bf16.mxu0 0
    %3846 = vmatpush1.bf16.xpose.msra.mxu0 0
    %3847 = vmatprep.subr.bf16.mxu0 0
    %3848 = vmatpush1.bf16.xpose.msra.mxu0 0
    %3849 = vmatprep.subr.bf16.mxu0 0
    %3850 = vmatpush1.bf16.xpose.msra.mxu0 0
    %3851 = vmatprep.subr.bf16.mxu0 0
    %3852 = vmatpush1.bf16.xpose.msra.mxu0 0
    %3853 = vmatprep.subr.bf16.mxu0 0
    %3854 = vmatpush1.bf16.xpose.msra.mxu0 0
    %3855 = vmatprep.subr.bf16.mxu0 0
    %3856 = vmatpush1.bf16.xpose.msra.mxu0 0
    %3857 = vmatprep.subr.bf16.mxu0 0
    %3858 = vmatpush1.bf16.xpose.msra.mxu0 0
    %3859 = vmatprep.subr.bf16.mxu0 0
    %3860 = vmatpush1.bf16.xpose.msra.mxu0 %v2429
    %3861 = vmatprep.subr.bf16.mxu0 0
    %3862 = vmatpush2.bf16.xpose.msra.mxu0 0
    %3863 = vmatprep.subr.bf16.mxu0 0
    %3864 = vmatpush2.bf16.xpose.msra.mxu0 0
    %3865 = vmatprep.subr.bf16.mxu0 0
    %3866 = vmatpush2.bf16.xpose.msra.mxu0 0
    %3867 = vmatprep.subr.bf16.mxu0 0
    %3868 = vmatpush2.bf16.xpose.msra.mxu0 0
    %3869 = vmatprep.subr.bf16.mxu0 0
    %3870 = vmatpush2.bf16.xpose.msra.mxu0 0
    %3871 = vmatprep.subr.bf16.mxu0 0
    %3872 = vmatpush2.bf16.xpose.msra.mxu0 0
    %3873 = vmatprep.subr.bf16.mxu0 0
    %3874 = vmatpush2.bf16.xpose.msra.mxu0 0
    %3875 = vmatprep.subr.bf16.mxu0 0
    %3876 = vmatpush2.bf16.xpose.msra.mxu0 0
    %3877 = vmatprep.mubr.bf16.mxu0 0
    %3878 = vmatmul.mubr.bf16.gmra.mxu0 %v3843
    %v3879 = vpop.f32.mrf.mxu0
    %v3880 = vadd.f32 0.0, %v3879
    %v3881 = vpop.f32.mrf.mxu0
    %v3882 = vpop.f32.mrf.mxu0
    %v3883 = vpop.f32.mrf.mxu0
    %3884 = vdwg.mxu0
    %v3886 = vsel %vm185, %v3841, 0
    %3888 = vmatprep.subr.bf16.mxu0 0
    %3889 = vmatpush1.bf16.xpose.msra.mxu0 0
    %3890 = vmatprep.subr.bf16.mxu0 0
    %3891 = vmatpush1.bf16.xpose.msra.mxu0 0
    %3892 = vmatprep.subr.bf16.mxu0 0
    %3893 = vmatpush1.bf16.xpose.msra.mxu0 0
    %3894 = vmatprep.subr.bf16.mxu0 0
    %3895 = vmatpush1.bf16.xpose.msra.mxu0 0
    %3896 = vmatprep.subr.bf16.mxu0 0
    %3897 = vmatpush1.bf16.xpose.msra.mxu0 0
    %3898 = vmatprep.subr.bf16.mxu0 0
    %3899 = vmatpush1.bf16.xpose.msra.mxu0 0
    %3900 = vmatprep.subr.bf16.mxu0 0
    %3901 = vmatpush1.bf16.xpose.msra.mxu0 0
    %3902 = vmatprep.subr.bf16.mxu0 0
    %3903 = vmatpush1.bf16.xpose.msra.mxu0 %v2475
    %3904 = vmatprep.subr.bf16.mxu0 0
    %3905 = vmatpush2.bf16.xpose.msra.mxu0 0
    %3906 = vmatprep.subr.bf16.mxu0 0
    %3907 = vmatpush2.bf16.xpose.msra.mxu0 0
    %3908 = vmatprep.subr.bf16.mxu0 0
    %3909 = vmatpush2.bf16.xpose.msra.mxu0 0
    %3910 = vmatprep.subr.bf16.mxu0 0
    %3911 = vmatpush2.bf16.xpose.msra.mxu0 0
    %3912 = vmatprep.subr.bf16.mxu0 0
    %3913 = vmatpush2.bf16.xpose.msra.mxu0 0
    %3914 = vmatprep.subr.bf16.mxu0 0
    %3915 = vmatpush2.bf16.xpose.msra.mxu0 0
    %3916 = vmatprep.subr.bf16.mxu0 0
    %3917 = vmatpush2.bf16.xpose.msra.mxu0 0
    %3918 = vmatprep.subr.bf16.mxu0 0
    %3919 = vmatpush2.bf16.xpose.msra.mxu0 0
    %3920 = vmatprep.mubr.bf16.mxu0 0
    %3921 = vmatmul.mubr.bf16.gmra.mxu0 %v3886
    %v3922 = vpop.f32.mrf.mxu0
    %v3923 = vadd.f32 0.0, %v3922
    %v3924 = vpop.f32.mrf.mxu0
    %v3925 = vpop.f32.mrf.mxu0
    %v3926 = vpop.f32.mrf.mxu0
    %3927 = vdwg.mxu0
    %v3928 = vsel %vm2517, %v3880, -inf
    %3929 = vmax.xlane.f32.xlu0 %v3928
    %v3930 = vpop.xlane.xlu0 %3929
    %v3931 = vsel %vm2517, %v3923, -inf
    %3932 = vmax.xlane.f32.xlu0 %v3931
    %v3933 = vpop.xlane.xlu0 %3932
    %v3934 = vsub.f32 %v3880, %v3930
    %v3935 = vsub.f32 %v3923, %v3933
    %v3936 = vmul.f32 %v3934, 1.442695
    %v3937 = vpow.pop %v3936
    %v3938 = vmul.f32 %v3935, 1.442695
    %v3939 = vpow.pop %v3938
    %v3940 = vsel %vm2517, %v3937, 0.0
    %3941 = vadd.xlane.f32.xlu0 %v3940
    %v3942 = vpop.xlane.xlu0 %3941
    %v3943 = vsel %vm2517, %v3939, 0.0
    %3944 = vadd.xlane.f32.xlu0 %v3943
    %v3945 = vpop.xlane.xlu0 %3944
    %v3946 = vrcp.pop %v3942
    %v3947 = vrcp.pop %v3945
    %v3948 = vmul.f32 %v3937, %v3946
    %v3949 = vmul.f32 %v3939, %v3947
    %v3950 = vmul.bf16 %v2421, %v1871
    %v3951 = vmul.bf16 %v2422, %v1871
    %v3952 = vpack.c.bf16 %v3948, %v3948
    %v3953 = vpack.c.bf16 %v3949, %v3949
    %v3955 = vsel %vm2517, %v3952, 0
    %3957 = vmatprep.subr.bf16.mxu0 0
    %3958 = vmatpush1.bf16.msra.mxu0 0
    %3959 = vmatprep.subr.bf16.mxu0 0
    %3960 = vmatpush1.bf16.msra.mxu0 0
    %3961 = vmatprep.subr.bf16.mxu0 0
    %3962 = vmatpush1.bf16.msra.mxu0 0
    %3963 = vmatprep.subr.bf16.mxu0 0
    %3964 = vmatpush1.bf16.msra.mxu0 0
    %3965 = vmatprep.subr.bf16.mxu0 0
    %3966 = vmatpush1.bf16.msra.mxu0 0
    %3967 = vmatprep.subr.bf16.mxu0 0
    %3968 = vmatpush1.bf16.msra.mxu0 0
    %3969 = vmatprep.subr.bf16.mxu0 0
    %3970 = vmatpush1.bf16.msra.mxu0 0
    %3971 = vmatprep.subr.bf16.mxu0 0
    %3972 = vmatpush1.bf16.msra.mxu0 %v3950
    %3973 = vmatprep.subr.bf16.mxu0 0
    %3974 = vmatpush2.bf16.msra.mxu0 0
    %3975 = vmatprep.subr.bf16.mxu0 0
    %3976 = vmatpush2.bf16.msra.mxu0 0
    %3977 = vmatprep.subr.bf16.mxu0 0
    %3978 = vmatpush2.bf16.msra.mxu0 0
    %3979 = vmatprep.subr.bf16.mxu0 0
    %3980 = vmatpush2.bf16.msra.mxu0 0
    %3981 = vmatprep.subr.bf16.mxu0 0
    %3982 = vmatpush2.bf16.msra.mxu0 0
    %3983 = vmatprep.subr.bf16.mxu0 0
    %3984 = vmatpush2.bf16.msra.mxu0 0
    %3985 = vmatprep.subr.bf16.mxu0 0
    %3986 = vmatpush2.bf16.msra.mxu0 0
    %3987 = vmatprep.subr.bf16.mxu0 0
    %3988 = vmatpush2.bf16.msra.mxu0 0
    %3989 = vmatprep.mubr.bf16.mxu0 0
    %3990 = vmatmul.mubr.bf16.gmra.mxu0 %v3955
    %v3991 = vpop.f32.mrf.mxu0
    %v3992 = vadd.f32 0.0, %v3991
    %v3993 = vpop.f32.mrf.mxu0
    %v3994 = vpop.f32.mrf.mxu0
    %v3995 = vpop.f32.mrf.mxu0
    %3996 = vdwg.mxu0
    %v3998 = vsel %vm2517, %v3953, 0
    %4000 = vmatprep.subr.bf16.mxu0 0
    %4001 = vmatpush1.bf16.msra.mxu0 0
    %4002 = vmatprep.subr.bf16.mxu0 0
    %4003 = vmatpush1.bf16.msra.mxu0 0
    %4004 = vmatprep.subr.bf16.mxu0 0
    %4005 = vmatpush1.bf16.msra.mxu0 0
    %4006 = vmatprep.subr.bf16.mxu0 0
    %4007 = vmatpush1.bf16.msra.mxu0 0
    %4008 = vmatprep.subr.bf16.mxu0 0
    %4009 = vmatpush1.bf16.msra.mxu0 0
    %4010 = vmatprep.subr.bf16.mxu0 0
    %4011 = vmatpush1.bf16.msra.mxu0 0
    %4012 = vmatprep.subr.bf16.mxu0 0
    %4013 = vmatpush1.bf16.msra.mxu0 0
    %4014 = vmatprep.subr.bf16.mxu0 0
    %4015 = vmatpush1.bf16.msra.mxu0 %v3951
    %4016 = vmatprep.subr.bf16.mxu0 0
    %4017 = vmatpush2.bf16.msra.mxu0 0
    %4018 = vmatprep.subr.bf16.mxu0 0
    %4019 = vmatpush2.bf16.msra.mxu0 0
    %4020 = vmatprep.subr.bf16.mxu0 0
    %4021 = vmatpush2.bf16.msra.mxu0 0
    %4022 = vmatprep.subr.bf16.mxu0 0
    %4023 = vmatpush2.bf16.msra.mxu0 0
    %4024 = vmatprep.subr.bf16.mxu0 0
    %4025 = vmatpush2.bf16.msra.mxu0 0
    %4026 = vmatprep.subr.bf16.mxu0 0
    %4027 = vmatpush2.bf16.msra.mxu0 0
    %4028 = vmatprep.subr.bf16.mxu0 0
    %4029 = vmatpush2.bf16.msra.mxu0 0
    %4030 = vmatprep.subr.bf16.mxu0 0
    %4031 = vmatpush2.bf16.msra.mxu0 0
    %4032 = vmatprep.mubr.bf16.mxu0 0
    %4033 = vmatmul.mubr.bf16.gmra.mxu0 %v3998
    %v4034 = vpop.f32.mrf.mxu0
    %v4035 = vadd.f32 0.0, %v4034
    %v4036 = vpop.f32.mrf.mxu0
    %v4037 = vpop.f32.mrf.mxu0
    %v4038 = vpop.f32.mrf.mxu0
    %4039 = vdwg.mxu0
    %v4040 = vadd.f32 %v3838, %v3992
    %v4041 = vadd.f32 %v3839, %v4035
    %v4042 = vpack.c.bf16 %v4041, %v4040
    %v4044 = vlaneseq
    %v4045 = vshrl.u32 %v4044, 7
    %v4046 = vsub.s32 0, %v4045
    %v4047 = vrot.slane %v2209, %v4046
    %v4053 = vunpack.c.l.b16 %v2205
    %v4054 = vunpack.c.l.b16 %v2206
    %v4055 = vunpack.c.l.b16 %v2207
    %v4056 = vunpack.c.l.b16 %v2208
    %v4057 = vpack.c.b16 %v4054, %v4053
    %v4058 = vpack.c.b16 %v4056, %v4055
    %v4062 = vsel %vm185, %v4042, 0
    %4064 = vmatprep.subr.bf16.mxu0 0
    %4065 = vmatpush1.bf16.msra.mxu0 0
    %4066 = vmatprep.subr.bf16.mxu0 0
    %4067 = vmatpush1.bf16.msra.mxu0 0
    %4068 = vmatprep.subr.bf16.mxu0 0
    %4069 = vmatpush1.bf16.msra.mxu0 0
    %4070 = vmatprep.subr.bf16.mxu0 0
    %4071 = vmatpush1.bf16.msra.mxu0 0
    %4072 = vmatprep.subr.bf16.mxu0 0
    %4073 = vmatpush1.bf16.msra.mxu0 0
    %4074 = vmatprep.subr.bf16.mxu0 0
    %4075 = vmatpush1.bf16.msra.mxu0 0
    %4076 = vmatprep.subr.bf16.mxu0 0
    %4077 = vmatpush1.bf16.msra.mxu0 %v4058
    %4078 = vmatprep.subr.bf16.mxu0 0
    %4079 = vmatpush1.bf16.msra.mxu0 %v4057
    %4080 = vmatprep.subr.bf16.mxu0 0
    %4081 = vmatpush2.bf16.msra.mxu0 0
    %4082 = vmatprep.subr.bf16.mxu0 0
    %4083 = vmatpush2.bf16.msra.mxu0 0
    %4084 = vmatprep.subr.bf16.mxu0 0
    %4085 = vmatpush2.bf16.msra.mxu0 0
    %4086 = vmatprep.subr.bf16.mxu0 0
    %4087 = vmatpush2.bf16.msra.mxu0 0
    %4088 = vmatprep.subr.bf16.mxu0 0
    %4089 = vmatpush2.bf16.msra.mxu0 0
    %4090 = vmatprep.subr.bf16.mxu0 0
    %4091 = vmatpush2.bf16.msra.mxu0 0
    %4092 = vmatprep.subr.bf16.mxu0 0
    %4093 = vmatpush2.bf16.msra.mxu0 0
    %4094 = vmatprep.subr.bf16.mxu0 0
    %4095 = vmatpush2.bf16.msra.mxu0 0
    %4096 = vmatprep.mubr.bf16.mxu0 0
    %4097 = vmatmul.mubr.bf16.gmra.mxu0 %v4062
    %v4098 = vpop.f32.mrf.mxu0
    %v4099 = vadd.f32 %v4047, %v4098
    %v4100 = vpop.f32.mrf.mxu0
    %v4101 = vpop.f32.mrf.mxu0
    %v4102 = vadd.f32 %v4047, %v4101
    %v4103 = vpop.f32.mrf.mxu0
    %4104 = vdwg.mxu0
    %v4105 = vadd.f32 %v2188, %v4099
    %v4106 = vadd.f32 %v2189, %v4102
    %v4107 = vld [vmem:[%s43] sm:$0x1]
    %v4108 = vld [vmem:[%s45] sm:$0x1]
    %v4109 = vsel %vm185, %v4105, 0.0
    %4110 = vadd.xlane.f32.xlu0 %v4109
    %v4111 = vpop.xlane.xlu0 %4110
    %v4112 = vsel %vm185, %v4106, 0.0
    %4113 = vadd.xlane.f32.xlu0 %v4112
    %v4114 = vpop.xlane.xlu0 %4113
    %v4115 = vmul.f32 %v4111, %v2153
    %v4116 = vmul.f32 %v4114, %v2153
    %v4117 = vsub.f32 %v4105, %v4115
    %v4118 = vsub.f32 %v4106, %v4116
    %v4119 = vmul.f32 %v4117, %v4117
    %v4120 = vmul.f32 %v4118, %v4118
    %v4121 = vsel %vm185, %v4119, 0.0
    %4122 = vadd.xlane.f32.xlu0 %v4121
    %v4123 = vpop.xlane.xlu0 %4122
    %v4124 = vsel %vm185, %v4120, 0.0
    %4125 = vadd.xlane.f32.xlu0 %v4124
    %v4126 = vpop.xlane.xlu0 %4125
    %v4127 = vmul.f32 %v4123, %v2153
    %v4128 = vmul.f32 %v4126, %v2153
    %v4129 = vadd.f32 %v4127, 1e-05
    %v4130 = vadd.f32 %v4128, 1e-05
    %v4131 = vrsqrt.pop %v4129
    %v4132 = vrsqrt.pop %v4130
    %v4133 = vmul.f32 %v4117, %v4131
    %v4134 = vmul.f32 %v4118, %v4132
    %v4136 = vlaneseq
    %v4137 = vshrl.u32 %v4136, 7
    %v4138 = vsub.s32 0, %v4137
    %v4139 = vrot.slane %v4107, %v4138
    %v4141 = vmul.f32 %v4133, %v4139
    %v4142 = vmul.f32 %v4134, %v4139
    %v4144 = vlaneseq
    %v4145 = vshrl.u32 %v4144, 7
    %v4146 = vsub.s32 0, %v4145
    %v4147 = vrot.slane %v4108, %v4146
    %v4149 = vadd.f32 %v4141, %v4147
    %v4150 = vadd.f32 %v4142, %v4147
    %v4151 = vld [vmem:[%s47] sm:$0xf]
    %v4152 = vld [vmem:[%s47 + $0x4] sm:$0xf]
    %v4153 = vld [vmem:[%s47 + $0x8] sm:$0xf]
    %v4154 = vld [vmem:[%s47 + $0xc] sm:$0xf]
    %v4155 = vld [vmem:[%s49] sm:$0x1]
    %v4156 = vld [vmem:[%s51] sm:$0xf]
    %v4157 = vld [vmem:[%s51 + $0x4] sm:$0xf]
    %v4158 = vld [vmem:[%s51 + $0x8] sm:$0xf]
    %v4159 = vld [vmem:[%s51 + $0xc] sm:$0xf]
    %v4160 = vld [vmem:[%s53] sm:$0x1]
    %v4161 = vpack.c.bf16 %v4150, %v4149
    %v4163 = vlaneseq
    %v4164 = vshrl.u32 %v4163, 7
    %v4165 = vsub.s32 0, %v4164
    %v4166 = vrot.slane %v4155, %v4165
    %v4172 = vunpack.c.l.b16 %v4151
    %v4173 = vunpack.c.l.b16 %v4152
    %v4174 = vunpack.c.l.b16 %v4153
    %v4175 = vunpack.c.l.b16 %v4154
    %v4176 = vpack.c.b16 %v4173, %v4172
    %v4177 = vpack.c.b16 %v4175, %v4174
    %v4181 = vsel %vm185, %v4161, 0
    %4183 = vmatprep.subr.bf16.mxu0 0
    %4184 = vmatpush1.bf16.msra.mxu0 0
    %4185 = vmatprep.subr.bf16.mxu0 0
    %4186 = vmatpush1.bf16.msra.mxu0 0
    %4187 = vmatprep.subr.bf16.mxu0 0
    %4188 = vmatpush1.bf16.msra.mxu0 0
    %4189 = vmatprep.subr.bf16.mxu0 0
    %4190 = vmatpush1.bf16.msra.mxu0 0
    %4191 = vmatprep.subr.bf16.mxu0 0
    %4192 = vmatpush1.bf16.msra.mxu0 0
    %4193 = vmatprep.subr.bf16.mxu0 0
    %4194 = vmatpush1.bf16.msra.mxu0 0
    %4195 = vmatprep.subr.bf16.mxu0 0
    %4196 = vmatpush1.bf16.msra.mxu0 %v4177
    %4197 = vmatprep.subr.bf16.mxu0 0
    %4198 = vmatpush1.bf16.msra.mxu0 %v4176
    %4199 = vmatprep.subr.bf16.mxu0 0
    %4200 = vmatpush2.bf16.msra.mxu0 0
    %4201 = vmatprep.subr.bf16.mxu0 0
    %4202 = vmatpush2.bf16.msra.mxu0 0
    %4203 = vmatprep.subr.bf16.mxu0 0
    %4204 = vmatpush2.bf16.msra.mxu0 0
    %4205 = vmatprep.subr.bf16.mxu0 0
    %4206 = vmatpush2.bf16.msra.mxu0 0
    %4207 = vmatprep.subr.bf16.mxu0 0
    %4208 = vmatpush2.bf16.msra.mxu0 0
    %4209 = vmatprep.subr.bf16.mxu0 0
    %4210 = vmatpush2.bf16.msra.mxu0 0
    %4211 = vmatprep.subr.bf16.mxu0 0
    %4212 = vmatpush2.bf16.msra.mxu0 0
    %4213 = vmatprep.subr.bf16.mxu0 0
    %4214 = vmatpush2.bf16.msra.mxu0 0
    %4215 = vmatprep.mubr.bf16.mxu0 0
    %4216 = vmatmul.mubr.bf16.gmra.mxu0 %v4181
    %v4217 = vpop.f32.mrf.mxu0
    %v4218 = vadd.f32 %v4166, %v4217
    %v4219 = vpop.f32.mrf.mxu0
    %v4220 = vpop.f32.mrf.mxu0
    %v4221 = vadd.f32 %v4166, %v4220
    %v4222 = vpop.f32.mrf.mxu0
    %4223 = vdwg.mxu0
    %v4224 = vmax.f32 %v4218, 0.0
    %v4225 = vmax.f32 %v4221, 0.0
    %v4226 = vpack.c.bf16 %v4225, %v4224
    %v4228 = vlaneseq
    %v4229 = vshrl.u32 %v4228, 7
    %v4230 = vsub.s32 0, %v4229
    %v4231 = vrot.slane %v4160, %v4230
    %v4237 = vunpack.c.l.b16 %v4156
    %v4238 = vunpack.c.l.b16 %v4157
    %v4239 = vunpack.c.l.b16 %v4158
    %v4240 = vunpack.c.l.b16 %v4159
    %v4241 = vpack.c.b16 %v4238, %v4237
    %v4242 = vpack.c.b16 %v4240, %v4239
    %v4246 = vsel %vm185, %v4226, 0
    %4248 = vmatprep.subr.bf16.mxu0 0
    %4249 = vmatpush1.bf16.msra.mxu0 0
    %4250 = vmatprep.subr.bf16.mxu0 0
    %4251 = vmatpush1.bf16.msra.mxu0 0
    %4252 = vmatprep.subr.bf16.mxu0 0
    %4253 = vmatpush1.bf16.msra.mxu0 0
    %4254 = vmatprep.subr.bf16.mxu0 0
    %4255 = vmatpush1.bf16.msra.mxu0 0
    %4256 = vmatprep.subr.bf16.mxu0 0
    %4257 = vmatpush1.bf16.msra.mxu0 0
    %4258 = vmatprep.subr.bf16.mxu0 0
    %4259 = vmatpush1.bf16.msra.mxu0 0
    %4260 = vmatprep.subr.bf16.mxu0 0
    %4261 = vmatpush1.bf16.msra.mxu0 %v4242
    %4262 = vmatprep.subr.bf16.mxu0 0
    %4263 = vmatpush1.bf16.msra.mxu0 %v4241
    %4264 = vmatprep.subr.bf16.mxu0 0
    %4265 = vmatpush2.bf16.msra.mxu0 0
    %4266 = vmatprep.subr.bf16.mxu0 0
    %4267 = vmatpush2.bf16.msra.mxu0 0
    %4268 = vmatprep.subr.bf16.mxu0 0
    %4269 = vmatpush2.bf16.msra.mxu0 0
    %4270 = vmatprep.subr.bf16.mxu0 0
    %4271 = vmatpush2.bf16.msra.mxu0 0
    %4272 = vmatprep.subr.bf16.mxu0 0
    %4273 = vmatpush2.bf16.msra.mxu0 0
    %4274 = vmatprep.subr.bf16.mxu0 0
    %4275 = vmatpush2.bf16.msra.mxu0 0
    %4276 = vmatprep.subr.bf16.mxu0 0
    %4277 = vmatpush2.bf16.msra.mxu0 0
    %4278 = vmatprep.subr.bf16.mxu0 0
    %4279 = vmatpush2.bf16.msra.mxu0 0
    %4280 = vmatprep.mubr.bf16.mxu0 0
    %4281 = vmatmul.mubr.bf16.gmra.mxu0 %v4246
    %v4282 = vpop.f32.mrf.mxu0
    %v4283 = vadd.f32 %v4231, %v4282
    %v4284 = vpop.f32.mrf.mxu0
    %v4285 = vpop.f32.mrf.mxu0
    %v4286 = vadd.f32 %v4231, %v4285
    %v4287 = vpop.f32.mrf.mxu0
    %4288 = vdwg.mxu0
    %v4289 = vadd.f32 %v4149, %v4283
    %v4290 = vadd.f32 %v4150, %v4286
    %v4291 = vld [vmem:[%s55] sm:$0x1]
    %v4292 = vld [vmem:[%s57] sm:$0x1]
    %v4293 = vsel %vm185, %v4289, 0.0
    %4294 = vadd.xlane.f32.xlu0 %v4293
    %v4295 = vpop.xlane.xlu0 %4294
    %v4296 = vsel %vm185, %v4290, 0.0
    %4297 = vadd.xlane.f32.xlu0 %v4296
    %v4298 = vpop.xlane.xlu0 %4297
    %v4299 = vmul.f32 %v4295, %v2153
    %v4300 = vmul.f32 %v4298, %v2153
    %v4301 = vsub.f32 %v4289, %v4299
    %v4302 = vsub.f32 %v4290, %v4300
    %v4303 = vmul.f32 %v4301, %v4301
    %v4304 = vmul.f32 %v4302, %v4302
    %v4305 = vsel %vm185, %v4303, 0.0
    %4306 = vadd.xlane.f32.xlu0 %v4305
    %v4307 = vpop.xlane.xlu0 %4306
    %v4308 = vsel %vm185, %v4304, 0.0
    %4309 = vadd.xlane.f32.xlu0 %v4308
    %v4310 = vpop.xlane.xlu0 %4309
    %v4311 = vmul.f32 %v4307, %v2153
    %v4312 = vmul.f32 %v4310, %v2153
    %v4313 = vadd.f32 %v4311, 1e-05
    %v4314 = vadd.f32 %v4312, 1e-05
    %v4315 = vrsqrt.pop %v4313
    %v4316 = vrsqrt.pop %v4314
    %v4317 = vmul.f32 %v4301, %v4315
    %v4318 = vmul.f32 %v4302, %v4316
    %v4320 = vlaneseq
    %v4321 = vshrl.u32 %v4320, 7
    %v4322 = vsub.s32 0, %v4321
    %v4323 = vrot.slane %v4291, %v4322
    %v4325 = vmul.f32 %v4317, %v4323
    %v4326 = vmul.f32 %v4318, %v4323
    %v4328 = vlaneseq
    %v4329 = vshrl.u32 %v4328, 7
    %v4330 = vsub.s32 0, %v4329
    %v4331 = vrot.slane %v4292, %v4330
    %v4333 = vadd.f32 %v4325, %v4331
    %v4334 = vadd.f32 %v4326, %v4331
    %v4335 = vld [vmem:[%s59] sm:$0x1]
    %v4336 = vld [vmem:[%s61] sm:$0x1]
    %v4337 = vsel %vm185, %v4333, 0.0
    %4338 = vadd.xlane.f32.xlu0 %v4337
    %v4339 = vpop.xlane.xlu0 %4338
    %v4340 = vsel %vm185, %v4334, 0.0
    %4341 = vadd.xlane.f32.xlu0 %v4340
    %v4342 = vpop.xlane.xlu0 %4341
    %v4343 = vmul.f32 %v4339, %v2153
    %v4344 = vmul.f32 %v4342, %v2153
    %v4345 = vsub.f32 %v4333, %v4343
    %v4346 = vsub.f32 %v4334, %v4344
    %v4347 = vmul.f32 %v4345, %v4345
    %v4348 = vmul.f32 %v4346, %v4346
    %v4349 = vsel %vm185, %v4347, 0.0
    %4350 = vadd.xlane.f32.xlu0 %v4349
    %v4351 = vpop.xlane.xlu0 %4350
    %v4352 = vsel %vm185, %v4348, 0.0
    %4353 = vadd.xlane.f32.xlu0 %v4352
    %v4354 = vpop.xlane.xlu0 %4353
    %v4355 = vmul.f32 %v4351, %v2153
    %v4356 = vmul.f32 %v4354, %v2153
    %v4357 = vadd.f32 %v4355, 1e-05
    %v4358 = vadd.f32 %v4356, 1e-05
    %v4359 = vrsqrt.pop %v4357
    %v4360 = vrsqrt.pop %v4358
    %v4361 = vmul.f32 %v4345, %v4359
    %v4362 = vmul.f32 %v4346, %v4360
    %v4364 = vlaneseq
    %v4365 = vshrl.u32 %v4364, 7
    %v4366 = vsub.s32 0, %v4365
    %v4367 = vrot.slane %v4335, %v4366
    %v4369 = vmul.f32 %v4361, %v4367
    %v4370 = vmul.f32 %v4362, %v4367
    %v4372 = vlaneseq
    %v4373 = vshrl.u32 %v4372, 7
    %v4374 = vsub.s32 0, %v4373
    %v4375 = vrot.slane %v4336, %v4374
    %v4377 = vadd.f32 %v4369, %v4375
    %v4378 = vadd.f32 %v4370, %v4375
    %4379 = vst.msk [vmem:[#allocation2] sm:$0xff] %vm185, %v4377
    %4380 = vst.msk [vmem:[#allocation2 + $0x8] sm:$0xff] %vm185, %v4378
    // Predicated region
    $region126: #{transformer_relation.3} parent=1 // pred_check
      _
    $region127: #{transformer_relation.3} parent=1 // pred_check_branch
      %4382 = sbr.rel (0) target = $region129
    $region128: #{transformer_relation.3} parent=1 // pred_region
      %s4384 = ssub.s32 256, 256
      %4385 = vsyncadd [#allocation3], %s4384
      %s4386 = sshll.u32 [#allocation2], 4
      %s4387 = int_to_ptr.vmem [resolvable:$true] %s4386
      %4392 = dma.vmem_to_hbm [thread:$0]  %s4387, 256, %s63, [#allocation3], 128, 128, 8
    $region129: #{transformer_relation.3} parent=1 // pred_fallthru
      _
    // Predicated region
    $region130: #{transformer_relation.3} parent=1 // pred_check
      _
    $region131: #{transformer_relation.3} parent=1 // pred_check_branch
      %4394 = sbr.rel (0) target = $region133
    $region132: #{transformer_relation.3} parent=1 // pred_region
      %4395 = dma.done [#allocation3], 256
    $region133: #{transformer_relation.3} parent=1 // pred_fallthru
      _
    %4396 = vsyncpa [#allocation3], 1

</llo_original>
